<compile_context>
chip_gen: v7x
topology: tpu7x:2x2x1
jax: 0.10.0
libtpu: 0.0.40
codegen_flags: <defaults>
</compile_context>

<pallas_src>
import jax
import jax.numpy as jnp
from jax import lax
from jax.experimental import pallas as pl
from jax.experimental.pallas import tpu as pltpu


# ---------------------------------------------------------------------------
# Fused forward kernel.
#   x_ref  : (B, f, f, 1)      input images (channel-last, C=1)
#   w1_ref : (9, 8)            conv1 weights  [tap = dh*3+dw, cout]
#   b1_ref : (1, 8)
#   w2_ref : (9, 16, 8)        conv2 weights  [tap, cout, cin]
#   b2_ref : (16, 1)
#   wl_ref : (16*f*f, n)       linear weights (rows in NCHW-flatten order)
#   bl_ref : (1, n)
#   o_ref  : (B, n)
# scratch:
#   xpad   : (f+2, f+16, 1)    zero-padded conv1 input  (image at cols [8, 8+f))
#   h1pad  : (f+2, f+16, 8)    zero-padded conv1 output (same placement)
#   flat   : (B, 16*f*f)       NCHW-flattened conv2 output feeding the Linear
# ---------------------------------------------------------------------------
def cnn_mnist_fused_kernel(x_ref, w1_ref, b1_ref, w2_ref, b2_ref,
                           wl_ref, bl_ref, o_ref, xpad, h1pad, flat):
    B, f = x_ref.shape[0], x_ref.shape[1]
    ff = f * f
    c1 = h1pad.shape[-1]        # 8
    c2 = w2_ref.shape[1]        # 16
    W0 = 8                      # sublane-aligned column offset of the valid image

    # Zero the padded scratches once: borders stay zero, interiors are rewritten
    # for every image of the batch.
    xpad[...] = jnp.zeros_like(xpad)
    h1pad[...] = jnp.zeros_like(h1pad)

    w1 = w1_ref[...]            # (9, c1)
    b1 = b1_ref[...]            # (1, c1)
    w2 = w2_ref[...]            # (9, c2, c1)
    b2 = b2_ref[...]            # (c2, 1)

    for b in range(B):          # static unroll; B is small
        # ---- in-kernel zero padding (no jnp.pad / HBM round trip) ----
        xpad[1:f + 1, W0:W0 + f, :] = x_ref[b]

        # ---- conv1 (1 -> 8) + ReLU on the VPU: 9 broadcast MACs. K=1 matmuls
        #      would waste 9 MXU push/pop round trips for near-zero work.
        acc1 = jnp.zeros((ff, c1), dtype=jnp.float32)
        for dh in range(3):
            for dw in range(3):
                tap = dh * 3 + dw
                patch = xpad[dh:dh + f, W0 - 1 + dw:W0 - 1 + dw + f, :]
                acc1 = acc1 + patch.reshape(ff, 1) * w1[tap].reshape(1, c1)
        h1 = jnp.maximum(acc1 + b1, 0.0)                     # (ff, c1)

        # ---- stage padded h1 in VMEM for conv2's shifted window reads ----
        h1pad[1:f + 1, W0:W0 + f, :] = h1.reshape(f, f, c1)

        # ---- conv2 (8 -> 16) + ReLU: 9 accumulated MXU matmuls, output kept
        #      channel-major (c2, ff) so the lane dim (ff = 256) is fully dense
        #      and the NCHW flatten below is free.  Contraction pattern is the
        #      standard "rhs-transposed" dot (q @ k.T style).
        acc2 = jnp.zeros((c2, ff), dtype=jnp.float32)
        for dh in range(3):
            for dw in range(3):
                tap = dh * 3 + dw
                patch = h1pad[dh:dh + f, W0 - 1 + dw:W0 - 1 + dw + f, :]
                acc2 = acc2 + lax.dot_general(
                    w2[tap], patch.reshape(ff, c1),
                    dimension_numbers=(((1,), (1,)), ((), ())),
                    preferred_element_type=jnp.float32)      # (c2, ff)
        h2 = jnp.maximum(acc2 + b2, 0.0)                     # (c2, ff)

        # ---- PyTorch NCHW flatten: row c of h2 is exactly flat[c*ff:(c+1)*ff],
        #      written as lane-aligned 256-wide copies (no runtime transpose).
        for c in range(c2):
            flat[b:b + 1, c * ff:(c + 1) * ff] = h2[c:c + 1, :]

    # ---- Linear layer: single lane-dense matmul for the whole batch ----
    o_ref[...] = (
        jnp.dot(flat[...], wl_ref[...], preferred_element_type=jnp.float32)
        + bl_ref[...]
    )


def cnn_mnist_forward(o_t, params):
    """o_t: (B, f, f) -> (B, n), fused single-kernel forward."""
    B, f, _ = o_t.shape
    n = params["wl_t"].shape[1]
    c1 = params["w1_k"].shape[1]      # 8
    c2 = params["w2_k"].shape[1]      # 16
    x = o_t[..., None].astype(jnp.float32)          # (B, f, f, 1), free reshape

    return pl.pallas_call(
        cnn_mnist_fused_kernel,
        out_shape=jax.ShapeDtypeStruct((B, n), jnp.float32),
        in_specs=[pl.BlockSpec(memory_space=pltpu.MemorySpace.VMEM)] * 7,
        out_specs=pl.BlockSpec(memory_space=pltpu.MemorySpace.VMEM),
        scratch_shapes=[
            pltpu.VMEM((f + 2, f + 16, 1), jnp.float32),     # padded conv1 input
            pltpu.VMEM((f + 2, f + 16, c1), jnp.float32),    # padded conv1 output
            pltpu.VMEM((B, c2 * f * f), jnp.float32),        # NCHW-flattened features
        ],
    )(x, params["w1_k"], params["b1_k"], params["w2_k"], params["b2_k"],
      params["wl_t"], params["bl_k"])


# ---------------------------------------------------------------------------
# Parameters (synthetic, deterministic).  Canonical HWIO / (K, n) forms are kept
# for the pure-JAX reference; kernel-layout copies are precomputed ONCE here so
# no layout permutation happens at forward time.
# ---------------------------------------------------------------------------
def init_params(key, f, n):
    k1, k2, k3, k4, k5, k6 = jax.random.split(key, 6)
    w1 = jax.random.uniform(k1, (3, 3, 1, 8), jnp.float32, -0.3, 0.3)    # HWIO
    b1 = jax.random.uniform(k2, (8,), jnp.float32, -0.3, 0.3)
    w2 = jax.random.uniform(k3, (3, 3, 8, 16), jnp.float32, -0.1, 0.1)   # HWIO
    b2 = jax.random.uniform(k4, (16,), jnp.float32, -0.1, 0.1)
    # PyTorch Linear stores (n, 16*f*f) with NCHW flatten order; keep the transpose.
    wl_t = jax.random.uniform(k5, (16 * f * f, n), jnp.float32, -0.05, 0.05)
    bl = jax.random.uniform(k6, (n,), jnp.float32, -0.05, 0.05)

    params = dict(w1=w1, b1=b1, w2=w2, b2=b2, wl_t=wl_t, bl=bl)
    # One-time kernel layouts (zero runtime cost):
    params["w1_k"] = w1.reshape(9, 8)                                    # [tap, co]
    params["b1_k"] = b1.reshape(1, 8)
    params["w2_k"] = jnp.transpose(w2, (0, 1, 3, 2)).reshape(9, 16, 8)   # [tap, co, ci]
    params["b2_k"] = b2.reshape(16, 1)
    params["bl_k"] = bl.reshape(1, n)
    return params


# Pure-JAX reference for a correctness sanity check.
def cnn_mnist_ref(o_t, params):
    x = o_t[..., None].astype(jnp.float32)

    def conv(x, w, b):
        y = lax.conv_general_dilated(
            x, w, window_strides=(1, 1), padding="SAME",
            dimension_numbers=("NHWC", "HWIO", "NHWC"))
        return jnp.maximum(y + b, 0.0)

    h1 = conv(x, params["w1"], params["b1"])
    h2 = conv(h1, params["w2"], params["b2"])
    flat = jnp.transpose(h2, (0, 3, 1, 2)).reshape(h2.shape[0], -1)      # NCHW flatten
    return flat @ params["wl_t"] + params["bl"]


if __name__ == "__main__":
    B, f, n = 2, 16, 32
    key = jax.random.PRNGKey(0)
    k_in, k_par = jax.random.split(key)
    o_t = jax.random.normal(k_in, (B, f, f), jnp.float32)
    params = init_params(k_par, f, n)

    out = cnn_mnist_forward(o_t, params)
    out = jax.block_until_ready(out)

    ref = cnn_mnist_ref(o_t, params)
    assert out.shape == (B, n)
    assert jnp.allclose(out, ref, atol=1e-4, rtol=1e-4)

    print("KERNEL_OK")
</pallas_src>

<mosaic_0001>
module attributes {stable_mosaic.version = 11 : i64} {
  func.func @cnn_mnist_fused_kernel(%arg0: memref<2x16x16x1xf32, #tpu.memory_space<vmem>>, %arg1: memref<9x8xf32, #tpu.memory_space<vmem>>, %arg2: memref<1x8xf32, #tpu.memory_space<vmem>>, %arg3: memref<9x16x8xf32, #tpu.memory_space<vmem>>, %arg4: memref<16x1xf32, #tpu.memory_space<vmem>>, %arg5: memref<4096x32xf32, #tpu.memory_space<vmem>>, %arg6: memref<1x32xf32, #tpu.memory_space<vmem>>, %arg7: memref<2x32xf32, #tpu.memory_space<vmem>>, %arg8: memref<18x32x1xf32, #tpu.memory_space<vmem>>, %arg9: memref<18x32x8xf32, #tpu.memory_space<vmem>>, %arg10: memref<2x4096xf32, #tpu.memory_space<vmem>>) attributes {dimension_semantics = [], scalar_prefetch = 0 : i64, scratch_operands = 3 : i64, tpu.core_type = #tpu.core_type<tc>} {
    %cst = arith.constant 0.000000e+00 : f32
    %0 = vector.broadcast %cst : f32 to vector<18x32x1xf32>
    %c0 = arith.constant 0 : index
    %c0_0 = arith.constant 0 : index
    %c0_1 = arith.constant 0 : index
    %1 = vector.load %arg8[%c0, %c0_0, %c0_1] : memref<18x32x1xf32, #tpu.memory_space<vmem>>, vector<18x32x1xf32>
    tpu.vector_store %arg8[%c0, %c0_0, %c0_1], %0 {strides = array<i32>} : memref<18x32x1xf32, #tpu.memory_space<vmem>>, vector<18x32x1xf32>,
    %cst_2 = arith.constant 0.000000e+00 : f32
    %2 = vector.broadcast %cst_2 : f32 to vector<18x32x8xf32>
    %c0_3 = arith.constant 0 : index
    %c0_4 = arith.constant 0 : index
    %c0_5 = arith.constant 0 : index
    %3 = vector.load %arg9[%c0_3, %c0_4, %c0_5] : memref<18x32x8xf32, #tpu.memory_space<vmem>>, vector<18x32x8xf32>
    tpu.vector_store %arg9[%c0_3, %c0_4, %c0_5], %2 {strides = array<i32>} : memref<18x32x8xf32, #tpu.memory_space<vmem>>, vector<18x32x8xf32>,
    %c0_6 = arith.constant 0 : index
    %c0_7 = arith.constant 0 : index
    %4 = vector.load %arg1[%c0_6, %c0_7] : memref<9x8xf32, #tpu.memory_space<vmem>>, vector<9x8xf32>
    %c0_8 = arith.constant 0 : index
    %c0_9 = arith.constant 0 : index
    %5 = vector.load %arg2[%c0_8, %c0_9] : memref<1x8xf32, #tpu.memory_space<vmem>>, vector<1x8xf32>
    %c0_10 = arith.constant 0 : index
    %c0_11 = arith.constant 0 : index
    %c0_12 = arith.constant 0 : index
    %6 = vector.load %arg3[%c0_10, %c0_11, %c0_12] : memref<9x16x8xf32, #tpu.memory_space<vmem>>, vector<9x16x8xf32>
    %c0_13 = arith.constant 0 : index
    %c0_14 = arith.constant 0 : index
    %7 = vector.load %arg4[%c0_13, %c0_14] : memref<16x1xf32, #tpu.memory_space<vmem>>, vector<16x1xf32>
    %c0_15 = arith.constant 0 : index
    %c0_16 = arith.constant 0 : index
    %c0_17 = arith.constant 0 : index
    %c0_18 = arith.constant 0 : index
    %8 = vector.load %arg0[%c0_15, %c0_16, %c0_17, %c0_18] : memref<2x16x16x1xf32, #tpu.memory_space<vmem>>, vector<1x16x16x1xf32>
    %9 = vector.shape_cast %8 : vector<1x16x16x1xf32> to vector<16x16x1xf32>
    %c1 = arith.constant 1 : index
    %c8 = arith.constant 8 : index
    %c0_19 = arith.constant 0 : index
    %10 = vector.load %arg8[%c1, %c8, %c0_19] : memref<18x32x1xf32, #tpu.memory_space<vmem>>, vector<16x16x1xf32>
    tpu.vector_store %arg8[%c1, %c8, %c0_19], %9 {strides = array<i32>} : memref<18x32x1xf32, #tpu.memory_space<vmem>>, vector<16x16x1xf32>,
    %cst_20 = arith.constant 0.000000e+00 : f32
    %11 = vector.broadcast %cst_20 : f32 to vector<256x8xf32>
    %c0_21 = arith.constant 0 : index
    %c7 = arith.constant 7 : index
    %c0_22 = arith.constant 0 : index
    %12 = vector.load %arg8[%c0_21, %c7, %c0_22] : memref<18x32x1xf32, #tpu.memory_space<vmem>>, vector<16x16x1xf32>
    %13 = vector.shape_cast %12 : vector<16x16x1xf32> to vector<256x1xf32>
    %14 = vector.extract_strided_slice %4 {offsets = [0, 0], sizes = [1, 8], strides = [1, 1]} : vector<9x8xf32> to vector<1x8xf32>
    %15 = vector.shape_cast %14 : vector<1x8xf32> to vector<8xf32>
    %16 = vector.shape_cast %15 : vector<8xf32> to vector<1x8xf32>
    %17 = vector.broadcast %13 : vector<256x1xf32> to vector<256x8xf32>
    %18 = vector.broadcast %16 : vector<1x8xf32> to vector<256x8xf32>
    %19 = arith.mulf %17, %18 : vector<256x8xf32>
    %20 = arith.addf %11, %19 : vector<256x8xf32>
    %c0_23 = arith.constant 0 : index
    %c8_24 = arith.constant 8 : index
    %c0_25 = arith.constant 0 : index
    %21 = vector.load %arg8[%c0_23, %c8_24, %c0_25] : memref<18x32x1xf32, #tpu.memory_space<vmem>>, vector<16x16x1xf32>
    %22 = vector.shape_cast %21 : vector<16x16x1xf32> to vector<256x1xf32>
    %23 = vector.extract_strided_slice %4 {offsets = [1, 0], sizes = [1, 8], strides = [1, 1]} : vector<9x8xf32> to vector<1x8xf32>
    %24 = vector.shape_cast %23 : vector<1x8xf32> to vector<8xf32>
    %25 = vector.shape_cast %24 : vector<8xf32> to vector<1x8xf32>
    %26 = vector.broadcast %22 : vector<256x1xf32> to vector<256x8xf32>
    %27 = vector.broadcast %25 : vector<1x8xf32> to vector<256x8xf32>
    %28 = arith.mulf %26, %27 : vector<256x8xf32>
    %29 = arith.addf %20, %28 : vector<256x8xf32>
    %c0_26 = arith.constant 0 : index
    %c9 = arith.constant 9 : index
    %c0_27 = arith.constant 0 : index
    %30 = vector.load %arg8[%c0_26, %c9, %c0_27] : memref<18x32x1xf32, #tpu.memory_space<vmem>>, vector<16x16x1xf32>
    %31 = vector.shape_cast %30 : vector<16x16x1xf32> to vector<256x1xf32>
    %32 = vector.extract_strided_slice %4 {offsets = [2, 0], sizes = [1, 8], strides = [1, 1]} : vector<9x8xf32> to vector<1x8xf32>
    %33 = vector.shape_cast %32 : vector<1x8xf32> to vector<8xf32>
    %34 = vector.shape_cast %33 : vector<8xf32> to vector<1x8xf32>
    %35 = vector.broadcast %31 : vector<256x1xf32> to vector<256x8xf32>
    %36 = vector.broadcast %34 : vector<1x8xf32> to vector<256x8xf32>
    %37 = arith.mulf %35, %36 : vector<256x8xf32>
    %38 = arith.addf %29, %37 : vector<256x8xf32>
    %c1_28 = arith.constant 1 : index
    %c7_29 = arith.constant 7 : index
    %c0_30 = arith.constant 0 : index
    %39 = vector.load %arg8[%c1_28, %c7_29, %c0_30] : memref<18x32x1xf32, #tpu.memory_space<vmem>>, vector<16x16x1xf32>
    %40 = vector.shape_cast %39 : vector<16x16x1xf32> to vector<256x1xf32>
    %41 = vector.extract_strided_slice %4 {offsets = [3, 0], sizes = [1, 8], strides = [1, 1]} : vector<9x8xf32> to vector<1x8xf32>
    %42 = vector.shape_cast %41 : vector<1x8xf32> to vector<8xf32>
    %43 = vector.shape_cast %42 : vector<8xf32> to vector<1x8xf32>
    %44 = vector.broadcast %40 : vector<256x1xf32> to vector<256x8xf32>
    %45 = vector.broadcast %43 : vector<1x8xf32> to vector<256x8xf32>
    %46 = arith.mulf %44, %45 : vector<256x8xf32>
    %47 = arith.addf %38, %46 : vector<256x8xf32>
    %c1_31 = arith.constant 1 : index
    %c8_32 = arith.constant 8 : index
    %c0_33 = arith.constant 0 : index
    %48 = vector.load %arg8[%c1_31, %c8_32, %c0_33] : memref<18x32x1xf32, #tpu.memory_space<vmem>>, vector<16x16x1xf32>
    %49 = vector.shape_cast %48 : vector<16x16x1xf32> to vector<256x1xf32>
    %50 = vector.extract_strided_slice %4 {offsets = [4, 0], sizes = [1, 8], strides = [1, 1]} : vector<9x8xf32> to vector<1x8xf32>
    %51 = vector.shape_cast %50 : vector<1x8xf32> to vector<8xf32>
    %52 = vector.shape_cast %51 : vector<8xf32> to vector<1x8xf32>
    %53 = vector.broadcast %49 : vector<256x1xf32> to vector<256x8xf32>
    %54 = vector.broadcast %52 : vector<1x8xf32> to vector<256x8xf32>
    %55 = arith.mulf %53, %54 : vector<256x8xf32>
    %56 = arith.addf %47, %55 : vector<256x8xf32>
    %c1_34 = arith.constant 1 : index
    %c9_35 = arith.constant 9 : index
    %c0_36 = arith.constant 0 : index
    %57 = vector.load %arg8[%c1_34, %c9_35, %c0_36] : memref<18x32x1xf32, #tpu.memory_space<vmem>>, vector<16x16x1xf32>
    %58 = vector.shape_cast %57 : vector<16x16x1xf32> to vector<256x1xf32>
    %59 = vector.extract_strided_slice %4 {offsets = [5, 0], sizes = [1, 8], strides = [1, 1]} : vector<9x8xf32> to vector<1x8xf32>
    %60 = vector.shape_cast %59 : vector<1x8xf32> to vector<8xf32>
    %61 = vector.shape_cast %60 : vector<8xf32> to vector<1x8xf32>
    %62 = vector.broadcast %58 : vector<256x1xf32> to vector<256x8xf32>
    %63 = vector.broadcast %61 : vector<1x8xf32> to vector<256x8xf32>
    %64 = arith.mulf %62, %63 : vector<256x8xf32>
    %65 = arith.addf %56, %64 : vector<256x8xf32>
    %c2 = arith.constant 2 : index
    %c7_37 = arith.constant 7 : index
    %c0_38 = arith.constant 0 : index
    %66 = vector.load %arg8[%c2, %c7_37, %c0_38] : memref<18x32x1xf32, #tpu.memory_space<vmem>>, vector<16x16x1xf32>
    %67 = vector.shape_cast %66 : vector<16x16x1xf32> to vector<256x1xf32>
    %68 = vector.extract_strided_slice %4 {offsets = [6, 0], sizes = [1, 8], strides = [1, 1]} : vector<9x8xf32> to vector<1x8xf32>
    %69 = vector.shape_cast %68 : vector<1x8xf32> to vector<8xf32>
    %70 = vector.shape_cast %69 : vector<8xf32> to vector<1x8xf32>
    %71 = vector.broadcast %67 : vector<256x1xf32> to vector<256x8xf32>
    %72 = vector.broadcast %70 : vector<1x8xf32> to vector<256x8xf32>
    %73 = arith.mulf %71, %72 : vector<256x8xf32>
    %74 = arith.addf %65, %73 : vector<256x8xf32>
    %c2_39 = arith.constant 2 : index
    %c8_40 = arith.constant 8 : index
    %c0_41 = arith.constant 0 : index
    %75 = vector.load %arg8[%c2_39, %c8_40, %c0_41] : memref<18x32x1xf32, #tpu.memory_space<vmem>>, vector<16x16x1xf32>
    %76 = vector.shape_cast %75 : vector<16x16x1xf32> to vector<256x1xf32>
    %77 = vector.extract_strided_slice %4 {offsets = [7, 0], sizes = [1, 8], strides = [1, 1]} : vector<9x8xf32> to vector<1x8xf32>
    %78 = vector.shape_cast %77 : vector<1x8xf32> to vector<8xf32>
    %79 = vector.shape_cast %78 : vector<8xf32> to vector<1x8xf32>
    %80 = vector.broadcast %76 : vector<256x1xf32> to vector<256x8xf32>
    %81 = vector.broadcast %79 : vector<1x8xf32> to vector<256x8xf32>
    %82 = arith.mulf %80, %81 : vector<256x8xf32>
    %83 = arith.addf %74, %82 : vector<256x8xf32>
    %c2_42 = arith.constant 2 : index
    %c9_43 = arith.constant 9 : index
    %c0_44 = arith.constant 0 : index
    %84 = vector.load %arg8[%c2_42, %c9_43, %c0_44] : memref<18x32x1xf32, #tpu.memory_space<vmem>>, vector<16x16x1xf32>
    %85 = vector.shape_cast %84 : vector<16x16x1xf32> to vector<256x1xf32>
    %86 = vector.extract_strided_slice %4 {offsets = [8, 0], sizes = [1, 8], strides = [1, 1]} : vector<9x8xf32> to vector<1x8xf32>
    %87 = vector.shape_cast %86 : vector<1x8xf32> to vector<8xf32>
    %88 = vector.shape_cast %87 : vector<8xf32> to vector<1x8xf32>
    %89 = vector.broadcast %85 : vector<256x1xf32> to vector<256x8xf32>
    %90 = vector.broadcast %88 : vector<1x8xf32> to vector<256x8xf32>
    %91 = arith.mulf %89, %90 : vector<256x8xf32>
    %92 = arith.addf %83, %91 : vector<256x8xf32>
    %93 = vector.broadcast %5 : vector<1x8xf32> to vector<256x8xf32>
    %94 = arith.addf %92, %93 : vector<256x8xf32>
    %cst_45 = arith.constant 0.000000e+00 : f32
    %95 = vector.broadcast %cst_45 : f32 to vector<256x8xf32>
    %96 = arith.maximumf %94, %95 : vector<256x8xf32>
    %97 = vector.shape_cast %96 : vector<256x8xf32> to vector<16x16x8xf32>
    %c1_46 = arith.constant 1 : index
    %c8_47 = arith.constant 8 : index
    %c0_48 = arith.constant 0 : index
    %98 = vector.load %arg9[%c1_46, %c8_47, %c0_48] : memref<18x32x8xf32, #tpu.memory_space<vmem>>, vector<16x16x8xf32>
    tpu.vector_store %arg9[%c1_46, %c8_47, %c0_48], %97 {strides = array<i32>} : memref<18x32x8xf32, #tpu.memory_space<vmem>>, vector<16x16x8xf32>,
    %cst_49 = arith.constant 0.000000e+00 : f32
    %99 = vector.broadcast %cst_49 : f32 to vector<16x256xf32>
    %c0_50 = arith.constant 0 : index
    %c7_51 = arith.constant 7 : index
    %c0_52 = arith.constant 0 : index
    %100 = vector.load %arg9[%c0_50, %c7_51, %c0_52] : memref<18x32x8xf32, #tpu.memory_space<vmem>>, vector<16x16x8xf32>
    %101 = vector.extract_strided_slice %6 {offsets = [0, 0, 0], sizes = [1, 16, 8], strides = [1, 1, 1]} : vector<9x16x8xf32> to vector<1x16x8xf32>
    %102 = vector.shape_cast %101 : vector<1x16x8xf32> to vector<16x8xf32>
    %103 = vector.shape_cast %100 : vector<16x16x8xf32> to vector<256x8xf32>
    %cst_53 = arith.constant dense<0.000000e+00> : vector<16x256xf32>
    %104 = tpu.matmul %102, %103, %cst_53 {dimension_numbers = #tpu.dot_dimension_numbers<[1], [1], [0], [0], [0, 0, 1, 0], [], []>} : vector<16x8xf32>, vector<256x8xf32>, vector<16x256xf32> -> vector<16x256xf32>
    %105 = arith.addf %99, %104 : vector<16x256xf32>
    %c0_54 = arith.constant 0 : index
    %c8_55 = arith.constant 8 : index
    %c0_56 = arith.constant 0 : index
    %106 = vector.load %arg9[%c0_54, %c8_55, %c0_56] : memref<18x32x8xf32, #tpu.memory_space<vmem>>, vector<16x16x8xf32>
    %107 = vector.extract_strided_slice %6 {offsets = [1, 0, 0], sizes = [1, 16, 8], strides = [1, 1, 1]} : vector<9x16x8xf32> to vector<1x16x8xf32>
    %108 = vector.shape_cast %107 : vector<1x16x8xf32> to vector<16x8xf32>
    %109 = vector.shape_cast %106 : vector<16x16x8xf32> to vector<256x8xf32>
    %cst_57 = arith.constant dense<0.000000e+00> : vector<16x256xf32>
    %110 = tpu.matmul %108, %109, %cst_57 {dimension_numbers = #tpu.dot_dimension_numbers<[1], [1], [0], [0], [0, 0, 1, 0], [], []>} : vector<16x8xf32>, vector<256x8xf32>, vector<16x256xf32> -> vector<16x256xf32>
    %111 = arith.addf %105, %110 : vector<16x256xf32>
    %c0_58 = arith.constant 0 : index
    %c9_59 = arith.constant 9 : index
    %c0_60 = arith.constant 0 : index
    %112 = vector.load %arg9[%c0_58, %c9_59, %c0_60] : memref<18x32x8xf32, #tpu.memory_space<vmem>>, vector<16x16x8xf32>
    %113 = vector.extract_strided_slice %6 {offsets = [2, 0, 0], sizes = [1, 16, 8], strides = [1, 1, 1]} : vector<9x16x8xf32> to vector<1x16x8xf32>
    %114 = vector.shape_cast %113 : vector<1x16x8xf32> to vector<16x8xf32>
    %115 = vector.shape_cast %112 : vector<16x16x8xf32> to vector<256x8xf32>
    %cst_61 = arith.constant dense<0.000000e+00> : vector<16x256xf32>
    %116 = tpu.matmul %114, %115, %cst_61 {dimension_numbers = #tpu.dot_dimension_numbers<[1], [1], [0], [0], [0, 0, 1, 0], [], []>} : vector<16x8xf32>, vector<256x8xf32>, vector<16x256xf32> -> vector<16x256xf32>
    %117 = arith.addf %111, %116 : vector<16x256xf32>
    %c1_62 = arith.constant 1 : index
    %c7_63 = arith.constant 7 : index
    %c0_64 = arith.constant 0 : index
    %118 = vector.load %arg9[%c1_62, %c7_63, %c0_64] : memref<18x32x8xf32, #tpu.memory_space<vmem>>, vector<16x16x8xf32>
    %119 = vector.extract_strided_slice %6 {offsets = [3, 0, 0], sizes = [1, 16, 8], strides = [1, 1, 1]} : vector<9x16x8xf32> to vector<1x16x8xf32>
    %120 = vector.shape_cast %119 : vector<1x16x8xf32> to vector<16x8xf32>
    %121 = vector.shape_cast %118 : vector<16x16x8xf32> to vector<256x8xf32>
    %cst_65 = arith.constant dense<0.000000e+00> : vector<16x256xf32>
    %122 = tpu.matmul %120, %121, %cst_65 {dimension_numbers = #tpu.dot_dimension_numbers<[1], [1], [0], [0], [0, 0, 1, 0], [], []>} : vector<16x8xf32>, vector<256x8xf32>, vector<16x256xf32> -> vector<16x256xf32>
    %123 = arith.addf %117, %122 : vector<16x256xf32>
    %c1_66 = arith.constant 1 : index
    %c8_67 = arith.constant 8 : index
    %c0_68 = arith.constant 0 : index
    %124 = vector.load %arg9[%c1_66, %c8_67, %c0_68] : memref<18x32x8xf32, #tpu.memory_space<vmem>>, vector<16x16x8xf32>
    %125 = vector.extract_strided_slice %6 {offsets = [4, 0, 0], sizes = [1, 16, 8], strides = [1, 1, 1]} : vector<9x16x8xf32> to vector<1x16x8xf32>
    %126 = vector.shape_cast %125 : vector<1x16x8xf32> to vector<16x8xf32>
    %127 = vector.shape_cast %124 : vector<16x16x8xf32> to vector<256x8xf32>
    %cst_69 = arith.constant dense<0.000000e+00> : vector<16x256xf32>
    %128 = tpu.matmul %126, %127, %cst_69 {dimension_numbers = #tpu.dot_dimension_numbers<[1], [1], [0], [0], [0, 0, 1, 0], [], []>} : vector<16x8xf32>, vector<256x8xf32>, vector<16x256xf32> -> vector<16x256xf32>
    %129 = arith.addf %123, %128 : vector<16x256xf32>
    %c1_70 = arith.constant 1 : index
    %c9_71 = arith.constant 9 : index
    %c0_72 = arith.constant 0 : index
    %130 = vector.load %arg9[%c1_70, %c9_71, %c0_72] : memref<18x32x8xf32, #tpu.memory_space<vmem>>, vector<16x16x8xf32>
    %131 = vector.extract_strided_slice %6 {offsets = [5, 0, 0], sizes = [1, 16, 8], strides = [1, 1, 1]} : vector<9x16x8xf32> to vector<1x16x8xf32>
    %132 = vector.shape_cast %131 : vector<1x16x8xf32> to vector<16x8xf32>
    %133 = vector.shape_cast %130 : vector<16x16x8xf32> to vector<256x8xf32>
    %cst_73 = arith.constant dense<0.000000e+00> : vector<16x256xf32>
    %134 = tpu.matmul %132, %133, %cst_73 {dimension_numbers = #tpu.dot_dimension_numbers<[1], [1], [0], [0], [0, 0, 1, 0], [], []>} : vector<16x8xf32>, vector<256x8xf32>, vector<16x256xf32> -> vector<16x256xf32>
    %135 = arith.addf %129, %134 : vector<16x256xf32>
    %c2_74 = arith.constant 2 : index
    %c7_75 = arith.constant 7 : index
    %c0_76 = arith.constant 0 : index
    %136 = vector.load %arg9[%c2_74, %c7_75, %c0_76] : memref<18x32x8xf32, #tpu.memory_space<vmem>>, vector<16x16x8xf32>
    %137 = vector.extract_strided_slice %6 {offsets = [6, 0, 0], sizes = [1, 16, 8], strides = [1, 1, 1]} : vector<9x16x8xf32> to vector<1x16x8xf32>
    %138 = vector.shape_cast %137 : vector<1x16x8xf32> to vector<16x8xf32>
    %139 = vector.shape_cast %136 : vector<16x16x8xf32> to vector<256x8xf32>
    %cst_77 = arith.constant dense<0.000000e+00> : vector<16x256xf32>
    %140 = tpu.matmul %138, %139, %cst_77 {dimension_numbers = #tpu.dot_dimension_numbers<[1], [1], [0], [0], [0, 0, 1, 0], [], []>} : vector<16x8xf32>, vector<256x8xf32>, vector<16x256xf32> -> vector<16x256xf32>
    %141 = arith.addf %135, %140 : vector<16x256xf32>
    %c2_78 = arith.constant 2 : index
    %c8_79 = arith.constant 8 : index
    %c0_80 = arith.constant 0 : index
    %142 = vector.load %arg9[%c2_78, %c8_79, %c0_80] : memref<18x32x8xf32, #tpu.memory_space<vmem>>, vector<16x16x8xf32>
    %143 = vector.extract_strided_slice %6 {offsets = [7, 0, 0], sizes = [1, 16, 8], strides = [1, 1, 1]} : vector<9x16x8xf32> to vector<1x16x8xf32>
    %144 = vector.shape_cast %143 : vector<1x16x8xf32> to vector<16x8xf32>
    %145 = vector.shape_cast %142 : vector<16x16x8xf32> to vector<256x8xf32>
    %cst_81 = arith.constant dense<0.000000e+00> : vector<16x256xf32>
    %146 = tpu.matmul %144, %145, %cst_81 {dimension_numbers = #tpu.dot_dimension_numbers<[1], [1], [0], [0], [0, 0, 1, 0], [], []>} : vector<16x8xf32>, vector<256x8xf32>, vector<16x256xf32> -> vector<16x256xf32>
    %147 = arith.addf %141, %146 : vector<16x256xf32>
    %c2_82 = arith.constant 2 : index
    %c9_83 = arith.constant 9 : index
    %c0_84 = arith.constant 0 : index
    %148 = vector.load %arg9[%c2_82, %c9_83, %c0_84] : memref<18x32x8xf32, #tpu.memory_space<vmem>>, vector<16x16x8xf32>
    %149 = vector.extract_strided_slice %6 {offsets = [8, 0, 0], sizes = [1, 16, 8], strides = [1, 1, 1]} : vector<9x16x8xf32> to vector<1x16x8xf32>
    %150 = vector.shape_cast %149 : vector<1x16x8xf32> to vector<16x8xf32>
    %151 = vector.shape_cast %148 : vector<16x16x8xf32> to vector<256x8xf32>
    %cst_85 = arith.constant dense<0.000000e+00> : vector<16x256xf32>
    %152 = tpu.matmul %150, %151, %cst_85 {dimension_numbers = #tpu.dot_dimension_numbers<[1], [1], [0], [0], [0, 0, 1, 0], [], []>} : vector<16x8xf32>, vector<256x8xf32>, vector<16x256xf32> -> vector<16x256xf32>
    %153 = arith.addf %147, %152 : vector<16x256xf32>
    %154 = vector.broadcast %7 : vector<16x1xf32> to vector<16x256xf32>
    %155 = arith.addf %153, %154 : vector<16x256xf32>
    %cst_86 = arith.constant 0.000000e+00 : f32
    %156 = vector.broadcast %cst_86 : f32 to vector<16x256xf32>
    %157 = arith.maximumf %155, %156 : vector<16x256xf32>
    %158 = vector.extract_strided_slice %157 {offsets = [0, 0], sizes = [1, 256], strides = [1, 1]} : vector<16x256xf32> to vector<1x256xf32>
    %c0_87 = arith.constant 0 : index
    %c0_88 = arith.constant 0 : index
    %159 = vector.load %arg10[%c0_87, %c0_88] : memref<2x4096xf32, #tpu.memory_space<vmem>>, vector<1x256xf32>
    tpu.vector_store %arg10[%c0_87, %c0_88], %158 {strides = array<i32>} : memref<2x4096xf32, #tpu.memory_space<vmem>>, vector<1x256xf32>,
    %160 = vector.extract_strided_slice %157 {offsets = [1, 0], sizes = [1, 256], strides = [1, 1]} : vector<16x256xf32> to vector<1x256xf32>
    %c0_89 = arith.constant 0 : index
    %c256 = arith.constant 256 : index
    %161 = vector.load %arg10[%c0_89, %c256] : memref<2x4096xf32, #tpu.memory_space<vmem>>, vector<1x256xf32>
    tpu.vector_store %arg10[%c0_89, %c256], %160 {strides = array<i32>} : memref<2x4096xf32, #tpu.memory_space<vmem>>, vector<1x256xf32>,
    %162 = vector.extract_strided_slice %157 {offsets = [2, 0], sizes = [1, 256], strides = [1, 1]} : vector<16x256xf32> to vector<1x256xf32>
    %c0_90 = arith.constant 0 : index
    %c512 = arith.constant 512 : index
    %163 = vector.load %arg10[%c0_90, %c512] : memref<2x4096xf32, #tpu.memory_space<vmem>>, vector<1x256xf32>
    tpu.vector_store %arg10[%c0_90, %c512], %162 {strides = array<i32>} : memref<2x4096xf32, #tpu.memory_space<vmem>>, vector<1x256xf32>,
    %164 = vector.extract_strided_slice %157 {offsets = [3, 0], sizes = [1, 256], strides = [1, 1]} : vector<16x256xf32> to vector<1x256xf32>
    %c0_91 = arith.constant 0 : index
    %c768 = arith.constant 768 : index
    %165 = vector.load %arg10[%c0_91, %c768] : memref<2x4096xf32, #tpu.memory_space<vmem>>, vector<1x256xf32>
    tpu.vector_store %arg10[%c0_91, %c768], %164 {strides = array<i32>} : memref<2x4096xf32, #tpu.memory_space<vmem>>, vector<1x256xf32>,
    %166 = vector.extract_strided_slice %157 {offsets = [4, 0], sizes = [1, 256], strides = [1, 1]} : vector<16x256xf32> to vector<1x256xf32>
    %c0_92 = arith.constant 0 : index
    %c1024 = arith.constant 1024 : index
    %167 = vector.load %arg10[%c0_92, %c1024] : memref<2x4096xf32, #tpu.memory_space<vmem>>, vector<1x256xf32>
    tpu.vector_store %arg10[%c0_92, %c1024], %166 {strides = array<i32>} : memref<2x4096xf32, #tpu.memory_space<vmem>>, vector<1x256xf32>,
    %168 = vector.extract_strided_slice %157 {offsets = [5, 0], sizes = [1, 256], strides = [1, 1]} : vector<16x256xf32> to vector<1x256xf32>
    %c0_93 = arith.constant 0 : index
    %c1280 = arith.constant 1280 : index
    %169 = vector.load %arg10[%c0_93, %c1280] : memref<2x4096xf32, #tpu.memory_space<vmem>>, vector<1x256xf32>
    tpu.vector_store %arg10[%c0_93, %c1280], %168 {strides = array<i32>} : memref<2x4096xf32, #tpu.memory_space<vmem>>, vector<1x256xf32>,
    %170 = vector.extract_strided_slice %157 {offsets = [6, 0], sizes = [1, 256], strides = [1, 1]} : vector<16x256xf32> to vector<1x256xf32>
    %c0_94 = arith.constant 0 : index
    %c1536 = arith.constant 1536 : index
    %171 = vector.load %arg10[%c0_94, %c1536] : memref<2x4096xf32, #tpu.memory_space<vmem>>, vector<1x256xf32>
    tpu.vector_store %arg10[%c0_94, %c1536], %170 {strides = array<i32>} : memref<2x4096xf32, #tpu.memory_space<vmem>>, vector<1x256xf32>,
    %172 = vector.extract_strided_slice %157 {offsets = [7, 0], sizes = [1, 256], strides = [1, 1]} : vector<16x256xf32> to vector<1x256xf32>
    %c0_95 = arith.constant 0 : index
    %c1792 = arith.constant 1792 : index
    %173 = vector.load %arg10[%c0_95, %c1792] : memref<2x4096xf32, #tpu.memory_space<vmem>>, vector<1x256xf32>
    tpu.vector_store %arg10[%c0_95, %c1792], %172 {strides = array<i32>} : memref<2x4096xf32, #tpu.memory_space<vmem>>, vector<1x256xf32>,
    %174 = vector.extract_strided_slice %157 {offsets = [8, 0], sizes = [1, 256], strides = [1, 1]} : vector<16x256xf32> to vector<1x256xf32>
    %c0_96 = arith.constant 0 : index
    %c2048 = arith.constant 2048 : index
    %175 = vector.load %arg10[%c0_96, %c2048] : memref<2x4096xf32, #tpu.memory_space<vmem>>, vector<1x256xf32>
    tpu.vector_store %arg10[%c0_96, %c2048], %174 {strides = array<i32>} : memref<2x4096xf32, #tpu.memory_space<vmem>>, vector<1x256xf32>,
    %176 = vector.extract_strided_slice %157 {offsets = [9, 0], sizes = [1, 256], strides = [1, 1]} : vector<16x256xf32> to vector<1x256xf32>
    %c0_97 = arith.constant 0 : index
    %c2304 = arith.constant 2304 : index
    %177 = vector.load %arg10[%c0_97, %c2304] : memref<2x4096xf32, #tpu.memory_space<vmem>>, vector<1x256xf32>
    tpu.vector_store %arg10[%c0_97, %c2304], %176 {strides = array<i32>} : memref<2x4096xf32, #tpu.memory_space<vmem>>, vector<1x256xf32>,
    %178 = vector.extract_strided_slice %157 {offsets = [10, 0], sizes = [1, 256], strides = [1, 1]} : vector<16x256xf32> to vector<1x256xf32>
    %c0_98 = arith.constant 0 : index
    %c2560 = arith.constant 2560 : index
    %179 = vector.load %arg10[%c0_98, %c2560] : memref<2x4096xf32, #tpu.memory_space<vmem>>, vector<1x256xf32>
    tpu.vector_store %arg10[%c0_98, %c2560], %178 {strides = array<i32>} : memref<2x4096xf32, #tpu.memory_space<vmem>>, vector<1x256xf32>,
    %180 = vector.extract_strided_slice %157 {offsets = [11, 0], sizes = [1, 256], strides = [1, 1]} : vector<16x256xf32> to vector<1x256xf32>
    %c0_99 = arith.constant 0 : index
    %c2816 = arith.constant 2816 : index
    %181 = vector.load %arg10[%c0_99, %c2816] : memref<2x4096xf32, #tpu.memory_space<vmem>>, vector<1x256xf32>
    tpu.vector_store %arg10[%c0_99, %c2816], %180 {strides = array<i32>} : memref<2x4096xf32, #tpu.memory_space<vmem>>, vector<1x256xf32>,
    %182 = vector.extract_strided_slice %157 {offsets = [12, 0], sizes = [1, 256], strides = [1, 1]} : vector<16x256xf32> to vector<1x256xf32>
    %c0_100 = arith.constant 0 : index
    %c3072 = arith.constant 3072 : index
    %183 = vector.load %arg10[%c0_100, %c3072] : memref<2x4096xf32, #tpu.memory_space<vmem>>, vector<1x256xf32>
    tpu.vector_store %arg10[%c0_100, %c3072], %182 {strides = array<i32>} : memref<2x4096xf32, #tpu.memory_space<vmem>>, vector<1x256xf32>,
    %184 = vector.extract_strided_slice %157 {offsets = [13, 0], sizes = [1, 256], strides = [1, 1]} : vector<16x256xf32> to vector<1x256xf32>
    %c0_101 = arith.constant 0 : index
    %c3328 = arith.constant 3328 : index
    %185 = vector.load %arg10[%c0_101, %c3328] : memref<2x4096xf32, #tpu.memory_space<vmem>>, vector<1x256xf32>
    tpu.vector_store %arg10[%c0_101, %c3328], %184 {strides = array<i32>} : memref<2x4096xf32, #tpu.memory_space<vmem>>, vector<1x256xf32>,
    %186 = vector.extract_strided_slice %157 {offsets = [14, 0], sizes = [1, 256], strides = [1, 1]} : vector<16x256xf32> to vector<1x256xf32>
    %c0_102 = arith.constant 0 : index
    %c3584 = arith.constant 3584 : index
    %187 = vector.load %arg10[%c0_102, %c3584] : memref<2x4096xf32, #tpu.memory_space<vmem>>, vector<1x256xf32>
    tpu.vector_store %arg10[%c0_102, %c3584], %186 {strides = array<i32>} : memref<2x4096xf32, #tpu.memory_space<vmem>>, vector<1x256xf32>,
    %188 = vector.extract_strided_slice %157 {offsets = [15, 0], sizes = [1, 256], strides = [1, 1]} : vector<16x256xf32> to vector<1x256xf32>
    %c0_103 = arith.constant 0 : index
    %c3840 = arith.constant 3840 : index
    %189 = vector.load %arg10[%c0_103, %c3840] : memref<2x4096xf32, #tpu.memory_space<vmem>>, vector<1x256xf32>
    tpu.vector_store %arg10[%c0_103, %c3840], %188 {strides = array<i32>} : memref<2x4096xf32, #tpu.memory_space<vmem>>, vector<1x256xf32>,
    %c1_104 = arith.constant 1 : index
    %c0_105 = arith.constant 0 : index
    %c0_106 = arith.constant 0 : index
    %c0_107 = arith.constant 0 : index
    %190 = vector.load %arg0[%c1_104, %c0_105, %c0_106, %c0_107] : memref<2x16x16x1xf32, #tpu.memory_space<vmem>>, vector<1x16x16x1xf32>
    %191 = vector.shape_cast %190 : vector<1x16x16x1xf32> to vector<16x16x1xf32>
    %c1_108 = arith.constant 1 : index
    %c8_109 = arith.constant 8 : index
    %c0_110 = arith.constant 0 : index
    %192 = vector.load %arg8[%c1_108, %c8_109, %c0_110] : memref<18x32x1xf32, #tpu.memory_space<vmem>>, vector<16x16x1xf32>
    tpu.vector_store %arg8[%c1_108, %c8_109, %c0_110], %191 {strides = array<i32>} : memref<18x32x1xf32, #tpu.memory_space<vmem>>, vector<16x16x1xf32>,
    %cst_111 = arith.constant 0.000000e+00 : f32
    %193 = vector.broadcast %cst_111 : f32 to vector<256x8xf32>
    %c0_112 = arith.constant 0 : index
    %c7_113 = arith.constant 7 : index
    %c0_114 = arith.constant 0 : index
    %194 = vector.load %arg8[%c0_112, %c7_113, %c0_114] : memref<18x32x1xf32, #tpu.memory_space<vmem>>, vector<16x16x1xf32>
    %195 = vector.shape_cast %194 : vector<16x16x1xf32> to vector<256x1xf32>
    %196 = vector.extract_strided_slice %4 {offsets = [0, 0], sizes = [1, 8], strides = [1, 1]} : vector<9x8xf32> to vector<1x8xf32>
    %197 = vector.shape_cast %196 : vector<1x8xf32> to vector<8xf32>
    %198 = vector.shape_cast %197 : vector<8xf32> to vector<1x8xf32>
    %199 = vector.broadcast %195 : vector<256x1xf32> to vector<256x8xf32>
    %200 = vector.broadcast %198 : vector<1x8xf32> to vector<256x8xf32>
    %201 = arith.mulf %199, %200 : vector<256x8xf32>
    %202 = arith.addf %193, %201 : vector<256x8xf32>
    %c0_115 = arith.constant 0 : index
    %c8_116 = arith.constant 8 : index
    %c0_117 = arith.constant 0 : index
    %203 = vector.load %arg8[%c0_115, %c8_116, %c0_117] : memref<18x32x1xf32, #tpu.memory_space<vmem>>, vector<16x16x1xf32>
    %204 = vector.shape_cast %203 : vector<16x16x1xf32> to vector<256x1xf32>
    %205 = vector.extract_strided_slice %4 {offsets = [1, 0], sizes = [1, 8], strides = [1, 1]} : vector<9x8xf32> to vector<1x8xf32>
    %206 = vector.shape_cast %205 : vector<1x8xf32> to vector<8xf32>
    %207 = vector.shape_cast %206 : vector<8xf32> to vector<1x8xf32>
    %208 = vector.broadcast %204 : vector<256x1xf32> to vector<256x8xf32>
    %209 = vector.broadcast %207 : vector<1x8xf32> to vector<256x8xf32>
    %210 = arith.mulf %208, %209 : vector<256x8xf32>
    %211 = arith.addf %202, %210 : vector<256x8xf32>
    %c0_118 = arith.constant 0 : index
    %c9_119 = arith.constant 9 : index
    %c0_120 = arith.constant 0 : index
    %212 = vector.load %arg8[%c0_118, %c9_119, %c0_120] : memref<18x32x1xf32, #tpu.memory_space<vmem>>, vector<16x16x1xf32>
    %213 = vector.shape_cast %212 : vector<16x16x1xf32> to vector<256x1xf32>
    %214 = vector.extract_strided_slice %4 {offsets = [2, 0], sizes = [1, 8], strides = [1, 1]} : vector<9x8xf32> to vector<1x8xf32>
    %215 = vector.shape_cast %214 : vector<1x8xf32> to vector<8xf32>
    %216 = vector.shape_cast %215 : vector<8xf32> to vector<1x8xf32>
    %217 = vector.broadcast %213 : vector<256x1xf32> to vector<256x8xf32>
    %218 = vector.broadcast %216 : vector<1x8xf32> to vector<256x8xf32>
    %219 = arith.mulf %217, %218 : vector<256x8xf32>
    %220 = arith.addf %211, %219 : vector<256x8xf32>
    %c1_121 = arith.constant 1 : index
    %c7_122 = arith.constant 7 : index
    %c0_123 = arith.constant 0 : index
    %221 = vector.load %arg8[%c1_121, %c7_122, %c0_123] : memref<18x32x1xf32, #tpu.memory_space<vmem>>, vector<16x16x1xf32>
    %222 = vector.shape_cast %221 : vector<16x16x1xf32> to vector<256x1xf32>
    %223 = vector.extract_strided_slice %4 {offsets = [3, 0], sizes = [1, 8], strides = [1, 1]} : vector<9x8xf32> to vector<1x8xf32>
    %224 = vector.shape_cast %223 : vector<1x8xf32> to vector<8xf32>
    %225 = vector.shape_cast %224 : vector<8xf32> to vector<1x8xf32>
    %226 = vector.broadcast %222 : vector<256x1xf32> to vector<256x8xf32>
    %227 = vector.broadcast %225 : vector<1x8xf32> to vector<256x8xf32>
    %228 = arith.mulf %226, %227 : vector<256x8xf32>
    %229 = arith.addf %220, %228 : vector<256x8xf32>
    %c1_124 = arith.constant 1 : index
    %c8_125 = arith.constant 8 : index
    %c0_126 = arith.constant 0 : index
    %230 = vector.load %arg8[%c1_124, %c8_125, %c0_126] : memref<18x32x1xf32, #tpu.memory_space<vmem>>, vector<16x16x1xf32>
    %231 = vector.shape_cast %230 : vector<16x16x1xf32> to vector<256x1xf32>
    %232 = vector.extract_strided_slice %4 {offsets = [4, 0], sizes = [1, 8], strides = [1, 1]} : vector<9x8xf32> to vector<1x8xf32>
    %233 = vector.shape_cast %232 : vector<1x8xf32> to vector<8xf32>
    %234 = vector.shape_cast %233 : vector<8xf32> to vector<1x8xf32>
    %235 = vector.broadcast %231 : vector<256x1xf32> to vector<256x8xf32>
    %236 = vector.broadcast %234 : vector<1x8xf32> to vector<256x8xf32>
    %237 = arith.mulf %235, %236 : vector<256x8xf32>
    %238 = arith.addf %229, %237 : vector<256x8xf32>
    %c1_127 = arith.constant 1 : index
    %c9_128 = arith.constant 9 : index
    %c0_129 = arith.constant 0 : index
    %239 = vector.load %arg8[%c1_127, %c9_128, %c0_129] : memref<18x32x1xf32, #tpu.memory_space<vmem>>, vector<16x16x1xf32>
    %240 = vector.shape_cast %239 : vector<16x16x1xf32> to vector<256x1xf32>
    %241 = vector.extract_strided_slice %4 {offsets = [5, 0], sizes = [1, 8], strides = [1, 1]} : vector<9x8xf32> to vector<1x8xf32>
    %242 = vector.shape_cast %241 : vector<1x8xf32> to vector<8xf32>
    %243 = vector.shape_cast %242 : vector<8xf32> to vector<1x8xf32>
    %244 = vector.broadcast %240 : vector<256x1xf32> to vector<256x8xf32>
    %245 = vector.broadcast %243 : vector<1x8xf32> to vector<256x8xf32>
    %246 = arith.mulf %244, %245 : vector<256x8xf32>
    %247 = arith.addf %238, %246 : vector<256x8xf32>
    %c2_130 = arith.constant 2 : index
    %c7_131 = arith.constant 7 : index
    %c0_132 = arith.constant 0 : index
    %248 = vector.load %arg8[%c2_130, %c7_131, %c0_132] : memref<18x32x1xf32, #tpu.memory_space<vmem>>, vector<16x16x1xf32>
    %249 = vector.shape_cast %248 : vector<16x16x1xf32> to vector<256x1xf32>
    %250 = vector.extract_strided_slice %4 {offsets = [6, 0], sizes = [1, 8], strides = [1, 1]} : vector<9x8xf32> to vector<1x8xf32>
    %251 = vector.shape_cast %250 : vector<1x8xf32> to vector<8xf32>
    %252 = vector.shape_cast %251 : vector<8xf32> to vector<1x8xf32>
    %253 = vector.broadcast %249 : vector<256x1xf32> to vector<256x8xf32>
    %254 = vector.broadcast %252 : vector<1x8xf32> to vector<256x8xf32>
    %255 = arith.mulf %253, %254 : vector<256x8xf32>
    %256 = arith.addf %247, %255 : vector<256x8xf32>
    %c2_133 = arith.constant 2 : index
    %c8_134 = arith.constant 8 : index
    %c0_135 = arith.constant 0 : index
    %257 = vector.load %arg8[%c2_133, %c8_134, %c0_135] : memref<18x32x1xf32, #tpu.memory_space<vmem>>, vector<16x16x1xf32>
    %258 = vector.shape_cast %257 : vector<16x16x1xf32> to vector<256x1xf32>
    %259 = vector.extract_strided_slice %4 {offsets = [7, 0], sizes = [1, 8], strides = [1, 1]} : vector<9x8xf32> to vector<1x8xf32>
    %260 = vector.shape_cast %259 : vector<1x8xf32> to vector<8xf32>
    %261 = vector.shape_cast %260 : vector<8xf32> to vector<1x8xf32>
    %262 = vector.broadcast %258 : vector<256x1xf32> to vector<256x8xf32>
    %263 = vector.broadcast %261 : vector<1x8xf32> to vector<256x8xf32>
    %264 = arith.mulf %262, %263 : vector<256x8xf32>
    %265 = arith.addf %256, %264 : vector<256x8xf32>
    %c2_136 = arith.constant 2 : index
    %c9_137 = arith.constant 9 : index
    %c0_138 = arith.constant 0 : index
    %266 = vector.load %arg8[%c2_136, %c9_137, %c0_138] : memref<18x32x1xf32, #tpu.memory_space<vmem>>, vector<16x16x1xf32>
    %267 = vector.shape_cast %266 : vector<16x16x1xf32> to vector<256x1xf32>
    %268 = vector.extract_strided_slice %4 {offsets = [8, 0], sizes = [1, 8], strides = [1, 1]} : vector<9x8xf32> to vector<1x8xf32>
    %269 = vector.shape_cast %268 : vector<1x8xf32> to vector<8xf32>
    %270 = vector.shape_cast %269 : vector<8xf32> to vector<1x8xf32>
    %271 = vector.broadcast %267 : vector<256x1xf32> to vector<256x8xf32>
    %272 = vector.broadcast %270 : vector<1x8xf32> to vector<256x8xf32>
    %273 = arith.mulf %271, %272 : vector<256x8xf32>
    %274 = arith.addf %265, %273 : vector<256x8xf32>
    %275 = vector.broadcast %5 : vector<1x8xf32> to vector<256x8xf32>
    %276 = arith.addf %274, %275 : vector<256x8xf32>
    %cst_139 = arith.constant 0.000000e+00 : f32
    %277 = vector.broadcast %cst_139 : f32 to vector<256x8xf32>
    %278 = arith.maximumf %276, %277 : vector<256x8xf32>
    %279 = vector.shape_cast %278 : vector<256x8xf32> to vector<16x16x8xf32>
    %c1_140 = arith.constant 1 : index
    %c8_141 = arith.constant 8 : index
    %c0_142 = arith.constant 0 : index
    %280 = vector.load %arg9[%c1_140, %c8_141, %c0_142] : memref<18x32x8xf32, #tpu.memory_space<vmem>>, vector<16x16x8xf32>
    tpu.vector_store %arg9[%c1_140, %c8_141, %c0_142], %279 {strides = array<i32>} : memref<18x32x8xf32, #tpu.memory_space<vmem>>, vector<16x16x8xf32>,
    %cst_143 = arith.constant 0.000000e+00 : f32
    %281 = vector.broadcast %cst_143 : f32 to vector<16x256xf32>
    %c0_144 = arith.constant 0 : index
    %c7_145 = arith.constant 7 : index
    %c0_146 = arith.constant 0 : index
    %282 = vector.load %arg9[%c0_144, %c7_145, %c0_146] : memref<18x32x8xf32, #tpu.memory_space<vmem>>, vector<16x16x8xf32>
    %283 = vector.extract_strided_slice %6 {offsets = [0, 0, 0], sizes = [1, 16, 8], strides = [1, 1, 1]} : vector<9x16x8xf32> to vector<1x16x8xf32>
    %284 = vector.shape_cast %283 : vector<1x16x8xf32> to vector<16x8xf32>
    %285 = vector.shape_cast %282 : vector<16x16x8xf32> to vector<256x8xf32>
    %cst_147 = arith.constant dense<0.000000e+00> : vector<16x256xf32>
    %286 = tpu.matmul %284, %285, %cst_147 {dimension_numbers = #tpu.dot_dimension_numbers<[1], [1], [0], [0], [0, 0, 1, 0], [], []>} : vector<16x8xf32>, vector<256x8xf32>, vector<16x256xf32> -> vector<16x256xf32>
    %287 = arith.addf %281, %286 : vector<16x256xf32>
    %c0_148 = arith.constant 0 : index
    %c8_149 = arith.constant 8 : index
    %c0_150 = arith.constant 0 : index
    %288 = vector.load %arg9[%c0_148, %c8_149, %c0_150] : memref<18x32x8xf32, #tpu.memory_space<vmem>>, vector<16x16x8xf32>
    %289 = vector.extract_strided_slice %6 {offsets = [1, 0, 0], sizes = [1, 16, 8], strides = [1, 1, 1]} : vector<9x16x8xf32> to vector<1x16x8xf32>
    %290 = vector.shape_cast %289 : vector<1x16x8xf32> to vector<16x8xf32>
    %291 = vector.shape_cast %288 : vector<16x16x8xf32> to vector<256x8xf32>
    %cst_151 = arith.constant dense<0.000000e+00> : vector<16x256xf32>
    %292 = tpu.matmul %290, %291, %cst_151 {dimension_numbers = #tpu.dot_dimension_numbers<[1], [1], [0], [0], [0, 0, 1, 0], [], []>} : vector<16x8xf32>, vector<256x8xf32>, vector<16x256xf32> -> vector<16x256xf32>
    %293 = arith.addf %287, %292 : vector<16x256xf32>
    %c0_152 = arith.constant 0 : index
    %c9_153 = arith.constant 9 : index
    %c0_154 = arith.constant 0 : index
    %294 = vector.load %arg9[%c0_152, %c9_153, %c0_154] : memref<18x32x8xf32, #tpu.memory_space<vmem>>, vector<16x16x8xf32>
    %295 = vector.extract_strided_slice %6 {offsets = [2, 0, 0], sizes = [1, 16, 8], strides = [1, 1, 1]} : vector<9x16x8xf32> to vector<1x16x8xf32>
    %296 = vector.shape_cast %295 : vector<1x16x8xf32> to vector<16x8xf32>
    %297 = vector.shape_cast %294 : vector<16x16x8xf32> to vector<256x8xf32>
    %cst_155 = arith.constant dense<0.000000e+00> : vector<16x256xf32>
    %298 = tpu.matmul %296, %297, %cst_155 {dimension_numbers = #tpu.dot_dimension_numbers<[1], [1], [0], [0], [0, 0, 1, 0], [], []>} : vector<16x8xf32>, vector<256x8xf32>, vector<16x256xf32> -> vector<16x256xf32>
    %299 = arith.addf %293, %298 : vector<16x256xf32>
    %c1_156 = arith.constant 1 : index
    %c7_157 = arith.constant 7 : index
    %c0_158 = arith.constant 0 : index
    %300 = vector.load %arg9[%c1_156, %c7_157, %c0_158] : memref<18x32x8xf32, #tpu.memory_space<vmem>>, vector<16x16x8xf32>
    %301 = vector.extract_strided_slice %6 {offsets = [3, 0, 0], sizes = [1, 16, 8], strides = [1, 1, 1]} : vector<9x16x8xf32> to vector<1x16x8xf32>
    %302 = vector.shape_cast %301 : vector<1x16x8xf32> to vector<16x8xf32>
    %303 = vector.shape_cast %300 : vector<16x16x8xf32> to vector<256x8xf32>
    %cst_159 = arith.constant dense<0.000000e+00> : vector<16x256xf32>
    %304 = tpu.matmul %302, %303, %cst_159 {dimension_numbers = #tpu.dot_dimension_numbers<[1], [1], [0], [0], [0, 0, 1, 0], [], []>} : vector<16x8xf32>, vector<256x8xf32>, vector<16x256xf32> -> vector<16x256xf32>
    %305 = arith.addf %299, %304 : vector<16x256xf32>
    %c1_160 = arith.constant 1 : index
    %c8_161 = arith.constant 8 : index
    %c0_162 = arith.constant 0 : index
    %306 = vector.load %arg9[%c1_160, %c8_161, %c0_162] : memref<18x32x8xf32, #tpu.memory_space<vmem>>, vector<16x16x8xf32>
    %307 = vector.extract_strided_slice %6 {offsets = [4, 0, 0], sizes = [1, 16, 8], strides = [1, 1, 1]} : vector<9x16x8xf32> to vector<1x16x8xf32>
    %308 = vector.shape_cast %307 : vector<1x16x8xf32> to vector<16x8xf32>
    %309 = vector.shape_cast %306 : vector<16x16x8xf32> to vector<256x8xf32>
    %cst_163 = arith.constant dense<0.000000e+00> : vector<16x256xf32>
    %310 = tpu.matmul %308, %309, %cst_163 {dimension_numbers = #tpu.dot_dimension_numbers<[1], [1], [0], [0], [0, 0, 1, 0], [], []>} : vector<16x8xf32>, vector<256x8xf32>, vector<16x256xf32> -> vector<16x256xf32>
    %311 = arith.addf %305, %310 : vector<16x256xf32>
    %c1_164 = arith.constant 1 : index
    %c9_165 = arith.constant 9 : index
    %c0_166 = arith.constant 0 : index
    %312 = vector.load %arg9[%c1_164, %c9_165, %c0_166] : memref<18x32x8xf32, #tpu.memory_space<vmem>>, vector<16x16x8xf32>
    %313 = vector.extract_strided_slice %6 {offsets = [5, 0, 0], sizes = [1, 16, 8], strides = [1, 1, 1]} : vector<9x16x8xf32> to vector<1x16x8xf32>
    %314 = vector.shape_cast %313 : vector<1x16x8xf32> to vector<16x8xf32>
    %315 = vector.shape_cast %312 : vector<16x16x8xf32> to vector<256x8xf32>
    %cst_167 = arith.constant dense<0.000000e+00> : vector<16x256xf32>
    %316 = tpu.matmul %314, %315, %cst_167 {dimension_numbers = #tpu.dot_dimension_numbers<[1], [1], [0], [0], [0, 0, 1, 0], [], []>} : vector<16x8xf32>, vector<256x8xf32>, vector<16x256xf32> -> vector<16x256xf32>
    %317 = arith.addf %311, %316 : vector<16x256xf32>
    %c2_168 = arith.constant 2 : index
    %c7_169 = arith.constant 7 : index
    %c0_170 = arith.constant 0 : index
    %318 = vector.load %arg9[%c2_168, %c7_169, %c0_170] : memref<18x32x8xf32, #tpu.memory_space<vmem>>, vector<16x16x8xf32>
    %319 = vector.extract_strided_slice %6 {offsets = [6, 0, 0], sizes = [1, 16, 8], strides = [1, 1, 1]} : vector<9x16x8xf32> to vector<1x16x8xf32>
    %320 = vector.shape_cast %319 : vector<1x16x8xf32> to vector<16x8xf32>
    %321 = vector.shape_cast %318 : vector<16x16x8xf32> to vector<256x8xf32>
    %cst_171 = arith.constant dense<0.000000e+00> : vector<16x256xf32>
    %322 = tpu.matmul %320, %321, %cst_171 {dimension_numbers = #tpu.dot_dimension_numbers<[1], [1], [0], [0], [0, 0, 1, 0], [], []>} : vector<16x8xf32>, vector<256x8xf32>, vector<16x256xf32> -> vector<16x256xf32>
    %323 = arith.addf %317, %322 : vector<16x256xf32>
    %c2_172 = arith.constant 2 : index
    %c8_173 = arith.constant 8 : index
    %c0_174 = arith.constant 0 : index
    %324 = vector.load %arg9[%c2_172, %c8_173, %c0_174] : memref<18x32x8xf32, #tpu.memory_space<vmem>>, vector<16x16x8xf32>
    %325 = vector.extract_strided_slice %6 {offsets = [7, 0, 0], sizes = [1, 16, 8], strides = [1, 1, 1]} : vector<9x16x8xf32> to vector<1x16x8xf32>
    %326 = vector.shape_cast %325 : vector<1x16x8xf32> to vector<16x8xf32>
    %327 = vector.shape_cast %324 : vector<16x16x8xf32> to vector<256x8xf32>
    %cst_175 = arith.constant dense<0.000000e+00> : vector<16x256xf32>
    %328 = tpu.matmul %326, %327, %cst_175 {dimension_numbers = #tpu.dot_dimension_numbers<[1], [1], [0], [0], [0, 0, 1, 0], [], []>} : vector<16x8xf32>, vector<256x8xf32>, vector<16x256xf32> -> vector<16x256xf32>
    %329 = arith.addf %323, %328 : vector<16x256xf32>
    %c2_176 = arith.constant 2 : index
    %c9_177 = arith.constant 9 : index
    %c0_178 = arith.constant 0 : index
    %330 = vector.load %arg9[%c2_176, %c9_177, %c0_178] : memref<18x32x8xf32, #tpu.memory_space<vmem>>, vector<16x16x8xf32>
    %331 = vector.extract_strided_slice %6 {offsets = [8, 0, 0], sizes = [1, 16, 8], strides = [1, 1, 1]} : vector<9x16x8xf32> to vector<1x16x8xf32>
    %332 = vector.shape_cast %331 : vector<1x16x8xf32> to vector<16x8xf32>
    %333 = vector.shape_cast %330 : vector<16x16x8xf32> to vector<256x8xf32>
    %cst_179 = arith.constant dense<0.000000e+00> : vector<16x256xf32>
    %334 = tpu.matmul %332, %333, %cst_179 {dimension_numbers = #tpu.dot_dimension_numbers<[1], [1], [0], [0], [0, 0, 1, 0], [], []>} : vector<16x8xf32>, vector<256x8xf32>, vector<16x256xf32> -> vector<16x256xf32>
    %335 = arith.addf %329, %334 : vector<16x256xf32>
    %336 = vector.broadcast %7 : vector<16x1xf32> to vector<16x256xf32>
    %337 = arith.addf %335, %336 : vector<16x256xf32>
    %cst_180 = arith.constant 0.000000e+00 : f32
    %338 = vector.broadcast %cst_180 : f32 to vector<16x256xf32>
    %339 = arith.maximumf %337, %338 : vector<16x256xf32>
    %340 = vector.extract_strided_slice %339 {offsets = [0, 0], sizes = [1, 256], strides = [1, 1]} : vector<16x256xf32> to vector<1x256xf32>
    %c1_181 = arith.constant 1 : index
    %c0_182 = arith.constant 0 : index
    %341 = vector.load %arg10[%c1_181, %c0_182] : memref<2x4096xf32, #tpu.memory_space<vmem>>, vector<1x256xf32>
    tpu.vector_store %arg10[%c1_181, %c0_182], %340 {strides = array<i32>} : memref<2x4096xf32, #tpu.memory_space<vmem>>, vector<1x256xf32>,
    %342 = vector.extract_strided_slice %339 {offsets = [1, 0], sizes = [1, 256], strides = [1, 1]} : vector<16x256xf32> to vector<1x256xf32>
    %c1_183 = arith.constant 1 : index
    %c256_184 = arith.constant 256 : index
    %343 = vector.load %arg10[%c1_183, %c256_184] : memref<2x4096xf32, #tpu.memory_space<vmem>>, vector<1x256xf32>
    tpu.vector_store %arg10[%c1_183, %c256_184], %342 {strides = array<i32>} : memref<2x4096xf32, #tpu.memory_space<vmem>>, vector<1x256xf32>,
    %344 = vector.extract_strided_slice %339 {offsets = [2, 0], sizes = [1, 256], strides = [1, 1]} : vector<16x256xf32> to vector<1x256xf32>
    %c1_185 = arith.constant 1 : index
    %c512_186 = arith.constant 512 : index
    %345 = vector.load %arg10[%c1_185, %c512_186] : memref<2x4096xf32, #tpu.memory_space<vmem>>, vector<1x256xf32>
    tpu.vector_store %arg10[%c1_185, %c512_186], %344 {strides = array<i32>} : memref<2x4096xf32, #tpu.memory_space<vmem>>, vector<1x256xf32>,
    %346 = vector.extract_strided_slice %339 {offsets = [3, 0], sizes = [1, 256], strides = [1, 1]} : vector<16x256xf32> to vector<1x256xf32>
    %c1_187 = arith.constant 1 : index
    %c768_188 = arith.constant 768 : index
    %347 = vector.load %arg10[%c1_187, %c768_188] : memref<2x4096xf32, #tpu.memory_space<vmem>>, vector<1x256xf32>
    tpu.vector_store %arg10[%c1_187, %c768_188], %346 {strides = array<i32>} : memref<2x4096xf32, #tpu.memory_space<vmem>>, vector<1x256xf32>,
    %348 = vector.extract_strided_slice %339 {offsets = [4, 0], sizes = [1, 256], strides = [1, 1]} : vector<16x256xf32> to vector<1x256xf32>
    %c1_189 = arith.constant 1 : index
    %c1024_190 = arith.constant 1024 : index
    %349 = vector.load %arg10[%c1_189, %c1024_190] : memref<2x4096xf32, #tpu.memory_space<vmem>>, vector<1x256xf32>
    tpu.vector_store %arg10[%c1_189, %c1024_190], %348 {strides = array<i32>} : memref<2x4096xf32, #tpu.memory_space<vmem>>, vector<1x256xf32>,
    %350 = vector.extract_strided_slice %339 {offsets = [5, 0], sizes = [1, 256], strides = [1, 1]} : vector<16x256xf32> to vector<1x256xf32>
    %c1_191 = arith.constant 1 : index
    %c1280_192 = arith.constant 1280 : index
    %351 = vector.load %arg10[%c1_191, %c1280_192] : memref<2x4096xf32, #tpu.memory_space<vmem>>, vector<1x256xf32>
    tpu.vector_store %arg10[%c1_191, %c1280_192], %350 {strides = array<i32>} : memref<2x4096xf32, #tpu.memory_space<vmem>>, vector<1x256xf32>,
    %352 = vector.extract_strided_slice %339 {offsets = [6, 0], sizes = [1, 256], strides = [1, 1]} : vector<16x256xf32> to vector<1x256xf32>
    %c1_193 = arith.constant 1 : index
    %c1536_194 = arith.constant 1536 : index
    %353 = vector.load %arg10[%c1_193, %c1536_194] : memref<2x4096xf32, #tpu.memory_space<vmem>>, vector<1x256xf32>
    tpu.vector_store %arg10[%c1_193, %c1536_194], %352 {strides = array<i32>} : memref<2x4096xf32, #tpu.memory_space<vmem>>, vector<1x256xf32>,
    %354 = vector.extract_strided_slice %339 {offsets = [7, 0], sizes = [1, 256], strides = [1, 1]} : vector<16x256xf32> to vector<1x256xf32>
    %c1_195 = arith.constant 1 : index
    %c1792_196 = arith.constant 1792 : index
    %355 = vector.load %arg10[%c1_195, %c1792_196] : memref<2x4096xf32, #tpu.memory_space<vmem>>, vector<1x256xf32>
    tpu.vector_store %arg10[%c1_195, %c1792_196], %354 {strides = array<i32>} : memref<2x4096xf32, #tpu.memory_space<vmem>>, vector<1x256xf32>,
    %356 = vector.extract_strided_slice %339 {offsets = [8, 0], sizes = [1, 256], strides = [1, 1]} : vector<16x256xf32> to vector<1x256xf32>
    %c1_197 = arith.constant 1 : index
    %c2048_198 = arith.constant 2048 : index
    %357 = vector.load %arg10[%c1_197, %c2048_198] : memref<2x4096xf32, #tpu.memory_space<vmem>>, vector<1x256xf32>
    tpu.vector_store %arg10[%c1_197, %c2048_198], %356 {strides = array<i32>} : memref<2x4096xf32, #tpu.memory_space<vmem>>, vector<1x256xf32>,
    %358 = vector.extract_strided_slice %339 {offsets = [9, 0], sizes = [1, 256], strides = [1, 1]} : vector<16x256xf32> to vector<1x256xf32>
    %c1_199 = arith.constant 1 : index
    %c2304_200 = arith.constant 2304 : index
    %359 = vector.load %arg10[%c1_199, %c2304_200] : memref<2x4096xf32, #tpu.memory_space<vmem>>, vector<1x256xf32>
    tpu.vector_store %arg10[%c1_199, %c2304_200], %358 {strides = array<i32>} : memref<2x4096xf32, #tpu.memory_space<vmem>>, vector<1x256xf32>,
    %360 = vector.extract_strided_slice %339 {offsets = [10, 0], sizes = [1, 256], strides = [1, 1]} : vector<16x256xf32> to vector<1x256xf32>
    %c1_201 = arith.constant 1 : index
    %c2560_202 = arith.constant 2560 : index
    %361 = vector.load %arg10[%c1_201, %c2560_202] : memref<2x4096xf32, #tpu.memory_space<vmem>>, vector<1x256xf32>
    tpu.vector_store %arg10[%c1_201, %c2560_202], %360 {strides = array<i32>} : memref<2x4096xf32, #tpu.memory_space<vmem>>, vector<1x256xf32>,
    %362 = vector.extract_strided_slice %339 {offsets = [11, 0], sizes = [1, 256], strides = [1, 1]} : vector<16x256xf32> to vector<1x256xf32>
    %c1_203 = arith.constant 1 : index
    %c2816_204 = arith.constant 2816 : index
    %363 = vector.load %arg10[%c1_203, %c2816_204] : memref<2x4096xf32, #tpu.memory_space<vmem>>, vector<1x256xf32>
    tpu.vector_store %arg10[%c1_203, %c2816_204], %362 {strides = array<i32>} : memref<2x4096xf32, #tpu.memory_space<vmem>>, vector<1x256xf32>,
    %364 = vector.extract_strided_slice %339 {offsets = [12, 0], sizes = [1, 256], strides = [1, 1]} : vector<16x256xf32> to vector<1x256xf32>
    %c1_205 = arith.constant 1 : index
    %c3072_206 = arith.constant 3072 : index
    %365 = vector.load %arg10[%c1_205, %c3072_206] : memref<2x4096xf32, #tpu.memory_space<vmem>>, vector<1x256xf32>
    tpu.vector_store %arg10[%c1_205, %c3072_206], %364 {strides = array<i32>} : memref<2x4096xf32, #tpu.memory_space<vmem>>, vector<1x256xf32>,
    %366 = vector.extract_strided_slice %339 {offsets = [13, 0], sizes = [1, 256], strides = [1, 1]} : vector<16x256xf32> to vector<1x256xf32>
    %c1_207 = arith.constant 1 : index
    %c3328_208 = arith.constant 3328 : index
    %367 = vector.load %arg10[%c1_207, %c3328_208] : memref<2x4096xf32, #tpu.memory_space<vmem>>, vector<1x256xf32>
    tpu.vector_store %arg10[%c1_207, %c3328_208], %366 {strides = array<i32>} : memref<2x4096xf32, #tpu.memory_space<vmem>>, vector<1x256xf32>,
    %368 = vector.extract_strided_slice %339 {offsets = [14, 0], sizes = [1, 256], strides = [1, 1]} : vector<16x256xf32> to vector<1x256xf32>
    %c1_209 = arith.constant 1 : index
    %c3584_210 = arith.constant 3584 : index
    %369 = vector.load %arg10[%c1_209, %c3584_210] : memref<2x4096xf32, #tpu.memory_space<vmem>>, vector<1x256xf32>
    tpu.vector_store %arg10[%c1_209, %c3584_210], %368 {strides = array<i32>} : memref<2x4096xf32, #tpu.memory_space<vmem>>, vector<1x256xf32>,
    %370 = vector.extract_strided_slice %339 {offsets = [15, 0], sizes = [1, 256], strides = [1, 1]} : vector<16x256xf32> to vector<1x256xf32>
    %c1_211 = arith.constant 1 : index
    %c3840_212 = arith.constant 3840 : index
    %371 = vector.load %arg10[%c1_211, %c3840_212] : memref<2x4096xf32, #tpu.memory_space<vmem>>, vector<1x256xf32>
    tpu.vector_store %arg10[%c1_211, %c3840_212], %370 {strides = array<i32>} : memref<2x4096xf32, #tpu.memory_space<vmem>>, vector<1x256xf32>,
    %c0_213 = arith.constant 0 : index
    %c0_214 = arith.constant 0 : index
    %372 = vector.load %arg10[%c0_213, %c0_214] : memref<2x4096xf32, #tpu.memory_space<vmem>>, vector<2x4096xf32>
    %c0_215 = arith.constant 0 : index
    %c0_216 = arith.constant 0 : index
    %373 = vector.load %arg5[%c0_215, %c0_216] : memref<4096x32xf32, #tpu.memory_space<vmem>>, vector<4096x32xf32>
    %cst_217 = arith.constant dense<0.000000e+00> : vector<2x32xf32>
    %374 = tpu.matmul %372, %373, %cst_217 {dimension_numbers = #tpu.dot_dimension_numbers<[1], [0], [0], [1], [0, 0, 1, 1], [], []>} : vector<2x4096xf32>, vector<4096x32xf32>, vector<2x32xf32> -> vector<2x32xf32>
    %c0_218 = arith.constant 0 : index
    %c0_219 = arith.constant 0 : index
    %375 = vector.load %arg6[%c0_218, %c0_219] : memref<1x32xf32, #tpu.memory_space<vmem>>, vector<1x32xf32>
    %376 = vector.broadcast %375 : vector<1x32xf32> to vector<2x32xf32>
    %377 = arith.addf %374, %376 : vector<2x32xf32>
    %c0_220 = arith.constant 0 : index
    %c0_221 = arith.constant 0 : index
    %378 = vector.load %arg7[%c0_220, %c0_221] : memref<2x32xf32, #tpu.memory_space<vmem>>, vector<2x32xf32>
    tpu.vector_store %arg7[%c0_220, %c0_221], %377 {strides = array<i32>} : memref<2x32xf32, #tpu.memory_space<vmem>>, vector<2x32xf32>,
    return
  }
}

</mosaic_0001>

<llo_original>
// kernel: tpu_custom_call.1
$region0: #{tpu_custom_call.1}
  #allocation0 [shape = 'u32[]', space=smem, size = 0x4, offset = 0x4, fixed_abs, tag = 'smem constant byte address 0x4 - core index']
  #allocation1 [shape = 'u32[144,128]{1,0:T(1,128)}', space=vmem, size = 0x12000, scoped, tag = 'internal scratch']
  #allocation2 [shape = 'f32[18,32,1]{2,1,0:T(8,128)}', space=vmem, size = 0x48000, scoped, tag = 'scratch operand']
  #allocation3 [shape = 'f32[18,32,8]{2,1,0:T(8,128)}', space=vmem, size = 0x48000, scoped, tag = 'scratch operand']
  #allocation4 [shape = 'f32[2,4096]{1,0:T(2,128)}', space=vmem, size = 0x8000, scoped, tag = 'scratch operand']
  %s0 = inlined_call_operand.vmem [shape: f32[2,16,16,1], index: 0, kind: input, shape index: {}]
  %s1 = inlined_call_operand.vmem [shape: f32[9,8], index: 1, kind: input, shape index: {}]
  %s2 = inlined_call_operand.vmem [shape: f32[1,8], index: 2, kind: input, shape index: {}]
  %s3 = inlined_call_operand.vmem [shape: f32[9,16,8], index: 3, kind: input, shape index: {}]
  %s4 = inlined_call_operand.vmem [shape: f32[16,1], index: 4, kind: input, shape index: {}]
  %s5 = inlined_call_operand.vmem [shape: f32[4096,32], index: 5, kind: input, shape index: {}]
  %s6 = inlined_call_operand.vmem [shape: f32[1,32], index: 6, kind: input, shape index: {}]
  %s7 = inlined_call_operand.hbm [shape: f32[2,32], index: 7, kind: output, shape index: {}]
  %s8 = sld [smem:[#allocation0]]
  $region38: #{tpu_custom_call.1} parent=0
    _
  %s10 = ssub.s32 1, %s8
  %s11 = scalar_select 0, %s10, %s8
  $region1: #{tpu_custom_call.1} parent=0
    #allocation5 [shape = 'u8[1024]{0}', space=vmem, size = 0x400, scoped, tag = 'output window, operand 0, single buffered']
    #allocation6 [shape = 's32[1]{0}', space=sflag, size = 0x4, scoped, tag = 'scoped memory for tpu_custom_call.1']
    %12 = vsyncpa [#allocation6], 0
    // Predicated region
    $region2: #{tpu_custom_call.1} parent=1 // pred_check
      _
    $region3: #{tpu_custom_call.1} parent=1 // pred_check_branch
      %14 = sbr.rel (0) target = $region5
    $region4: #{tpu_custom_call.1} parent=1 // pred_region
      _
    $region5: #{tpu_custom_call.1} parent=1 // pred_fallthru
      _
    // Predicated region
    $region6: #{tpu_custom_call.1} parent=1 // pred_check
      _
    $region7: #{tpu_custom_call.1} parent=1 // pred_check_branch
      %16 = sbr.rel (0) target = $region9
    $region8: #{tpu_custom_call.1} parent=1 // pred_region
      _
    $region9: #{tpu_custom_call.1} parent=1 // pred_fallthru
      _
    // Predicated region
    $region10: #{tpu_custom_call.1} parent=1 // pred_check
      _
    $region11: #{tpu_custom_call.1} parent=1 // pred_check_branch
      %18 = sbr.rel (0) target = $region13
    $region12: #{tpu_custom_call.1} parent=1 // pred_region
      _
    $region13: #{tpu_custom_call.1} parent=1 // pred_fallthru
      _
    // Predicated region
    $region14: #{tpu_custom_call.1} parent=1 // pred_check
      _
    $region15: #{tpu_custom_call.1} parent=1 // pred_check_branch
      %20 = sbr.rel (0) target = $region17
    $region16: #{tpu_custom_call.1} parent=1 // pred_region
      _
    $region17: #{tpu_custom_call.1} parent=1 // pred_fallthru
      _
    // Predicated region
    $region18: #{tpu_custom_call.1} parent=1 // pred_check
      _
    $region19: #{tpu_custom_call.1} parent=1 // pred_check_branch
      %22 = sbr.rel (0) target = $region21
    $region20: #{tpu_custom_call.1} parent=1 // pred_region
      _
    $region21: #{tpu_custom_call.1} parent=1 // pred_fallthru
      _
    // Predicated region
    $region22: #{tpu_custom_call.1} parent=1 // pred_check
      _
    $region23: #{tpu_custom_call.1} parent=1 // pred_check_branch
      %24 = sbr.rel (0) target = $region25
    $region24: #{tpu_custom_call.1} parent=1 // pred_region
      _
    $region25: #{tpu_custom_call.1} parent=1 // pred_fallthru
      _
    // Predicated region
    $region26: #{tpu_custom_call.1} parent=1 // pred_check
      _
    $region27: #{tpu_custom_call.1} parent=1 // pred_check_branch
      %26 = sbr.rel (0) target = $region29
    $region28: #{tpu_custom_call.1} parent=1 // pred_region
      _
    $region29: #{tpu_custom_call.1} parent=1 // pred_fallthru
      _
    %vm27 = vcmask 7168
    %28 = vst.msk [vmem:[#allocation2] sm:$0xff] %vm27, 0.0
    %29 = vst.msk [vmem:[#allocation2 + $0x8] sm:$0xff] %vm27, 0.0
    %30 = vst.msk [vmem:[#allocation2 + $0x10] sm:$0xff] %vm27, 0.0
    %31 = vst.msk [vmem:[#allocation2 + $0x18] sm:$0xff] %vm27, 0.0
    %32 = vst.msk [vmem:[#allocation2 + $0x20] sm:$0xff] %vm27, 0.0
    %33 = vst.msk [vmem:[#allocation2 + $0x28] sm:$0xff] %vm27, 0.0
    %34 = vst.msk [vmem:[#allocation2 + $0x30] sm:$0xff] %vm27, 0.0
    %35 = vst.msk [vmem:[#allocation2 + $0x38] sm:$0xff] %vm27, 0.0
    %36 = vst.msk [vmem:[#allocation2 + $0x40] sm:$0xff] %vm27, 0.0
    %37 = vst.msk [vmem:[#allocation2 + $0x48] sm:$0xff] %vm27, 0.0
    %38 = vst.msk [vmem:[#allocation2 + $0x50] sm:$0xff] %vm27, 0.0
    %39 = vst.msk [vmem:[#allocation2 + $0x58] sm:$0xff] %vm27, 0.0
    %40 = vst.msk [vmem:[#allocation2 + $0x60] sm:$0xff] %vm27, 0.0
    %41 = vst.msk [vmem:[#allocation2 + $0x68] sm:$0xff] %vm27, 0.0
    %42 = vst.msk [vmem:[#allocation2 + $0x70] sm:$0xff] %vm27, 0.0
    %43 = vst.msk [vmem:[#allocation2 + $0x78] sm:$0xff] %vm27, 0.0
    %44 = vst.msk [vmem:[#allocation2 + $0x80] sm:$0xff] %vm27, 0.0
    %45 = vst.msk [vmem:[#allocation2 + $0x88] sm:$0xff] %vm27, 0.0
    %46 = vst.msk [vmem:[#allocation2 + $0x90] sm:$0xff] %vm27, 0.0
    %47 = vst.msk [vmem:[#allocation2 + $0x98] sm:$0xff] %vm27, 0.0
    %48 = vst.msk [vmem:[#allocation2 + $0xa0] sm:$0xff] %vm27, 0.0
    %49 = vst.msk [vmem:[#allocation2 + $0xa8] sm:$0xff] %vm27, 0.0
    %50 = vst.msk [vmem:[#allocation2 + $0xb0] sm:$0xff] %vm27, 0.0
    %51 = vst.msk [vmem:[#allocation2 + $0xb8] sm:$0xff] %vm27, 0.0
    %52 = vst.msk [vmem:[#allocation2 + $0xc0] sm:$0xff] %vm27, 0.0
    %53 = vst.msk [vmem:[#allocation2 + $0xc8] sm:$0xff] %vm27, 0.0
    %54 = vst.msk [vmem:[#allocation2 + $0xd0] sm:$0xff] %vm27, 0.0
    %55 = vst.msk [vmem:[#allocation2 + $0xd8] sm:$0xff] %vm27, 0.0
    %56 = vst.msk [vmem:[#allocation2 + $0xe0] sm:$0xff] %vm27, 0.0
    %57 = vst.msk [vmem:[#allocation2 + $0xe8] sm:$0xff] %vm27, 0.0
    %58 = vst.msk [vmem:[#allocation2 + $0xf0] sm:$0xff] %vm27, 0.0
    %59 = vst.msk [vmem:[#allocation2 + $0xf8] sm:$0xff] %vm27, 0.0
    %60 = vst.msk [vmem:[#allocation2 + $0x100] sm:$0xff] %vm27, 0.0
    %61 = vst.msk [vmem:[#allocation2 + $0x108] sm:$0xff] %vm27, 0.0
    %62 = vst.msk [vmem:[#allocation2 + $0x110] sm:$0xff] %vm27, 0.0
    %63 = vst.msk [vmem:[#allocation2 + $0x118] sm:$0xff] %vm27, 0.0
    %64 = vst.msk [vmem:[#allocation2 + $0x120] sm:$0xff] %vm27, 0.0
    %65 = vst.msk [vmem:[#allocation2 + $0x128] sm:$0xff] %vm27, 0.0
    %66 = vst.msk [vmem:[#allocation2 + $0x130] sm:$0xff] %vm27, 0.0
    %67 = vst.msk [vmem:[#allocation2 + $0x138] sm:$0xff] %vm27, 0.0
    %68 = vst.msk [vmem:[#allocation2 + $0x140] sm:$0xff] %vm27, 0.0
    %69 = vst.msk [vmem:[#allocation2 + $0x148] sm:$0xff] %vm27, 0.0
    %70 = vst.msk [vmem:[#allocation2 + $0x150] sm:$0xff] %vm27, 0.0
    %71 = vst.msk [vmem:[#allocation2 + $0x158] sm:$0xff] %vm27, 0.0
    %72 = vst.msk [vmem:[#allocation2 + $0x160] sm:$0xff] %vm27, 0.0
    %73 = vst.msk [vmem:[#allocation2 + $0x168] sm:$0xff] %vm27, 0.0
    %74 = vst.msk [vmem:[#allocation2 + $0x170] sm:$0xff] %vm27, 0.0
    %75 = vst.msk [vmem:[#allocation2 + $0x178] sm:$0xff] %vm27, 0.0
    %76 = vst.msk [vmem:[#allocation2 + $0x180] sm:$0xff] %vm27, 0.0
    %77 = vst.msk [vmem:[#allocation2 + $0x188] sm:$0xff] %vm27, 0.0
    %78 = vst.msk [vmem:[#allocation2 + $0x190] sm:$0xff] %vm27, 0.0
    %79 = vst.msk [vmem:[#allocation2 + $0x198] sm:$0xff] %vm27, 0.0
    %80 = vst.msk [vmem:[#allocation2 + $0x1a0] sm:$0xff] %vm27, 0.0
    %81 = vst.msk [vmem:[#allocation2 + $0x1a8] sm:$0xff] %vm27, 0.0
    %82 = vst.msk [vmem:[#allocation2 + $0x1b0] sm:$0xff] %vm27, 0.0
    %83 = vst.msk [vmem:[#allocation2 + $0x1b8] sm:$0xff] %vm27, 0.0
    %84 = vst.msk [vmem:[#allocation2 + $0x1c0] sm:$0xff] %vm27, 0.0
    %85 = vst.msk [vmem:[#allocation2 + $0x1c8] sm:$0xff] %vm27, 0.0
    %86 = vst.msk [vmem:[#allocation2 + $0x1d0] sm:$0xff] %vm27, 0.0
    %87 = vst.msk [vmem:[#allocation2 + $0x1d8] sm:$0xff] %vm27, 0.0
    %88 = vst.msk [vmem:[#allocation2 + $0x1e0] sm:$0xff] %vm27, 0.0
    %89 = vst.msk [vmem:[#allocation2 + $0x1e8] sm:$0xff] %vm27, 0.0
    %90 = vst.msk [vmem:[#allocation2 + $0x1f0] sm:$0xff] %vm27, 0.0
    %91 = vst.msk [vmem:[#allocation2 + $0x1f8] sm:$0xff] %vm27, 0.0
    %92 = vst.msk [vmem:[#allocation2 + $0x200] sm:$0xff] %vm27, 0.0
    %93 = vst.msk [vmem:[#allocation2 + $0x208] sm:$0xff] %vm27, 0.0
    %94 = vst.msk [vmem:[#allocation2 + $0x210] sm:$0xff] %vm27, 0.0
    %95 = vst.msk [vmem:[#allocation2 + $0x218] sm:$0xff] %vm27, 0.0
    %96 = vst.msk [vmem:[#allocation2 + $0x220] sm:$0xff] %vm27, 0.0
    %97 = vst.msk [vmem:[#allocation2 + $0x228] sm:$0xff] %vm27, 0.0
    %98 = vst.msk [vmem:[#allocation2 + $0x230] sm:$0xff] %vm27, 0.0
    %99 = vst.msk [vmem:[#allocation2 + $0x238] sm:$0xff] %vm27, 0.0
    %vm100 = vcmask 64512
    %101 = vst.msk [vmem:[#allocation3] sm:$0xff] %vm100, 0.0
    %102 = vst.msk [vmem:[#allocation3 + $0x8] sm:$0xff] %vm100, 0.0
    %103 = vst.msk [vmem:[#allocation3 + $0x10] sm:$0xff] %vm100, 0.0
    %104 = vst.msk [vmem:[#allocation3 + $0x18] sm:$0xff] %vm100, 0.0
    %105 = vst.msk [vmem:[#allocation3 + $0x20] sm:$0xff] %vm100, 0.0
    %106 = vst.msk [vmem:[#allocation3 + $0x28] sm:$0xff] %vm100, 0.0
    %107 = vst.msk [vmem:[#allocation3 + $0x30] sm:$0xff] %vm100, 0.0
    %108 = vst.msk [vmem:[#allocation3 + $0x38] sm:$0xff] %vm100, 0.0
    %109 = vst.msk [vmem:[#allocation3 + $0x40] sm:$0xff] %vm100, 0.0
    %110 = vst.msk [vmem:[#allocation3 + $0x48] sm:$0xff] %vm100, 0.0
    %111 = vst.msk [vmem:[#allocation3 + $0x50] sm:$0xff] %vm100, 0.0
    %112 = vst.msk [vmem:[#allocation3 + $0x58] sm:$0xff] %vm100, 0.0
    %113 = vst.msk [vmem:[#allocation3 + $0x60] sm:$0xff] %vm100, 0.0
    %114 = vst.msk [vmem:[#allocation3 + $0x68] sm:$0xff] %vm100, 0.0
    %115 = vst.msk [vmem:[#allocation3 + $0x70] sm:$0xff] %vm100, 0.0
    %116 = vst.msk [vmem:[#allocation3 + $0x78] sm:$0xff] %vm100, 0.0
    %117 = vst.msk [vmem:[#allocation3 + $0x80] sm:$0xff] %vm100, 0.0
    %118 = vst.msk [vmem:[#allocation3 + $0x88] sm:$0xff] %vm100, 0.0
    %119 = vst.msk [vmem:[#allocation3 + $0x90] sm:$0xff] %vm100, 0.0
    %120 = vst.msk [vmem:[#allocation3 + $0x98] sm:$0xff] %vm100, 0.0
    %121 = vst.msk [vmem:[#allocation3 + $0xa0] sm:$0xff] %vm100, 0.0
    %122 = vst.msk [vmem:[#allocation3 + $0xa8] sm:$0xff] %vm100, 0.0
    %123 = vst.msk [vmem:[#allocation3 + $0xb0] sm:$0xff] %vm100, 0.0
    %124 = vst.msk [vmem:[#allocation3 + $0xb8] sm:$0xff] %vm100, 0.0
    %125 = vst.msk [vmem:[#allocation3 + $0xc0] sm:$0xff] %vm100, 0.0
    %126 = vst.msk [vmem:[#allocation3 + $0xc8] sm:$0xff] %vm100, 0.0
    %127 = vst.msk [vmem:[#allocation3 + $0xd0] sm:$0xff] %vm100, 0.0
    %128 = vst.msk [vmem:[#allocation3 + $0xd8] sm:$0xff] %vm100, 0.0
    %129 = vst.msk [vmem:[#allocation3 + $0xe0] sm:$0xff] %vm100, 0.0
    %130 = vst.msk [vmem:[#allocation3 + $0xe8] sm:$0xff] %vm100, 0.0
    %131 = vst.msk [vmem:[#allocation3 + $0xf0] sm:$0xff] %vm100, 0.0
    %132 = vst.msk [vmem:[#allocation3 + $0xf8] sm:$0xff] %vm100, 0.0
    %133 = vst.msk [vmem:[#allocation3 + $0x100] sm:$0xff] %vm100, 0.0
    %134 = vst.msk [vmem:[#allocation3 + $0x108] sm:$0xff] %vm100, 0.0
    %135 = vst.msk [vmem:[#allocation3 + $0x110] sm:$0xff] %vm100, 0.0
    %136 = vst.msk [vmem:[#allocation3 + $0x118] sm:$0xff] %vm100, 0.0
    %137 = vst.msk [vmem:[#allocation3 + $0x120] sm:$0xff] %vm100, 0.0
    %138 = vst.msk [vmem:[#allocation3 + $0x128] sm:$0xff] %vm100, 0.0
    %139 = vst.msk [vmem:[#allocation3 + $0x130] sm:$0xff] %vm100, 0.0
    %140 = vst.msk [vmem:[#allocation3 + $0x138] sm:$0xff] %vm100, 0.0
    %141 = vst.msk [vmem:[#allocation3 + $0x140] sm:$0xff] %vm100, 0.0
    %142 = vst.msk [vmem:[#allocation3 + $0x148] sm:$0xff] %vm100, 0.0
    %143 = vst.msk [vmem:[#allocation3 + $0x150] sm:$0xff] %vm100, 0.0
    %144 = vst.msk [vmem:[#allocation3 + $0x158] sm:$0xff] %vm100, 0.0
    %145 = vst.msk [vmem:[#allocation3 + $0x160] sm:$0xff] %vm100, 0.0
    %146 = vst.msk [vmem:[#allocation3 + $0x168] sm:$0xff] %vm100, 0.0
    %147 = vst.msk [vmem:[#allocation3 + $0x170] sm:$0xff] %vm100, 0.0
    %148 = vst.msk [vmem:[#allocation3 + $0x178] sm:$0xff] %vm100, 0.0
    %149 = vst.msk [vmem:[#allocation3 + $0x180] sm:$0xff] %vm100, 0.0
    %150 = vst.msk [vmem:[#allocation3 + $0x188] sm:$0xff] %vm100, 0.0
    %151 = vst.msk [vmem:[#allocation3 + $0x190] sm:$0xff] %vm100, 0.0
    %152 = vst.msk [vmem:[#allocation3 + $0x198] sm:$0xff] %vm100, 0.0
    %153 = vst.msk [vmem:[#allocation3 + $0x1a0] sm:$0xff] %vm100, 0.0
    %154 = vst.msk [vmem:[#allocation3 + $0x1a8] sm:$0xff] %vm100, 0.0
    %155 = vst.msk [vmem:[#allocation3 + $0x1b0] sm:$0xff] %vm100, 0.0
    %156 = vst.msk [vmem:[#allocation3 + $0x1b8] sm:$0xff] %vm100, 0.0
    %157 = vst.msk [vmem:[#allocation3 + $0x1c0] sm:$0xff] %vm100, 0.0
    %158 = vst.msk [vmem:[#allocation3 + $0x1c8] sm:$0xff] %vm100, 0.0
    %159 = vst.msk [vmem:[#allocation3 + $0x1d0] sm:$0xff] %vm100, 0.0
    %160 = vst.msk [vmem:[#allocation3 + $0x1d8] sm:$0xff] %vm100, 0.0
    %161 = vst.msk [vmem:[#allocation3 + $0x1e0] sm:$0xff] %vm100, 0.0
    %162 = vst.msk [vmem:[#allocation3 + $0x1e8] sm:$0xff] %vm100, 0.0
    %163 = vst.msk [vmem:[#allocation3 + $0x1f0] sm:$0xff] %vm100, 0.0
    %164 = vst.msk [vmem:[#allocation3 + $0x1f8] sm:$0xff] %vm100, 0.0
    %165 = vst.msk [vmem:[#allocation3 + $0x200] sm:$0xff] %vm100, 0.0
    %166 = vst.msk [vmem:[#allocation3 + $0x208] sm:$0xff] %vm100, 0.0
    %167 = vst.msk [vmem:[#allocation3 + $0x210] sm:$0xff] %vm100, 0.0
    %168 = vst.msk [vmem:[#allocation3 + $0x218] sm:$0xff] %vm100, 0.0
    %169 = vst.msk [vmem:[#allocation3 + $0x220] sm:$0xff] %vm100, 0.0
    %170 = vst.msk [vmem:[#allocation3 + $0x228] sm:$0xff] %vm100, 0.0
    %171 = vst.msk [vmem:[#allocation3 + $0x230] sm:$0xff] %vm100, 0.0
    %172 = vst.msk [vmem:[#allocation3 + $0x238] sm:$0xff] %vm100, 0.0
    %v173 = vld [vmem:[%s1] sm:$0xff]
    %v174 = vld [vmem:[%s1 + $0x8] sm:$0x1]
    %v175 = vld [vmem:[%s2] sm:$0x1]
    %v176 = vld [vmem:[%s3] sm:$0xff]
    %v177 = vld [vmem:[%s3 + $0x8] sm:$0xff]
    %v178 = vld [vmem:[%s3 + $0x10] sm:$0xff]
    %v179 = vld [vmem:[%s3 + $0x18] sm:$0xff]
    %v180 = vld [vmem:[%s3 + $0x20] sm:$0xff]
    %v181 = vld [vmem:[%s3 + $0x28] sm:$0xff]
    %v182 = vld [vmem:[%s3 + $0x30] sm:$0xff]
    %v183 = vld [vmem:[%s3 + $0x38] sm:$0xff]
    %v184 = vld [vmem:[%s3 + $0x40] sm:$0xff]
    %v185 = vld [vmem:[%s3 + $0x48] sm:$0xff]
    %v186 = vld [vmem:[%s3 + $0x50] sm:$0xff]
    %v187 = vld [vmem:[%s3 + $0x58] sm:$0xff]
    %v188 = vld [vmem:[%s3 + $0x60] sm:$0xff]
    %v189 = vld [vmem:[%s3 + $0x68] sm:$0xff]
    %v190 = vld [vmem:[%s3 + $0x70] sm:$0xff]
    %v191 = vld [vmem:[%s3 + $0x78] sm:$0xff]
    %v192 = vld [vmem:[%s3 + $0x80] sm:$0xff]
    %v193 = vld [vmem:[%s3 + $0x88] sm:$0xff]
    %v194 = vld [vmem:[%s4] sm:$0xff]
    %v195 = vld [vmem:[%s4 + $0x8] sm:$0xff]
    %v196 = vld [vmem:[%s0] sm:$0xff]
    %v197 = vld [vmem:[%s0 + $0x8] sm:$0xff]
    %v198 = vld [vmem:[%s0 + $0x10] sm:$0xff]
    %v199 = vld [vmem:[%s0 + $0x18] sm:$0xff]
    %v200 = vld [vmem:[%s0 + $0x20] sm:$0xff]
    %v201 = vld [vmem:[%s0 + $0x28] sm:$0xff]
    %v202 = vld [vmem:[%s0 + $0x30] sm:$0xff]
    %v203 = vld [vmem:[%s0 + $0x38] sm:$0xff]
    %v204 = vld [vmem:[%s0 + $0x40] sm:$0xff]
    %v205 = vld [vmem:[%s0 + $0x48] sm:$0xff]
    %v206 = vld [vmem:[%s0 + $0x50] sm:$0xff]
    %v207 = vld [vmem:[%s0 + $0x58] sm:$0xff]
    %v208 = vld [vmem:[%s0 + $0x60] sm:$0xff]
    %v209 = vld [vmem:[%s0 + $0x68] sm:$0xff]
    %v210 = vld [vmem:[%s0 + $0x70] sm:$0xff]
    %v211 = vld [vmem:[%s0 + $0x78] sm:$0xff]
    %v212 = vld [vmem:[%s0 + $0x80] sm:$0xff]
    %v213 = vld [vmem:[%s0 + $0x88] sm:$0xff]
    %v214 = vld [vmem:[%s0 + $0x90] sm:$0xff]
    %v215 = vld [vmem:[%s0 + $0x98] sm:$0xff]
    %v216 = vld [vmem:[%s0 + $0xa0] sm:$0xff]
    %v217 = vld [vmem:[%s0 + $0xa8] sm:$0xff]
    %v218 = vld [vmem:[%s0 + $0xb0] sm:$0xff]
    %v219 = vld [vmem:[%s0 + $0xb8] sm:$0xff]
    %v220 = vld [vmem:[%s0 + $0xc0] sm:$0xff]
    %v221 = vld [vmem:[%s0 + $0xc8] sm:$0xff]
    %v222 = vld [vmem:[%s0 + $0xd0] sm:$0xff]
    %v223 = vld [vmem:[%s0 + $0xd8] sm:$0xff]
    %v224 = vld [vmem:[%s0 + $0xe0] sm:$0xff]
    %v225 = vld [vmem:[%s0 + $0xe8] sm:$0xff]
    %v226 = vld [vmem:[%s0 + $0xf0] sm:$0xff]
    %v227 = vld [vmem:[%s0 + $0xf8] sm:$0xff]
    %s228 = scalar_lea.vmem [#allocation2], 32
    %229 = vst.msk [vmem:[%s228 + $0x8] sm:$0xff] %vm27, %v196
    %230 = vst.msk [vmem:[%s228 + $0x10] sm:$0xff] %vm27, %v197
    %231 = vst.msk [vmem:[%s228 + $0x28] sm:$0xff] %vm27, %v198
    %232 = vst.msk [vmem:[%s228 + $0x30] sm:$0xff] %vm27, %v199
    %233 = vst.msk [vmem:[%s228 + $0x48] sm:$0xff] %vm27, %v200
    %234 = vst.msk [vmem:[%s228 + $0x50] sm:$0xff] %vm27, %v201
    %235 = vst.msk [vmem:[%s228 + $0x68] sm:$0xff] %vm27, %v202
    %236 = vst.msk [vmem:[%s228 + $0x70] sm:$0xff] %vm27, %v203
    %237 = vst.msk [vmem:[%s228 + $0x88] sm:$0xff] %vm27, %v204
    %238 = vst.msk [vmem:[%s228 + $0x90] sm:$0xff] %vm27, %v205
    %239 = vst.msk [vmem:[%s228 + $0xa8] sm:$0xff] %vm27, %v206
    %240 = vst.msk [vmem:[%s228 + $0xb0] sm:$0xff] %vm27, %v207
    %241 = vst.msk [vmem:[%s228 + $0xc8] sm:$0xff] %vm27, %v208
    %242 = vst.msk [vmem:[%s228 + $0xd0] sm:$0xff] %vm27, %v209
    %243 = vst.msk [vmem:[%s228 + $0xe8] sm:$0xff] %vm27, %v210
    %244 = vst.msk [vmem:[%s228 + $0xf0] sm:$0xff] %vm27, %v211
    %245 = vst.msk [vmem:[%s228 + $0x108] sm:$0xff] %vm27, %v212
    %246 = vst.msk [vmem:[%s228 + $0x110] sm:$0xff] %vm27, %v213
    %247 = vst.msk [vmem:[%s228 + $0x128] sm:$0xff] %vm27, %v214
    %248 = vst.msk [vmem:[%s228 + $0x130] sm:$0xff] %vm27, %v215
    %249 = vst.msk [vmem:[%s228 + $0x148] sm:$0xff] %vm27, %v216
    %250 = vst.msk [vmem:[%s228 + $0x150] sm:$0xff] %vm27, %v217
    %251 = vst.msk [vmem:[%s228 + $0x168] sm:$0xff] %vm27, %v218
    %252 = vst.msk [vmem:[%s228 + $0x170] sm:$0xff] %vm27, %v219
    %253 = vst.msk [vmem:[%s228 + $0x188] sm:$0xff] %vm27, %v220
    %254 = vst.msk [vmem:[%s228 + $0x190] sm:$0xff] %vm27, %v221
    %255 = vst.msk [vmem:[%s228 + $0x1a8] sm:$0xff] %vm27, %v222
    %256 = vst.msk [vmem:[%s228 + $0x1b0] sm:$0xff] %vm27, %v223
    %257 = vst.msk [vmem:[%s228 + $0x1c8] sm:$0xff] %vm27, %v224
    %258 = vst.msk [vmem:[%s228 + $0x1d0] sm:$0xff] %vm27, %v225
    %259 = vst.msk [vmem:[%s228 + $0x1e8] sm:$0xff] %vm27, %v226
    %260 = vst.msk [vmem:[%s228 + $0x1f0] sm:$0xff] %vm27, %v227
    %v261 = vld [vmem:[#allocation2 + $0x7] sm:$0xff]
    %v262 = vld [vmem:[#allocation2 + $0xf] sm:$0xff]
    %v263 = vld [vmem:[#allocation2 + $0x27] sm:$0xff]
    %v264 = vld [vmem:[#allocation2 + $0x2f] sm:$0xff]
    %v265 = vld [vmem:[#allocation2 + $0x47] sm:$0xff]
    %v266 = vld [vmem:[#allocation2 + $0x4f] sm:$0xff]
    %v267 = vld [vmem:[#allocation2 + $0x67] sm:$0xff]
    %v268 = vld [vmem:[#allocation2 + $0x6f] sm:$0xff]
    %v269 = vld [vmem:[#allocation2 + $0x87] sm:$0xff]
    %v270 = vld [vmem:[#allocation2 + $0x8f] sm:$0xff]
    %v271 = vld [vmem:[#allocation2 + $0xa7] sm:$0xff]
    %v272 = vld [vmem:[#allocation2 + $0xaf] sm:$0xff]
    %v273 = vld [vmem:[#allocation2 + $0xc7] sm:$0xff]
    %v274 = vld [vmem:[#allocation2 + $0xcf] sm:$0xff]
    %v275 = vld [vmem:[#allocation2 + $0xe7] sm:$0xff]
    %v276 = vld [vmem:[#allocation2 + $0xef] sm:$0xff]
    %v277 = vld [vmem:[#allocation2 + $0x107] sm:$0xff]
    %v278 = vld [vmem:[#allocation2 + $0x10f] sm:$0xff]
    %v279 = vld [vmem:[#allocation2 + $0x127] sm:$0xff]
    %v280 = vld [vmem:[#allocation2 + $0x12f] sm:$0xff]
    %v281 = vld [vmem:[#allocation2 + $0x147] sm:$0xff]
    %v282 = vld [vmem:[#allocation2 + $0x14f] sm:$0xff]
    %v283 = vld [vmem:[#allocation2 + $0x167] sm:$0xff]
    %v284 = vld [vmem:[#allocation2 + $0x16f] sm:$0xff]
    %v285 = vld [vmem:[#allocation2 + $0x187] sm:$0xff]
    %v286 = vld [vmem:[#allocation2 + $0x18f] sm:$0xff]
    %v287 = vld [vmem:[#allocation2 + $0x1a7] sm:$0xff]
    %v288 = vld [vmem:[#allocation2 + $0x1af] sm:$0xff]
    %v289 = vld [vmem:[#allocation2 + $0x1c7] sm:$0xff]
    %v290 = vld [vmem:[#allocation2 + $0x1cf] sm:$0xff]
    %v291 = vld [vmem:[#allocation2 + $0x1e7] sm:$0xff]
    %v292 = vld [vmem:[#allocation2 + $0x1ef] sm:$0xff]
    %294 = vset.pattern.permute.xlu0 0
    %295 = vperm.xlu0 %294, %v261
    %v296 = vpop.permute.xlu0 %295
    %299 = vset.pattern.permute.xlu0 0
    %300 = vperm.xlu0 %299, %v262
    %v301 = vpop.permute.xlu0 %300
    %304 = vset.pattern.permute.xlu0 0
    %305 = vperm.xlu0 %304, %v263
    %v306 = vpop.permute.xlu0 %305
    %309 = vset.pattern.permute.xlu0 0
    %310 = vperm.xlu0 %309, %v264
    %v311 = vpop.permute.xlu0 %310
    %314 = vset.pattern.permute.xlu0 0
    %315 = vperm.xlu0 %314, %v265
    %v316 = vpop.permute.xlu0 %315
    %319 = vset.pattern.permute.xlu0 0
    %320 = vperm.xlu0 %319, %v266
    %v321 = vpop.permute.xlu0 %320
    %324 = vset.pattern.permute.xlu0 0
    %325 = vperm.xlu0 %324, %v267
    %v326 = vpop.permute.xlu0 %325
    %329 = vset.pattern.permute.xlu0 0
    %330 = vperm.xlu0 %329, %v268
    %v331 = vpop.permute.xlu0 %330
    %334 = vset.pattern.permute.xlu0 0
    %335 = vperm.xlu0 %334, %v269
    %v336 = vpop.permute.xlu0 %335
    %339 = vset.pattern.permute.xlu0 0
    %340 = vperm.xlu0 %339, %v270
    %v341 = vpop.permute.xlu0 %340
    %344 = vset.pattern.permute.xlu0 0
    %345 = vperm.xlu0 %344, %v271
    %v346 = vpop.permute.xlu0 %345
    %349 = vset.pattern.permute.xlu0 0
    %350 = vperm.xlu0 %349, %v272
    %v351 = vpop.permute.xlu0 %350
    %354 = vset.pattern.permute.xlu0 0
    %355 = vperm.xlu0 %354, %v273
    %v356 = vpop.permute.xlu0 %355
    %359 = vset.pattern.permute.xlu0 0
    %360 = vperm.xlu0 %359, %v274
    %v361 = vpop.permute.xlu0 %360
    %364 = vset.pattern.permute.xlu0 0
    %365 = vperm.xlu0 %364, %v275
    %v366 = vpop.permute.xlu0 %365
    %369 = vset.pattern.permute.xlu0 0
    %370 = vperm.xlu0 %369, %v276
    %v371 = vpop.permute.xlu0 %370
    %374 = vset.pattern.permute.xlu0 0
    %375 = vperm.xlu0 %374, %v277
    %v376 = vpop.permute.xlu0 %375
    %379 = vset.pattern.permute.xlu0 0
    %380 = vperm.xlu0 %379, %v278
    %v381 = vpop.permute.xlu0 %380
    %384 = vset.pattern.permute.xlu0 0
    %385 = vperm.xlu0 %384, %v279
    %v386 = vpop.permute.xlu0 %385
    %389 = vset.pattern.permute.xlu0 0
    %390 = vperm.xlu0 %389, %v280
    %v391 = vpop.permute.xlu0 %390
    %394 = vset.pattern.permute.xlu0 0
    %395 = vperm.xlu0 %394, %v281
    %v396 = vpop.permute.xlu0 %395
    %399 = vset.pattern.permute.xlu0 0
    %400 = vperm.xlu0 %399, %v282
    %v401 = vpop.permute.xlu0 %400
    %404 = vset.pattern.permute.xlu0 0
    %405 = vperm.xlu0 %404, %v283
    %v406 = vpop.permute.xlu0 %405
    %409 = vset.pattern.permute.xlu0 0
    %410 = vperm.xlu0 %409, %v284
    %v411 = vpop.permute.xlu0 %410
    %414 = vset.pattern.permute.xlu0 0
    %415 = vperm.xlu0 %414, %v285
    %v416 = vpop.permute.xlu0 %415
    %419 = vset.pattern.permute.xlu0 0
    %420 = vperm.xlu0 %419, %v286
    %v421 = vpop.permute.xlu0 %420
    %424 = vset.pattern.permute.xlu0 0
    %425 = vperm.xlu0 %424, %v287
    %v426 = vpop.permute.xlu0 %425
    %429 = vset.pattern.permute.xlu0 0
    %430 = vperm.xlu0 %429, %v288
    %v431 = vpop.permute.xlu0 %430
    %434 = vset.pattern.permute.xlu0 0
    %435 = vperm.xlu0 %434, %v289
    %v436 = vpop.permute.xlu0 %435
    %439 = vset.pattern.permute.xlu0 0
    %440 = vperm.xlu0 %439, %v290
    %v441 = vpop.permute.xlu0 %440
    %444 = vset.pattern.permute.xlu0 0
    %445 = vperm.xlu0 %444, %v291
    %v446 = vpop.permute.xlu0 %445
    %449 = vset.pattern.permute.xlu0 0
    %450 = vperm.xlu0 %449, %v292
    %v451 = vpop.permute.xlu0 %450
    %v453 = vlaneseq
    %v454 = vshrl.u32 %v453, 7
    %v455 = vsub.s32 0, %v454
    %v456 = vrot.slane %v173, %v455
    %v457 = vmul.f32 %v296, %v456
    %v458 = vmul.f32 %v301, %v456
    %v459 = vmul.f32 %v306, %v456
    %v460 = vmul.f32 %v311, %v456
    %v461 = vmul.f32 %v316, %v456
    %v462 = vmul.f32 %v321, %v456
    %v463 = vmul.f32 %v326, %v456
    %v464 = vmul.f32 %v331, %v456
    %v465 = vmul.f32 %v336, %v456
    %v466 = vmul.f32 %v341, %v456
    %v467 = vmul.f32 %v346, %v456
    %v468 = vmul.f32 %v351, %v456
    %v469 = vmul.f32 %v356, %v456
    %v470 = vmul.f32 %v361, %v456
    %v471 = vmul.f32 %v366, %v456
    %v472 = vmul.f32 %v371, %v456
    %v473 = vmul.f32 %v376, %v456
    %v474 = vmul.f32 %v381, %v456
    %v475 = vmul.f32 %v386, %v456
    %v476 = vmul.f32 %v391, %v456
    %v477 = vmul.f32 %v396, %v456
    %v478 = vmul.f32 %v401, %v456
    %v479 = vmul.f32 %v406, %v456
    %v480 = vmul.f32 %v411, %v456
    %v481 = vmul.f32 %v416, %v456
    %v482 = vmul.f32 %v421, %v456
    %v483 = vmul.f32 %v426, %v456
    %v484 = vmul.f32 %v431, %v456
    %v485 = vmul.f32 %v436, %v456
    %v486 = vmul.f32 %v441, %v456
    %v487 = vmul.f32 %v446, %v456
    %v488 = vmul.f32 %v451, %v456
    %v489 = vadd.f32 %v457, 0.0
    %v490 = vadd.f32 %v458, 0.0
    %v491 = vadd.f32 %v459, 0.0
    %v492 = vadd.f32 %v460, 0.0
    %v493 = vadd.f32 %v461, 0.0
    %v494 = vadd.f32 %v462, 0.0
    %v495 = vadd.f32 %v463, 0.0
    %v496 = vadd.f32 %v464, 0.0
    %v497 = vadd.f32 %v465, 0.0
    %v498 = vadd.f32 %v466, 0.0
    %v499 = vadd.f32 %v467, 0.0
    %v500 = vadd.f32 %v468, 0.0
    %v501 = vadd.f32 %v469, 0.0
    %v502 = vadd.f32 %v470, 0.0
    %v503 = vadd.f32 %v471, 0.0
    %v504 = vadd.f32 %v472, 0.0
    %v505 = vadd.f32 %v473, 0.0
    %v506 = vadd.f32 %v474, 0.0
    %v507 = vadd.f32 %v475, 0.0
    %v508 = vadd.f32 %v476, 0.0
    %v509 = vadd.f32 %v477, 0.0
    %v510 = vadd.f32 %v478, 0.0
    %v511 = vadd.f32 %v479, 0.0
    %v512 = vadd.f32 %v480, 0.0
    %v513 = vadd.f32 %v481, 0.0
    %v514 = vadd.f32 %v482, 0.0
    %v515 = vadd.f32 %v483, 0.0
    %v516 = vadd.f32 %v484, 0.0
    %v517 = vadd.f32 %v485, 0.0
    %v518 = vadd.f32 %v486, 0.0
    %v519 = vadd.f32 %v487, 0.0
    %v520 = vadd.f32 %v488, 0.0
    %v521 = vld [vmem:[#allocation2 + $0x8] sm:$0xff]
    %v522 = vld [vmem:[#allocation2 + $0x10] sm:$0xff]
    %v523 = vld [vmem:[#allocation2 + $0x28] sm:$0xff]
    %v524 = vld [vmem:[#allocation2 + $0x30] sm:$0xff]
    %v525 = vld [vmem:[#allocation2 + $0x48] sm:$0xff]
    %v526 = vld [vmem:[#allocation2 + $0x50] sm:$0xff]
    %v527 = vld [vmem:[#allocation2 + $0x68] sm:$0xff]
    %v528 = vld [vmem:[#allocation2 + $0x70] sm:$0xff]
    %v529 = vld [vmem:[#allocation2 + $0x88] sm:$0xff]
    %v530 = vld [vmem:[#allocation2 + $0x90] sm:$0xff]
    %v531 = vld [vmem:[#allocation2 + $0xa8] sm:$0xff]
    %v532 = vld [vmem:[#allocation2 + $0xb0] sm:$0xff]
    %v533 = vld [vmem:[#allocation2 + $0xc8] sm:$0xff]
    %v534 = vld [vmem:[#allocation2 + $0xd0] sm:$0xff]
    %v535 = vld [vmem:[#allocation2 + $0xe8] sm:$0xff]
    %v536 = vld [vmem:[#allocation2 + $0xf0] sm:$0xff]
    %v537 = vld [vmem:[#allocation2 + $0x108] sm:$0xff]
    %v538 = vld [vmem:[#allocation2 + $0x110] sm:$0xff]
    %v539 = vld [vmem:[#allocation2 + $0x128] sm:$0xff]
    %v540 = vld [vmem:[#allocation2 + $0x130] sm:$0xff]
    %v541 = vld [vmem:[#allocation2 + $0x148] sm:$0xff]
    %v542 = vld [vmem:[#allocation2 + $0x150] sm:$0xff]
    %v543 = vld [vmem:[#allocation2 + $0x168] sm:$0xff]
    %v544 = vld [vmem:[#allocation2 + $0x170] sm:$0xff]
    %v545 = vld [vmem:[#allocation2 + $0x188] sm:$0xff]
    %v546 = vld [vmem:[#allocation2 + $0x190] sm:$0xff]
    %v547 = vld [vmem:[#allocation2 + $0x1a8] sm:$0xff]
    %v548 = vld [vmem:[#allocation2 + $0x1b0] sm:$0xff]
    %v549 = vld [vmem:[#allocation2 + $0x1c8] sm:$0xff]
    %v550 = vld [vmem:[#allocation2 + $0x1d0] sm:$0xff]
    %v551 = vld [vmem:[#allocation2 + $0x1e8] sm:$0xff]
    %v552 = vld [vmem:[#allocation2 + $0x1f0] sm:$0xff]
    %554 = vset.pattern.permute.xlu0 0
    %555 = vperm.xlu0 %554, %v521
    %v556 = vpop.permute.xlu0 %555
    %559 = vset.pattern.permute.xlu0 0
    %560 = vperm.xlu0 %559, %v522
    %v561 = vpop.permute.xlu0 %560
    %564 = vset.pattern.permute.xlu0 0
    %565 = vperm.xlu0 %564, %v523
    %v566 = vpop.permute.xlu0 %565
    %569 = vset.pattern.permute.xlu0 0
    %570 = vperm.xlu0 %569, %v524
    %v571 = vpop.permute.xlu0 %570
    %574 = vset.pattern.permute.xlu0 0
    %575 = vperm.xlu0 %574, %v525
    %v576 = vpop.permute.xlu0 %575
    %579 = vset.pattern.permute.xlu0 0
    %580 = vperm.xlu0 %579, %v526
    %v581 = vpop.permute.xlu0 %580
    %584 = vset.pattern.permute.xlu0 0
    %585 = vperm.xlu0 %584, %v527
    %v586 = vpop.permute.xlu0 %585
    %589 = vset.pattern.permute.xlu0 0
    %590 = vperm.xlu0 %589, %v528
    %v591 = vpop.permute.xlu0 %590
    %594 = vset.pattern.permute.xlu0 0
    %595 = vperm.xlu0 %594, %v529
    %v596 = vpop.permute.xlu0 %595
    %599 = vset.pattern.permute.xlu0 0
    %600 = vperm.xlu0 %599, %v530
    %v601 = vpop.permute.xlu0 %600
    %604 = vset.pattern.permute.xlu0 0
    %605 = vperm.xlu0 %604, %v531
    %v606 = vpop.permute.xlu0 %605
    %609 = vset.pattern.permute.xlu0 0
    %610 = vperm.xlu0 %609, %v532
    %v611 = vpop.permute.xlu0 %610
    %614 = vset.pattern.permute.xlu0 0
    %615 = vperm.xlu0 %614, %v533
    %v616 = vpop.permute.xlu0 %615
    %619 = vset.pattern.permute.xlu0 0
    %620 = vperm.xlu0 %619, %v534
    %v621 = vpop.permute.xlu0 %620
    %624 = vset.pattern.permute.xlu0 0
    %625 = vperm.xlu0 %624, %v535
    %v626 = vpop.permute.xlu0 %625
    %629 = vset.pattern.permute.xlu0 0
    %630 = vperm.xlu0 %629, %v536
    %v631 = vpop.permute.xlu0 %630
    %634 = vset.pattern.permute.xlu0 0
    %635 = vperm.xlu0 %634, %v537
    %v636 = vpop.permute.xlu0 %635
    %639 = vset.pattern.permute.xlu0 0
    %640 = vperm.xlu0 %639, %v538
    %v641 = vpop.permute.xlu0 %640
    %644 = vset.pattern.permute.xlu0 0
    %645 = vperm.xlu0 %644, %v539
    %v646 = vpop.permute.xlu0 %645
    %649 = vset.pattern.permute.xlu0 0
    %650 = vperm.xlu0 %649, %v540
    %v651 = vpop.permute.xlu0 %650
    %654 = vset.pattern.permute.xlu0 0
    %655 = vperm.xlu0 %654, %v541
    %v656 = vpop.permute.xlu0 %655
    %659 = vset.pattern.permute.xlu0 0
    %660 = vperm.xlu0 %659, %v542
    %v661 = vpop.permute.xlu0 %660
    %664 = vset.pattern.permute.xlu0 0
    %665 = vperm.xlu0 %664, %v543
    %v666 = vpop.permute.xlu0 %665
    %669 = vset.pattern.permute.xlu0 0
    %670 = vperm.xlu0 %669, %v544
    %v671 = vpop.permute.xlu0 %670
    %674 = vset.pattern.permute.xlu0 0
    %675 = vperm.xlu0 %674, %v545
    %v676 = vpop.permute.xlu0 %675
    %679 = vset.pattern.permute.xlu0 0
    %680 = vperm.xlu0 %679, %v546
    %v681 = vpop.permute.xlu0 %680
    %684 = vset.pattern.permute.xlu0 0
    %685 = vperm.xlu0 %684, %v547
    %v686 = vpop.permute.xlu0 %685
    %689 = vset.pattern.permute.xlu0 0
    %690 = vperm.xlu0 %689, %v548
    %v691 = vpop.permute.xlu0 %690
    %694 = vset.pattern.permute.xlu0 0
    %695 = vperm.xlu0 %694, %v549
    %v696 = vpop.permute.xlu0 %695
    %699 = vset.pattern.permute.xlu0 0
    %700 = vperm.xlu0 %699, %v550
    %v701 = vpop.permute.xlu0 %700
    %704 = vset.pattern.permute.xlu0 0
    %705 = vperm.xlu0 %704, %v551
    %v706 = vpop.permute.xlu0 %705
    %709 = vset.pattern.permute.xlu0 0
    %710 = vperm.xlu0 %709, %v552
    %v711 = vpop.permute.xlu0 %710
    %v713 = vlaneseq
    %v714 = vshrl.u32 %v713, 7
    %v715 = vsub.s32 1, %v714
    %v716 = vrot.slane %v173, %v715
    %v717 = vmul.f32 %v556, %v716
    %v718 = vmul.f32 %v561, %v716
    %v719 = vmul.f32 %v566, %v716
    %v720 = vmul.f32 %v571, %v716
    %v721 = vmul.f32 %v576, %v716
    %v722 = vmul.f32 %v581, %v716
    %v723 = vmul.f32 %v586, %v716
    %v724 = vmul.f32 %v591, %v716
    %v725 = vmul.f32 %v596, %v716
    %v726 = vmul.f32 %v601, %v716
    %v727 = vmul.f32 %v606, %v716
    %v728 = vmul.f32 %v611, %v716
    %v729 = vmul.f32 %v616, %v716
    %v730 = vmul.f32 %v621, %v716
    %v731 = vmul.f32 %v626, %v716
    %v732 = vmul.f32 %v631, %v716
    %v733 = vmul.f32 %v636, %v716
    %v734 = vmul.f32 %v641, %v716
    %v735 = vmul.f32 %v646, %v716
    %v736 = vmul.f32 %v651, %v716
    %v737 = vmul.f32 %v656, %v716
    %v738 = vmul.f32 %v661, %v716
    %v739 = vmul.f32 %v666, %v716
    %v740 = vmul.f32 %v671, %v716
    %v741 = vmul.f32 %v676, %v716
    %v742 = vmul.f32 %v681, %v716
    %v743 = vmul.f32 %v686, %v716
    %v744 = vmul.f32 %v691, %v716
    %v745 = vmul.f32 %v696, %v716
    %v746 = vmul.f32 %v701, %v716
    %v747 = vmul.f32 %v706, %v716
    %v748 = vmul.f32 %v711, %v716
    %v749 = vadd.f32 %v489, %v717
    %v750 = vadd.f32 %v490, %v718
    %v751 = vadd.f32 %v491, %v719
    %v752 = vadd.f32 %v492, %v720
    %v753 = vadd.f32 %v493, %v721
    %v754 = vadd.f32 %v494, %v722
    %v755 = vadd.f32 %v495, %v723
    %v756 = vadd.f32 %v496, %v724
    %v757 = vadd.f32 %v497, %v725
    %v758 = vadd.f32 %v498, %v726
    %v759 = vadd.f32 %v499, %v727
    %v760 = vadd.f32 %v500, %v728
    %v761 = vadd.f32 %v501, %v729
    %v762 = vadd.f32 %v502, %v730
    %v763 = vadd.f32 %v503, %v731
    %v764 = vadd.f32 %v504, %v732
    %v765 = vadd.f32 %v505, %v733
    %v766 = vadd.f32 %v506, %v734
    %v767 = vadd.f32 %v507, %v735
    %v768 = vadd.f32 %v508, %v736
    %v769 = vadd.f32 %v509, %v737
    %v770 = vadd.f32 %v510, %v738
    %v771 = vadd.f32 %v511, %v739
    %v772 = vadd.f32 %v512, %v740
    %v773 = vadd.f32 %v513, %v741
    %v774 = vadd.f32 %v514, %v742
    %v775 = vadd.f32 %v515, %v743
    %v776 = vadd.f32 %v516, %v744
    %v777 = vadd.f32 %v517, %v745
    %v778 = vadd.f32 %v518, %v746
    %v779 = vadd.f32 %v519, %v747
    %v780 = vadd.f32 %v520, %v748
    %v781 = vld [vmem:[#allocation2 + $0x9] sm:$0xff]
    %v782 = vld [vmem:[#allocation2 + $0x11] sm:$0xff]
    %v783 = vld [vmem:[#allocation2 + $0x29] sm:$0xff]
    %v784 = vld [vmem:[#allocation2 + $0x31] sm:$0xff]
    %v785 = vld [vmem:[#allocation2 + $0x49] sm:$0xff]
    %v786 = vld [vmem:[#allocation2 + $0x51] sm:$0xff]
    %v787 = vld [vmem:[#allocation2 + $0x69] sm:$0xff]
    %v788 = vld [vmem:[#allocation2 + $0x71] sm:$0xff]
    %v789 = vld [vmem:[#allocation2 + $0x89] sm:$0xff]
    %v790 = vld [vmem:[#allocation2 + $0x91] sm:$0xff]
    %v791 = vld [vmem:[#allocation2 + $0xa9] sm:$0xff]
    %v792 = vld [vmem:[#allocation2 + $0xb1] sm:$0xff]
    %v793 = vld [vmem:[#allocation2 + $0xc9] sm:$0xff]
    %v794 = vld [vmem:[#allocation2 + $0xd1] sm:$0xff]
    %v795 = vld [vmem:[#allocation2 + $0xe9] sm:$0xff]
    %v796 = vld [vmem:[#allocation2 + $0xf1] sm:$0xff]
    %v797 = vld [vmem:[#allocation2 + $0x109] sm:$0xff]
    %v798 = vld [vmem:[#allocation2 + $0x111] sm:$0xff]
    %v799 = vld [vmem:[#allocation2 + $0x129] sm:$0xff]
    %v800 = vld [vmem:[#allocation2 + $0x131] sm:$0xff]
    %v801 = vld [vmem:[#allocation2 + $0x149] sm:$0xff]
    %v802 = vld [vmem:[#allocation2 + $0x151] sm:$0xff]
    %v803 = vld [vmem:[#allocation2 + $0x169] sm:$0xff]
    %v804 = vld [vmem:[#allocation2 + $0x171] sm:$0xff]
    %v805 = vld [vmem:[#allocation2 + $0x189] sm:$0xff]
    %v806 = vld [vmem:[#allocation2 + $0x191] sm:$0xff]
    %v807 = vld [vmem:[#allocation2 + $0x1a9] sm:$0xff]
    %v808 = vld [vmem:[#allocation2 + $0x1b1] sm:$0xff]
    %v809 = vld [vmem:[#allocation2 + $0x1c9] sm:$0xff]
    %v810 = vld [vmem:[#allocation2 + $0x1d1] sm:$0xff]
    %v811 = vld [vmem:[#allocation2 + $0x1e9] sm:$0xff]
    %v812 = vld [vmem:[#allocation2 + $0x1f1] sm:$0xff]
    %814 = vset.pattern.permute.xlu0 0
    %815 = vperm.xlu0 %814, %v781
    %v816 = vpop.permute.xlu0 %815
    %819 = vset.pattern.permute.xlu0 0
    %820 = vperm.xlu0 %819, %v782
    %v821 = vpop.permute.xlu0 %820
    %824 = vset.pattern.permute.xlu0 0
    %825 = vperm.xlu0 %824, %v783
    %v826 = vpop.permute.xlu0 %825
    %829 = vset.pattern.permute.xlu0 0
    %830 = vperm.xlu0 %829, %v784
    %v831 = vpop.permute.xlu0 %830
    %834 = vset.pattern.permute.xlu0 0
    %835 = vperm.xlu0 %834, %v785
    %v836 = vpop.permute.xlu0 %835
    %839 = vset.pattern.permute.xlu0 0
    %840 = vperm.xlu0 %839, %v786
    %v841 = vpop.permute.xlu0 %840
    %844 = vset.pattern.permute.xlu0 0
    %845 = vperm.xlu0 %844, %v787
    %v846 = vpop.permute.xlu0 %845
    %849 = vset.pattern.permute.xlu0 0
    %850 = vperm.xlu0 %849, %v788
    %v851 = vpop.permute.xlu0 %850
    %854 = vset.pattern.permute.xlu0 0
    %855 = vperm.xlu0 %854, %v789
    %v856 = vpop.permute.xlu0 %855
    %859 = vset.pattern.permute.xlu0 0
    %860 = vperm.xlu0 %859, %v790
    %v861 = vpop.permute.xlu0 %860
    %864 = vset.pattern.permute.xlu0 0
    %865 = vperm.xlu0 %864, %v791
    %v866 = vpop.permute.xlu0 %865
    %869 = vset.pattern.permute.xlu0 0
    %870 = vperm.xlu0 %869, %v792
    %v871 = vpop.permute.xlu0 %870
    %874 = vset.pattern.permute.xlu0 0
    %875 = vperm.xlu0 %874, %v793
    %v876 = vpop.permute.xlu0 %875
    %879 = vset.pattern.permute.xlu0 0
    %880 = vperm.xlu0 %879, %v794
    %v881 = vpop.permute.xlu0 %880
    %884 = vset.pattern.permute.xlu0 0
    %885 = vperm.xlu0 %884, %v795
    %v886 = vpop.permute.xlu0 %885
    %889 = vset.pattern.permute.xlu0 0
    %890 = vperm.xlu0 %889, %v796
    %v891 = vpop.permute.xlu0 %890
    %894 = vset.pattern.permute.xlu0 0
    %895 = vperm.xlu0 %894, %v797
    %v896 = vpop.permute.xlu0 %895
    %899 = vset.pattern.permute.xlu0 0
    %900 = vperm.xlu0 %899, %v798
    %v901 = vpop.permute.xlu0 %900
    %904 = vset.pattern.permute.xlu0 0
    %905 = vperm.xlu0 %904, %v799
    %v906 = vpop.permute.xlu0 %905
    %909 = vset.pattern.permute.xlu0 0
    %910 = vperm.xlu0 %909, %v800
    %v911 = vpop.permute.xlu0 %910
    %914 = vset.pattern.permute.xlu0 0
    %915 = vperm.xlu0 %914, %v801
    %v916 = vpop.permute.xlu0 %915
    %919 = vset.pattern.permute.xlu0 0
    %920 = vperm.xlu0 %919, %v802
    %v921 = vpop.permute.xlu0 %920
    %924 = vset.pattern.permute.xlu0 0
    %925 = vperm.xlu0 %924, %v803
    %v926 = vpop.permute.xlu0 %925
    %929 = vset.pattern.permute.xlu0 0
    %930 = vperm.xlu0 %929, %v804
    %v931 = vpop.permute.xlu0 %930
    %934 = vset.pattern.permute.xlu0 0
    %935 = vperm.xlu0 %934, %v805
    %v936 = vpop.permute.xlu0 %935
    %939 = vset.pattern.permute.xlu0 0
    %940 = vperm.xlu0 %939, %v806
    %v941 = vpop.permute.xlu0 %940
    %944 = vset.pattern.permute.xlu0 0
    %945 = vperm.xlu0 %944, %v807
    %v946 = vpop.permute.xlu0 %945
    %949 = vset.pattern.permute.xlu0 0
    %950 = vperm.xlu0 %949, %v808
    %v951 = vpop.permute.xlu0 %950
    %954 = vset.pattern.permute.xlu0 0
    %955 = vperm.xlu0 %954, %v809
    %v956 = vpop.permute.xlu0 %955
    %959 = vset.pattern.permute.xlu0 0
    %960 = vperm.xlu0 %959, %v810
    %v961 = vpop.permute.xlu0 %960
    %964 = vset.pattern.permute.xlu0 0
    %965 = vperm.xlu0 %964, %v811
    %v966 = vpop.permute.xlu0 %965
    %969 = vset.pattern.permute.xlu0 0
    %970 = vperm.xlu0 %969, %v812
    %v971 = vpop.permute.xlu0 %970
    %v973 = vlaneseq
    %v974 = vshrl.u32 %v973, 7
    %v975 = vsub.s32 2, %v974
    %v976 = vrot.slane %v173, %v975
    %v977 = vmul.f32 %v816, %v976
    %v978 = vmul.f32 %v821, %v976
    %v979 = vmul.f32 %v826, %v976
    %v980 = vmul.f32 %v831, %v976
    %v981 = vmul.f32 %v836, %v976
    %v982 = vmul.f32 %v841, %v976
    %v983 = vmul.f32 %v846, %v976
    %v984 = vmul.f32 %v851, %v976
    %v985 = vmul.f32 %v856, %v976
    %v986 = vmul.f32 %v861, %v976
    %v987 = vmul.f32 %v866, %v976
    %v988 = vmul.f32 %v871, %v976
    %v989 = vmul.f32 %v876, %v976
    %v990 = vmul.f32 %v881, %v976
    %v991 = vmul.f32 %v886, %v976
    %v992 = vmul.f32 %v891, %v976
    %v993 = vmul.f32 %v896, %v976
    %v994 = vmul.f32 %v901, %v976
    %v995 = vmul.f32 %v906, %v976
    %v996 = vmul.f32 %v911, %v976
    %v997 = vmul.f32 %v916, %v976
    %v998 = vmul.f32 %v921, %v976
    %v999 = vmul.f32 %v926, %v976
    %v1000 = vmul.f32 %v931, %v976
    %v1001 = vmul.f32 %v936, %v976
    %v1002 = vmul.f32 %v941, %v976
    %v1003 = vmul.f32 %v946, %v976
    %v1004 = vmul.f32 %v951, %v976
    %v1005 = vmul.f32 %v956, %v976
    %v1006 = vmul.f32 %v961, %v976
    %v1007 = vmul.f32 %v966, %v976
    %v1008 = vmul.f32 %v971, %v976
    %v1009 = vadd.f32 %v749, %v977
    %v1010 = vadd.f32 %v750, %v978
    %v1011 = vadd.f32 %v751, %v979
    %v1012 = vadd.f32 %v752, %v980
    %v1013 = vadd.f32 %v753, %v981
    %v1014 = vadd.f32 %v754, %v982
    %v1015 = vadd.f32 %v755, %v983
    %v1016 = vadd.f32 %v756, %v984
    %v1017 = vadd.f32 %v757, %v985
    %v1018 = vadd.f32 %v758, %v986
    %v1019 = vadd.f32 %v759, %v987
    %v1020 = vadd.f32 %v760, %v988
    %v1021 = vadd.f32 %v761, %v989
    %v1022 = vadd.f32 %v762, %v990
    %v1023 = vadd.f32 %v763, %v991
    %v1024 = vadd.f32 %v764, %v992
    %v1025 = vadd.f32 %v765, %v993
    %v1026 = vadd.f32 %v766, %v994
    %v1027 = vadd.f32 %v767, %v995
    %v1028 = vadd.f32 %v768, %v996
    %v1029 = vadd.f32 %v769, %v997
    %v1030 = vadd.f32 %v770, %v998
    %v1031 = vadd.f32 %v771, %v999
    %v1032 = vadd.f32 %v772, %v1000
    %v1033 = vadd.f32 %v773, %v1001
    %v1034 = vadd.f32 %v774, %v1002
    %v1035 = vadd.f32 %v775, %v1003
    %v1036 = vadd.f32 %v776, %v1004
    %v1037 = vadd.f32 %v777, %v1005
    %v1038 = vadd.f32 %v778, %v1006
    %v1039 = vadd.f32 %v779, %v1007
    %v1040 = vadd.f32 %v780, %v1008
    %v1041 = vld [vmem:[%s228 + $0x7] sm:$0xff]
    %v1042 = vld [vmem:[%s228 + $0xf] sm:$0xff]
    %v1043 = vld [vmem:[%s228 + $0x27] sm:$0xff]
    %v1044 = vld [vmem:[%s228 + $0x2f] sm:$0xff]
    %v1045 = vld [vmem:[%s228 + $0x47] sm:$0xff]
    %v1046 = vld [vmem:[%s228 + $0x4f] sm:$0xff]
    %v1047 = vld [vmem:[%s228 + $0x67] sm:$0xff]
    %v1048 = vld [vmem:[%s228 + $0x6f] sm:$0xff]
    %v1049 = vld [vmem:[%s228 + $0x87] sm:$0xff]
    %v1050 = vld [vmem:[%s228 + $0x8f] sm:$0xff]
    %v1051 = vld [vmem:[%s228 + $0xa7] sm:$0xff]
    %v1052 = vld [vmem:[%s228 + $0xaf] sm:$0xff]
    %v1053 = vld [vmem:[%s228 + $0xc7] sm:$0xff]
    %v1054 = vld [vmem:[%s228 + $0xcf] sm:$0xff]
    %v1055 = vld [vmem:[%s228 + $0xe7] sm:$0xff]
    %v1056 = vld [vmem:[%s228 + $0xef] sm:$0xff]
    %v1057 = vld [vmem:[%s228 + $0x107] sm:$0xff]
    %v1058 = vld [vmem:[%s228 + $0x10f] sm:$0xff]
    %v1059 = vld [vmem:[%s228 + $0x127] sm:$0xff]
    %v1060 = vld [vmem:[%s228 + $0x12f] sm:$0xff]
    %v1061 = vld [vmem:[%s228 + $0x147] sm:$0xff]
    %v1062 = vld [vmem:[%s228 + $0x14f] sm:$0xff]
    %v1063 = vld [vmem:[%s228 + $0x167] sm:$0xff]
    %v1064 = vld [vmem:[%s228 + $0x16f] sm:$0xff]
    %v1065 = vld [vmem:[%s228 + $0x187] sm:$0xff]
    %v1066 = vld [vmem:[%s228 + $0x18f] sm:$0xff]
    %v1067 = vld [vmem:[%s228 + $0x1a7] sm:$0xff]
    %v1068 = vld [vmem:[%s228 + $0x1af] sm:$0xff]
    %v1069 = vld [vmem:[%s228 + $0x1c7] sm:$0xff]
    %v1070 = vld [vmem:[%s228 + $0x1cf] sm:$0xff]
    %v1071 = vld [vmem:[%s228 + $0x1e7] sm:$0xff]
    %v1072 = vld [vmem:[%s228 + $0x1ef] sm:$0xff]
    %1074 = vset.pattern.permute.xlu0 0
    %1075 = vperm.xlu0 %1074, %v1041
    %v1076 = vpop.permute.xlu0 %1075
    %1079 = vset.pattern.permute.xlu0 0
    %1080 = vperm.xlu0 %1079, %v1042
    %v1081 = vpop.permute.xlu0 %1080
    %1084 = vset.pattern.permute.xlu0 0
    %1085 = vperm.xlu0 %1084, %v1043
    %v1086 = vpop.permute.xlu0 %1085
    %1089 = vset.pattern.permute.xlu0 0
    %1090 = vperm.xlu0 %1089, %v1044
    %v1091 = vpop.permute.xlu0 %1090
    %1094 = vset.pattern.permute.xlu0 0
    %1095 = vperm.xlu0 %1094, %v1045
    %v1096 = vpop.permute.xlu0 %1095
    %1099 = vset.pattern.permute.xlu0 0
    %1100 = vperm.xlu0 %1099, %v1046
    %v1101 = vpop.permute.xlu0 %1100
    %1104 = vset.pattern.permute.xlu0 0
    %1105 = vperm.xlu0 %1104, %v1047
    %v1106 = vpop.permute.xlu0 %1105
    %1109 = vset.pattern.permute.xlu0 0
    %1110 = vperm.xlu0 %1109, %v1048
    %v1111 = vpop.permute.xlu0 %1110
    %1114 = vset.pattern.permute.xlu0 0
    %1115 = vperm.xlu0 %1114, %v1049
    %v1116 = vpop.permute.xlu0 %1115
    %1119 = vset.pattern.permute.xlu0 0
    %1120 = vperm.xlu0 %1119, %v1050
    %v1121 = vpop.permute.xlu0 %1120
    %1124 = vset.pattern.permute.xlu0 0
    %1125 = vperm.xlu0 %1124, %v1051
    %v1126 = vpop.permute.xlu0 %1125
    %1129 = vset.pattern.permute.xlu0 0
    %1130 = vperm.xlu0 %1129, %v1052
    %v1131 = vpop.permute.xlu0 %1130
    %1134 = vset.pattern.permute.xlu0 0
    %1135 = vperm.xlu0 %1134, %v1053
    %v1136 = vpop.permute.xlu0 %1135
    %1139 = vset.pattern.permute.xlu0 0
    %1140 = vperm.xlu0 %1139, %v1054
    %v1141 = vpop.permute.xlu0 %1140
    %1144 = vset.pattern.permute.xlu0 0
    %1145 = vperm.xlu0 %1144, %v1055
    %v1146 = vpop.permute.xlu0 %1145
    %1149 = vset.pattern.permute.xlu0 0
    %1150 = vperm.xlu0 %1149, %v1056
    %v1151 = vpop.permute.xlu0 %1150
    %1154 = vset.pattern.permute.xlu0 0
    %1155 = vperm.xlu0 %1154, %v1057
    %v1156 = vpop.permute.xlu0 %1155
    %1159 = vset.pattern.permute.xlu0 0
    %1160 = vperm.xlu0 %1159, %v1058
    %v1161 = vpop.permute.xlu0 %1160
    %1164 = vset.pattern.permute.xlu0 0
    %1165 = vperm.xlu0 %1164, %v1059
    %v1166 = vpop.permute.xlu0 %1165
    %1169 = vset.pattern.permute.xlu0 0
    %1170 = vperm.xlu0 %1169, %v1060
    %v1171 = vpop.permute.xlu0 %1170
    %1174 = vset.pattern.permute.xlu0 0
    %1175 = vperm.xlu0 %1174, %v1061
    %v1176 = vpop.permute.xlu0 %1175
    %1179 = vset.pattern.permute.xlu0 0
    %1180 = vperm.xlu0 %1179, %v1062
    %v1181 = vpop.permute.xlu0 %1180
    %1184 = vset.pattern.permute.xlu0 0
    %1185 = vperm.xlu0 %1184, %v1063
    %v1186 = vpop.permute.xlu0 %1185
    %1189 = vset.pattern.permute.xlu0 0
    %1190 = vperm.xlu0 %1189, %v1064
    %v1191 = vpop.permute.xlu0 %1190
    %1194 = vset.pattern.permute.xlu0 0
    %1195 = vperm.xlu0 %1194, %v1065
    %v1196 = vpop.permute.xlu0 %1195
    %1199 = vset.pattern.permute.xlu0 0
    %1200 = vperm.xlu0 %1199, %v1066
    %v1201 = vpop.permute.xlu0 %1200
    %1204 = vset.pattern.permute.xlu0 0
    %1205 = vperm.xlu0 %1204, %v1067
    %v1206 = vpop.permute.xlu0 %1205
    %1209 = vset.pattern.permute.xlu0 0
    %1210 = vperm.xlu0 %1209, %v1068
    %v1211 = vpop.permute.xlu0 %1210
    %1214 = vset.pattern.permute.xlu0 0
    %1215 = vperm.xlu0 %1214, %v1069
    %v1216 = vpop.permute.xlu0 %1215
    %1219 = vset.pattern.permute.xlu0 0
    %1220 = vperm.xlu0 %1219, %v1070
    %v1221 = vpop.permute.xlu0 %1220
    %1224 = vset.pattern.permute.xlu0 0
    %1225 = vperm.xlu0 %1224, %v1071
    %v1226 = vpop.permute.xlu0 %1225
    %1229 = vset.pattern.permute.xlu0 0
    %1230 = vperm.xlu0 %1229, %v1072
    %v1231 = vpop.permute.xlu0 %1230
    %v1233 = vlaneseq
    %v1234 = vshrl.u32 %v1233, 7
    %v1235 = vsub.s32 3, %v1234
    %v1236 = vrot.slane %v173, %v1235
    %v1237 = vmul.f32 %v1076, %v1236
    %v1238 = vmul.f32 %v1081, %v1236
    %v1239 = vmul.f32 %v1086, %v1236
    %v1240 = vmul.f32 %v1091, %v1236
    %v1241 = vmul.f32 %v1096, %v1236
    %v1242 = vmul.f32 %v1101, %v1236
    %v1243 = vmul.f32 %v1106, %v1236
    %v1244 = vmul.f32 %v1111, %v1236
    %v1245 = vmul.f32 %v1116, %v1236
    %v1246 = vmul.f32 %v1121, %v1236
    %v1247 = vmul.f32 %v1126, %v1236
    %v1248 = vmul.f32 %v1131, %v1236
    %v1249 = vmul.f32 %v1136, %v1236
    %v1250 = vmul.f32 %v1141, %v1236
    %v1251 = vmul.f32 %v1146, %v1236
    %v1252 = vmul.f32 %v1151, %v1236
    %v1253 = vmul.f32 %v1156, %v1236
    %v1254 = vmul.f32 %v1161, %v1236
    %v1255 = vmul.f32 %v1166, %v1236
    %v1256 = vmul.f32 %v1171, %v1236
    %v1257 = vmul.f32 %v1176, %v1236
    %v1258 = vmul.f32 %v1181, %v1236
    %v1259 = vmul.f32 %v1186, %v1236
    %v1260 = vmul.f32 %v1191, %v1236
    %v1261 = vmul.f32 %v1196, %v1236
    %v1262 = vmul.f32 %v1201, %v1236
    %v1263 = vmul.f32 %v1206, %v1236
    %v1264 = vmul.f32 %v1211, %v1236
    %v1265 = vmul.f32 %v1216, %v1236
    %v1266 = vmul.f32 %v1221, %v1236
    %v1267 = vmul.f32 %v1226, %v1236
    %v1268 = vmul.f32 %v1231, %v1236
    %v1269 = vadd.f32 %v1009, %v1237
    %v1270 = vadd.f32 %v1010, %v1238
    %v1271 = vadd.f32 %v1011, %v1239
    %v1272 = vadd.f32 %v1012, %v1240
    %v1273 = vadd.f32 %v1013, %v1241
    %v1274 = vadd.f32 %v1014, %v1242
    %v1275 = vadd.f32 %v1015, %v1243
    %v1276 = vadd.f32 %v1016, %v1244
    %v1277 = vadd.f32 %v1017, %v1245
    %v1278 = vadd.f32 %v1018, %v1246
    %v1279 = vadd.f32 %v1019, %v1247
    %v1280 = vadd.f32 %v1020, %v1248
    %v1281 = vadd.f32 %v1021, %v1249
    %v1282 = vadd.f32 %v1022, %v1250
    %v1283 = vadd.f32 %v1023, %v1251
    %v1284 = vadd.f32 %v1024, %v1252
    %v1285 = vadd.f32 %v1025, %v1253
    %v1286 = vadd.f32 %v1026, %v1254
    %v1287 = vadd.f32 %v1027, %v1255
    %v1288 = vadd.f32 %v1028, %v1256
    %v1289 = vadd.f32 %v1029, %v1257
    %v1290 = vadd.f32 %v1030, %v1258
    %v1291 = vadd.f32 %v1031, %v1259
    %v1292 = vadd.f32 %v1032, %v1260
    %v1293 = vadd.f32 %v1033, %v1261
    %v1294 = vadd.f32 %v1034, %v1262
    %v1295 = vadd.f32 %v1035, %v1263
    %v1296 = vadd.f32 %v1036, %v1264
    %v1297 = vadd.f32 %v1037, %v1265
    %v1298 = vadd.f32 %v1038, %v1266
    %v1299 = vadd.f32 %v1039, %v1267
    %v1300 = vadd.f32 %v1040, %v1268
    %v1301 = vld [vmem:[%s228 + $0x8] sm:$0xff]
    %v1302 = vld [vmem:[%s228 + $0x10] sm:$0xff]
    %v1303 = vld [vmem:[%s228 + $0x28] sm:$0xff]
    %v1304 = vld [vmem:[%s228 + $0x30] sm:$0xff]
    %v1305 = vld [vmem:[%s228 + $0x48] sm:$0xff]
    %v1306 = vld [vmem:[%s228 + $0x50] sm:$0xff]
    %v1307 = vld [vmem:[%s228 + $0x68] sm:$0xff]
    %v1308 = vld [vmem:[%s228 + $0x70] sm:$0xff]
    %v1309 = vld [vmem:[%s228 + $0x88] sm:$0xff]
    %v1310 = vld [vmem:[%s228 + $0x90] sm:$0xff]
    %v1311 = vld [vmem:[%s228 + $0xa8] sm:$0xff]
    %v1312 = vld [vmem:[%s228 + $0xb0] sm:$0xff]
    %v1313 = vld [vmem:[%s228 + $0xc8] sm:$0xff]
    %v1314 = vld [vmem:[%s228 + $0xd0] sm:$0xff]
    %v1315 = vld [vmem:[%s228 + $0xe8] sm:$0xff]
    %v1316 = vld [vmem:[%s228 + $0xf0] sm:$0xff]
    %v1317 = vld [vmem:[%s228 + $0x108] sm:$0xff]
    %v1318 = vld [vmem:[%s228 + $0x110] sm:$0xff]
    %v1319 = vld [vmem:[%s228 + $0x128] sm:$0xff]
    %v1320 = vld [vmem:[%s228 + $0x130] sm:$0xff]
    %v1321 = vld [vmem:[%s228 + $0x148] sm:$0xff]
    %v1322 = vld [vmem:[%s228 + $0x150] sm:$0xff]
    %v1323 = vld [vmem:[%s228 + $0x168] sm:$0xff]
    %v1324 = vld [vmem:[%s228 + $0x170] sm:$0xff]
    %v1325 = vld [vmem:[%s228 + $0x188] sm:$0xff]
    %v1326 = vld [vmem:[%s228 + $0x190] sm:$0xff]
    %v1327 = vld [vmem:[%s228 + $0x1a8] sm:$0xff]
    %v1328 = vld [vmem:[%s228 + $0x1b0] sm:$0xff]
    %v1329 = vld [vmem:[%s228 + $0x1c8] sm:$0xff]
    %v1330 = vld [vmem:[%s228 + $0x1d0] sm:$0xff]
    %v1331 = vld [vmem:[%s228 + $0x1e8] sm:$0xff]
    %v1332 = vld [vmem:[%s228 + $0x1f0] sm:$0xff]
    %1334 = vset.pattern.permute.xlu0 0
    %1335 = vperm.xlu0 %1334, %v1301
    %v1336 = vpop.permute.xlu0 %1335
    %1339 = vset.pattern.permute.xlu0 0
    %1340 = vperm.xlu0 %1339, %v1302
    %v1341 = vpop.permute.xlu0 %1340
    %1344 = vset.pattern.permute.xlu0 0
    %1345 = vperm.xlu0 %1344, %v1303
    %v1346 = vpop.permute.xlu0 %1345
    %1349 = vset.pattern.permute.xlu0 0
    %1350 = vperm.xlu0 %1349, %v1304
    %v1351 = vpop.permute.xlu0 %1350
    %1354 = vset.pattern.permute.xlu0 0
    %1355 = vperm.xlu0 %1354, %v1305
    %v1356 = vpop.permute.xlu0 %1355
    %1359 = vset.pattern.permute.xlu0 0
    %1360 = vperm.xlu0 %1359, %v1306
    %v1361 = vpop.permute.xlu0 %1360
    %1364 = vset.pattern.permute.xlu0 0
    %1365 = vperm.xlu0 %1364, %v1307
    %v1366 = vpop.permute.xlu0 %1365
    %1369 = vset.pattern.permute.xlu0 0
    %1370 = vperm.xlu0 %1369, %v1308
    %v1371 = vpop.permute.xlu0 %1370
    %1374 = vset.pattern.permute.xlu0 0
    %1375 = vperm.xlu0 %1374, %v1309
    %v1376 = vpop.permute.xlu0 %1375
    %1379 = vset.pattern.permute.xlu0 0
    %1380 = vperm.xlu0 %1379, %v1310
    %v1381 = vpop.permute.xlu0 %1380
    %1384 = vset.pattern.permute.xlu0 0
    %1385 = vperm.xlu0 %1384, %v1311
    %v1386 = vpop.permute.xlu0 %1385
    %1389 = vset.pattern.permute.xlu0 0
    %1390 = vperm.xlu0 %1389, %v1312
    %v1391 = vpop.permute.xlu0 %1390
    %1394 = vset.pattern.permute.xlu0 0
    %1395 = vperm.xlu0 %1394, %v1313
    %v1396 = vpop.permute.xlu0 %1395
    %1399 = vset.pattern.permute.xlu0 0
    %1400 = vperm.xlu0 %1399, %v1314
    %v1401 = vpop.permute.xlu0 %1400
    %1404 = vset.pattern.permute.xlu0 0
    %1405 = vperm.xlu0 %1404, %v1315
    %v1406 = vpop.permute.xlu0 %1405
    %1409 = vset.pattern.permute.xlu0 0
    %1410 = vperm.xlu0 %1409, %v1316
    %v1411 = vpop.permute.xlu0 %1410
    %1414 = vset.pattern.permute.xlu0 0
    %1415 = vperm.xlu0 %1414, %v1317
    %v1416 = vpop.permute.xlu0 %1415
    %1419 = vset.pattern.permute.xlu0 0
    %1420 = vperm.xlu0 %1419, %v1318
    %v1421 = vpop.permute.xlu0 %1420
    %1424 = vset.pattern.permute.xlu0 0
    %1425 = vperm.xlu0 %1424, %v1319
    %v1426 = vpop.permute.xlu0 %1425
    %1429 = vset.pattern.permute.xlu0 0
    %1430 = vperm.xlu0 %1429, %v1320
    %v1431 = vpop.permute.xlu0 %1430
    %1434 = vset.pattern.permute.xlu0 0
    %1435 = vperm.xlu0 %1434, %v1321
    %v1436 = vpop.permute.xlu0 %1435
    %1439 = vset.pattern.permute.xlu0 0
    %1440 = vperm.xlu0 %1439, %v1322
    %v1441 = vpop.permute.xlu0 %1440
    %1444 = vset.pattern.permute.xlu0 0
    %1445 = vperm.xlu0 %1444, %v1323
    %v1446 = vpop.permute.xlu0 %1445
    %1449 = vset.pattern.permute.xlu0 0
    %1450 = vperm.xlu0 %1449, %v1324
    %v1451 = vpop.permute.xlu0 %1450
    %1454 = vset.pattern.permute.xlu0 0
    %1455 = vperm.xlu0 %1454, %v1325
    %v1456 = vpop.permute.xlu0 %1455
    %1459 = vset.pattern.permute.xlu0 0
    %1460 = vperm.xlu0 %1459, %v1326
    %v1461 = vpop.permute.xlu0 %1460
    %1464 = vset.pattern.permute.xlu0 0
    %1465 = vperm.xlu0 %1464, %v1327
    %v1466 = vpop.permute.xlu0 %1465
    %1469 = vset.pattern.permute.xlu0 0
    %1470 = vperm.xlu0 %1469, %v1328
    %v1471 = vpop.permute.xlu0 %1470
    %1474 = vset.pattern.permute.xlu0 0
    %1475 = vperm.xlu0 %1474, %v1329
    %v1476 = vpop.permute.xlu0 %1475
    %1479 = vset.pattern.permute.xlu0 0
    %1480 = vperm.xlu0 %1479, %v1330
    %v1481 = vpop.permute.xlu0 %1480
    %1484 = vset.pattern.permute.xlu0 0
    %1485 = vperm.xlu0 %1484, %v1331
    %v1486 = vpop.permute.xlu0 %1485
    %1489 = vset.pattern.permute.xlu0 0
    %1490 = vperm.xlu0 %1489, %v1332
    %v1491 = vpop.permute.xlu0 %1490
    %v1493 = vlaneseq
    %v1494 = vshrl.u32 %v1493, 7
    %v1495 = vsub.s32 4, %v1494
    %v1496 = vrot.slane %v173, %v1495
    %v1497 = vmul.f32 %v1336, %v1496
    %v1498 = vmul.f32 %v1341, %v1496
    %v1499 = vmul.f32 %v1346, %v1496
    %v1500 = vmul.f32 %v1351, %v1496
    %v1501 = vmul.f32 %v1356, %v1496
    %v1502 = vmul.f32 %v1361, %v1496
    %v1503 = vmul.f32 %v1366, %v1496
    %v1504 = vmul.f32 %v1371, %v1496
    %v1505 = vmul.f32 %v1376, %v1496
    %v1506 = vmul.f32 %v1381, %v1496
    %v1507 = vmul.f32 %v1386, %v1496
    %v1508 = vmul.f32 %v1391, %v1496
    %v1509 = vmul.f32 %v1396, %v1496
    %v1510 = vmul.f32 %v1401, %v1496
    %v1511 = vmul.f32 %v1406, %v1496
    %v1512 = vmul.f32 %v1411, %v1496
    %v1513 = vmul.f32 %v1416, %v1496
    %v1514 = vmul.f32 %v1421, %v1496
    %v1515 = vmul.f32 %v1426, %v1496
    %v1516 = vmul.f32 %v1431, %v1496
    %v1517 = vmul.f32 %v1436, %v1496
    %v1518 = vmul.f32 %v1441, %v1496
    %v1519 = vmul.f32 %v1446, %v1496
    %v1520 = vmul.f32 %v1451, %v1496
    %v1521 = vmul.f32 %v1456, %v1496
    %v1522 = vmul.f32 %v1461, %v1496
    %v1523 = vmul.f32 %v1466, %v1496
    %v1524 = vmul.f32 %v1471, %v1496
    %v1525 = vmul.f32 %v1476, %v1496
    %v1526 = vmul.f32 %v1481, %v1496
    %v1527 = vmul.f32 %v1486, %v1496
    %v1528 = vmul.f32 %v1491, %v1496
    %v1529 = vadd.f32 %v1269, %v1497
    %v1530 = vadd.f32 %v1270, %v1498
    %v1531 = vadd.f32 %v1271, %v1499
    %v1532 = vadd.f32 %v1272, %v1500
    %v1533 = vadd.f32 %v1273, %v1501
    %v1534 = vadd.f32 %v1274, %v1502
    %v1535 = vadd.f32 %v1275, %v1503
    %v1536 = vadd.f32 %v1276, %v1504
    %v1537 = vadd.f32 %v1277, %v1505
    %v1538 = vadd.f32 %v1278, %v1506
    %v1539 = vadd.f32 %v1279, %v1507
    %v1540 = vadd.f32 %v1280, %v1508
    %v1541 = vadd.f32 %v1281, %v1509
    %v1542 = vadd.f32 %v1282, %v1510
    %v1543 = vadd.f32 %v1283, %v1511
    %v1544 = vadd.f32 %v1284, %v1512
    %v1545 = vadd.f32 %v1285, %v1513
    %v1546 = vadd.f32 %v1286, %v1514
    %v1547 = vadd.f32 %v1287, %v1515
    %v1548 = vadd.f32 %v1288, %v1516
    %v1549 = vadd.f32 %v1289, %v1517
    %v1550 = vadd.f32 %v1290, %v1518
    %v1551 = vadd.f32 %v1291, %v1519
    %v1552 = vadd.f32 %v1292, %v1520
    %v1553 = vadd.f32 %v1293, %v1521
    %v1554 = vadd.f32 %v1294, %v1522
    %v1555 = vadd.f32 %v1295, %v1523
    %v1556 = vadd.f32 %v1296, %v1524
    %v1557 = vadd.f32 %v1297, %v1525
    %v1558 = vadd.f32 %v1298, %v1526
    %v1559 = vadd.f32 %v1299, %v1527
    %v1560 = vadd.f32 %v1300, %v1528
    %v1561 = vld [vmem:[%s228 + $0x9] sm:$0xff]
    %v1562 = vld [vmem:[%s228 + $0x11] sm:$0xff]
    %v1563 = vld [vmem:[%s228 + $0x29] sm:$0xff]
    %v1564 = vld [vmem:[%s228 + $0x31] sm:$0xff]
    %v1565 = vld [vmem:[%s228 + $0x49] sm:$0xff]
    %v1566 = vld [vmem:[%s228 + $0x51] sm:$0xff]
    %v1567 = vld [vmem:[%s228 + $0x69] sm:$0xff]
    %v1568 = vld [vmem:[%s228 + $0x71] sm:$0xff]
    %v1569 = vld [vmem:[%s228 + $0x89] sm:$0xff]
    %v1570 = vld [vmem:[%s228 + $0x91] sm:$0xff]
    %v1571 = vld [vmem:[%s228 + $0xa9] sm:$0xff]
    %v1572 = vld [vmem:[%s228 + $0xb1] sm:$0xff]
    %v1573 = vld [vmem:[%s228 + $0xc9] sm:$0xff]
    %v1574 = vld [vmem:[%s228 + $0xd1] sm:$0xff]
    %v1575 = vld [vmem:[%s228 + $0xe9] sm:$0xff]
    %v1576 = vld [vmem:[%s228 + $0xf1] sm:$0xff]
    %v1577 = vld [vmem:[%s228 + $0x109] sm:$0xff]
    %v1578 = vld [vmem:[%s228 + $0x111] sm:$0xff]
    %v1579 = vld [vmem:[%s228 + $0x129] sm:$0xff]
    %v1580 = vld [vmem:[%s228 + $0x131] sm:$0xff]
    %v1581 = vld [vmem:[%s228 + $0x149] sm:$0xff]
    %v1582 = vld [vmem:[%s228 + $0x151] sm:$0xff]
    %v1583 = vld [vmem:[%s228 + $0x169] sm:$0xff]
    %v1584 = vld [vmem:[%s228 + $0x171] sm:$0xff]
    %v1585 = vld [vmem:[%s228 + $0x189] sm:$0xff]
    %v1586 = vld [vmem:[%s228 + $0x191] sm:$0xff]
    %v1587 = vld [vmem:[%s228 + $0x1a9] sm:$0xff]
    %v1588 = vld [vmem:[%s228 + $0x1b1] sm:$0xff]
    %v1589 = vld [vmem:[%s228 + $0x1c9] sm:$0xff]
    %v1590 = vld [vmem:[%s228 + $0x1d1] sm:$0xff]
    %v1591 = vld [vmem:[%s228 + $0x1e9] sm:$0xff]
    %v1592 = vld [vmem:[%s228 + $0x1f1] sm:$0xff]
    %1594 = vset.pattern.permute.xlu0 0
    %1595 = vperm.xlu0 %1594, %v1561
    %v1596 = vpop.permute.xlu0 %1595
    %1599 = vset.pattern.permute.xlu0 0
    %1600 = vperm.xlu0 %1599, %v1562
    %v1601 = vpop.permute.xlu0 %1600
    %1604 = vset.pattern.permute.xlu0 0
    %1605 = vperm.xlu0 %1604, %v1563
    %v1606 = vpop.permute.xlu0 %1605
    %1609 = vset.pattern.permute.xlu0 0
    %1610 = vperm.xlu0 %1609, %v1564
    %v1611 = vpop.permute.xlu0 %1610
    %1614 = vset.pattern.permute.xlu0 0
    %1615 = vperm.xlu0 %1614, %v1565
    %v1616 = vpop.permute.xlu0 %1615
    %1619 = vset.pattern.permute.xlu0 0
    %1620 = vperm.xlu0 %1619, %v1566
    %v1621 = vpop.permute.xlu0 %1620
    %1624 = vset.pattern.permute.xlu0 0
    %1625 = vperm.xlu0 %1624, %v1567
    %v1626 = vpop.permute.xlu0 %1625
    %1629 = vset.pattern.permute.xlu0 0
    %1630 = vperm.xlu0 %1629, %v1568
    %v1631 = vpop.permute.xlu0 %1630
    %1634 = vset.pattern.permute.xlu0 0
    %1635 = vperm.xlu0 %1634, %v1569
    %v1636 = vpop.permute.xlu0 %1635
    %1639 = vset.pattern.permute.xlu0 0
    %1640 = vperm.xlu0 %1639, %v1570
    %v1641 = vpop.permute.xlu0 %1640
    %1644 = vset.pattern.permute.xlu0 0
    %1645 = vperm.xlu0 %1644, %v1571
    %v1646 = vpop.permute.xlu0 %1645
    %1649 = vset.pattern.permute.xlu0 0
    %1650 = vperm.xlu0 %1649, %v1572
    %v1651 = vpop.permute.xlu0 %1650
    %1654 = vset.pattern.permute.xlu0 0
    %1655 = vperm.xlu0 %1654, %v1573
    %v1656 = vpop.permute.xlu0 %1655
    %1659 = vset.pattern.permute.xlu0 0
    %1660 = vperm.xlu0 %1659, %v1574
    %v1661 = vpop.permute.xlu0 %1660
    %1664 = vset.pattern.permute.xlu0 0
    %1665 = vperm.xlu0 %1664, %v1575
    %v1666 = vpop.permute.xlu0 %1665
    %1669 = vset.pattern.permute.xlu0 0
    %1670 = vperm.xlu0 %1669, %v1576
    %v1671 = vpop.permute.xlu0 %1670
    %1674 = vset.pattern.permute.xlu0 0
    %1675 = vperm.xlu0 %1674, %v1577
    %v1676 = vpop.permute.xlu0 %1675
    %1679 = vset.pattern.permute.xlu0 0
    %1680 = vperm.xlu0 %1679, %v1578
    %v1681 = vpop.permute.xlu0 %1680
    %1684 = vset.pattern.permute.xlu0 0
    %1685 = vperm.xlu0 %1684, %v1579
    %v1686 = vpop.permute.xlu0 %1685
    %1689 = vset.pattern.permute.xlu0 0
    %1690 = vperm.xlu0 %1689, %v1580
    %v1691 = vpop.permute.xlu0 %1690
    %1694 = vset.pattern.permute.xlu0 0
    %1695 = vperm.xlu0 %1694, %v1581
    %v1696 = vpop.permute.xlu0 %1695
    %1699 = vset.pattern.permute.xlu0 0
    %1700 = vperm.xlu0 %1699, %v1582
    %v1701 = vpop.permute.xlu0 %1700
    %1704 = vset.pattern.permute.xlu0 0
    %1705 = vperm.xlu0 %1704, %v1583
    %v1706 = vpop.permute.xlu0 %1705
    %1709 = vset.pattern.permute.xlu0 0
    %1710 = vperm.xlu0 %1709, %v1584
    %v1711 = vpop.permute.xlu0 %1710
    %1714 = vset.pattern.permute.xlu0 0
    %1715 = vperm.xlu0 %1714, %v1585
    %v1716 = vpop.permute.xlu0 %1715
    %1719 = vset.pattern.permute.xlu0 0
    %1720 = vperm.xlu0 %1719, %v1586
    %v1721 = vpop.permute.xlu0 %1720
    %1724 = vset.pattern.permute.xlu0 0
    %1725 = vperm.xlu0 %1724, %v1587
    %v1726 = vpop.permute.xlu0 %1725
    %1729 = vset.pattern.permute.xlu0 0
    %1730 = vperm.xlu0 %1729, %v1588
    %v1731 = vpop.permute.xlu0 %1730
    %1734 = vset.pattern.permute.xlu0 0
    %1735 = vperm.xlu0 %1734, %v1589
    %v1736 = vpop.permute.xlu0 %1735
    %1739 = vset.pattern.permute.xlu0 0
    %1740 = vperm.xlu0 %1739, %v1590
    %v1741 = vpop.permute.xlu0 %1740
    %1744 = vset.pattern.permute.xlu0 0
    %1745 = vperm.xlu0 %1744, %v1591
    %v1746 = vpop.permute.xlu0 %1745
    %1749 = vset.pattern.permute.xlu0 0
    %1750 = vperm.xlu0 %1749, %v1592
    %v1751 = vpop.permute.xlu0 %1750
    %v1753 = vlaneseq
    %v1754 = vshrl.u32 %v1753, 7
    %v1755 = vsub.s32 5, %v1754
    %v1756 = vrot.slane %v173, %v1755
    %v1757 = vmul.f32 %v1596, %v1756
    %v1758 = vmul.f32 %v1601, %v1756
    %v1759 = vmul.f32 %v1606, %v1756
    %v1760 = vmul.f32 %v1611, %v1756
    %v1761 = vmul.f32 %v1616, %v1756
    %v1762 = vmul.f32 %v1621, %v1756
    %v1763 = vmul.f32 %v1626, %v1756
    %v1764 = vmul.f32 %v1631, %v1756
    %v1765 = vmul.f32 %v1636, %v1756
    %v1766 = vmul.f32 %v1641, %v1756
    %v1767 = vmul.f32 %v1646, %v1756
    %v1768 = vmul.f32 %v1651, %v1756
    %v1769 = vmul.f32 %v1656, %v1756
    %v1770 = vmul.f32 %v1661, %v1756
    %v1771 = vmul.f32 %v1666, %v1756
    %v1772 = vmul.f32 %v1671, %v1756
    %v1773 = vmul.f32 %v1676, %v1756
    %v1774 = vmul.f32 %v1681, %v1756
    %v1775 = vmul.f32 %v1686, %v1756
    %v1776 = vmul.f32 %v1691, %v1756
    %v1777 = vmul.f32 %v1696, %v1756
    %v1778 = vmul.f32 %v1701, %v1756
    %v1779 = vmul.f32 %v1706, %v1756
    %v1780 = vmul.f32 %v1711, %v1756
    %v1781 = vmul.f32 %v1716, %v1756
    %v1782 = vmul.f32 %v1721, %v1756
    %v1783 = vmul.f32 %v1726, %v1756
    %v1784 = vmul.f32 %v1731, %v1756
    %v1785 = vmul.f32 %v1736, %v1756
    %v1786 = vmul.f32 %v1741, %v1756
    %v1787 = vmul.f32 %v1746, %v1756
    %v1788 = vmul.f32 %v1751, %v1756
    %v1789 = vadd.f32 %v1529, %v1757
    %v1790 = vadd.f32 %v1530, %v1758
    %v1791 = vadd.f32 %v1531, %v1759
    %v1792 = vadd.f32 %v1532, %v1760
    %v1793 = vadd.f32 %v1533, %v1761
    %v1794 = vadd.f32 %v1534, %v1762
    %v1795 = vadd.f32 %v1535, %v1763
    %v1796 = vadd.f32 %v1536, %v1764
    %v1797 = vadd.f32 %v1537, %v1765
    %v1798 = vadd.f32 %v1538, %v1766
    %v1799 = vadd.f32 %v1539, %v1767
    %v1800 = vadd.f32 %v1540, %v1768
    %v1801 = vadd.f32 %v1541, %v1769
    %v1802 = vadd.f32 %v1542, %v1770
    %v1803 = vadd.f32 %v1543, %v1771
    %v1804 = vadd.f32 %v1544, %v1772
    %v1805 = vadd.f32 %v1545, %v1773
    %v1806 = vadd.f32 %v1546, %v1774
    %v1807 = vadd.f32 %v1547, %v1775
    %v1808 = vadd.f32 %v1548, %v1776
    %v1809 = vadd.f32 %v1549, %v1777
    %v1810 = vadd.f32 %v1550, %v1778
    %v1811 = vadd.f32 %v1551, %v1779
    %v1812 = vadd.f32 %v1552, %v1780
    %v1813 = vadd.f32 %v1553, %v1781
    %v1814 = vadd.f32 %v1554, %v1782
    %v1815 = vadd.f32 %v1555, %v1783
    %v1816 = vadd.f32 %v1556, %v1784
    %v1817 = vadd.f32 %v1557, %v1785
    %v1818 = vadd.f32 %v1558, %v1786
    %v1819 = vadd.f32 %v1559, %v1787
    %v1820 = vadd.f32 %v1560, %v1788
    %s1821 = scalar_lea.vmem [#allocation2], 64
    %v1822 = vld [vmem:[%s1821 + $0x7] sm:$0xff]
    %v1823 = vld [vmem:[%s1821 + $0xf] sm:$0xff]
    %v1824 = vld [vmem:[%s1821 + $0x27] sm:$0xff]
    %v1825 = vld [vmem:[%s1821 + $0x2f] sm:$0xff]
    %v1826 = vld [vmem:[%s1821 + $0x47] sm:$0xff]
    %v1827 = vld [vmem:[%s1821 + $0x4f] sm:$0xff]
    %v1828 = vld [vmem:[%s1821 + $0x67] sm:$0xff]
    %v1829 = vld [vmem:[%s1821 + $0x6f] sm:$0xff]
    %v1830 = vld [vmem:[%s1821 + $0x87] sm:$0xff]
    %v1831 = vld [vmem:[%s1821 + $0x8f] sm:$0xff]
    %v1832 = vld [vmem:[%s1821 + $0xa7] sm:$0xff]
    %v1833 = vld [vmem:[%s1821 + $0xaf] sm:$0xff]
    %v1834 = vld [vmem:[%s1821 + $0xc7] sm:$0xff]
    %v1835 = vld [vmem:[%s1821 + $0xcf] sm:$0xff]
    %v1836 = vld [vmem:[%s1821 + $0xe7] sm:$0xff]
    %v1837 = vld [vmem:[%s1821 + $0xef] sm:$0xff]
    %v1838 = vld [vmem:[%s1821 + $0x107] sm:$0xff]
    %v1839 = vld [vmem:[%s1821 + $0x10f] sm:$0xff]
    %v1840 = vld [vmem:[%s1821 + $0x127] sm:$0xff]
    %v1841 = vld [vmem:[%s1821 + $0x12f] sm:$0xff]
    %v1842 = vld [vmem:[%s1821 + $0x147] sm:$0xff]
    %v1843 = vld [vmem:[%s1821 + $0x14f] sm:$0xff]
    %v1844 = vld [vmem:[%s1821 + $0x167] sm:$0xff]
    %v1845 = vld [vmem:[%s1821 + $0x16f] sm:$0xff]
    %v1846 = vld [vmem:[%s1821 + $0x187] sm:$0xff]
    %v1847 = vld [vmem:[%s1821 + $0x18f] sm:$0xff]
    %v1848 = vld [vmem:[%s1821 + $0x1a7] sm:$0xff]
    %v1849 = vld [vmem:[%s1821 + $0x1af] sm:$0xff]
    %v1850 = vld [vmem:[%s1821 + $0x1c7] sm:$0xff]
    %v1851 = vld [vmem:[%s1821 + $0x1cf] sm:$0xff]
    %v1852 = vld [vmem:[%s1821 + $0x1e7] sm:$0xff]
    %v1853 = vld [vmem:[%s1821 + $0x1ef] sm:$0xff]
    %1855 = vset.pattern.permute.xlu0 0
    %1856 = vperm.xlu0 %1855, %v1822
    %v1857 = vpop.permute.xlu0 %1856
    %1860 = vset.pattern.permute.xlu0 0
    %1861 = vperm.xlu0 %1860, %v1823
    %v1862 = vpop.permute.xlu0 %1861
    %1865 = vset.pattern.permute.xlu0 0
    %1866 = vperm.xlu0 %1865, %v1824
    %v1867 = vpop.permute.xlu0 %1866
    %1870 = vset.pattern.permute.xlu0 0
    %1871 = vperm.xlu0 %1870, %v1825
    %v1872 = vpop.permute.xlu0 %1871
    %1875 = vset.pattern.permute.xlu0 0
    %1876 = vperm.xlu0 %1875, %v1826
    %v1877 = vpop.permute.xlu0 %1876
    %1880 = vset.pattern.permute.xlu0 0
    %1881 = vperm.xlu0 %1880, %v1827
    %v1882 = vpop.permute.xlu0 %1881
    %1885 = vset.pattern.permute.xlu0 0
    %1886 = vperm.xlu0 %1885, %v1828
    %v1887 = vpop.permute.xlu0 %1886
    %1890 = vset.pattern.permute.xlu0 0
    %1891 = vperm.xlu0 %1890, %v1829
    %v1892 = vpop.permute.xlu0 %1891
    %1895 = vset.pattern.permute.xlu0 0
    %1896 = vperm.xlu0 %1895, %v1830
    %v1897 = vpop.permute.xlu0 %1896
    %1900 = vset.pattern.permute.xlu0 0
    %1901 = vperm.xlu0 %1900, %v1831
    %v1902 = vpop.permute.xlu0 %1901
    %1905 = vset.pattern.permute.xlu0 0
    %1906 = vperm.xlu0 %1905, %v1832
    %v1907 = vpop.permute.xlu0 %1906
    %1910 = vset.pattern.permute.xlu0 0
    %1911 = vperm.xlu0 %1910, %v1833
    %v1912 = vpop.permute.xlu0 %1911
    %1915 = vset.pattern.permute.xlu0 0
    %1916 = vperm.xlu0 %1915, %v1834
    %v1917 = vpop.permute.xlu0 %1916
    %1920 = vset.pattern.permute.xlu0 0
    %1921 = vperm.xlu0 %1920, %v1835
    %v1922 = vpop.permute.xlu0 %1921
    %1925 = vset.pattern.permute.xlu0 0
    %1926 = vperm.xlu0 %1925, %v1836
    %v1927 = vpop.permute.xlu0 %1926
    %1930 = vset.pattern.permute.xlu0 0
    %1931 = vperm.xlu0 %1930, %v1837
    %v1932 = vpop.permute.xlu0 %1931
    %1935 = vset.pattern.permute.xlu0 0
    %1936 = vperm.xlu0 %1935, %v1838
    %v1937 = vpop.permute.xlu0 %1936
    %1940 = vset.pattern.permute.xlu0 0
    %1941 = vperm.xlu0 %1940, %v1839
    %v1942 = vpop.permute.xlu0 %1941
    %1945 = vset.pattern.permute.xlu0 0
    %1946 = vperm.xlu0 %1945, %v1840
    %v1947 = vpop.permute.xlu0 %1946
    %1950 = vset.pattern.permute.xlu0 0
    %1951 = vperm.xlu0 %1950, %v1841
    %v1952 = vpop.permute.xlu0 %1951
    %1955 = vset.pattern.permute.xlu0 0
    %1956 = vperm.xlu0 %1955, %v1842
    %v1957 = vpop.permute.xlu0 %1956
    %1960 = vset.pattern.permute.xlu0 0
    %1961 = vperm.xlu0 %1960, %v1843
    %v1962 = vpop.permute.xlu0 %1961
    %1965 = vset.pattern.permute.xlu0 0
    %1966 = vperm.xlu0 %1965, %v1844
    %v1967 = vpop.permute.xlu0 %1966
    %1970 = vset.pattern.permute.xlu0 0
    %1971 = vperm.xlu0 %1970, %v1845
    %v1972 = vpop.permute.xlu0 %1971
    %1975 = vset.pattern.permute.xlu0 0
    %1976 = vperm.xlu0 %1975, %v1846
    %v1977 = vpop.permute.xlu0 %1976
    %1980 = vset.pattern.permute.xlu0 0
    %1981 = vperm.xlu0 %1980, %v1847
    %v1982 = vpop.permute.xlu0 %1981
    %1985 = vset.pattern.permute.xlu0 0
    %1986 = vperm.xlu0 %1985, %v1848
    %v1987 = vpop.permute.xlu0 %1986
    %1990 = vset.pattern.permute.xlu0 0
    %1991 = vperm.xlu0 %1990, %v1849
    %v1992 = vpop.permute.xlu0 %1991
    %1995 = vset.pattern.permute.xlu0 0
    %1996 = vperm.xlu0 %1995, %v1850
    %v1997 = vpop.permute.xlu0 %1996
    %2000 = vset.pattern.permute.xlu0 0
    %2001 = vperm.xlu0 %2000, %v1851
    %v2002 = vpop.permute.xlu0 %2001
    %2005 = vset.pattern.permute.xlu0 0
    %2006 = vperm.xlu0 %2005, %v1852
    %v2007 = vpop.permute.xlu0 %2006
    %2010 = vset.pattern.permute.xlu0 0
    %2011 = vperm.xlu0 %2010, %v1853
    %v2012 = vpop.permute.xlu0 %2011
    %v2014 = vlaneseq
    %v2015 = vshrl.u32 %v2014, 7
    %v2016 = vsub.s32 6, %v2015
    %v2017 = vrot.slane %v173, %v2016
    %v2018 = vmul.f32 %v1857, %v2017
    %v2019 = vmul.f32 %v1862, %v2017
    %v2020 = vmul.f32 %v1867, %v2017
    %v2021 = vmul.f32 %v1872, %v2017
    %v2022 = vmul.f32 %v1877, %v2017
    %v2023 = vmul.f32 %v1882, %v2017
    %v2024 = vmul.f32 %v1887, %v2017
    %v2025 = vmul.f32 %v1892, %v2017
    %v2026 = vmul.f32 %v1897, %v2017
    %v2027 = vmul.f32 %v1902, %v2017
    %v2028 = vmul.f32 %v1907, %v2017
    %v2029 = vmul.f32 %v1912, %v2017
    %v2030 = vmul.f32 %v1917, %v2017
    %v2031 = vmul.f32 %v1922, %v2017
    %v2032 = vmul.f32 %v1927, %v2017
    %v2033 = vmul.f32 %v1932, %v2017
    %v2034 = vmul.f32 %v1937, %v2017
    %v2035 = vmul.f32 %v1942, %v2017
    %v2036 = vmul.f32 %v1947, %v2017
    %v2037 = vmul.f32 %v1952, %v2017
    %v2038 = vmul.f32 %v1957, %v2017
    %v2039 = vmul.f32 %v1962, %v2017
    %v2040 = vmul.f32 %v1967, %v2017
    %v2041 = vmul.f32 %v1972, %v2017
    %v2042 = vmul.f32 %v1977, %v2017
    %v2043 = vmul.f32 %v1982, %v2017
    %v2044 = vmul.f32 %v1987, %v2017
    %v2045 = vmul.f32 %v1992, %v2017
    %v2046 = vmul.f32 %v1997, %v2017
    %v2047 = vmul.f32 %v2002, %v2017
    %v2048 = vmul.f32 %v2007, %v2017
    %v2049 = vmul.f32 %v2012, %v2017
    %v2050 = vadd.f32 %v1789, %v2018
    %v2051 = vadd.f32 %v1790, %v2019
    %v2052 = vadd.f32 %v1791, %v2020
    %v2053 = vadd.f32 %v1792, %v2021
    %v2054 = vadd.f32 %v1793, %v2022
    %v2055 = vadd.f32 %v1794, %v2023
    %v2056 = vadd.f32 %v1795, %v2024
    %v2057 = vadd.f32 %v1796, %v2025
    %v2058 = vadd.f32 %v1797, %v2026
    %v2059 = vadd.f32 %v1798, %v2027
    %v2060 = vadd.f32 %v1799, %v2028
    %v2061 = vadd.f32 %v1800, %v2029
    %v2062 = vadd.f32 %v1801, %v2030
    %v2063 = vadd.f32 %v1802, %v2031
    %v2064 = vadd.f32 %v1803, %v2032
    %v2065 = vadd.f32 %v1804, %v2033
    %v2066 = vadd.f32 %v1805, %v2034
    %v2067 = vadd.f32 %v1806, %v2035
    %v2068 = vadd.f32 %v1807, %v2036
    %v2069 = vadd.f32 %v1808, %v2037
    %v2070 = vadd.f32 %v1809, %v2038
    %v2071 = vadd.f32 %v1810, %v2039
    %v2072 = vadd.f32 %v1811, %v2040
    %v2073 = vadd.f32 %v1812, %v2041
    %v2074 = vadd.f32 %v1813, %v2042
    %v2075 = vadd.f32 %v1814, %v2043
    %v2076 = vadd.f32 %v1815, %v2044
    %v2077 = vadd.f32 %v1816, %v2045
    %v2078 = vadd.f32 %v1817, %v2046
    %v2079 = vadd.f32 %v1818, %v2047
    %v2080 = vadd.f32 %v1819, %v2048
    %v2081 = vadd.f32 %v1820, %v2049
    %v2082 = vld [vmem:[%s1821 + $0x8] sm:$0xff]
    %v2083 = vld [vmem:[%s1821 + $0x10] sm:$0xff]
    %v2084 = vld [vmem:[%s1821 + $0x28] sm:$0xff]
    %v2085 = vld [vmem:[%s1821 + $0x30] sm:$0xff]
    %v2086 = vld [vmem:[%s1821 + $0x48] sm:$0xff]
    %v2087 = vld [vmem:[%s1821 + $0x50] sm:$0xff]
    %v2088 = vld [vmem:[%s1821 + $0x68] sm:$0xff]
    %v2089 = vld [vmem:[%s1821 + $0x70] sm:$0xff]
    %v2090 = vld [vmem:[%s1821 + $0x88] sm:$0xff]
    %v2091 = vld [vmem:[%s1821 + $0x90] sm:$0xff]
    %v2092 = vld [vmem:[%s1821 + $0xa8] sm:$0xff]
    %v2093 = vld [vmem:[%s1821 + $0xb0] sm:$0xff]
    %v2094 = vld [vmem:[%s1821 + $0xc8] sm:$0xff]
    %v2095 = vld [vmem:[%s1821 + $0xd0] sm:$0xff]
    %v2096 = vld [vmem:[%s1821 + $0xe8] sm:$0xff]
    %v2097 = vld [vmem:[%s1821 + $0xf0] sm:$0xff]
    %v2098 = vld [vmem:[%s1821 + $0x108] sm:$0xff]
    %v2099 = vld [vmem:[%s1821 + $0x110] sm:$0xff]
    %v2100 = vld [vmem:[%s1821 + $0x128] sm:$0xff]
    %v2101 = vld [vmem:[%s1821 + $0x130] sm:$0xff]
    %v2102 = vld [vmem:[%s1821 + $0x148] sm:$0xff]
    %v2103 = vld [vmem:[%s1821 + $0x150] sm:$0xff]
    %v2104 = vld [vmem:[%s1821 + $0x168] sm:$0xff]
    %v2105 = vld [vmem:[%s1821 + $0x170] sm:$0xff]
    %v2106 = vld [vmem:[%s1821 + $0x188] sm:$0xff]
    %v2107 = vld [vmem:[%s1821 + $0x190] sm:$0xff]
    %v2108 = vld [vmem:[%s1821 + $0x1a8] sm:$0xff]
    %v2109 = vld [vmem:[%s1821 + $0x1b0] sm:$0xff]
    %v2110 = vld [vmem:[%s1821 + $0x1c8] sm:$0xff]
    %v2111 = vld [vmem:[%s1821 + $0x1d0] sm:$0xff]
    %v2112 = vld [vmem:[%s1821 + $0x1e8] sm:$0xff]
    %v2113 = vld [vmem:[%s1821 + $0x1f0] sm:$0xff]
    %2115 = vset.pattern.permute.xlu0 0
    %2116 = vperm.xlu0 %2115, %v2082
    %v2117 = vpop.permute.xlu0 %2116
    %2120 = vset.pattern.permute.xlu0 0
    %2121 = vperm.xlu0 %2120, %v2083
    %v2122 = vpop.permute.xlu0 %2121
    %2125 = vset.pattern.permute.xlu0 0
    %2126 = vperm.xlu0 %2125, %v2084
    %v2127 = vpop.permute.xlu0 %2126
    %2130 = vset.pattern.permute.xlu0 0
    %2131 = vperm.xlu0 %2130, %v2085
    %v2132 = vpop.permute.xlu0 %2131
    %2135 = vset.pattern.permute.xlu0 0
    %2136 = vperm.xlu0 %2135, %v2086
    %v2137 = vpop.permute.xlu0 %2136
    %2140 = vset.pattern.permute.xlu0 0
    %2141 = vperm.xlu0 %2140, %v2087
    %v2142 = vpop.permute.xlu0 %2141
    %2145 = vset.pattern.permute.xlu0 0
    %2146 = vperm.xlu0 %2145, %v2088
    %v2147 = vpop.permute.xlu0 %2146
    %2150 = vset.pattern.permute.xlu0 0
    %2151 = vperm.xlu0 %2150, %v2089
    %v2152 = vpop.permute.xlu0 %2151
    %2155 = vset.pattern.permute.xlu0 0
    %2156 = vperm.xlu0 %2155, %v2090
    %v2157 = vpop.permute.xlu0 %2156
    %2160 = vset.pattern.permute.xlu0 0
    %2161 = vperm.xlu0 %2160, %v2091
    %v2162 = vpop.permute.xlu0 %2161
    %2165 = vset.pattern.permute.xlu0 0
    %2166 = vperm.xlu0 %2165, %v2092
    %v2167 = vpop.permute.xlu0 %2166
    %2170 = vset.pattern.permute.xlu0 0
    %2171 = vperm.xlu0 %2170, %v2093
    %v2172 = vpop.permute.xlu0 %2171
    %2175 = vset.pattern.permute.xlu0 0
    %2176 = vperm.xlu0 %2175, %v2094
    %v2177 = vpop.permute.xlu0 %2176
    %2180 = vset.pattern.permute.xlu0 0
    %2181 = vperm.xlu0 %2180, %v2095
    %v2182 = vpop.permute.xlu0 %2181
    %2185 = vset.pattern.permute.xlu0 0
    %2186 = vperm.xlu0 %2185, %v2096
    %v2187 = vpop.permute.xlu0 %2186
    %2190 = vset.pattern.permute.xlu0 0
    %2191 = vperm.xlu0 %2190, %v2097
    %v2192 = vpop.permute.xlu0 %2191
    %2195 = vset.pattern.permute.xlu0 0
    %2196 = vperm.xlu0 %2195, %v2098
    %v2197 = vpop.permute.xlu0 %2196
    %2200 = vset.pattern.permute.xlu0 0
    %2201 = vperm.xlu0 %2200, %v2099
    %v2202 = vpop.permute.xlu0 %2201
    %2205 = vset.pattern.permute.xlu0 0
    %2206 = vperm.xlu0 %2205, %v2100
    %v2207 = vpop.permute.xlu0 %2206
    %2210 = vset.pattern.permute.xlu0 0
    %2211 = vperm.xlu0 %2210, %v2101
    %v2212 = vpop.permute.xlu0 %2211
    %2215 = vset.pattern.permute.xlu0 0
    %2216 = vperm.xlu0 %2215, %v2102
    %v2217 = vpop.permute.xlu0 %2216
    %2220 = vset.pattern.permute.xlu0 0
    %2221 = vperm.xlu0 %2220, %v2103
    %v2222 = vpop.permute.xlu0 %2221
    %2225 = vset.pattern.permute.xlu0 0
    %2226 = vperm.xlu0 %2225, %v2104
    %v2227 = vpop.permute.xlu0 %2226
    %2230 = vset.pattern.permute.xlu0 0
    %2231 = vperm.xlu0 %2230, %v2105
    %v2232 = vpop.permute.xlu0 %2231
    %2235 = vset.pattern.permute.xlu0 0
    %2236 = vperm.xlu0 %2235, %v2106
    %v2237 = vpop.permute.xlu0 %2236
    %2240 = vset.pattern.permute.xlu0 0
    %2241 = vperm.xlu0 %2240, %v2107
    %v2242 = vpop.permute.xlu0 %2241
    %2245 = vset.pattern.permute.xlu0 0
    %2246 = vperm.xlu0 %2245, %v2108
    %v2247 = vpop.permute.xlu0 %2246
    %2250 = vset.pattern.permute.xlu0 0
    %2251 = vperm.xlu0 %2250, %v2109
    %v2252 = vpop.permute.xlu0 %2251
    %2255 = vset.pattern.permute.xlu0 0
    %2256 = vperm.xlu0 %2255, %v2110
    %v2257 = vpop.permute.xlu0 %2256
    %2260 = vset.pattern.permute.xlu0 0
    %2261 = vperm.xlu0 %2260, %v2111
    %v2262 = vpop.permute.xlu0 %2261
    %2265 = vset.pattern.permute.xlu0 0
    %2266 = vperm.xlu0 %2265, %v2112
    %v2267 = vpop.permute.xlu0 %2266
    %2270 = vset.pattern.permute.xlu0 0
    %2271 = vperm.xlu0 %2270, %v2113
    %v2272 = vpop.permute.xlu0 %2271
    %v2274 = vlaneseq
    %v2275 = vshrl.u32 %v2274, 7
    %v2276 = vsub.s32 7, %v2275
    %v2277 = vrot.slane %v173, %v2276
    %v2278 = vmul.f32 %v2117, %v2277
    %v2279 = vmul.f32 %v2122, %v2277
    %v2280 = vmul.f32 %v2127, %v2277
    %v2281 = vmul.f32 %v2132, %v2277
    %v2282 = vmul.f32 %v2137, %v2277
    %v2283 = vmul.f32 %v2142, %v2277
    %v2284 = vmul.f32 %v2147, %v2277
    %v2285 = vmul.f32 %v2152, %v2277
    %v2286 = vmul.f32 %v2157, %v2277
    %v2287 = vmul.f32 %v2162, %v2277
    %v2288 = vmul.f32 %v2167, %v2277
    %v2289 = vmul.f32 %v2172, %v2277
    %v2290 = vmul.f32 %v2177, %v2277
    %v2291 = vmul.f32 %v2182, %v2277
    %v2292 = vmul.f32 %v2187, %v2277
    %v2293 = vmul.f32 %v2192, %v2277
    %v2294 = vmul.f32 %v2197, %v2277
    %v2295 = vmul.f32 %v2202, %v2277
    %v2296 = vmul.f32 %v2207, %v2277
    %v2297 = vmul.f32 %v2212, %v2277
    %v2298 = vmul.f32 %v2217, %v2277
    %v2299 = vmul.f32 %v2222, %v2277
    %v2300 = vmul.f32 %v2227, %v2277
    %v2301 = vmul.f32 %v2232, %v2277
    %v2302 = vmul.f32 %v2237, %v2277
    %v2303 = vmul.f32 %v2242, %v2277
    %v2304 = vmul.f32 %v2247, %v2277
    %v2305 = vmul.f32 %v2252, %v2277
    %v2306 = vmul.f32 %v2257, %v2277
    %v2307 = vmul.f32 %v2262, %v2277
    %v2308 = vmul.f32 %v2267, %v2277
    %v2309 = vmul.f32 %v2272, %v2277
    %v2310 = vadd.f32 %v2050, %v2278
    %v2311 = vadd.f32 %v2051, %v2279
    %v2312 = vadd.f32 %v2052, %v2280
    %v2313 = vadd.f32 %v2053, %v2281
    %v2314 = vadd.f32 %v2054, %v2282
    %v2315 = vadd.f32 %v2055, %v2283
    %v2316 = vadd.f32 %v2056, %v2284
    %v2317 = vadd.f32 %v2057, %v2285
    %v2318 = vadd.f32 %v2058, %v2286
    %v2319 = vadd.f32 %v2059, %v2287
    %v2320 = vadd.f32 %v2060, %v2288
    %v2321 = vadd.f32 %v2061, %v2289
    %v2322 = vadd.f32 %v2062, %v2290
    %v2323 = vadd.f32 %v2063, %v2291
    %v2324 = vadd.f32 %v2064, %v2292
    %v2325 = vadd.f32 %v2065, %v2293
    %v2326 = vadd.f32 %v2066, %v2294
    %v2327 = vadd.f32 %v2067, %v2295
    %v2328 = vadd.f32 %v2068, %v2296
    %v2329 = vadd.f32 %v2069, %v2297
    %v2330 = vadd.f32 %v2070, %v2298
    %v2331 = vadd.f32 %v2071, %v2299
    %v2332 = vadd.f32 %v2072, %v2300
    %v2333 = vadd.f32 %v2073, %v2301
    %v2334 = vadd.f32 %v2074, %v2302
    %v2335 = vadd.f32 %v2075, %v2303
    %v2336 = vadd.f32 %v2076, %v2304
    %v2337 = vadd.f32 %v2077, %v2305
    %v2338 = vadd.f32 %v2078, %v2306
    %v2339 = vadd.f32 %v2079, %v2307
    %v2340 = vadd.f32 %v2080, %v2308
    %v2341 = vadd.f32 %v2081, %v2309
    %v2342 = vld [vmem:[%s1821 + $0x9] sm:$0xff]
    %v2343 = vld [vmem:[%s1821 + $0x11] sm:$0xff]
    %v2344 = vld [vmem:[%s1821 + $0x29] sm:$0xff]
    %v2345 = vld [vmem:[%s1821 + $0x31] sm:$0xff]
    %v2346 = vld [vmem:[%s1821 + $0x49] sm:$0xff]
    %v2347 = vld [vmem:[%s1821 + $0x51] sm:$0xff]
    %v2348 = vld [vmem:[%s1821 + $0x69] sm:$0xff]
    %v2349 = vld [vmem:[%s1821 + $0x71] sm:$0xff]
    %v2350 = vld [vmem:[%s1821 + $0x89] sm:$0xff]
    %v2351 = vld [vmem:[%s1821 + $0x91] sm:$0xff]
    %v2352 = vld [vmem:[%s1821 + $0xa9] sm:$0xff]
    %v2353 = vld [vmem:[%s1821 + $0xb1] sm:$0xff]
    %v2354 = vld [vmem:[%s1821 + $0xc9] sm:$0xff]
    %v2355 = vld [vmem:[%s1821 + $0xd1] sm:$0xff]
    %v2356 = vld [vmem:[%s1821 + $0xe9] sm:$0xff]
    %v2357 = vld [vmem:[%s1821 + $0xf1] sm:$0xff]
    %v2358 = vld [vmem:[%s1821 + $0x109] sm:$0xff]
    %v2359 = vld [vmem:[%s1821 + $0x111] sm:$0xff]
    %v2360 = vld [vmem:[%s1821 + $0x129] sm:$0xff]
    %v2361 = vld [vmem:[%s1821 + $0x131] sm:$0xff]
    %v2362 = vld [vmem:[%s1821 + $0x149] sm:$0xff]
    %v2363 = vld [vmem:[%s1821 + $0x151] sm:$0xff]
    %v2364 = vld [vmem:[%s1821 + $0x169] sm:$0xff]
    %v2365 = vld [vmem:[%s1821 + $0x171] sm:$0xff]
    %v2366 = vld [vmem:[%s1821 + $0x189] sm:$0xff]
    %v2367 = vld [vmem:[%s1821 + $0x191] sm:$0xff]
    %v2368 = vld [vmem:[%s1821 + $0x1a9] sm:$0xff]
    %v2369 = vld [vmem:[%s1821 + $0x1b1] sm:$0xff]
    %v2370 = vld [vmem:[%s1821 + $0x1c9] sm:$0xff]
    %v2371 = vld [vmem:[%s1821 + $0x1d1] sm:$0xff]
    %v2372 = vld [vmem:[%s1821 + $0x1e9] sm:$0xff]
    %v2373 = vld [vmem:[%s1821 + $0x1f1] sm:$0xff]
    %2375 = vset.pattern.permute.xlu0 0
    %2376 = vperm.xlu0 %2375, %v2342
    %v2377 = vpop.permute.xlu0 %2376
    %2380 = vset.pattern.permute.xlu0 0
    %2381 = vperm.xlu0 %2380, %v2343
    %v2382 = vpop.permute.xlu0 %2381
    %2385 = vset.pattern.permute.xlu0 0
    %2386 = vperm.xlu0 %2385, %v2344
    %v2387 = vpop.permute.xlu0 %2386
    %2390 = vset.pattern.permute.xlu0 0
    %2391 = vperm.xlu0 %2390, %v2345
    %v2392 = vpop.permute.xlu0 %2391
    %2395 = vset.pattern.permute.xlu0 0
    %2396 = vperm.xlu0 %2395, %v2346
    %v2397 = vpop.permute.xlu0 %2396
    %2400 = vset.pattern.permute.xlu0 0
    %2401 = vperm.xlu0 %2400, %v2347
    %v2402 = vpop.permute.xlu0 %2401
    %2405 = vset.pattern.permute.xlu0 0
    %2406 = vperm.xlu0 %2405, %v2348
    %v2407 = vpop.permute.xlu0 %2406
    %2410 = vset.pattern.permute.xlu0 0
    %2411 = vperm.xlu0 %2410, %v2349
    %v2412 = vpop.permute.xlu0 %2411
    %2415 = vset.pattern.permute.xlu0 0
    %2416 = vperm.xlu0 %2415, %v2350
    %v2417 = vpop.permute.xlu0 %2416
    %2420 = vset.pattern.permute.xlu0 0
    %2421 = vperm.xlu0 %2420, %v2351
    %v2422 = vpop.permute.xlu0 %2421
    %2425 = vset.pattern.permute.xlu0 0
    %2426 = vperm.xlu0 %2425, %v2352
    %v2427 = vpop.permute.xlu0 %2426
    %2430 = vset.pattern.permute.xlu0 0
    %2431 = vperm.xlu0 %2430, %v2353
    %v2432 = vpop.permute.xlu0 %2431
    %2435 = vset.pattern.permute.xlu0 0
    %2436 = vperm.xlu0 %2435, %v2354
    %v2437 = vpop.permute.xlu0 %2436
    %2440 = vset.pattern.permute.xlu0 0
    %2441 = vperm.xlu0 %2440, %v2355
    %v2442 = vpop.permute.xlu0 %2441
    %2445 = vset.pattern.permute.xlu0 0
    %2446 = vperm.xlu0 %2445, %v2356
    %v2447 = vpop.permute.xlu0 %2446
    %2450 = vset.pattern.permute.xlu0 0
    %2451 = vperm.xlu0 %2450, %v2357
    %v2452 = vpop.permute.xlu0 %2451
    %2455 = vset.pattern.permute.xlu0 0
    %2456 = vperm.xlu0 %2455, %v2358
    %v2457 = vpop.permute.xlu0 %2456
    %2460 = vset.pattern.permute.xlu0 0
    %2461 = vperm.xlu0 %2460, %v2359
    %v2462 = vpop.permute.xlu0 %2461
    %2465 = vset.pattern.permute.xlu0 0
    %2466 = vperm.xlu0 %2465, %v2360
    %v2467 = vpop.permute.xlu0 %2466
    %2470 = vset.pattern.permute.xlu0 0
    %2471 = vperm.xlu0 %2470, %v2361
    %v2472 = vpop.permute.xlu0 %2471
    %2475 = vset.pattern.permute.xlu0 0
    %2476 = vperm.xlu0 %2475, %v2362
    %v2477 = vpop.permute.xlu0 %2476
    %2480 = vset.pattern.permute.xlu0 0
    %2481 = vperm.xlu0 %2480, %v2363
    %v2482 = vpop.permute.xlu0 %2481
    %2485 = vset.pattern.permute.xlu0 0
    %2486 = vperm.xlu0 %2485, %v2364
    %v2487 = vpop.permute.xlu0 %2486
    %2490 = vset.pattern.permute.xlu0 0
    %2491 = vperm.xlu0 %2490, %v2365
    %v2492 = vpop.permute.xlu0 %2491
    %2495 = vset.pattern.permute.xlu0 0
    %2496 = vperm.xlu0 %2495, %v2366
    %v2497 = vpop.permute.xlu0 %2496
    %2500 = vset.pattern.permute.xlu0 0
    %2501 = vperm.xlu0 %2500, %v2367
    %v2502 = vpop.permute.xlu0 %2501
    %2505 = vset.pattern.permute.xlu0 0
    %2506 = vperm.xlu0 %2505, %v2368
    %v2507 = vpop.permute.xlu0 %2506
    %2510 = vset.pattern.permute.xlu0 0
    %2511 = vperm.xlu0 %2510, %v2369
    %v2512 = vpop.permute.xlu0 %2511
    %2515 = vset.pattern.permute.xlu0 0
    %2516 = vperm.xlu0 %2515, %v2370
    %v2517 = vpop.permute.xlu0 %2516
    %2520 = vset.pattern.permute.xlu0 0
    %2521 = vperm.xlu0 %2520, %v2371
    %v2522 = vpop.permute.xlu0 %2521
    %2525 = vset.pattern.permute.xlu0 0
    %2526 = vperm.xlu0 %2525, %v2372
    %v2527 = vpop.permute.xlu0 %2526
    %2530 = vset.pattern.permute.xlu0 0
    %2531 = vperm.xlu0 %2530, %v2373
    %v2532 = vpop.permute.xlu0 %2531
    %v2534 = vlaneseq
    %v2535 = vshrl.u32 %v2534, 7
    %v2536 = vsub.s32 0, %v2535
    %v2537 = vrot.slane %v174, %v2536
    %v2538 = vmul.f32 %v2377, %v2537
    %v2539 = vmul.f32 %v2382, %v2537
    %v2540 = vmul.f32 %v2387, %v2537
    %v2541 = vmul.f32 %v2392, %v2537
    %v2542 = vmul.f32 %v2397, %v2537
    %v2543 = vmul.f32 %v2402, %v2537
    %v2544 = vmul.f32 %v2407, %v2537
    %v2545 = vmul.f32 %v2412, %v2537
    %v2546 = vmul.f32 %v2417, %v2537
    %v2547 = vmul.f32 %v2422, %v2537
    %v2548 = vmul.f32 %v2427, %v2537
    %v2549 = vmul.f32 %v2432, %v2537
    %v2550 = vmul.f32 %v2437, %v2537
    %v2551 = vmul.f32 %v2442, %v2537
    %v2552 = vmul.f32 %v2447, %v2537
    %v2553 = vmul.f32 %v2452, %v2537
    %v2554 = vmul.f32 %v2457, %v2537
    %v2555 = vmul.f32 %v2462, %v2537
    %v2556 = vmul.f32 %v2467, %v2537
    %v2557 = vmul.f32 %v2472, %v2537
    %v2558 = vmul.f32 %v2477, %v2537
    %v2559 = vmul.f32 %v2482, %v2537
    %v2560 = vmul.f32 %v2487, %v2537
    %v2561 = vmul.f32 %v2492, %v2537
    %v2562 = vmul.f32 %v2497, %v2537
    %v2563 = vmul.f32 %v2502, %v2537
    %v2564 = vmul.f32 %v2507, %v2537
    %v2565 = vmul.f32 %v2512, %v2537
    %v2566 = vmul.f32 %v2517, %v2537
    %v2567 = vmul.f32 %v2522, %v2537
    %v2568 = vmul.f32 %v2527, %v2537
    %v2569 = vmul.f32 %v2532, %v2537
    %v2570 = vadd.f32 %v2310, %v2538
    %v2571 = vadd.f32 %v2311, %v2539
    %v2572 = vadd.f32 %v2312, %v2540
    %v2573 = vadd.f32 %v2313, %v2541
    %v2574 = vadd.f32 %v2314, %v2542
    %v2575 = vadd.f32 %v2315, %v2543
    %v2576 = vadd.f32 %v2316, %v2544
    %v2577 = vadd.f32 %v2317, %v2545
    %v2578 = vadd.f32 %v2318, %v2546
    %v2579 = vadd.f32 %v2319, %v2547
    %v2580 = vadd.f32 %v2320, %v2548
    %v2581 = vadd.f32 %v2321, %v2549
    %v2582 = vadd.f32 %v2322, %v2550
    %v2583 = vadd.f32 %v2323, %v2551
    %v2584 = vadd.f32 %v2324, %v2552
    %v2585 = vadd.f32 %v2325, %v2553
    %v2586 = vadd.f32 %v2326, %v2554
    %v2587 = vadd.f32 %v2327, %v2555
    %v2588 = vadd.f32 %v2328, %v2556
    %v2589 = vadd.f32 %v2329, %v2557
    %v2590 = vadd.f32 %v2330, %v2558
    %v2591 = vadd.f32 %v2331, %v2559
    %v2592 = vadd.f32 %v2332, %v2560
    %v2593 = vadd.f32 %v2333, %v2561
    %v2594 = vadd.f32 %v2334, %v2562
    %v2595 = vadd.f32 %v2335, %v2563
    %v2596 = vadd.f32 %v2336, %v2564
    %v2597 = vadd.f32 %v2337, %v2565
    %v2598 = vadd.f32 %v2338, %v2566
    %v2599 = vadd.f32 %v2339, %v2567
    %v2600 = vadd.f32 %v2340, %v2568
    %v2601 = vadd.f32 %v2341, %v2569
    %v2603 = vlaneseq
    %v2604 = vshrl.u32 %v2603, 7
    %v2605 = vsub.s32 0, %v2604
    %v2606 = vrot.slane %v175, %v2605
    %v2608 = vadd.f32 %v2570, %v2606
    %v2609 = vadd.f32 %v2571, %v2606
    %v2610 = vadd.f32 %v2572, %v2606
    %v2611 = vadd.f32 %v2573, %v2606
    %v2612 = vadd.f32 %v2574, %v2606
    %v2613 = vadd.f32 %v2575, %v2606
    %v2614 = vadd.f32 %v2576, %v2606
    %v2615 = vadd.f32 %v2577, %v2606
    %v2616 = vadd.f32 %v2578, %v2606
    %v2617 = vadd.f32 %v2579, %v2606
    %v2618 = vadd.f32 %v2580, %v2606
    %v2619 = vadd.f32 %v2581, %v2606
    %v2620 = vadd.f32 %v2582, %v2606
    %v2621 = vadd.f32 %v2583, %v2606
    %v2622 = vadd.f32 %v2584, %v2606
    %v2623 = vadd.f32 %v2585, %v2606
    %v2624 = vadd.f32 %v2586, %v2606
    %v2625 = vadd.f32 %v2587, %v2606
    %v2626 = vadd.f32 %v2588, %v2606
    %v2627 = vadd.f32 %v2589, %v2606
    %v2628 = vadd.f32 %v2590, %v2606
    %v2629 = vadd.f32 %v2591, %v2606
    %v2630 = vadd.f32 %v2592, %v2606
    %v2631 = vadd.f32 %v2593, %v2606
    %v2632 = vadd.f32 %v2594, %v2606
    %v2633 = vadd.f32 %v2595, %v2606
    %v2634 = vadd.f32 %v2596, %v2606
    %v2635 = vadd.f32 %v2597, %v2606
    %v2636 = vadd.f32 %v2598, %v2606
    %v2637 = vadd.f32 %v2599, %v2606
    %v2638 = vadd.f32 %v2600, %v2606
    %v2639 = vadd.f32 %v2601, %v2606
    %v2640 = vmax.f32 %v2608, 0.0
    %v2641 = vmax.f32 %v2609, 0.0
    %v2642 = vmax.f32 %v2610, 0.0
    %v2643 = vmax.f32 %v2611, 0.0
    %v2644 = vmax.f32 %v2612, 0.0
    %v2645 = vmax.f32 %v2613, 0.0
    %v2646 = vmax.f32 %v2614, 0.0
    %v2647 = vmax.f32 %v2615, 0.0
    %v2648 = vmax.f32 %v2616, 0.0
    %v2649 = vmax.f32 %v2617, 0.0
    %v2650 = vmax.f32 %v2618, 0.0
    %v2651 = vmax.f32 %v2619, 0.0
    %v2652 = vmax.f32 %v2620, 0.0
    %v2653 = vmax.f32 %v2621, 0.0
    %v2654 = vmax.f32 %v2622, 0.0
    %v2655 = vmax.f32 %v2623, 0.0
    %v2656 = vmax.f32 %v2624, 0.0
    %v2657 = vmax.f32 %v2625, 0.0
    %v2658 = vmax.f32 %v2626, 0.0
    %v2659 = vmax.f32 %v2627, 0.0
    %v2660 = vmax.f32 %v2628, 0.0
    %v2661 = vmax.f32 %v2629, 0.0
    %v2662 = vmax.f32 %v2630, 0.0
    %v2663 = vmax.f32 %v2631, 0.0
    %v2664 = vmax.f32 %v2632, 0.0
    %v2665 = vmax.f32 %v2633, 0.0
    %v2666 = vmax.f32 %v2634, 0.0
    %v2667 = vmax.f32 %v2635, 0.0
    %v2668 = vmax.f32 %v2636, 0.0
    %v2669 = vmax.f32 %v2637, 0.0
    %v2670 = vmax.f32 %v2638, 0.0
    %v2671 = vmax.f32 %v2639, 0.0
    %s2672 = scalar_lea.vmem [#allocation3], 32
    %2673 = vst.msk [vmem:[%s2672 + $0x8] sm:$0xff] %vm100, %v2640
    %2674 = vst.msk [vmem:[%s2672 + $0x10] sm:$0xff] %vm100, %v2641
    %2675 = vst.msk [vmem:[%s2672 + $0x28] sm:$0xff] %vm100, %v2642
    %2676 = vst.msk [vmem:[%s2672 + $0x30] sm:$0xff] %vm100, %v2643
    %2677 = vst.msk [vmem:[%s2672 + $0x48] sm:$0xff] %vm100, %v2644
    %2678 = vst.msk [vmem:[%s2672 + $0x50] sm:$0xff] %vm100, %v2645
    %2679 = vst.msk [vmem:[%s2672 + $0x68] sm:$0xff] %vm100, %v2646
    %2680 = vst.msk [vmem:[%s2672 + $0x70] sm:$0xff] %vm100, %v2647
    %2681 = vst.msk [vmem:[%s2672 + $0x88] sm:$0xff] %vm100, %v2648
    %2682 = vst.msk [vmem:[%s2672 + $0x90] sm:$0xff] %vm100, %v2649
    %2683 = vst.msk [vmem:[%s2672 + $0xa8] sm:$0xff] %vm100, %v2650
    %2684 = vst.msk [vmem:[%s2672 + $0xb0] sm:$0xff] %vm100, %v2651
    %2685 = vst.msk [vmem:[%s2672 + $0xc8] sm:$0xff] %vm100, %v2652
    %2686 = vst.msk [vmem:[%s2672 + $0xd0] sm:$0xff] %vm100, %v2653
    %2687 = vst.msk [vmem:[%s2672 + $0xe8] sm:$0xff] %vm100, %v2654
    %2688 = vst.msk [vmem:[%s2672 + $0xf0] sm:$0xff] %vm100, %v2655
    %2689 = vst.msk [vmem:[%s2672 + $0x108] sm:$0xff] %vm100, %v2656
    %2690 = vst.msk [vmem:[%s2672 + $0x110] sm:$0xff] %vm100, %v2657
    %2691 = vst.msk [vmem:[%s2672 + $0x128] sm:$0xff] %vm100, %v2658
    %2692 = vst.msk [vmem:[%s2672 + $0x130] sm:$0xff] %vm100, %v2659
    %2693 = vst.msk [vmem:[%s2672 + $0x148] sm:$0xff] %vm100, %v2660
    %2694 = vst.msk [vmem:[%s2672 + $0x150] sm:$0xff] %vm100, %v2661
    %2695 = vst.msk [vmem:[%s2672 + $0x168] sm:$0xff] %vm100, %v2662
    %2696 = vst.msk [vmem:[%s2672 + $0x170] sm:$0xff] %vm100, %v2663
    %2697 = vst.msk [vmem:[%s2672 + $0x188] sm:$0xff] %vm100, %v2664
    %2698 = vst.msk [vmem:[%s2672 + $0x190] sm:$0xff] %vm100, %v2665
    %2699 = vst.msk [vmem:[%s2672 + $0x1a8] sm:$0xff] %vm100, %v2666
    %2700 = vst.msk [vmem:[%s2672 + $0x1b0] sm:$0xff] %vm100, %v2667
    %2701 = vst.msk [vmem:[%s2672 + $0x1c8] sm:$0xff] %vm100, %v2668
    %2702 = vst.msk [vmem:[%s2672 + $0x1d0] sm:$0xff] %vm100, %v2669
    %2703 = vst.msk [vmem:[%s2672 + $0x1e8] sm:$0xff] %vm100, %v2670
    %2704 = vst.msk [vmem:[%s2672 + $0x1f0] sm:$0xff] %vm100, %v2671
    %v2705 = vld [vmem:[#allocation3 + $0x7] sm:$0xff]
    %v2706 = vld [vmem:[#allocation3 + $0xf] sm:$0xff]
    %v2707 = vld [vmem:[#allocation3 + $0x27] sm:$0xff]
    %v2708 = vld [vmem:[#allocation3 + $0x2f] sm:$0xff]
    %v2709 = vld [vmem:[#allocation3 + $0x47] sm:$0xff]
    %v2710 = vld [vmem:[#allocation3 + $0x4f] sm:$0xff]
    %v2711 = vld [vmem:[#allocation3 + $0x67] sm:$0xff]
    %v2712 = vld [vmem:[#allocation3 + $0x6f] sm:$0xff]
    %v2713 = vld [vmem:[#allocation3 + $0x87] sm:$0xff]
    %v2714 = vld [vmem:[#allocation3 + $0x8f] sm:$0xff]
    %v2715 = vld [vmem:[#allocation3 + $0xa7] sm:$0xff]
    %v2716 = vld [vmem:[#allocation3 + $0xaf] sm:$0xff]
    %v2717 = vld [vmem:[#allocation3 + $0xc7] sm:$0xff]
    %v2718 = vld [vmem:[#allocation3 + $0xcf] sm:$0xff]
    %v2719 = vld [vmem:[#allocation3 + $0xe7] sm:$0xff]
    %v2720 = vld [vmem:[#allocation3 + $0xef] sm:$0xff]
    %v2721 = vld [vmem:[#allocation3 + $0x107] sm:$0xff]
    %v2722 = vld [vmem:[#allocation3 + $0x10f] sm:$0xff]
    %v2723 = vld [vmem:[#allocation3 + $0x127] sm:$0xff]
    %v2724 = vld [vmem:[#allocation3 + $0x12f] sm:$0xff]
    %v2725 = vld [vmem:[#allocation3 + $0x147] sm:$0xff]
    %v2726 = vld [vmem:[#allocation3 + $0x14f] sm:$0xff]
    %v2727 = vld [vmem:[#allocation3 + $0x167] sm:$0xff]
    %v2728 = vld [vmem:[#allocation3 + $0x16f] sm:$0xff]
    %v2729 = vld [vmem:[#allocation3 + $0x187] sm:$0xff]
    %v2730 = vld [vmem:[#allocation3 + $0x18f] sm:$0xff]
    %v2731 = vld [vmem:[#allocation3 + $0x1a7] sm:$0xff]
    %v2732 = vld [vmem:[#allocation3 + $0x1af] sm:$0xff]
    %v2733 = vld [vmem:[#allocation3 + $0x1c7] sm:$0xff]
    %v2734 = vld [vmem:[#allocation3 + $0x1cf] sm:$0xff]
    %v2735 = vld [vmem:[#allocation3 + $0x1e7] sm:$0xff]
    %v2736 = vld [vmem:[#allocation3 + $0x1ef] sm:$0xff]
    %v2737 = vld [vmem:[#allocation3 + $0x8] sm:$0xff]
    %v2738 = vld [vmem:[#allocation3 + $0x10] sm:$0xff]
    %v2739 = vld [vmem:[#allocation3 + $0x28] sm:$0xff]
    %v2740 = vld [vmem:[#allocation3 + $0x30] sm:$0xff]
    %v2741 = vld [vmem:[#allocation3 + $0x48] sm:$0xff]
    %v2742 = vld [vmem:[#allocation3 + $0x50] sm:$0xff]
    %v2743 = vld [vmem:[#allocation3 + $0x68] sm:$0xff]
    %v2744 = vld [vmem:[#allocation3 + $0x70] sm:$0xff]
    %v2745 = vld [vmem:[#allocation3 + $0x88] sm:$0xff]
    %v2746 = vld [vmem:[#allocation3 + $0x90] sm:$0xff]
    %v2747 = vld [vmem:[#allocation3 + $0xa8] sm:$0xff]
    %v2748 = vld [vmem:[#allocation3 + $0xb0] sm:$0xff]
    %v2749 = vld [vmem:[#allocation3 + $0xc8] sm:$0xff]
    %v2750 = vld [vmem:[#allocation3 + $0xd0] sm:$0xff]
    %v2751 = vld [vmem:[#allocation3 + $0xe8] sm:$0xff]
    %v2752 = vld [vmem:[#allocation3 + $0xf0] sm:$0xff]
    %v2753 = vld [vmem:[#allocation3 + $0x108] sm:$0xff]
    %v2754 = vld [vmem:[#allocation3 + $0x110] sm:$0xff]
    %v2755 = vld [vmem:[#allocation3 + $0x128] sm:$0xff]
    %v2756 = vld [vmem:[#allocation3 + $0x130] sm:$0xff]
    %v2757 = vld [vmem:[#allocation3 + $0x148] sm:$0xff]
    %v2758 = vld [vmem:[#allocation3 + $0x150] sm:$0xff]
    %v2759 = vld [vmem:[#allocation3 + $0x168] sm:$0xff]
    %v2760 = vld [vmem:[#allocation3 + $0x170] sm:$0xff]
    %v2761 = vld [vmem:[#allocation3 + $0x188] sm:$0xff]
    %v2762 = vld [vmem:[#allocation3 + $0x190] sm:$0xff]
    %v2763 = vld [vmem:[#allocation3 + $0x1a8] sm:$0xff]
    %v2764 = vld [vmem:[#allocation3 + $0x1b0] sm:$0xff]
    %v2765 = vld [vmem:[#allocation3 + $0x1c8] sm:$0xff]
    %v2766 = vld [vmem:[#allocation3 + $0x1d0] sm:$0xff]
    %v2767 = vld [vmem:[#allocation3 + $0x1e8] sm:$0xff]
    %v2768 = vld [vmem:[#allocation3 + $0x1f0] sm:$0xff]
    %v2770 = vsel %vm100, %v178, 0
    %v2773 = vsel %vm100, %v179, 0
    %v2776 = vsel %vm100, %v2737, 0
    %v2779 = vsel %vm100, %v2738, 0
    %v2782 = vsel %vm100, %v2739, 0
    %v2785 = vsel %vm100, %v2740, 0
    %v2788 = vsel %vm100, %v2741, 0
    %v2791 = vsel %vm100, %v2742, 0
    %v2794 = vsel %vm100, %v2743, 0
    %v2797 = vsel %vm100, %v2744, 0
    %v2800 = vsel %vm100, %v2745, 0
    %v2803 = vsel %vm100, %v2746, 0
    %v2806 = vsel %vm100, %v2747, 0
    %v2809 = vsel %vm100, %v2748, 0
    %v2812 = vsel %vm100, %v2749, 0
    %v2815 = vsel %vm100, %v2750, 0
    %v2818 = vsel %vm100, %v2751, 0
    %v2821 = vsel %vm100, %v2752, 0
    %v2824 = vsel %vm100, %v2753, 0
    %v2827 = vsel %vm100, %v2754, 0
    %v2830 = vsel %vm100, %v2755, 0
    %v2833 = vsel %vm100, %v2756, 0
    %v2836 = vsel %vm100, %v2757, 0
    %v2839 = vsel %vm100, %v2758, 0
    %v2842 = vsel %vm100, %v2759, 0
    %v2845 = vsel %vm100, %v2760, 0
    %v2848 = vsel %vm100, %v2761, 0
    %v2851 = vsel %vm100, %v2762, 0
    %v2854 = vsel %vm100, %v2763, 0
    %v2857 = vsel %vm100, %v2764, 0
    %v2860 = vsel %vm100, %v2765, 0
    %v2863 = vsel %vm100, %v2766, 0
    %v2866 = vsel %vm100, %v2767, 0
    %v2869 = vsel %vm100, %v2768, 0
    %2871 = vmatprep.subr.mxu0 0.0
    %2872 = vmatpush1.xpose.msra.mxu0 %v2776
    %2873 = vmatprep.subr.mxu0 0.0
    %2874 = vmatpush1.xpose.msra.mxu0 %v2779
    %2875 = vmatprep.subr.mxu0 0.0
    %2876 = vmatpush1.xpose.msra.mxu0 %v2782
    %2877 = vmatprep.subr.mxu0 0.0
    %2878 = vmatpush1.xpose.msra.mxu0 %v2785
    %2879 = vmatprep.subr.mxu0 0.0
    %2880 = vmatpush1.xpose.msra.mxu0 %v2788
    %2881 = vmatprep.subr.mxu0 0.0
    %2882 = vmatpush1.xpose.msra.mxu0 %v2791
    %2883 = vmatprep.subr.mxu0 0.0
    %2884 = vmatpush1.xpose.msra.mxu0 %v2794
    %2885 = vmatprep.subr.mxu0 0.0
    %2886 = vmatpush1.xpose.msra.mxu0 %v2797
    %2887 = vmatprep.subr.mxu0 0.0
    %2888 = vmatpush1.xpose.msra.mxu0 %v2800
    %2889 = vmatprep.subr.mxu0 0.0
    %2890 = vmatpush1.xpose.msra.mxu0 %v2803
    %2891 = vmatprep.subr.mxu0 0.0
    %2892 = vmatpush1.xpose.msra.mxu0 %v2806
    %2893 = vmatprep.subr.mxu0 0.0
    %2894 = vmatpush1.xpose.msra.mxu0 %v2809
    %2895 = vmatprep.subr.mxu0 0.0
    %2896 = vmatpush1.xpose.msra.mxu0 %v2812
    %2897 = vmatprep.subr.mxu0 0.0
    %2898 = vmatpush1.xpose.msra.mxu0 %v2815
    %2899 = vmatprep.subr.mxu0 0.0
    %2900 = vmatpush1.xpose.msra.mxu0 %v2818
    %2901 = vmatprep.subr.mxu0 0.0
    %2902 = vmatpush1.xpose.msra.mxu0 %v2821
    %2903 = vmatprep.subr.mxu0 0.0
    %2904 = vmatpush1.xpose.msra.mxu0 %v2824
    %2905 = vmatprep.subr.mxu0 0.0
    %2906 = vmatpush1.xpose.msra.mxu0 %v2827
    %2907 = vmatprep.subr.mxu0 0.0
    %2908 = vmatpush1.xpose.msra.mxu0 %v2830
    %2909 = vmatprep.subr.mxu0 0.0
    %2910 = vmatpush1.xpose.msra.mxu0 %v2833
    %2911 = vmatprep.subr.mxu0 0.0
    %2912 = vmatpush1.xpose.msra.mxu0 %v2836
    %2913 = vmatprep.subr.mxu0 0.0
    %2914 = vmatpush1.xpose.msra.mxu0 %v2839
    %2915 = vmatprep.subr.mxu0 0.0
    %2916 = vmatpush1.xpose.msra.mxu0 %v2842
    %2917 = vmatprep.subr.mxu0 0.0
    %2918 = vmatpush1.xpose.msra.mxu0 %v2845
    %2919 = vmatprep.subr.mxu0 0.0
    %2920 = vmatpush1.xpose.msra.mxu0 %v2848
    %2921 = vmatprep.subr.mxu0 0.0
    %2922 = vmatpush1.xpose.msra.mxu0 %v2851
    %2923 = vmatprep.subr.mxu0 0.0
    %2924 = vmatpush1.xpose.msra.mxu0 %v2854
    %2925 = vmatprep.subr.mxu0 0.0
    %2926 = vmatpush1.xpose.msra.mxu0 %v2857
    %2927 = vmatprep.subr.mxu0 0.0
    %2928 = vmatpush1.xpose.msra.mxu0 %v2860
    %2929 = vmatprep.subr.mxu0 0.0
    %2930 = vmatpush1.xpose.msra.mxu0 %v2863
    %2931 = vmatprep.subr.mxu0 0.0
    %2932 = vmatpush1.xpose.msra.mxu0 %v2866
    %2933 = vmatprep.subr.mxu0 0.0
    %2934 = vmatpush1.xpose.msra.mxu0 %v2869
    %2935 = vmatprep.mubr.f32.mxu0 0.0
    %2936 = vmatmul.mubr.f32.gmra.mrb[0].mxu0 %v2770
    %v2937 = vpop.f32.mrb[0].mxu0
    %v2938 = vadd.f32 0.0, %v2937
    %v2939 = vpop.f32.mrb[0].mxu0
    %v2940 = vadd.f32 0.0, %v2939
    %2941 = vmatprep.mubr.f32.mxu0 0.0
    %2942 = vmatmul.mubr.f32.gmra.mrb[0].mxu0 %v2773
    %v2943 = vpop.f32.mrb[0].mxu0
    %v2944 = vadd.f32 0.0, %v2943
    %v2945 = vpop.f32.mrb[0].mxu0
    %v2946 = vadd.f32 0.0, %v2945
    %2947 = vdwg.mxu0
    %v2949 = vsel %vm100, %v176, 0
    %v2952 = vsel %vm100, %v177, 0
    %v2955 = vsel %vm100, %v2705, 0
    %v2958 = vsel %vm100, %v2706, 0
    %v2961 = vsel %vm100, %v2707, 0
    %v2964 = vsel %vm100, %v2708, 0
    %v2967 = vsel %vm100, %v2709, 0
    %v2970 = vsel %vm100, %v2710, 0
    %v2973 = vsel %vm100, %v2711, 0
    %v2976 = vsel %vm100, %v2712, 0
    %v2979 = vsel %vm100, %v2713, 0
    %v2982 = vsel %vm100, %v2714, 0
    %v2985 = vsel %vm100, %v2715, 0
    %v2988 = vsel %vm100, %v2716, 0
    %v2991 = vsel %vm100, %v2717, 0
    %v2994 = vsel %vm100, %v2718, 0
    %v2997 = vsel %vm100, %v2719, 0
    %v3000 = vsel %vm100, %v2720, 0
    %v3003 = vsel %vm100, %v2721, 0
    %v3006 = vsel %vm100, %v2722, 0
    %v3009 = vsel %vm100, %v2723, 0
    %v3012 = vsel %vm100, %v2724, 0
    %v3015 = vsel %vm100, %v2725, 0
    %v3018 = vsel %vm100, %v2726, 0
    %v3021 = vsel %vm100, %v2727, 0
    %v3024 = vsel %vm100, %v2728, 0
    %v3027 = vsel %vm100, %v2729, 0
    %v3030 = vsel %vm100, %v2730, 0
    %v3033 = vsel %vm100, %v2731, 0
    %v3036 = vsel %vm100, %v2732, 0
    %v3039 = vsel %vm100, %v2733, 0
    %v3042 = vsel %vm100, %v2734, 0
    %v3045 = vsel %vm100, %v2735, 0
    %v3048 = vsel %vm100, %v2736, 0
    %3050 = vmatprep.subr.mxu0 0.0
    %3051 = vmatpush1.xpose.msra.mxu0 %v2955
    %3052 = vmatprep.subr.mxu0 0.0
    %3053 = vmatpush1.xpose.msra.mxu0 %v2958
    %3054 = vmatprep.subr.mxu0 0.0
    %3055 = vmatpush1.xpose.msra.mxu0 %v2961
    %3056 = vmatprep.subr.mxu0 0.0
    %3057 = vmatpush1.xpose.msra.mxu0 %v2964
    %3058 = vmatprep.subr.mxu0 0.0
    %3059 = vmatpush1.xpose.msra.mxu0 %v2967
    %3060 = vmatprep.subr.mxu0 0.0
    %3061 = vmatpush1.xpose.msra.mxu0 %v2970
    %3062 = vmatprep.subr.mxu0 0.0
    %3063 = vmatpush1.xpose.msra.mxu0 %v2973
    %3064 = vmatprep.subr.mxu0 0.0
    %3065 = vmatpush1.xpose.msra.mxu0 %v2976
    %3066 = vmatprep.subr.mxu0 0.0
    %3067 = vmatpush1.xpose.msra.mxu0 %v2979
    %3068 = vmatprep.subr.mxu0 0.0
    %3069 = vmatpush1.xpose.msra.mxu0 %v2982
    %3070 = vmatprep.subr.mxu0 0.0
    %3071 = vmatpush1.xpose.msra.mxu0 %v2985
    %3072 = vmatprep.subr.mxu0 0.0
    %3073 = vmatpush1.xpose.msra.mxu0 %v2988
    %3074 = vmatprep.subr.mxu0 0.0
    %3075 = vmatpush1.xpose.msra.mxu0 %v2991
    %3076 = vmatprep.subr.mxu0 0.0
    %3077 = vmatpush1.xpose.msra.mxu0 %v2994
    %3078 = vmatprep.subr.mxu0 0.0
    %3079 = vmatpush1.xpose.msra.mxu0 %v2997
    %3080 = vmatprep.subr.mxu0 0.0
    %3081 = vmatpush1.xpose.msra.mxu0 %v3000
    %3082 = vmatprep.subr.mxu0 0.0
    %3083 = vmatpush1.xpose.msra.mxu0 %v3003
    %3084 = vmatprep.subr.mxu0 0.0
    %3085 = vmatpush1.xpose.msra.mxu0 %v3006
    %3086 = vmatprep.subr.mxu0 0.0
    %3087 = vmatpush1.xpose.msra.mxu0 %v3009
    %3088 = vmatprep.subr.mxu0 0.0
    %3089 = vmatpush1.xpose.msra.mxu0 %v3012
    %3090 = vmatprep.subr.mxu0 0.0
    %3091 = vmatpush1.xpose.msra.mxu0 %v3015
    %3092 = vmatprep.subr.mxu0 0.0
    %3093 = vmatpush1.xpose.msra.mxu0 %v3018
    %3094 = vmatprep.subr.mxu0 0.0
    %3095 = vmatpush1.xpose.msra.mxu0 %v3021
    %3096 = vmatprep.subr.mxu0 0.0
    %3097 = vmatpush1.xpose.msra.mxu0 %v3024
    %3098 = vmatprep.subr.mxu0 0.0
    %3099 = vmatpush1.xpose.msra.mxu0 %v3027
    %3100 = vmatprep.subr.mxu0 0.0
    %3101 = vmatpush1.xpose.msra.mxu0 %v3030
    %3102 = vmatprep.subr.mxu0 0.0
    %3103 = vmatpush1.xpose.msra.mxu0 %v3033
    %3104 = vmatprep.subr.mxu0 0.0
    %3105 = vmatpush1.xpose.msra.mxu0 %v3036
    %3106 = vmatprep.subr.mxu0 0.0
    %3107 = vmatpush1.xpose.msra.mxu0 %v3039
    %3108 = vmatprep.subr.mxu0 0.0
    %3109 = vmatpush1.xpose.msra.mxu0 %v3042
    %3110 = vmatprep.subr.mxu0 0.0
    %3111 = vmatpush1.xpose.msra.mxu0 %v3045
    %3112 = vmatprep.subr.mxu0 0.0
    %3113 = vmatpush1.xpose.msra.mxu0 %v3048
    %3114 = vmatprep.mubr.f32.mxu0 0.0
    %3115 = vmatmul.mubr.f32.gmra.mrb[0].mxu0 %v2949
    %v3116 = vpop.f32.mrb[0].mxu0
    %v3117 = vadd.f32 %v2938, %v3116
    %v3118 = vpop.f32.mrb[0].mxu0
    %v3119 = vadd.f32 %v2940, %v3118
    %3120 = vmatprep.mubr.f32.mxu0 0.0
    %3121 = vmatmul.mubr.f32.gmra.mrb[0].mxu0 %v2952
    %v3122 = vpop.f32.mrb[0].mxu0
    %v3123 = vadd.f32 %v2944, %v3122
    %v3124 = vpop.f32.mrb[0].mxu0
    %v3125 = vadd.f32 %v2946, %v3124
    %3126 = vdwg.mxu0
    %v3127 = vld [vmem:[#allocation3 + $0x9] sm:$0xff]
    %v3128 = vld [vmem:[#allocation3 + $0x11] sm:$0xff]
    %v3129 = vld [vmem:[#allocation3 + $0x29] sm:$0xff]
    %v3130 = vld [vmem:[#allocation3 + $0x31] sm:$0xff]
    %v3131 = vld [vmem:[#allocation3 + $0x49] sm:$0xff]
    %v3132 = vld [vmem:[#allocation3 + $0x51] sm:$0xff]
    %v3133 = vld [vmem:[#allocation3 + $0x69] sm:$0xff]
    %v3134 = vld [vmem:[#allocation3 + $0x71] sm:$0xff]
    %v3135 = vld [vmem:[#allocation3 + $0x89] sm:$0xff]
    %v3136 = vld [vmem:[#allocation3 + $0x91] sm:$0xff]
    %v3137 = vld [vmem:[#allocation3 + $0xa9] sm:$0xff]
    %v3138 = vld [vmem:[#allocation3 + $0xb1] sm:$0xff]
    %v3139 = vld [vmem:[#allocation3 + $0xc9] sm:$0xff]
    %v3140 = vld [vmem:[#allocation3 + $0xd1] sm:$0xff]
    %v3141 = vld [vmem:[#allocation3 + $0xe9] sm:$0xff]
    %v3142 = vld [vmem:[#allocation3 + $0xf1] sm:$0xff]
    %v3143 = vld [vmem:[#allocation3 + $0x109] sm:$0xff]
    %v3144 = vld [vmem:[#allocation3 + $0x111] sm:$0xff]
    %v3145 = vld [vmem:[#allocation3 + $0x129] sm:$0xff]
    %v3146 = vld [vmem:[#allocation3 + $0x131] sm:$0xff]
    %v3147 = vld [vmem:[#allocation3 + $0x149] sm:$0xff]
    %v3148 = vld [vmem:[#allocation3 + $0x151] sm:$0xff]
    %v3149 = vld [vmem:[#allocation3 + $0x169] sm:$0xff]
    %v3150 = vld [vmem:[#allocation3 + $0x171] sm:$0xff]
    %v3151 = vld [vmem:[#allocation3 + $0x189] sm:$0xff]
    %v3152 = vld [vmem:[#allocation3 + $0x191] sm:$0xff]
    %v3153 = vld [vmem:[#allocation3 + $0x1a9] sm:$0xff]
    %v3154 = vld [vmem:[#allocation3 + $0x1b1] sm:$0xff]
    %v3155 = vld [vmem:[#allocation3 + $0x1c9] sm:$0xff]
    %v3156 = vld [vmem:[#allocation3 + $0x1d1] sm:$0xff]
    %v3157 = vld [vmem:[#allocation3 + $0x1e9] sm:$0xff]
    %v3158 = vld [vmem:[#allocation3 + $0x1f1] sm:$0xff]
    %v3160 = vsel %vm100, %v180, 0
    %v3163 = vsel %vm100, %v181, 0
    %v3166 = vsel %vm100, %v3127, 0
    %v3169 = vsel %vm100, %v3128, 0
    %v3172 = vsel %vm100, %v3129, 0
    %v3175 = vsel %vm100, %v3130, 0
    %v3178 = vsel %vm100, %v3131, 0
    %v3181 = vsel %vm100, %v3132, 0
    %v3184 = vsel %vm100, %v3133, 0
    %v3187 = vsel %vm100, %v3134, 0
    %v3190 = vsel %vm100, %v3135, 0
    %v3193 = vsel %vm100, %v3136, 0
    %v3196 = vsel %vm100, %v3137, 0
    %v3199 = vsel %vm100, %v3138, 0
    %v3202 = vsel %vm100, %v3139, 0
    %v3205 = vsel %vm100, %v3140, 0
    %v3208 = vsel %vm100, %v3141, 0
    %v3211 = vsel %vm100, %v3142, 0
    %v3214 = vsel %vm100, %v3143, 0
    %v3217 = vsel %vm100, %v3144, 0
    %v3220 = vsel %vm100, %v3145, 0
    %v3223 = vsel %vm100, %v3146, 0
    %v3226 = vsel %vm100, %v3147, 0
    %v3229 = vsel %vm100, %v3148, 0
    %v3232 = vsel %vm100, %v3149, 0
    %v3235 = vsel %vm100, %v3150, 0
    %v3238 = vsel %vm100, %v3151, 0
    %v3241 = vsel %vm100, %v3152, 0
    %v3244 = vsel %vm100, %v3153, 0
    %v3247 = vsel %vm100, %v3154, 0
    %v3250 = vsel %vm100, %v3155, 0
    %v3253 = vsel %vm100, %v3156, 0
    %v3256 = vsel %vm100, %v3157, 0
    %v3259 = vsel %vm100, %v3158, 0
    %3261 = vmatprep.subr.mxu0 0.0
    %3262 = vmatpush1.xpose.msra.mxu0 %v3166
    %3263 = vmatprep.subr.mxu0 0.0
    %3264 = vmatpush1.xpose.msra.mxu0 %v3169
    %3265 = vmatprep.subr.mxu0 0.0
    %3266 = vmatpush1.xpose.msra.mxu0 %v3172
    %3267 = vmatprep.subr.mxu0 0.0
    %3268 = vmatpush1.xpose.msra.mxu0 %v3175
    %3269 = vmatprep.subr.mxu0 0.0
    %3270 = vmatpush1.xpose.msra.mxu0 %v3178
    %3271 = vmatprep.subr.mxu0 0.0
    %3272 = vmatpush1.xpose.msra.mxu0 %v3181
    %3273 = vmatprep.subr.mxu0 0.0
    %3274 = vmatpush1.xpose.msra.mxu0 %v3184
    %3275 = vmatprep.subr.mxu0 0.0
    %3276 = vmatpush1.xpose.msra.mxu0 %v3187
    %3277 = vmatprep.subr.mxu0 0.0
    %3278 = vmatpush1.xpose.msra.mxu0 %v3190
    %3279 = vmatprep.subr.mxu0 0.0
    %3280 = vmatpush1.xpose.msra.mxu0 %v3193
    %3281 = vmatprep.subr.mxu0 0.0
    %3282 = vmatpush1.xpose.msra.mxu0 %v3196
    %3283 = vmatprep.subr.mxu0 0.0
    %3284 = vmatpush1.xpose.msra.mxu0 %v3199
    %3285 = vmatprep.subr.mxu0 0.0
    %3286 = vmatpush1.xpose.msra.mxu0 %v3202
    %3287 = vmatprep.subr.mxu0 0.0
    %3288 = vmatpush1.xpose.msra.mxu0 %v3205
    %3289 = vmatprep.subr.mxu0 0.0
    %3290 = vmatpush1.xpose.msra.mxu0 %v3208
    %3291 = vmatprep.subr.mxu0 0.0
    %3292 = vmatpush1.xpose.msra.mxu0 %v3211
    %3293 = vmatprep.subr.mxu0 0.0
    %3294 = vmatpush1.xpose.msra.mxu0 %v3214
    %3295 = vmatprep.subr.mxu0 0.0
    %3296 = vmatpush1.xpose.msra.mxu0 %v3217
    %3297 = vmatprep.subr.mxu0 0.0
    %3298 = vmatpush1.xpose.msra.mxu0 %v3220
    %3299 = vmatprep.subr.mxu0 0.0
    %3300 = vmatpush1.xpose.msra.mxu0 %v3223
    %3301 = vmatprep.subr.mxu0 0.0
    %3302 = vmatpush1.xpose.msra.mxu0 %v3226
    %3303 = vmatprep.subr.mxu0 0.0
    %3304 = vmatpush1.xpose.msra.mxu0 %v3229
    %3305 = vmatprep.subr.mxu0 0.0
    %3306 = vmatpush1.xpose.msra.mxu0 %v3232
    %3307 = vmatprep.subr.mxu0 0.0
    %3308 = vmatpush1.xpose.msra.mxu0 %v3235
    %3309 = vmatprep.subr.mxu0 0.0
    %3310 = vmatpush1.xpose.msra.mxu0 %v3238
    %3311 = vmatprep.subr.mxu0 0.0
    %3312 = vmatpush1.xpose.msra.mxu0 %v3241
    %3313 = vmatprep.subr.mxu0 0.0
    %3314 = vmatpush1.xpose.msra.mxu0 %v3244
    %3315 = vmatprep.subr.mxu0 0.0
    %3316 = vmatpush1.xpose.msra.mxu0 %v3247
    %3317 = vmatprep.subr.mxu0 0.0
    %3318 = vmatpush1.xpose.msra.mxu0 %v3250
    %3319 = vmatprep.subr.mxu0 0.0
    %3320 = vmatpush1.xpose.msra.mxu0 %v3253
    %3321 = vmatprep.subr.mxu0 0.0
    %3322 = vmatpush1.xpose.msra.mxu0 %v3256
    %3323 = vmatprep.subr.mxu0 0.0
    %3324 = vmatpush1.xpose.msra.mxu0 %v3259
    %3325 = vmatprep.mubr.f32.mxu0 0.0
    %3326 = vmatmul.mubr.f32.gmra.mrb[0].mxu0 %v3160
    %v3327 = vpop.f32.mrb[0].mxu0
    %v3328 = vadd.f32 0.0, %v3327
    %v3329 = vpop.f32.mrb[0].mxu0
    %v3330 = vadd.f32 0.0, %v3329
    %3331 = vmatprep.mubr.f32.mxu0 0.0
    %3332 = vmatmul.mubr.f32.gmra.mrb[0].mxu0 %v3163
    %v3333 = vpop.f32.mrb[0].mxu0
    %v3334 = vadd.f32 0.0, %v3333
    %v3335 = vpop.f32.mrb[0].mxu0
    %v3336 = vadd.f32 0.0, %v3335
    %3337 = vdwg.mxu0
    %v3338 = vadd.f32 %v3117, %v3328
    %v3339 = vadd.f32 %v3119, %v3330
    %v3340 = vadd.f32 %v3123, %v3334
    %v3341 = vadd.f32 %v3125, %v3336
    %v3342 = vld [vmem:[%s2672 + $0x7] sm:$0xff]
    %v3343 = vld [vmem:[%s2672 + $0xf] sm:$0xff]
    %v3344 = vld [vmem:[%s2672 + $0x27] sm:$0xff]
    %v3345 = vld [vmem:[%s2672 + $0x2f] sm:$0xff]
    %v3346 = vld [vmem:[%s2672 + $0x47] sm:$0xff]
    %v3347 = vld [vmem:[%s2672 + $0x4f] sm:$0xff]
    %v3348 = vld [vmem:[%s2672 + $0x67] sm:$0xff]
    %v3349 = vld [vmem:[%s2672 + $0x6f] sm:$0xff]
    %v3350 = vld [vmem:[%s2672 + $0x87] sm:$0xff]
    %v3351 = vld [vmem:[%s2672 + $0x8f] sm:$0xff]
    %v3352 = vld [vmem:[%s2672 + $0xa7] sm:$0xff]
    %v3353 = vld [vmem:[%s2672 + $0xaf] sm:$0xff]
    %v3354 = vld [vmem:[%s2672 + $0xc7] sm:$0xff]
    %v3355 = vld [vmem:[%s2672 + $0xcf] sm:$0xff]
    %v3356 = vld [vmem:[%s2672 + $0xe7] sm:$0xff]
    %v3357 = vld [vmem:[%s2672 + $0xef] sm:$0xff]
    %v3358 = vld [vmem:[%s2672 + $0x107] sm:$0xff]
    %v3359 = vld [vmem:[%s2672 + $0x10f] sm:$0xff]
    %v3360 = vld [vmem:[%s2672 + $0x127] sm:$0xff]
    %v3361 = vld [vmem:[%s2672 + $0x12f] sm:$0xff]
    %v3362 = vld [vmem:[%s2672 + $0x147] sm:$0xff]
    %v3363 = vld [vmem:[%s2672 + $0x14f] sm:$0xff]
    %v3364 = vld [vmem:[%s2672 + $0x167] sm:$0xff]
    %v3365 = vld [vmem:[%s2672 + $0x16f] sm:$0xff]
    %v3366 = vld [vmem:[%s2672 + $0x187] sm:$0xff]
    %v3367 = vld [vmem:[%s2672 + $0x18f] sm:$0xff]
    %v3368 = vld [vmem:[%s2672 + $0x1a7] sm:$0xff]
    %v3369 = vld [vmem:[%s2672 + $0x1af] sm:$0xff]
    %v3370 = vld [vmem:[%s2672 + $0x1c7] sm:$0xff]
    %v3371 = vld [vmem:[%s2672 + $0x1cf] sm:$0xff]
    %v3372 = vld [vmem:[%s2672 + $0x1e7] sm:$0xff]
    %v3373 = vld [vmem:[%s2672 + $0x1ef] sm:$0xff]
    %v3375 = vsel %vm100, %v182, 0
    %v3378 = vsel %vm100, %v183, 0
    %v3381 = vsel %vm100, %v3342, 0
    %v3384 = vsel %vm100, %v3343, 0
    %v3387 = vsel %vm100, %v3344, 0
    %v3390 = vsel %vm100, %v3345, 0
    %v3393 = vsel %vm100, %v3346, 0
    %v3396 = vsel %vm100, %v3347, 0
    %v3399 = vsel %vm100, %v3348, 0
    %v3402 = vsel %vm100, %v3349, 0
    %v3405 = vsel %vm100, %v3350, 0
    %v3408 = vsel %vm100, %v3351, 0
    %v3411 = vsel %vm100, %v3352, 0
    %v3414 = vsel %vm100, %v3353, 0
    %v3417 = vsel %vm100, %v3354, 0
    %v3420 = vsel %vm100, %v3355, 0
    %v3423 = vsel %vm100, %v3356, 0
    %v3426 = vsel %vm100, %v3357, 0
    %v3429 = vsel %vm100, %v3358, 0
    %v3432 = vsel %vm100, %v3359, 0
    %v3435 = vsel %vm100, %v3360, 0
    %v3438 = vsel %vm100, %v3361, 0
    %v3441 = vsel %vm100, %v3362, 0
    %v3444 = vsel %vm100, %v3363, 0
    %v3447 = vsel %vm100, %v3364, 0
    %v3450 = vsel %vm100, %v3365, 0
    %v3453 = vsel %vm100, %v3366, 0
    %v3456 = vsel %vm100, %v3367, 0
    %v3459 = vsel %vm100, %v3368, 0
    %v3462 = vsel %vm100, %v3369, 0
    %v3465 = vsel %vm100, %v3370, 0
    %v3468 = vsel %vm100, %v3371, 0
    %v3471 = vsel %vm100, %v3372, 0
    %v3474 = vsel %vm100, %v3373, 0
    %3476 = vmatprep.subr.mxu0 0.0
    %3477 = vmatpush1.xpose.msra.mxu0 %v3381
    %3478 = vmatprep.subr.mxu0 0.0
    %3479 = vmatpush1.xpose.msra.mxu0 %v3384
    %3480 = vmatprep.subr.mxu0 0.0
    %3481 = vmatpush1.xpose.msra.mxu0 %v3387
    %3482 = vmatprep.subr.mxu0 0.0
    %3483 = vmatpush1.xpose.msra.mxu0 %v3390
    %3484 = vmatprep.subr.mxu0 0.0
    %3485 = vmatpush1.xpose.msra.mxu0 %v3393
    %3486 = vmatprep.subr.mxu0 0.0
    %3487 = vmatpush1.xpose.msra.mxu0 %v3396
    %3488 = vmatprep.subr.mxu0 0.0
    %3489 = vmatpush1.xpose.msra.mxu0 %v3399
    %3490 = vmatprep.subr.mxu0 0.0
    %3491 = vmatpush1.xpose.msra.mxu0 %v3402
    %3492 = vmatprep.subr.mxu0 0.0
    %3493 = vmatpush1.xpose.msra.mxu0 %v3405
    %3494 = vmatprep.subr.mxu0 0.0
    %3495 = vmatpush1.xpose.msra.mxu0 %v3408
    %3496 = vmatprep.subr.mxu0 0.0
    %3497 = vmatpush1.xpose.msra.mxu0 %v3411
    %3498 = vmatprep.subr.mxu0 0.0
    %3499 = vmatpush1.xpose.msra.mxu0 %v3414
    %3500 = vmatprep.subr.mxu0 0.0
    %3501 = vmatpush1.xpose.msra.mxu0 %v3417
    %3502 = vmatprep.subr.mxu0 0.0
    %3503 = vmatpush1.xpose.msra.mxu0 %v3420
    %3504 = vmatprep.subr.mxu0 0.0
    %3505 = vmatpush1.xpose.msra.mxu0 %v3423
    %3506 = vmatprep.subr.mxu0 0.0
    %3507 = vmatpush1.xpose.msra.mxu0 %v3426
    %3508 = vmatprep.subr.mxu0 0.0
    %3509 = vmatpush1.xpose.msra.mxu0 %v3429
    %3510 = vmatprep.subr.mxu0 0.0
    %3511 = vmatpush1.xpose.msra.mxu0 %v3432
    %3512 = vmatprep.subr.mxu0 0.0
    %3513 = vmatpush1.xpose.msra.mxu0 %v3435
    %3514 = vmatprep.subr.mxu0 0.0
    %3515 = vmatpush1.xpose.msra.mxu0 %v3438
    %3516 = vmatprep.subr.mxu0 0.0
    %3517 = vmatpush1.xpose.msra.mxu0 %v3441
    %3518 = vmatprep.subr.mxu0 0.0
    %3519 = vmatpush1.xpose.msra.mxu0 %v3444
    %3520 = vmatprep.subr.mxu0 0.0
    %3521 = vmatpush1.xpose.msra.mxu0 %v3447
    %3522 = vmatprep.subr.mxu0 0.0
    %3523 = vmatpush1.xpose.msra.mxu0 %v3450
    %3524 = vmatprep.subr.mxu0 0.0
    %3525 = vmatpush1.xpose.msra.mxu0 %v3453
    %3526 = vmatprep.subr.mxu0 0.0
    %3527 = vmatpush1.xpose.msra.mxu0 %v3456
    %3528 = vmatprep.subr.mxu0 0.0
    %3529 = vmatpush1.xpose.msra.mxu0 %v3459
    %3530 = vmatprep.subr.mxu0 0.0
    %3531 = vmatpush1.xpose.msra.mxu0 %v3462
    %3532 = vmatprep.subr.mxu0 0.0
    %3533 = vmatpush1.xpose.msra.mxu0 %v3465
    %3534 = vmatprep.subr.mxu0 0.0
    %3535 = vmatpush1.xpose.msra.mxu0 %v3468
    %3536 = vmatprep.subr.mxu0 0.0
    %3537 = vmatpush1.xpose.msra.mxu0 %v3471
    %3538 = vmatprep.subr.mxu0 0.0
    %3539 = vmatpush1.xpose.msra.mxu0 %v3474
    %3540 = vmatprep.mubr.f32.mxu0 0.0
    %3541 = vmatmul.mubr.f32.gmra.mrb[0].mxu0 %v3375
    %v3542 = vpop.f32.mrb[0].mxu0
    %v3543 = vadd.f32 0.0, %v3542
    %v3544 = vpop.f32.mrb[0].mxu0
    %v3545 = vadd.f32 0.0, %v3544
    %3546 = vmatprep.mubr.f32.mxu0 0.0
    %3547 = vmatmul.mubr.f32.gmra.mrb[0].mxu0 %v3378
    %v3548 = vpop.f32.mrb[0].mxu0
    %v3549 = vadd.f32 0.0, %v3548
    %v3550 = vpop.f32.mrb[0].mxu0
    %v3551 = vadd.f32 0.0, %v3550
    %3552 = vdwg.mxu0
    %v3553 = vadd.f32 %v3338, %v3543
    %v3554 = vadd.f32 %v3339, %v3545
    %v3555 = vadd.f32 %v3340, %v3549
    %v3556 = vadd.f32 %v3341, %v3551
    %v3557 = vld [vmem:[%s2672 + $0x8] sm:$0xff]
    %v3558 = vld [vmem:[%s2672 + $0x10] sm:$0xff]
    %v3559 = vld [vmem:[%s2672 + $0x28] sm:$0xff]
    %v3560 = vld [vmem:[%s2672 + $0x30] sm:$0xff]
    %v3561 = vld [vmem:[%s2672 + $0x48] sm:$0xff]
    %v3562 = vld [vmem:[%s2672 + $0x50] sm:$0xff]
    %v3563 = vld [vmem:[%s2672 + $0x68] sm:$0xff]
    %v3564 = vld [vmem:[%s2672 + $0x70] sm:$0xff]
    %v3565 = vld [vmem:[%s2672 + $0x88] sm:$0xff]
    %v3566 = vld [vmem:[%s2672 + $0x90] sm:$0xff]
    %v3567 = vld [vmem:[%s2672 + $0xa8] sm:$0xff]
    %v3568 = vld [vmem:[%s2672 + $0xb0] sm:$0xff]
    %v3569 = vld [vmem:[%s2672 + $0xc8] sm:$0xff]
    %v3570 = vld [vmem:[%s2672 + $0xd0] sm:$0xff]
    %v3571 = vld [vmem:[%s2672 + $0xe8] sm:$0xff]
    %v3572 = vld [vmem:[%s2672 + $0xf0] sm:$0xff]
    %v3573 = vld [vmem:[%s2672 + $0x108] sm:$0xff]
    %v3574 = vld [vmem:[%s2672 + $0x110] sm:$0xff]
    %v3575 = vld [vmem:[%s2672 + $0x128] sm:$0xff]
    %v3576 = vld [vmem:[%s2672 + $0x130] sm:$0xff]
    %v3577 = vld [vmem:[%s2672 + $0x148] sm:$0xff]
    %v3578 = vld [vmem:[%s2672 + $0x150] sm:$0xff]
    %v3579 = vld [vmem:[%s2672 + $0x168] sm:$0xff]
    %v3580 = vld [vmem:[%s2672 + $0x170] sm:$0xff]
    %v3581 = vld [vmem:[%s2672 + $0x188] sm:$0xff]
    %v3582 = vld [vmem:[%s2672 + $0x190] sm:$0xff]
    %v3583 = vld [vmem:[%s2672 + $0x1a8] sm:$0xff]
    %v3584 = vld [vmem:[%s2672 + $0x1b0] sm:$0xff]
    %v3585 = vld [vmem:[%s2672 + $0x1c8] sm:$0xff]
    %v3586 = vld [vmem:[%s2672 + $0x1d0] sm:$0xff]
    %v3587 = vld [vmem:[%s2672 + $0x1e8] sm:$0xff]
    %v3588 = vld [vmem:[%s2672 + $0x1f0] sm:$0xff]
    %v3590 = vsel %vm100, %v184, 0
    %v3593 = vsel %vm100, %v185, 0
    %v3596 = vsel %vm100, %v3557, 0
    %v3599 = vsel %vm100, %v3558, 0
    %v3602 = vsel %vm100, %v3559, 0
    %v3605 = vsel %vm100, %v3560, 0
    %v3608 = vsel %vm100, %v3561, 0
    %v3611 = vsel %vm100, %v3562, 0
    %v3614 = vsel %vm100, %v3563, 0
    %v3617 = vsel %vm100, %v3564, 0
    %v3620 = vsel %vm100, %v3565, 0
    %v3623 = vsel %vm100, %v3566, 0
    %v3626 = vsel %vm100, %v3567, 0
    %v3629 = vsel %vm100, %v3568, 0
    %v3632 = vsel %vm100, %v3569, 0
    %v3635 = vsel %vm100, %v3570, 0
    %v3638 = vsel %vm100, %v3571, 0
    %v3641 = vsel %vm100, %v3572, 0
    %v3644 = vsel %vm100, %v3573, 0
    %v3647 = vsel %vm100, %v3574, 0
    %v3650 = vsel %vm100, %v3575, 0
    %v3653 = vsel %vm100, %v3576, 0
    %v3656 = vsel %vm100, %v3577, 0
    %v3659 = vsel %vm100, %v3578, 0
    %v3662 = vsel %vm100, %v3579, 0
    %v3665 = vsel %vm100, %v3580, 0
    %v3668 = vsel %vm100, %v3581, 0
    %v3671 = vsel %vm100, %v3582, 0
    %v3674 = vsel %vm100, %v3583, 0
    %v3677 = vsel %vm100, %v3584, 0
    %v3680 = vsel %vm100, %v3585, 0
    %v3683 = vsel %vm100, %v3586, 0
    %v3686 = vsel %vm100, %v3587, 0
    %v3689 = vsel %vm100, %v3588, 0
    %3691 = vmatprep.subr.mxu0 0.0
    %3692 = vmatpush1.xpose.msra.mxu0 %v3596
    %3693 = vmatprep.subr.mxu0 0.0
    %3694 = vmatpush1.xpose.msra.mxu0 %v3599
    %3695 = vmatprep.subr.mxu0 0.0
    %3696 = vmatpush1.xpose.msra.mxu0 %v3602
    %3697 = vmatprep.subr.mxu0 0.0
    %3698 = vmatpush1.xpose.msra.mxu0 %v3605
    %3699 = vmatprep.subr.mxu0 0.0
    %3700 = vmatpush1.xpose.msra.mxu0 %v3608
    %3701 = vmatprep.subr.mxu0 0.0
    %3702 = vmatpush1.xpose.msra.mxu0 %v3611
    %3703 = vmatprep.subr.mxu0 0.0
    %3704 = vmatpush1.xpose.msra.mxu0 %v3614
    %3705 = vmatprep.subr.mxu0 0.0
    %3706 = vmatpush1.xpose.msra.mxu0 %v3617
    %3707 = vmatprep.subr.mxu0 0.0
    %3708 = vmatpush1.xpose.msra.mxu0 %v3620
    %3709 = vmatprep.subr.mxu0 0.0
    %3710 = vmatpush1.xpose.msra.mxu0 %v3623
    %3711 = vmatprep.subr.mxu0 0.0
    %3712 = vmatpush1.xpose.msra.mxu0 %v3626
    %3713 = vmatprep.subr.mxu0 0.0
    %3714 = vmatpush1.xpose.msra.mxu0 %v3629
    %3715 = vmatprep.subr.mxu0 0.0
    %3716 = vmatpush1.xpose.msra.mxu0 %v3632
    %3717 = vmatprep.subr.mxu0 0.0
    %3718 = vmatpush1.xpose.msra.mxu0 %v3635
    %3719 = vmatprep.subr.mxu0 0.0
    %3720 = vmatpush1.xpose.msra.mxu0 %v3638
    %3721 = vmatprep.subr.mxu0 0.0
    %3722 = vmatpush1.xpose.msra.mxu0 %v3641
    %3723 = vmatprep.subr.mxu0 0.0
    %3724 = vmatpush1.xpose.msra.mxu0 %v3644
    %3725 = vmatprep.subr.mxu0 0.0
    %3726 = vmatpush1.xpose.msra.mxu0 %v3647
    %3727 = vmatprep.subr.mxu0 0.0
    %3728 = vmatpush1.xpose.msra.mxu0 %v3650
    %3729 = vmatprep.subr.mxu0 0.0
    %3730 = vmatpush1.xpose.msra.mxu0 %v3653
    %3731 = vmatprep.subr.mxu0 0.0
    %3732 = vmatpush1.xpose.msra.mxu0 %v3656
    %3733 = vmatprep.subr.mxu0 0.0
    %3734 = vmatpush1.xpose.msra.mxu0 %v3659
    %3735 = vmatprep.subr.mxu0 0.0
    %3736 = vmatpush1.xpose.msra.mxu0 %v3662
    %3737 = vmatprep.subr.mxu0 0.0
    %3738 = vmatpush1.xpose.msra.mxu0 %v3665
    %3739 = vmatprep.subr.mxu0 0.0
    %3740 = vmatpush1.xpose.msra.mxu0 %v3668
    %3741 = vmatprep.subr.mxu0 0.0
    %3742 = vmatpush1.xpose.msra.mxu0 %v3671
    %3743 = vmatprep.subr.mxu0 0.0
    %3744 = vmatpush1.xpose.msra.mxu0 %v3674
    %3745 = vmatprep.subr.mxu0 0.0
    %3746 = vmatpush1.xpose.msra.mxu0 %v3677
    %3747 = vmatprep.subr.mxu0 0.0
    %3748 = vmatpush1.xpose.msra.mxu0 %v3680
    %3749 = vmatprep.subr.mxu0 0.0
    %3750 = vmatpush1.xpose.msra.mxu0 %v3683
    %3751 = vmatprep.subr.mxu0 0.0
    %3752 = vmatpush1.xpose.msra.mxu0 %v3686
    %3753 = vmatprep.subr.mxu0 0.0
    %3754 = vmatpush1.xpose.msra.mxu0 %v3689
    %3755 = vmatprep.mubr.f32.mxu0 0.0
    %3756 = vmatmul.mubr.f32.gmra.mrb[0].mxu0 %v3590
    %v3757 = vpop.f32.mrb[0].mxu0
    %v3758 = vadd.f32 0.0, %v3757
    %v3759 = vpop.f32.mrb[0].mxu0
    %v3760 = vadd.f32 0.0, %v3759
    %3761 = vmatprep.mubr.f32.mxu0 0.0
    %3762 = vmatmul.mubr.f32.gmra.mrb[0].mxu0 %v3593
    %v3763 = vpop.f32.mrb[0].mxu0
    %v3764 = vadd.f32 0.0, %v3763
    %v3765 = vpop.f32.mrb[0].mxu0
    %v3766 = vadd.f32 0.0, %v3765
    %3767 = vdwg.mxu0
    %v3768 = vadd.f32 %v3553, %v3758
    %v3769 = vadd.f32 %v3554, %v3760
    %v3770 = vadd.f32 %v3555, %v3764
    %v3771 = vadd.f32 %v3556, %v3766
    %v3772 = vld [vmem:[%s2672 + $0x9] sm:$0xff]
    %v3773 = vld [vmem:[%s2672 + $0x11] sm:$0xff]
    %v3774 = vld [vmem:[%s2672 + $0x29] sm:$0xff]
    %v3775 = vld [vmem:[%s2672 + $0x31] sm:$0xff]
    %v3776 = vld [vmem:[%s2672 + $0x49] sm:$0xff]
    %v3777 = vld [vmem:[%s2672 + $0x51] sm:$0xff]
    %v3778 = vld [vmem:[%s2672 + $0x69] sm:$0xff]
    %v3779 = vld [vmem:[%s2672 + $0x71] sm:$0xff]
    %v3780 = vld [vmem:[%s2672 + $0x89] sm:$0xff]
    %v3781 = vld [vmem:[%s2672 + $0x91] sm:$0xff]
    %v3782 = vld [vmem:[%s2672 + $0xa9] sm:$0xff]
    %v3783 = vld [vmem:[%s2672 + $0xb1] sm:$0xff]
    %v3784 = vld [vmem:[%s2672 + $0xc9] sm:$0xff]
    %v3785 = vld [vmem:[%s2672 + $0xd1] sm:$0xff]
    %v3786 = vld [vmem:[%s2672 + $0xe9] sm:$0xff]
    %v3787 = vld [vmem:[%s2672 + $0xf1] sm:$0xff]
    %v3788 = vld [vmem:[%s2672 + $0x109] sm:$0xff]
    %v3789 = vld [vmem:[%s2672 + $0x111] sm:$0xff]
    %v3790 = vld [vmem:[%s2672 + $0x129] sm:$0xff]
    %v3791 = vld [vmem:[%s2672 + $0x131] sm:$0xff]
    %v3792 = vld [vmem:[%s2672 + $0x149] sm:$0xff]
    %v3793 = vld [vmem:[%s2672 + $0x151] sm:$0xff]
    %v3794 = vld [vmem:[%s2672 + $0x169] sm:$0xff]
    %v3795 = vld [vmem:[%s2672 + $0x171] sm:$0xff]
    %v3796 = vld [vmem:[%s2672 + $0x189] sm:$0xff]
    %v3797 = vld [vmem:[%s2672 + $0x191] sm:$0xff]
    %v3798 = vld [vmem:[%s2672 + $0x1a9] sm:$0xff]
    %v3799 = vld [vmem:[%s2672 + $0x1b1] sm:$0xff]
    %v3800 = vld [vmem:[%s2672 + $0x1c9] sm:$0xff]
    %v3801 = vld [vmem:[%s2672 + $0x1d1] sm:$0xff]
    %v3802 = vld [vmem:[%s2672 + $0x1e9] sm:$0xff]
    %v3803 = vld [vmem:[%s2672 + $0x1f1] sm:$0xff]
    %v3805 = vsel %vm100, %v186, 0
    %v3808 = vsel %vm100, %v187, 0
    %v3811 = vsel %vm100, %v3772, 0
    %v3814 = vsel %vm100, %v3773, 0
    %v3817 = vsel %vm100, %v3774, 0
    %v3820 = vsel %vm100, %v3775, 0
    %v3823 = vsel %vm100, %v3776, 0
    %v3826 = vsel %vm100, %v3777, 0
    %v3829 = vsel %vm100, %v3778, 0
    %v3832 = vsel %vm100, %v3779, 0
    %v3835 = vsel %vm100, %v3780, 0
    %v3838 = vsel %vm100, %v3781, 0
    %v3841 = vsel %vm100, %v3782, 0
    %v3844 = vsel %vm100, %v3783, 0
    %v3847 = vsel %vm100, %v3784, 0
    %v3850 = vsel %vm100, %v3785, 0
    %v3853 = vsel %vm100, %v3786, 0
    %v3856 = vsel %vm100, %v3787, 0
    %v3859 = vsel %vm100, %v3788, 0
    %v3862 = vsel %vm100, %v3789, 0
    %v3865 = vsel %vm100, %v3790, 0
    %v3868 = vsel %vm100, %v3791, 0
    %v3871 = vsel %vm100, %v3792, 0
    %v3874 = vsel %vm100, %v3793, 0
    %v3877 = vsel %vm100, %v3794, 0
    %v3880 = vsel %vm100, %v3795, 0
    %v3883 = vsel %vm100, %v3796, 0
    %v3886 = vsel %vm100, %v3797, 0
    %v3889 = vsel %vm100, %v3798, 0
    %v3892 = vsel %vm100, %v3799, 0
    %v3895 = vsel %vm100, %v3800, 0
    %v3898 = vsel %vm100, %v3801, 0
    %v3901 = vsel %vm100, %v3802, 0
    %v3904 = vsel %vm100, %v3803, 0
    %3906 = vmatprep.subr.mxu0 0.0
    %3907 = vmatpush1.xpose.msra.mxu0 %v3811
    %3908 = vmatprep.subr.mxu0 0.0
    %3909 = vmatpush1.xpose.msra.mxu0 %v3814
    %3910 = vmatprep.subr.mxu0 0.0
    %3911 = vmatpush1.xpose.msra.mxu0 %v3817
    %3912 = vmatprep.subr.mxu0 0.0
    %3913 = vmatpush1.xpose.msra.mxu0 %v3820
    %3914 = vmatprep.subr.mxu0 0.0
    %3915 = vmatpush1.xpose.msra.mxu0 %v3823
    %3916 = vmatprep.subr.mxu0 0.0
    %3917 = vmatpush1.xpose.msra.mxu0 %v3826
    %3918 = vmatprep.subr.mxu0 0.0
    %3919 = vmatpush1.xpose.msra.mxu0 %v3829
    %3920 = vmatprep.subr.mxu0 0.0
    %3921 = vmatpush1.xpose.msra.mxu0 %v3832
    %3922 = vmatprep.subr.mxu0 0.0
    %3923 = vmatpush1.xpose.msra.mxu0 %v3835
    %3924 = vmatprep.subr.mxu0 0.0
    %3925 = vmatpush1.xpose.msra.mxu0 %v3838
    %3926 = vmatprep.subr.mxu0 0.0
    %3927 = vmatpush1.xpose.msra.mxu0 %v3841
    %3928 = vmatprep.subr.mxu0 0.0
    %3929 = vmatpush1.xpose.msra.mxu0 %v3844
    %3930 = vmatprep.subr.mxu0 0.0
    %3931 = vmatpush1.xpose.msra.mxu0 %v3847
    %3932 = vmatprep.subr.mxu0 0.0
    %3933 = vmatpush1.xpose.msra.mxu0 %v3850
    %3934 = vmatprep.subr.mxu0 0.0
    %3935 = vmatpush1.xpose.msra.mxu0 %v3853
    %3936 = vmatprep.subr.mxu0 0.0
    %3937 = vmatpush1.xpose.msra.mxu0 %v3856
    %3938 = vmatprep.subr.mxu0 0.0
    %3939 = vmatpush1.xpose.msra.mxu0 %v3859
    %3940 = vmatprep.subr.mxu0 0.0
    %3941 = vmatpush1.xpose.msra.mxu0 %v3862
    %3942 = vmatprep.subr.mxu0 0.0
    %3943 = vmatpush1.xpose.msra.mxu0 %v3865
    %3944 = vmatprep.subr.mxu0 0.0
    %3945 = vmatpush1.xpose.msra.mxu0 %v3868
    %3946 = vmatprep.subr.mxu0 0.0
    %3947 = vmatpush1.xpose.msra.mxu0 %v3871
    %3948 = vmatprep.subr.mxu0 0.0
    %3949 = vmatpush1.xpose.msra.mxu0 %v3874
    %3950 = vmatprep.subr.mxu0 0.0
    %3951 = vmatpush1.xpose.msra.mxu0 %v3877
    %3952 = vmatprep.subr.mxu0 0.0
    %3953 = vmatpush1.xpose.msra.mxu0 %v3880
    %3954 = vmatprep.subr.mxu0 0.0
    %3955 = vmatpush1.xpose.msra.mxu0 %v3883
    %3956 = vmatprep.subr.mxu0 0.0
    %3957 = vmatpush1.xpose.msra.mxu0 %v3886
    %3958 = vmatprep.subr.mxu0 0.0
    %3959 = vmatpush1.xpose.msra.mxu0 %v3889
    %3960 = vmatprep.subr.mxu0 0.0
    %3961 = vmatpush1.xpose.msra.mxu0 %v3892
    %3962 = vmatprep.subr.mxu0 0.0
    %3963 = vmatpush1.xpose.msra.mxu0 %v3895
    %3964 = vmatprep.subr.mxu0 0.0
    %3965 = vmatpush1.xpose.msra.mxu0 %v3898
    %3966 = vmatprep.subr.mxu0 0.0
    %3967 = vmatpush1.xpose.msra.mxu0 %v3901
    %3968 = vmatprep.subr.mxu0 0.0
    %3969 = vmatpush1.xpose.msra.mxu0 %v3904
    %3970 = vmatprep.mubr.f32.mxu0 0.0
    %3971 = vmatmul.mubr.f32.gmra.mrb[0].mxu0 %v3805
    %v3972 = vpop.f32.mrb[0].mxu0
    %v3973 = vadd.f32 0.0, %v3972
    %v3974 = vpop.f32.mrb[0].mxu0
    %v3975 = vadd.f32 0.0, %v3974
    %3976 = vmatprep.mubr.f32.mxu0 0.0
    %3977 = vmatmul.mubr.f32.gmra.mrb[0].mxu0 %v3808
    %v3978 = vpop.f32.mrb[0].mxu0
    %v3979 = vadd.f32 0.0, %v3978
    %v3980 = vpop.f32.mrb[0].mxu0
    %v3981 = vadd.f32 0.0, %v3980
    %3982 = vdwg.mxu0
    %v3983 = vadd.f32 %v3768, %v3973
    %v3984 = vadd.f32 %v3769, %v3975
    %v3985 = vadd.f32 %v3770, %v3979
    %v3986 = vadd.f32 %v3771, %v3981
    %s3987 = scalar_lea.vmem [#allocation3], 64
    %v3988 = vld [vmem:[%s3987 + $0x7] sm:$0xff]
    %v3989 = vld [vmem:[%s3987 + $0xf] sm:$0xff]
    %v3990 = vld [vmem:[%s3987 + $0x27] sm:$0xff]
    %v3991 = vld [vmem:[%s3987 + $0x2f] sm:$0xff]
    %v3992 = vld [vmem:[%s3987 + $0x47] sm:$0xff]
    %v3993 = vld [vmem:[%s3987 + $0x4f] sm:$0xff]
    %v3994 = vld [vmem:[%s3987 + $0x67] sm:$0xff]
    %v3995 = vld [vmem:[%s3987 + $0x6f] sm:$0xff]
    %v3996 = vld [vmem:[%s3987 + $0x87] sm:$0xff]
    %v3997 = vld [vmem:[%s3987 + $0x8f] sm:$0xff]
    %v3998 = vld [vmem:[%s3987 + $0xa7] sm:$0xff]
    %v3999 = vld [vmem:[%s3987 + $0xaf] sm:$0xff]
    %v4000 = vld [vmem:[%s3987 + $0xc7] sm:$0xff]
    %v4001 = vld [vmem:[%s3987 + $0xcf] sm:$0xff]
    %v4002 = vld [vmem:[%s3987 + $0xe7] sm:$0xff]
    %v4003 = vld [vmem:[%s3987 + $0xef] sm:$0xff]
    %v4004 = vld [vmem:[%s3987 + $0x107] sm:$0xff]
    %v4005 = vld [vmem:[%s3987 + $0x10f] sm:$0xff]
    %v4006 = vld [vmem:[%s3987 + $0x127] sm:$0xff]
    %v4007 = vld [vmem:[%s3987 + $0x12f] sm:$0xff]
    %v4008 = vld [vmem:[%s3987 + $0x147] sm:$0xff]
    %v4009 = vld [vmem:[%s3987 + $0x14f] sm:$0xff]
    %v4010 = vld [vmem:[%s3987 + $0x167] sm:$0xff]
    %v4011 = vld [vmem:[%s3987 + $0x16f] sm:$0xff]
    %v4012 = vld [vmem:[%s3987 + $0x187] sm:$0xff]
    %v4013 = vld [vmem:[%s3987 + $0x18f] sm:$0xff]
    %v4014 = vld [vmem:[%s3987 + $0x1a7] sm:$0xff]
    %v4015 = vld [vmem:[%s3987 + $0x1af] sm:$0xff]
    %v4016 = vld [vmem:[%s3987 + $0x1c7] sm:$0xff]
    %v4017 = vld [vmem:[%s3987 + $0x1cf] sm:$0xff]
    %v4018 = vld [vmem:[%s3987 + $0x1e7] sm:$0xff]
    %v4019 = vld [vmem:[%s3987 + $0x1ef] sm:$0xff]
    %v4021 = vsel %vm100, %v188, 0
    %v4024 = vsel %vm100, %v189, 0
    %v4027 = vsel %vm100, %v3988, 0
    %v4030 = vsel %vm100, %v3989, 0
    %v4033 = vsel %vm100, %v3990, 0
    %v4036 = vsel %vm100, %v3991, 0
    %v4039 = vsel %vm100, %v3992, 0
    %v4042 = vsel %vm100, %v3993, 0
    %v4045 = vsel %vm100, %v3994, 0
    %v4048 = vsel %vm100, %v3995, 0
    %v4051 = vsel %vm100, %v3996, 0
    %v4054 = vsel %vm100, %v3997, 0
    %v4057 = vsel %vm100, %v3998, 0
    %v4060 = vsel %vm100, %v3999, 0
    %v4063 = vsel %vm100, %v4000, 0
    %v4066 = vsel %vm100, %v4001, 0
    %v4069 = vsel %vm100, %v4002, 0
    %v4072 = vsel %vm100, %v4003, 0
    %v4075 = vsel %vm100, %v4004, 0
    %v4078 = vsel %vm100, %v4005, 0
    %v4081 = vsel %vm100, %v4006, 0
    %v4084 = vsel %vm100, %v4007, 0
    %v4087 = vsel %vm100, %v4008, 0
    %v4090 = vsel %vm100, %v4009, 0
    %v4093 = vsel %vm100, %v4010, 0
    %v4096 = vsel %vm100, %v4011, 0
    %v4099 = vsel %vm100, %v4012, 0
    %v4102 = vsel %vm100, %v4013, 0
    %v4105 = vsel %vm100, %v4014, 0
    %v4108 = vsel %vm100, %v4015, 0
    %v4111 = vsel %vm100, %v4016, 0
    %v4114 = vsel %vm100, %v4017, 0
    %v4117 = vsel %vm100, %v4018, 0
    %v4120 = vsel %vm100, %v4019, 0
    %4122 = vmatprep.subr.mxu0 0.0
    %4123 = vmatpush1.xpose.msra.mxu0 %v4027
    %4124 = vmatprep.subr.mxu0 0.0
    %4125 = vmatpush1.xpose.msra.mxu0 %v4030
    %4126 = vmatprep.subr.mxu0 0.0
    %4127 = vmatpush1.xpose.msra.mxu0 %v4033
    %4128 = vmatprep.subr.mxu0 0.0
    %4129 = vmatpush1.xpose.msra.mxu0 %v4036
    %4130 = vmatprep.subr.mxu0 0.0
    %4131 = vmatpush1.xpose.msra.mxu0 %v4039
    %4132 = vmatprep.subr.mxu0 0.0
    %4133 = vmatpush1.xpose.msra.mxu0 %v4042
    %4134 = vmatprep.subr.mxu0 0.0
    %4135 = vmatpush1.xpose.msra.mxu0 %v4045
    %4136 = vmatprep.subr.mxu0 0.0
    %4137 = vmatpush1.xpose.msra.mxu0 %v4048
    %4138 = vmatprep.subr.mxu0 0.0
    %4139 = vmatpush1.xpose.msra.mxu0 %v4051
    %4140 = vmatprep.subr.mxu0 0.0
    %4141 = vmatpush1.xpose.msra.mxu0 %v4054
    %4142 = vmatprep.subr.mxu0 0.0
    %4143 = vmatpush1.xpose.msra.mxu0 %v4057
    %4144 = vmatprep.subr.mxu0 0.0
    %4145 = vmatpush1.xpose.msra.mxu0 %v4060
    %4146 = vmatprep.subr.mxu0 0.0
    %4147 = vmatpush1.xpose.msra.mxu0 %v4063
    %4148 = vmatprep.subr.mxu0 0.0
    %4149 = vmatpush1.xpose.msra.mxu0 %v4066
    %4150 = vmatprep.subr.mxu0 0.0
    %4151 = vmatpush1.xpose.msra.mxu0 %v4069
    %4152 = vmatprep.subr.mxu0 0.0
    %4153 = vmatpush1.xpose.msra.mxu0 %v4072
    %4154 = vmatprep.subr.mxu0 0.0
    %4155 = vmatpush1.xpose.msra.mxu0 %v4075
    %4156 = vmatprep.subr.mxu0 0.0
    %4157 = vmatpush1.xpose.msra.mxu0 %v4078
    %4158 = vmatprep.subr.mxu0 0.0
    %4159 = vmatpush1.xpose.msra.mxu0 %v4081
    %4160 = vmatprep.subr.mxu0 0.0
    %4161 = vmatpush1.xpose.msra.mxu0 %v4084
    %4162 = vmatprep.subr.mxu0 0.0
    %4163 = vmatpush1.xpose.msra.mxu0 %v4087
    %4164 = vmatprep.subr.mxu0 0.0
    %4165 = vmatpush1.xpose.msra.mxu0 %v4090
    %4166 = vmatprep.subr.mxu0 0.0
    %4167 = vmatpush1.xpose.msra.mxu0 %v4093
    %4168 = vmatprep.subr.mxu0 0.0
    %4169 = vmatpush1.xpose.msra.mxu0 %v4096
    %4170 = vmatprep.subr.mxu0 0.0
    %4171 = vmatpush1.xpose.msra.mxu0 %v4099
    %4172 = vmatprep.subr.mxu0 0.0
    %4173 = vmatpush1.xpose.msra.mxu0 %v4102
    %4174 = vmatprep.subr.mxu0 0.0
    %4175 = vmatpush1.xpose.msra.mxu0 %v4105
    %4176 = vmatprep.subr.mxu0 0.0
    %4177 = vmatpush1.xpose.msra.mxu0 %v4108
    %4178 = vmatprep.subr.mxu0 0.0
    %4179 = vmatpush1.xpose.msra.mxu0 %v4111
    %4180 = vmatprep.subr.mxu0 0.0
    %4181 = vmatpush1.xpose.msra.mxu0 %v4114
    %4182 = vmatprep.subr.mxu0 0.0
    %4183 = vmatpush1.xpose.msra.mxu0 %v4117
    %4184 = vmatprep.subr.mxu0 0.0
    %4185 = vmatpush1.xpose.msra.mxu0 %v4120
    %4186 = vmatprep.mubr.f32.mxu0 0.0
    %4187 = vmatmul.mubr.f32.gmra.mrb[0].mxu0 %v4021
    %v4188 = vpop.f32.mrb[0].mxu0
    %v4189 = vadd.f32 0.0, %v4188
    %v4190 = vpop.f32.mrb[0].mxu0
    %v4191 = vadd.f32 0.0, %v4190
    %4192 = vmatprep.mubr.f32.mxu0 0.0
    %4193 = vmatmul.mubr.f32.gmra.mrb[0].mxu0 %v4024
    %v4194 = vpop.f32.mrb[0].mxu0
    %v4195 = vadd.f32 0.0, %v4194
    %v4196 = vpop.f32.mrb[0].mxu0
    %v4197 = vadd.f32 0.0, %v4196
    %4198 = vdwg.mxu0
    %v4199 = vadd.f32 %v3983, %v4189
    %v4200 = vadd.f32 %v3984, %v4191
    %v4201 = vadd.f32 %v3985, %v4195
    %v4202 = vadd.f32 %v3986, %v4197
    %v4203 = vld [vmem:[%s3987 + $0x8] sm:$0xff]
    %v4204 = vld [vmem:[%s3987 + $0x10] sm:$0xff]
    %v4205 = vld [vmem:[%s3987 + $0x28] sm:$0xff]
    %v4206 = vld [vmem:[%s3987 + $0x30] sm:$0xff]
    %v4207 = vld [vmem:[%s3987 + $0x48] sm:$0xff]
    %v4208 = vld [vmem:[%s3987 + $0x50] sm:$0xff]
    %v4209 = vld [vmem:[%s3987 + $0x68] sm:$0xff]
    %v4210 = vld [vmem:[%s3987 + $0x70] sm:$0xff]
    %v4211 = vld [vmem:[%s3987 + $0x88] sm:$0xff]
    %v4212 = vld [vmem:[%s3987 + $0x90] sm:$0xff]
    %v4213 = vld [vmem:[%s3987 + $0xa8] sm:$0xff]
    %v4214 = vld [vmem:[%s3987 + $0xb0] sm:$0xff]
    %v4215 = vld [vmem:[%s3987 + $0xc8] sm:$0xff]
    %v4216 = vld [vmem:[%s3987 + $0xd0] sm:$0xff]
    %v4217 = vld [vmem:[%s3987 + $0xe8] sm:$0xff]
    %v4218 = vld [vmem:[%s3987 + $0xf0] sm:$0xff]
    %v4219 = vld [vmem:[%s3987 + $0x108] sm:$0xff]
    %v4220 = vld [vmem:[%s3987 + $0x110] sm:$0xff]
    %v4221 = vld [vmem:[%s3987 + $0x128] sm:$0xff]
    %v4222 = vld [vmem:[%s3987 + $0x130] sm:$0xff]
    %v4223 = vld [vmem:[%s3987 + $0x148] sm:$0xff]
    %v4224 = vld [vmem:[%s3987 + $0x150] sm:$0xff]
    %v4225 = vld [vmem:[%s3987 + $0x168] sm:$0xff]
    %v4226 = vld [vmem:[%s3987 + $0x170] sm:$0xff]
    %v4227 = vld [vmem:[%s3987 + $0x188] sm:$0xff]
    %v4228 = vld [vmem:[%s3987 + $0x190] sm:$0xff]
    %v4229 = vld [vmem:[%s3987 + $0x1a8] sm:$0xff]
    %v4230 = vld [vmem:[%s3987 + $0x1b0] sm:$0xff]
    %v4231 = vld [vmem:[%s3987 + $0x1c8] sm:$0xff]
    %v4232 = vld [vmem:[%s3987 + $0x1d0] sm:$0xff]
    %v4233 = vld [vmem:[%s3987 + $0x1e8] sm:$0xff]
    %v4234 = vld [vmem:[%s3987 + $0x1f0] sm:$0xff]
    %v4236 = vsel %vm100, %v190, 0
    %v4239 = vsel %vm100, %v191, 0
    %v4242 = vsel %vm100, %v4203, 0
    %v4245 = vsel %vm100, %v4204, 0
    %v4248 = vsel %vm100, %v4205, 0
    %v4251 = vsel %vm100, %v4206, 0
    %v4254 = vsel %vm100, %v4207, 0
    %v4257 = vsel %vm100, %v4208, 0
    %v4260 = vsel %vm100, %v4209, 0
    %v4263 = vsel %vm100, %v4210, 0
    %v4266 = vsel %vm100, %v4211, 0
    %v4269 = vsel %vm100, %v4212, 0
    %v4272 = vsel %vm100, %v4213, 0
    %v4275 = vsel %vm100, %v4214, 0
    %v4278 = vsel %vm100, %v4215, 0
    %v4281 = vsel %vm100, %v4216, 0
    %v4284 = vsel %vm100, %v4217, 0
    %v4287 = vsel %vm100, %v4218, 0
    %v4290 = vsel %vm100, %v4219, 0
    %v4293 = vsel %vm100, %v4220, 0
    %v4296 = vsel %vm100, %v4221, 0
    %v4299 = vsel %vm100, %v4222, 0
    %v4302 = vsel %vm100, %v4223, 0
    %v4305 = vsel %vm100, %v4224, 0
    %v4308 = vsel %vm100, %v4225, 0
    %v4311 = vsel %vm100, %v4226, 0
    %v4314 = vsel %vm100, %v4227, 0
    %v4317 = vsel %vm100, %v4228, 0
    %v4320 = vsel %vm100, %v4229, 0
    %v4323 = vsel %vm100, %v4230, 0
    %v4326 = vsel %vm100, %v4231, 0
    %v4329 = vsel %vm100, %v4232, 0
    %v4332 = vsel %vm100, %v4233, 0
    %v4335 = vsel %vm100, %v4234, 0
    %4337 = vmatprep.subr.mxu0 0.0
    %4338 = vmatpush1.xpose.msra.mxu0 %v4242
    %4339 = vmatprep.subr.mxu0 0.0
    %4340 = vmatpush1.xpose.msra.mxu0 %v4245
    %4341 = vmatprep.subr.mxu0 0.0
    %4342 = vmatpush1.xpose.msra.mxu0 %v4248
    %4343 = vmatprep.subr.mxu0 0.0
    %4344 = vmatpush1.xpose.msra.mxu0 %v4251
    %4345 = vmatprep.subr.mxu0 0.0
    %4346 = vmatpush1.xpose.msra.mxu0 %v4254
    %4347 = vmatprep.subr.mxu0 0.0
    %4348 = vmatpush1.xpose.msra.mxu0 %v4257
    %4349 = vmatprep.subr.mxu0 0.0
    %4350 = vmatpush1.xpose.msra.mxu0 %v4260
    %4351 = vmatprep.subr.mxu0 0.0
    %4352 = vmatpush1.xpose.msra.mxu0 %v4263
    %4353 = vmatprep.subr.mxu0 0.0
    %4354 = vmatpush1.xpose.msra.mxu0 %v4266
    %4355 = vmatprep.subr.mxu0 0.0
    %4356 = vmatpush1.xpose.msra.mxu0 %v4269
    %4357 = vmatprep.subr.mxu0 0.0
    %4358 = vmatpush1.xpose.msra.mxu0 %v4272
    %4359 = vmatprep.subr.mxu0 0.0
    %4360 = vmatpush1.xpose.msra.mxu0 %v4275
    %4361 = vmatprep.subr.mxu0 0.0
    %4362 = vmatpush1.xpose.msra.mxu0 %v4278
    %4363 = vmatprep.subr.mxu0 0.0
    %4364 = vmatpush1.xpose.msra.mxu0 %v4281
    %4365 = vmatprep.subr.mxu0 0.0
    %4366 = vmatpush1.xpose.msra.mxu0 %v4284
    %4367 = vmatprep.subr.mxu0 0.0
    %4368 = vmatpush1.xpose.msra.mxu0 %v4287
    %4369 = vmatprep.subr.mxu0 0.0
    %4370 = vmatpush1.xpose.msra.mxu0 %v4290
    %4371 = vmatprep.subr.mxu0 0.0
    %4372 = vmatpush1.xpose.msra.mxu0 %v4293
    %4373 = vmatprep.subr.mxu0 0.0
    %4374 = vmatpush1.xpose.msra.mxu0 %v4296
    %4375 = vmatprep.subr.mxu0 0.0
    %4376 = vmatpush1.xpose.msra.mxu0 %v4299
    %4377 = vmatprep.subr.mxu0 0.0
    %4378 = vmatpush1.xpose.msra.mxu0 %v4302
    %4379 = vmatprep.subr.mxu0 0.0
    %4380 = vmatpush1.xpose.msra.mxu0 %v4305
    %4381 = vmatprep.subr.mxu0 0.0
    %4382 = vmatpush1.xpose.msra.mxu0 %v4308
    %4383 = vmatprep.subr.mxu0 0.0
    %4384 = vmatpush1.xpose.msra.mxu0 %v4311
    %4385 = vmatprep.subr.mxu0 0.0
    %4386 = vmatpush1.xpose.msra.mxu0 %v4314
    %4387 = vmatprep.subr.mxu0 0.0
    %4388 = vmatpush1.xpose.msra.mxu0 %v4317
    %4389 = vmatprep.subr.mxu0 0.0
    %4390 = vmatpush1.xpose.msra.mxu0 %v4320
    %4391 = vmatprep.subr.mxu0 0.0
    %4392 = vmatpush1.xpose.msra.mxu0 %v4323
    %4393 = vmatprep.subr.mxu0 0.0
    %4394 = vmatpush1.xpose.msra.mxu0 %v4326
    %4395 = vmatprep.subr.mxu0 0.0
    %4396 = vmatpush1.xpose.msra.mxu0 %v4329
    %4397 = vmatprep.subr.mxu0 0.0
    %4398 = vmatpush1.xpose.msra.mxu0 %v4332
    %4399 = vmatprep.subr.mxu0 0.0
    %4400 = vmatpush1.xpose.msra.mxu0 %v4335
    %4401 = vmatprep.mubr.f32.mxu0 0.0
    %4402 = vmatmul.mubr.f32.gmra.mrb[0].mxu0 %v4236
    %v4403 = vpop.f32.mrb[0].mxu0
    %v4404 = vadd.f32 0.0, %v4403
    %v4405 = vpop.f32.mrb[0].mxu0
    %v4406 = vadd.f32 0.0, %v4405
    %4407 = vmatprep.mubr.f32.mxu0 0.0
    %4408 = vmatmul.mubr.f32.gmra.mrb[0].mxu0 %v4239
    %v4409 = vpop.f32.mrb[0].mxu0
    %v4410 = vadd.f32 0.0, %v4409
    %v4411 = vpop.f32.mrb[0].mxu0
    %v4412 = vadd.f32 0.0, %v4411
    %4413 = vdwg.mxu0
    %v4414 = vadd.f32 %v4199, %v4404
    %v4415 = vadd.f32 %v4200, %v4406
    %v4416 = vadd.f32 %v4201, %v4410
    %v4417 = vadd.f32 %v4202, %v4412
    %v4418 = vld [vmem:[%s3987 + $0x9] sm:$0xff]
    %v4419 = vld [vmem:[%s3987 + $0x11] sm:$0xff]
    %v4420 = vld [vmem:[%s3987 + $0x29] sm:$0xff]
    %v4421 = vld [vmem:[%s3987 + $0x31] sm:$0xff]
    %v4422 = vld [vmem:[%s3987 + $0x49] sm:$0xff]
    %v4423 = vld [vmem:[%s3987 + $0x51] sm:$0xff]
    %v4424 = vld [vmem:[%s3987 + $0x69] sm:$0xff]
    %v4425 = vld [vmem:[%s3987 + $0x71] sm:$0xff]
    %v4426 = vld [vmem:[%s3987 + $0x89] sm:$0xff]
    %v4427 = vld [vmem:[%s3987 + $0x91] sm:$0xff]
    %v4428 = vld [vmem:[%s3987 + $0xa9] sm:$0xff]
    %v4429 = vld [vmem:[%s3987 + $0xb1] sm:$0xff]
    %v4430 = vld [vmem:[%s3987 + $0xc9] sm:$0xff]
    %v4431 = vld [vmem:[%s3987 + $0xd1] sm:$0xff]
    %v4432 = vld [vmem:[%s3987 + $0xe9] sm:$0xff]
    %v4433 = vld [vmem:[%s3987 + $0xf1] sm:$0xff]
    %v4434 = vld [vmem:[%s3987 + $0x109] sm:$0xff]
    %v4435 = vld [vmem:[%s3987 + $0x111] sm:$0xff]
    %v4436 = vld [vmem:[%s3987 + $0x129] sm:$0xff]
    %v4437 = vld [vmem:[%s3987 + $0x131] sm:$0xff]
    %v4438 = vld [vmem:[%s3987 + $0x149] sm:$0xff]
    %v4439 = vld [vmem:[%s3987 + $0x151] sm:$0xff]
    %v4440 = vld [vmem:[%s3987 + $0x169] sm:$0xff]
    %v4441 = vld [vmem:[%s3987 + $0x171] sm:$0xff]
    %v4442 = vld [vmem:[%s3987 + $0x189] sm:$0xff]
    %v4443 = vld [vmem:[%s3987 + $0x191] sm:$0xff]
    %v4444 = vld [vmem:[%s3987 + $0x1a9] sm:$0xff]
    %v4445 = vld [vmem:[%s3987 + $0x1b1] sm:$0xff]
    %v4446 = vld [vmem:[%s3987 + $0x1c9] sm:$0xff]
    %v4447 = vld [vmem:[%s3987 + $0x1d1] sm:$0xff]
    %v4448 = vld [vmem:[%s3987 + $0x1e9] sm:$0xff]
    %v4449 = vld [vmem:[%s3987 + $0x1f1] sm:$0xff]
    %v4451 = vsel %vm100, %v192, 0
    %v4454 = vsel %vm100, %v193, 0
    %v4457 = vsel %vm100, %v4418, 0
    %v4460 = vsel %vm100, %v4419, 0
    %v4463 = vsel %vm100, %v4420, 0
    %v4466 = vsel %vm100, %v4421, 0
    %v4469 = vsel %vm100, %v4422, 0
    %v4472 = vsel %vm100, %v4423, 0
    %v4475 = vsel %vm100, %v4424, 0
    %v4478 = vsel %vm100, %v4425, 0
    %v4481 = vsel %vm100, %v4426, 0
    %v4484 = vsel %vm100, %v4427, 0
    %v4487 = vsel %vm100, %v4428, 0
    %v4490 = vsel %vm100, %v4429, 0
    %v4493 = vsel %vm100, %v4430, 0
    %v4496 = vsel %vm100, %v4431, 0
    %v4499 = vsel %vm100, %v4432, 0
    %v4502 = vsel %vm100, %v4433, 0
    %v4505 = vsel %vm100, %v4434, 0
    %v4508 = vsel %vm100, %v4435, 0
    %v4511 = vsel %vm100, %v4436, 0
    %v4514 = vsel %vm100, %v4437, 0
    %v4517 = vsel %vm100, %v4438, 0
    %v4520 = vsel %vm100, %v4439, 0
    %v4523 = vsel %vm100, %v4440, 0
    %v4526 = vsel %vm100, %v4441, 0
    %v4529 = vsel %vm100, %v4442, 0
    %v4532 = vsel %vm100, %v4443, 0
    %v4535 = vsel %vm100, %v4444, 0
    %v4538 = vsel %vm100, %v4445, 0
    %v4541 = vsel %vm100, %v4446, 0
    %v4544 = vsel %vm100, %v4447, 0
    %v4547 = vsel %vm100, %v4448, 0
    %v4550 = vsel %vm100, %v4449, 0
    %4552 = vmatprep.subr.mxu0 0.0
    %4553 = vmatpush1.xpose.msra.mxu0 %v4457
    %4554 = vmatprep.subr.mxu0 0.0
    %4555 = vmatpush1.xpose.msra.mxu0 %v4460
    %4556 = vmatprep.subr.mxu0 0.0
    %4557 = vmatpush1.xpose.msra.mxu0 %v4463
    %4558 = vmatprep.subr.mxu0 0.0
    %4559 = vmatpush1.xpose.msra.mxu0 %v4466
    %4560 = vmatprep.subr.mxu0 0.0
    %4561 = vmatpush1.xpose.msra.mxu0 %v4469
    %4562 = vmatprep.subr.mxu0 0.0
    %4563 = vmatpush1.xpose.msra.mxu0 %v4472
    %4564 = vmatprep.subr.mxu0 0.0
    %4565 = vmatpush1.xpose.msra.mxu0 %v4475
    %4566 = vmatprep.subr.mxu0 0.0
    %4567 = vmatpush1.xpose.msra.mxu0 %v4478
    %4568 = vmatprep.subr.mxu0 0.0
    %4569 = vmatpush1.xpose.msra.mxu0 %v4481
    %4570 = vmatprep.subr.mxu0 0.0
    %4571 = vmatpush1.xpose.msra.mxu0 %v4484
    %4572 = vmatprep.subr.mxu0 0.0
    %4573 = vmatpush1.xpose.msra.mxu0 %v4487
    %4574 = vmatprep.subr.mxu0 0.0
    %4575 = vmatpush1.xpose.msra.mxu0 %v4490
    %4576 = vmatprep.subr.mxu0 0.0
    %4577 = vmatpush1.xpose.msra.mxu0 %v4493
    %4578 = vmatprep.subr.mxu0 0.0
    %4579 = vmatpush1.xpose.msra.mxu0 %v4496
    %4580 = vmatprep.subr.mxu0 0.0
    %4581 = vmatpush1.xpose.msra.mxu0 %v4499
    %4582 = vmatprep.subr.mxu0 0.0
    %4583 = vmatpush1.xpose.msra.mxu0 %v4502
    %4584 = vmatprep.subr.mxu0 0.0
    %4585 = vmatpush1.xpose.msra.mxu0 %v4505
    %4586 = vmatprep.subr.mxu0 0.0
    %4587 = vmatpush1.xpose.msra.mxu0 %v4508
    %4588 = vmatprep.subr.mxu0 0.0
    %4589 = vmatpush1.xpose.msra.mxu0 %v4511
    %4590 = vmatprep.subr.mxu0 0.0
    %4591 = vmatpush1.xpose.msra.mxu0 %v4514
    %4592 = vmatprep.subr.mxu0 0.0
    %4593 = vmatpush1.xpose.msra.mxu0 %v4517
    %4594 = vmatprep.subr.mxu0 0.0
    %4595 = vmatpush1.xpose.msra.mxu0 %v4520
    %4596 = vmatprep.subr.mxu0 0.0
    %4597 = vmatpush1.xpose.msra.mxu0 %v4523
    %4598 = vmatprep.subr.mxu0 0.0
    %4599 = vmatpush1.xpose.msra.mxu0 %v4526
    %4600 = vmatprep.subr.mxu0 0.0
    %4601 = vmatpush1.xpose.msra.mxu0 %v4529
    %4602 = vmatprep.subr.mxu0 0.0
    %4603 = vmatpush1.xpose.msra.mxu0 %v4532
    %4604 = vmatprep.subr.mxu0 0.0
    %4605 = vmatpush1.xpose.msra.mxu0 %v4535
    %4606 = vmatprep.subr.mxu0 0.0
    %4607 = vmatpush1.xpose.msra.mxu0 %v4538
    %4608 = vmatprep.subr.mxu0 0.0
    %4609 = vmatpush1.xpose.msra.mxu0 %v4541
    %4610 = vmatprep.subr.mxu0 0.0
    %4611 = vmatpush1.xpose.msra.mxu0 %v4544
    %4612 = vmatprep.subr.mxu0 0.0
    %4613 = vmatpush1.xpose.msra.mxu0 %v4547
    %4614 = vmatprep.subr.mxu0 0.0
    %4615 = vmatpush1.xpose.msra.mxu0 %v4550
    %4616 = vmatprep.mubr.f32.mxu0 0.0
    %4617 = vmatmul.mubr.f32.gmra.mrb[0].mxu0 %v4451
    %v4618 = vpop.f32.mrb[0].mxu0
    %v4619 = vadd.f32 0.0, %v4618
    %v4620 = vpop.f32.mrb[0].mxu0
    %v4621 = vadd.f32 0.0, %v4620
    %4622 = vmatprep.mubr.f32.mxu0 0.0
    %4623 = vmatmul.mubr.f32.gmra.mrb[0].mxu0 %v4454
    %v4624 = vpop.f32.mrb[0].mxu0
    %v4625 = vadd.f32 0.0, %v4624
    %v4626 = vpop.f32.mrb[0].mxu0
    %v4627 = vadd.f32 0.0, %v4626
    %4628 = vdwg.mxu0
    %v4629 = vadd.f32 %v4414, %v4619
    %v4630 = vadd.f32 %v4415, %v4621
    %v4631 = vadd.f32 %v4416, %v4625
    %v4632 = vadd.f32 %v4417, %v4627
    %4634 = vset.pattern.permute.xlu0 0
    %4635 = vperm.xlu0 %4634, %v194
    %v4636 = vpop.permute.xlu0 %4635
    %4639 = vset.pattern.permute.xlu0 0
    %4640 = vperm.xlu0 %4639, %v195
    %v4641 = vpop.permute.xlu0 %4640
    %v4643 = vadd.f32 %v4629, %v4636
    %v4644 = vadd.f32 %v4630, %v4636
    %v4645 = vadd.f32 %v4631, %v4641
    %v4646 = vadd.f32 %v4632, %v4641
    %v4647 = vmax.f32 %v4643, 0.0
    %v4648 = vmax.f32 %v4644, 0.0
    %v4649 = vmax.f32 %v4645, 0.0
    %v4650 = vmax.f32 %v4646, 0.0
    %v4653 = vcombine.low %v4647, %v4648
    %v4655 = vunpack.c.l.s4 1966171168
    %v4656 = vunpack.c.0.s8 %v4655
    %v4657 = vlaneseq
    %v4658 = vshrl.u32 %v4657, 7
    %v4659 = vsub.s32 %v4656, %v4658
    %v4660 = vrot.slane %v4653, %v4659
    %v4662 = vunpack.c.l.s4 1966171168
    %v4663 = vunpack.c.0.s8 %v4662
    %v4664 = vlaneseq
    %v4665 = vshrl.u32 %v4664, 7
    %v4666 = vsub.s32 %v4663, %v4665
    %v4667 = vrot.slane %v4660, %v4666
    %v4669 = vlaneseq
    %vm4670 = vcmp.ge.s32.totalorder %v4669, 0
    %vm4671 = vcmp.lt.s32.totalorder %v4669, 256
    %vm4672 = vmand %vm4670, %vm4671
    %4673 = vst.msk [vmem:[#allocation4] ss:$2 sm:$0x3] %vm4672, %v4667
    %v4674 = vcombine.high %v4660, %v4660
    %v4676 = vunpack.c.l.s4 1966171168
    %v4677 = vunpack.c.0.s8 %v4676
    %v4678 = vlaneseq
    %v4679 = vshrl.u32 %v4678, 7
    %v4680 = vsub.s32 %v4677, %v4679
    %v4681 = vrot.slane %v4674, %v4680
    %s4683 = scalar_lea.vmem [#allocation4], 4
    %4684 = vst.msk [vmem:[%s4683] ss:$2 sm:$0x3] %vm4672, %v4681
    %v4685 = vcombine.high %v4667, %v4667
    %s4687 = scalar_lea.vmem [#allocation4], 8
    %4688 = vst.msk [vmem:[%s4687] ss:$2 sm:$0x3] %vm4672, %v4685
    %v4689 = vcombine.high %v4681, %v4681
    %s4691 = scalar_lea.vmem [#allocation4], 12
    %4692 = vst.msk [vmem:[%s4691] ss:$2 sm:$0x3] %vm4672, %v4689
    %v4693 = vcombine.high %v4647, %v4648
    %v4695 = vunpack.c.l.s4 1966171168
    %v4696 = vunpack.c.0.s8 %v4695
    %v4697 = vlaneseq
    %v4698 = vshrl.u32 %v4697, 7
    %v4699 = vsub.s32 %v4696, %v4698
    %v4700 = vrot.slane %v4693, %v4699
    %v4702 = vunpack.c.l.s4 1966171168
    %v4703 = vunpack.c.0.s8 %v4702
    %v4704 = vlaneseq
    %v4705 = vshrl.u32 %v4704, 7
    %v4706 = vsub.s32 %v4703, %v4705
    %v4707 = vrot.slane %v4700, %v4706
    %s4709 = scalar_lea.vmem [#allocation4], 16
    %4710 = vst.msk [vmem:[%s4709] ss:$2 sm:$0x3] %vm4672, %v4707
    %v4711 = vcombine.high %v4700, %v4700
    %v4713 = vunpack.c.l.s4 1966171168
    %v4714 = vunpack.c.0.s8 %v4713
    %v4715 = vlaneseq
    %v4716 = vshrl.u32 %v4715, 7
    %v4717 = vsub.s32 %v4714, %v4716
    %v4718 = vrot.slane %v4711, %v4717
    %s4720 = scalar_lea.vmem [#allocation4], 20
    %4721 = vst.msk [vmem:[%s4720] ss:$2 sm:$0x3] %vm4672, %v4718
    %v4722 = vcombine.high %v4707, %v4707
    %s4724 = scalar_lea.vmem [#allocation4], 24
    %4725 = vst.msk [vmem:[%s4724] ss:$2 sm:$0x3] %vm4672, %v4722
    %v4726 = vcombine.high %v4718, %v4718
    %s4728 = scalar_lea.vmem [#allocation4], 28
    %4729 = vst.msk [vmem:[%s4728] ss:$2 sm:$0x3] %vm4672, %v4726
    %v4732 = vcombine.low %v4649, %v4650
    %v4734 = vunpack.c.l.s4 1966171168
    %v4735 = vunpack.c.0.s8 %v4734
    %v4736 = vlaneseq
    %v4737 = vshrl.u32 %v4736, 7
    %v4738 = vsub.s32 %v4735, %v4737
    %v4739 = vrot.slane %v4732, %v4738
    %v4741 = vunpack.c.l.s4 1966171168
    %v4742 = vunpack.c.0.s8 %v4741
    %v4743 = vlaneseq
    %v4744 = vshrl.u32 %v4743, 7
    %v4745 = vsub.s32 %v4742, %v4744
    %v4746 = vrot.slane %v4739, %v4745
    %s4748 = scalar_lea.vmem [#allocation4], 32
    %4749 = vst.msk [vmem:[%s4748] ss:$2 sm:$0x3] %vm4672, %v4746
    %v4750 = vcombine.high %v4739, %v4739
    %v4752 = vunpack.c.l.s4 1966171168
    %v4753 = vunpack.c.0.s8 %v4752
    %v4754 = vlaneseq
    %v4755 = vshrl.u32 %v4754, 7
    %v4756 = vsub.s32 %v4753, %v4755
    %v4757 = vrot.slane %v4750, %v4756
    %s4759 = scalar_lea.vmem [#allocation4], 36
    %4760 = vst.msk [vmem:[%s4759] ss:$2 sm:$0x3] %vm4672, %v4757
    %v4761 = vcombine.high %v4746, %v4746
    %s4763 = scalar_lea.vmem [#allocation4], 40
    %4764 = vst.msk [vmem:[%s4763] ss:$2 sm:$0x3] %vm4672, %v4761
    %v4765 = vcombine.high %v4757, %v4757
    %s4767 = scalar_lea.vmem [#allocation4], 44
    %4768 = vst.msk [vmem:[%s4767] ss:$2 sm:$0x3] %vm4672, %v4765
    %v4769 = vcombine.high %v4649, %v4650
    %v4771 = vunpack.c.l.s4 1966171168
    %v4772 = vunpack.c.0.s8 %v4771
    %v4773 = vlaneseq
    %v4774 = vshrl.u32 %v4773, 7
    %v4775 = vsub.s32 %v4772, %v4774
    %v4776 = vrot.slane %v4769, %v4775
    %v4778 = vunpack.c.l.s4 1966171168
    %v4779 = vunpack.c.0.s8 %v4778
    %v4780 = vlaneseq
    %v4781 = vshrl.u32 %v4780, 7
    %v4782 = vsub.s32 %v4779, %v4781
    %v4783 = vrot.slane %v4776, %v4782
    %s4785 = scalar_lea.vmem [#allocation4], 48
    %4786 = vst.msk [vmem:[%s4785] ss:$2 sm:$0x3] %vm4672, %v4783
    %v4787 = vcombine.high %v4776, %v4776
    %v4789 = vunpack.c.l.s4 1966171168
    %v4790 = vunpack.c.0.s8 %v4789
    %v4791 = vlaneseq
    %v4792 = vshrl.u32 %v4791, 7
    %v4793 = vsub.s32 %v4790, %v4792
    %v4794 = vrot.slane %v4787, %v4793
    %s4796 = scalar_lea.vmem [#allocation4], 52
    %4797 = vst.msk [vmem:[%s4796] ss:$2 sm:$0x3] %vm4672, %v4794
    %v4798 = vcombine.high %v4783, %v4783
    %s4800 = scalar_lea.vmem [#allocation4], 56
    %4801 = vst.msk [vmem:[%s4800] ss:$2 sm:$0x3] %vm4672, %v4798
    %v4802 = vcombine.high %v4794, %v4794
    %s4804 = scalar_lea.vmem [#allocation4], 60
    %4805 = vst.msk [vmem:[%s4804] ss:$2 sm:$0x3] %vm4672, %v4802
    %s4806 = scalar_lea.vmem %s0, 256
    %v4807 = vld [vmem:[%s4806] sm:$0xff]
    %v4808 = vld [vmem:[%s4806 + $0x8] sm:$0xff]
    %v4809 = vld [vmem:[%s4806 + $0x10] sm:$0xff]
    %v4810 = vld [vmem:[%s4806 + $0x18] sm:$0xff]
    %v4811 = vld [vmem:[%s4806 + $0x20] sm:$0xff]
    %v4812 = vld [vmem:[%s4806 + $0x28] sm:$0xff]
    %v4813 = vld [vmem:[%s4806 + $0x30] sm:$0xff]
    %v4814 = vld [vmem:[%s4806 + $0x38] sm:$0xff]
    %v4815 = vld [vmem:[%s4806 + $0x40] sm:$0xff]
    %v4816 = vld [vmem:[%s4806 + $0x48] sm:$0xff]
    %v4817 = vld [vmem:[%s4806 + $0x50] sm:$0xff]
    %v4818 = vld [vmem:[%s4806 + $0x58] sm:$0xff]
    %v4819 = vld [vmem:[%s4806 + $0x60] sm:$0xff]
    %v4820 = vld [vmem:[%s4806 + $0x68] sm:$0xff]
    %v4821 = vld [vmem:[%s4806 + $0x70] sm:$0xff]
    %v4822 = vld [vmem:[%s4806 + $0x78] sm:$0xff]
    %v4823 = vld [vmem:[%s4806 + $0x80] sm:$0xff]
    %v4824 = vld [vmem:[%s4806 + $0x88] sm:$0xff]
    %v4825 = vld [vmem:[%s4806 + $0x90] sm:$0xff]
    %v4826 = vld [vmem:[%s4806 + $0x98] sm:$0xff]
    %v4827 = vld [vmem:[%s4806 + $0xa0] sm:$0xff]
    %v4828 = vld [vmem:[%s4806 + $0xa8] sm:$0xff]
    %v4829 = vld [vmem:[%s4806 + $0xb0] sm:$0xff]
    %v4830 = vld [vmem:[%s4806 + $0xb8] sm:$0xff]
    %v4831 = vld [vmem:[%s4806 + $0xc0] sm:$0xff]
    %v4832 = vld [vmem:[%s4806 + $0xc8] sm:$0xff]
    %v4833 = vld [vmem:[%s4806 + $0xd0] sm:$0xff]
    %v4834 = vld [vmem:[%s4806 + $0xd8] sm:$0xff]
    %v4835 = vld [vmem:[%s4806 + $0xe0] sm:$0xff]
    %v4836 = vld [vmem:[%s4806 + $0xe8] sm:$0xff]
    %v4837 = vld [vmem:[%s4806 + $0xf0] sm:$0xff]
    %v4838 = vld [vmem:[%s4806 + $0xf8] sm:$0xff]
    %4839 = vst.msk [vmem:[%s228 + $0x8] sm:$0xff] %vm27, %v4807
    %4840 = vst.msk [vmem:[%s228 + $0x10] sm:$0xff] %vm27, %v4808
    %4841 = vst.msk [vmem:[%s228 + $0x28] sm:$0xff] %vm27, %v4809
    %4842 = vst.msk [vmem:[%s228 + $0x30] sm:$0xff] %vm27, %v4810
    %4843 = vst.msk [vmem:[%s228 + $0x48] sm:$0xff] %vm27, %v4811
    %4844 = vst.msk [vmem:[%s228 + $0x50] sm:$0xff] %vm27, %v4812
    %4845 = vst.msk [vmem:[%s228 + $0x68] sm:$0xff] %vm27, %v4813
    %4846 = vst.msk [vmem:[%s228 + $0x70] sm:$0xff] %vm27, %v4814
    %4847 = vst.msk [vmem:[%s228 + $0x88] sm:$0xff] %vm27, %v4815
    %4848 = vst.msk [vmem:[%s228 + $0x90] sm:$0xff] %vm27, %v4816
    %4849 = vst.msk [vmem:[%s228 + $0xa8] sm:$0xff] %vm27, %v4817
    %4850 = vst.msk [vmem:[%s228 + $0xb0] sm:$0xff] %vm27, %v4818
    %4851 = vst.msk [vmem:[%s228 + $0xc8] sm:$0xff] %vm27, %v4819
    %4852 = vst.msk [vmem:[%s228 + $0xd0] sm:$0xff] %vm27, %v4820
    %4853 = vst.msk [vmem:[%s228 + $0xe8] sm:$0xff] %vm27, %v4821
    %4854 = vst.msk [vmem:[%s228 + $0xf0] sm:$0xff] %vm27, %v4822
    %4855 = vst.msk [vmem:[%s228 + $0x108] sm:$0xff] %vm27, %v4823
    %4856 = vst.msk [vmem:[%s228 + $0x110] sm:$0xff] %vm27, %v4824
    %4857 = vst.msk [vmem:[%s228 + $0x128] sm:$0xff] %vm27, %v4825
    %4858 = vst.msk [vmem:[%s228 + $0x130] sm:$0xff] %vm27, %v4826
    %4859 = vst.msk [vmem:[%s228 + $0x148] sm:$0xff] %vm27, %v4827
    %4860 = vst.msk [vmem:[%s228 + $0x150] sm:$0xff] %vm27, %v4828
    %4861 = vst.msk [vmem:[%s228 + $0x168] sm:$0xff] %vm27, %v4829
    %4862 = vst.msk [vmem:[%s228 + $0x170] sm:$0xff] %vm27, %v4830
    %4863 = vst.msk [vmem:[%s228 + $0x188] sm:$0xff] %vm27, %v4831
    %4864 = vst.msk [vmem:[%s228 + $0x190] sm:$0xff] %vm27, %v4832
    %4865 = vst.msk [vmem:[%s228 + $0x1a8] sm:$0xff] %vm27, %v4833
    %4866 = vst.msk [vmem:[%s228 + $0x1b0] sm:$0xff] %vm27, %v4834
    %4867 = vst.msk [vmem:[%s228 + $0x1c8] sm:$0xff] %vm27, %v4835
    %4868 = vst.msk [vmem:[%s228 + $0x1d0] sm:$0xff] %vm27, %v4836
    %4869 = vst.msk [vmem:[%s228 + $0x1e8] sm:$0xff] %vm27, %v4837
    %4870 = vst.msk [vmem:[%s228 + $0x1f0] sm:$0xff] %vm27, %v4838
    %v4871 = vld [vmem:[#allocation2 + $0x7] sm:$0xff]
    %v4872 = vld [vmem:[#allocation2 + $0xf] sm:$0xff]
    %v4873 = vld [vmem:[#allocation2 + $0x27] sm:$0xff]
    %v4874 = vld [vmem:[#allocation2 + $0x2f] sm:$0xff]
    %v4875 = vld [vmem:[#allocation2 + $0x47] sm:$0xff]
    %v4876 = vld [vmem:[#allocation2 + $0x4f] sm:$0xff]
    %v4877 = vld [vmem:[#allocation2 + $0x67] sm:$0xff]
    %v4878 = vld [vmem:[#allocation2 + $0x6f] sm:$0xff]
    %v4879 = vld [vmem:[#allocation2 + $0x87] sm:$0xff]
    %v4880 = vld [vmem:[#allocation2 + $0x8f] sm:$0xff]
    %v4881 = vld [vmem:[#allocation2 + $0xa7] sm:$0xff]
    %v4882 = vld [vmem:[#allocation2 + $0xaf] sm:$0xff]
    %v4883 = vld [vmem:[#allocation2 + $0xc7] sm:$0xff]
    %v4884 = vld [vmem:[#allocation2 + $0xcf] sm:$0xff]
    %v4885 = vld [vmem:[#allocation2 + $0xe7] sm:$0xff]
    %v4886 = vld [vmem:[#allocation2 + $0xef] sm:$0xff]
    %v4887 = vld [vmem:[#allocation2 + $0x107] sm:$0xff]
    %v4888 = vld [vmem:[#allocation2 + $0x10f] sm:$0xff]
    %v4889 = vld [vmem:[#allocation2 + $0x127] sm:$0xff]
    %v4890 = vld [vmem:[#allocation2 + $0x12f] sm:$0xff]
    %v4891 = vld [vmem:[#allocation2 + $0x147] sm:$0xff]
    %v4892 = vld [vmem:[#allocation2 + $0x14f] sm:$0xff]
    %v4893 = vld [vmem:[#allocation2 + $0x167] sm:$0xff]
    %v4894 = vld [vmem:[#allocation2 + $0x16f] sm:$0xff]
    %v4895 = vld [vmem:[#allocation2 + $0x187] sm:$0xff]
    %v4896 = vld [vmem:[#allocation2 + $0x18f] sm:$0xff]
    %v4897 = vld [vmem:[#allocation2 + $0x1a7] sm:$0xff]
    %v4898 = vld [vmem:[#allocation2 + $0x1af] sm:$0xff]
    %v4899 = vld [vmem:[#allocation2 + $0x1c7] sm:$0xff]
    %v4900 = vld [vmem:[#allocation2 + $0x1cf] sm:$0xff]
    %v4901 = vld [vmem:[#allocation2 + $0x1e7] sm:$0xff]
    %v4902 = vld [vmem:[#allocation2 + $0x1ef] sm:$0xff]
    %4904 = vset.pattern.permute.xlu0 0
    %4905 = vperm.xlu0 %4904, %v4871
    %v4906 = vpop.permute.xlu0 %4905
    %4909 = vset.pattern.permute.xlu0 0
    %4910 = vperm.xlu0 %4909, %v4872
    %v4911 = vpop.permute.xlu0 %4910
    %4914 = vset.pattern.permute.xlu0 0
    %4915 = vperm.xlu0 %4914, %v4873
    %v4916 = vpop.permute.xlu0 %4915
    %4919 = vset.pattern.permute.xlu0 0
    %4920 = vperm.xlu0 %4919, %v4874
    %v4921 = vpop.permute.xlu0 %4920
    %4924 = vset.pattern.permute.xlu0 0
    %4925 = vperm.xlu0 %4924, %v4875
    %v4926 = vpop.permute.xlu0 %4925
    %4929 = vset.pattern.permute.xlu0 0
    %4930 = vperm.xlu0 %4929, %v4876
    %v4931 = vpop.permute.xlu0 %4930
    %4934 = vset.pattern.permute.xlu0 0
    %4935 = vperm.xlu0 %4934, %v4877
    %v4936 = vpop.permute.xlu0 %4935
    %4939 = vset.pattern.permute.xlu0 0
    %4940 = vperm.xlu0 %4939, %v4878
    %v4941 = vpop.permute.xlu0 %4940
    %4944 = vset.pattern.permute.xlu0 0
    %4945 = vperm.xlu0 %4944, %v4879
    %v4946 = vpop.permute.xlu0 %4945
    %4949 = vset.pattern.permute.xlu0 0
    %4950 = vperm.xlu0 %4949, %v4880
    %v4951 = vpop.permute.xlu0 %4950
    %4954 = vset.pattern.permute.xlu0 0
    %4955 = vperm.xlu0 %4954, %v4881
    %v4956 = vpop.permute.xlu0 %4955
    %4959 = vset.pattern.permute.xlu0 0
    %4960 = vperm.xlu0 %4959, %v4882
    %v4961 = vpop.permute.xlu0 %4960
    %4964 = vset.pattern.permute.xlu0 0
    %4965 = vperm.xlu0 %4964, %v4883
    %v4966 = vpop.permute.xlu0 %4965
    %4969 = vset.pattern.permute.xlu0 0
    %4970 = vperm.xlu0 %4969, %v4884
    %v4971 = vpop.permute.xlu0 %4970
    %4974 = vset.pattern.permute.xlu0 0
    %4975 = vperm.xlu0 %4974, %v4885
    %v4976 = vpop.permute.xlu0 %4975
    %4979 = vset.pattern.permute.xlu0 0
    %4980 = vperm.xlu0 %4979, %v4886
    %v4981 = vpop.permute.xlu0 %4980
    %4984 = vset.pattern.permute.xlu0 0
    %4985 = vperm.xlu0 %4984, %v4887
    %v4986 = vpop.permute.xlu0 %4985
    %4989 = vset.pattern.permute.xlu0 0
    %4990 = vperm.xlu0 %4989, %v4888
    %v4991 = vpop.permute.xlu0 %4990
    %4994 = vset.pattern.permute.xlu0 0
    %4995 = vperm.xlu0 %4994, %v4889
    %v4996 = vpop.permute.xlu0 %4995
    %4999 = vset.pattern.permute.xlu0 0
    %5000 = vperm.xlu0 %4999, %v4890
    %v5001 = vpop.permute.xlu0 %5000
    %5004 = vset.pattern.permute.xlu0 0
    %5005 = vperm.xlu0 %5004, %v4891
    %v5006 = vpop.permute.xlu0 %5005
    %5009 = vset.pattern.permute.xlu0 0
    %5010 = vperm.xlu0 %5009, %v4892
    %v5011 = vpop.permute.xlu0 %5010
    %5014 = vset.pattern.permute.xlu0 0
    %5015 = vperm.xlu0 %5014, %v4893
    %v5016 = vpop.permute.xlu0 %5015
    %5019 = vset.pattern.permute.xlu0 0
    %5020 = vperm.xlu0 %5019, %v4894
    %v5021 = vpop.permute.xlu0 %5020
    %5024 = vset.pattern.permute.xlu0 0
    %5025 = vperm.xlu0 %5024, %v4895
    %v5026 = vpop.permute.xlu0 %5025
    %5029 = vset.pattern.permute.xlu0 0
    %5030 = vperm.xlu0 %5029, %v4896
    %v5031 = vpop.permute.xlu0 %5030
    %5034 = vset.pattern.permute.xlu0 0
    %5035 = vperm.xlu0 %5034, %v4897
    %v5036 = vpop.permute.xlu0 %5035
    %5039 = vset.pattern.permute.xlu0 0
    %5040 = vperm.xlu0 %5039, %v4898
    %v5041 = vpop.permute.xlu0 %5040
    %5044 = vset.pattern.permute.xlu0 0
    %5045 = vperm.xlu0 %5044, %v4899
    %v5046 = vpop.permute.xlu0 %5045
    %5049 = vset.pattern.permute.xlu0 0
    %5050 = vperm.xlu0 %5049, %v4900
    %v5051 = vpop.permute.xlu0 %5050
    %5054 = vset.pattern.permute.xlu0 0
    %5055 = vperm.xlu0 %5054, %v4901
    %v5056 = vpop.permute.xlu0 %5055
    %5059 = vset.pattern.permute.xlu0 0
    %5060 = vperm.xlu0 %5059, %v4902
    %v5061 = vpop.permute.xlu0 %5060
    %v5063 = vmul.f32 %v4906, %v456
    %v5064 = vmul.f32 %v4911, %v456
    %v5065 = vmul.f32 %v4916, %v456
    %v5066 = vmul.f32 %v4921, %v456
    %v5067 = vmul.f32 %v4926, %v456
    %v5068 = vmul.f32 %v4931, %v456
    %v5069 = vmul.f32 %v4936, %v456
    %v5070 = vmul.f32 %v4941, %v456
    %v5071 = vmul.f32 %v4946, %v456
    %v5072 = vmul.f32 %v4951, %v456
    %v5073 = vmul.f32 %v4956, %v456
    %v5074 = vmul.f32 %v4961, %v456
    %v5075 = vmul.f32 %v4966, %v456
    %v5076 = vmul.f32 %v4971, %v456
    %v5077 = vmul.f32 %v4976, %v456
    %v5078 = vmul.f32 %v4981, %v456
    %v5079 = vmul.f32 %v4986, %v456
    %v5080 = vmul.f32 %v4991, %v456
    %v5081 = vmul.f32 %v4996, %v456
    %v5082 = vmul.f32 %v5001, %v456
    %v5083 = vmul.f32 %v5006, %v456
    %v5084 = vmul.f32 %v5011, %v456
    %v5085 = vmul.f32 %v5016, %v456
    %v5086 = vmul.f32 %v5021, %v456
    %v5087 = vmul.f32 %v5026, %v456
    %v5088 = vmul.f32 %v5031, %v456
    %v5089 = vmul.f32 %v5036, %v456
    %v5090 = vmul.f32 %v5041, %v456
    %v5091 = vmul.f32 %v5046, %v456
    %v5092 = vmul.f32 %v5051, %v456
    %v5093 = vmul.f32 %v5056, %v456
    %v5094 = vmul.f32 %v5061, %v456
    %v5095 = vadd.f32 %v5063, 0.0
    %v5096 = vadd.f32 %v5064, 0.0
    %v5097 = vadd.f32 %v5065, 0.0
    %v5098 = vadd.f32 %v5066, 0.0
    %v5099 = vadd.f32 %v5067, 0.0
    %v5100 = vadd.f32 %v5068, 0.0
    %v5101 = vadd.f32 %v5069, 0.0
    %v5102 = vadd.f32 %v5070, 0.0
    %v5103 = vadd.f32 %v5071, 0.0
    %v5104 = vadd.f32 %v5072, 0.0
    %v5105 = vadd.f32 %v5073, 0.0
    %v5106 = vadd.f32 %v5074, 0.0
    %v5107 = vadd.f32 %v5075, 0.0
    %v5108 = vadd.f32 %v5076, 0.0
    %v5109 = vadd.f32 %v5077, 0.0
    %v5110 = vadd.f32 %v5078, 0.0
    %v5111 = vadd.f32 %v5079, 0.0
    %v5112 = vadd.f32 %v5080, 0.0
    %v5113 = vadd.f32 %v5081, 0.0
    %v5114 = vadd.f32 %v5082, 0.0
    %v5115 = vadd.f32 %v5083, 0.0
    %v5116 = vadd.f32 %v5084, 0.0
    %v5117 = vadd.f32 %v5085, 0.0
    %v5118 = vadd.f32 %v5086, 0.0
    %v5119 = vadd.f32 %v5087, 0.0
    %v5120 = vadd.f32 %v5088, 0.0
    %v5121 = vadd.f32 %v5089, 0.0
    %v5122 = vadd.f32 %v5090, 0.0
    %v5123 = vadd.f32 %v5091, 0.0
    %v5124 = vadd.f32 %v5092, 0.0
    %v5125 = vadd.f32 %v5093, 0.0
    %v5126 = vadd.f32 %v5094, 0.0
    %v5127 = vld [vmem:[#allocation2 + $0x8] sm:$0xff]
    %v5128 = vld [vmem:[#allocation2 + $0x10] sm:$0xff]
    %v5129 = vld [vmem:[#allocation2 + $0x28] sm:$0xff]
    %v5130 = vld [vmem:[#allocation2 + $0x30] sm:$0xff]
    %v5131 = vld [vmem:[#allocation2 + $0x48] sm:$0xff]
    %v5132 = vld [vmem:[#allocation2 + $0x50] sm:$0xff]
    %v5133 = vld [vmem:[#allocation2 + $0x68] sm:$0xff]
    %v5134 = vld [vmem:[#allocation2 + $0x70] sm:$0xff]
    %v5135 = vld [vmem:[#allocation2 + $0x88] sm:$0xff]
    %v5136 = vld [vmem:[#allocation2 + $0x90] sm:$0xff]
    %v5137 = vld [vmem:[#allocation2 + $0xa8] sm:$0xff]
    %v5138 = vld [vmem:[#allocation2 + $0xb0] sm:$0xff]
    %v5139 = vld [vmem:[#allocation2 + $0xc8] sm:$0xff]
    %v5140 = vld [vmem:[#allocation2 + $0xd0] sm:$0xff]
    %v5141 = vld [vmem:[#allocation2 + $0xe8] sm:$0xff]
    %v5142 = vld [vmem:[#allocation2 + $0xf0] sm:$0xff]
    %v5143 = vld [vmem:[#allocation2 + $0x108] sm:$0xff]
    %v5144 = vld [vmem:[#allocation2 + $0x110] sm:$0xff]
    %v5145 = vld [vmem:[#allocation2 + $0x128] sm:$0xff]
    %v5146 = vld [vmem:[#allocation2 + $0x130] sm:$0xff]
    %v5147 = vld [vmem:[#allocation2 + $0x148] sm:$0xff]
    %v5148 = vld [vmem:[#allocation2 + $0x150] sm:$0xff]
    %v5149 = vld [vmem:[#allocation2 + $0x168] sm:$0xff]
    %v5150 = vld [vmem:[#allocation2 + $0x170] sm:$0xff]
    %v5151 = vld [vmem:[#allocation2 + $0x188] sm:$0xff]
    %v5152 = vld [vmem:[#allocation2 + $0x190] sm:$0xff]
    %v5153 = vld [vmem:[#allocation2 + $0x1a8] sm:$0xff]
    %v5154 = vld [vmem:[#allocation2 + $0x1b0] sm:$0xff]
    %v5155 = vld [vmem:[#allocation2 + $0x1c8] sm:$0xff]
    %v5156 = vld [vmem:[#allocation2 + $0x1d0] sm:$0xff]
    %v5157 = vld [vmem:[#allocation2 + $0x1e8] sm:$0xff]
    %v5158 = vld [vmem:[#allocation2 + $0x1f0] sm:$0xff]
    %5160 = vset.pattern.permute.xlu0 0
    %5161 = vperm.xlu0 %5160, %v5127
    %v5162 = vpop.permute.xlu0 %5161
    %5165 = vset.pattern.permute.xlu0 0
    %5166 = vperm.xlu0 %5165, %v5128
    %v5167 = vpop.permute.xlu0 %5166
    %5170 = vset.pattern.permute.xlu0 0
    %5171 = vperm.xlu0 %5170, %v5129
    %v5172 = vpop.permute.xlu0 %5171
    %5175 = vset.pattern.permute.xlu0 0
    %5176 = vperm.xlu0 %5175, %v5130
    %v5177 = vpop.permute.xlu0 %5176
    %5180 = vset.pattern.permute.xlu0 0
    %5181 = vperm.xlu0 %5180, %v5131
    %v5182 = vpop.permute.xlu0 %5181
    %5185 = vset.pattern.permute.xlu0 0
    %5186 = vperm.xlu0 %5185, %v5132
    %v5187 = vpop.permute.xlu0 %5186
    %5190 = vset.pattern.permute.xlu0 0
    %5191 = vperm.xlu0 %5190, %v5133
    %v5192 = vpop.permute.xlu0 %5191
    %5195 = vset.pattern.permute.xlu0 0
    %5196 = vperm.xlu0 %5195, %v5134
    %v5197 = vpop.permute.xlu0 %5196
    %5200 = vset.pattern.permute.xlu0 0
    %5201 = vperm.xlu0 %5200, %v5135
    %v5202 = vpop.permute.xlu0 %5201
    %5205 = vset.pattern.permute.xlu0 0
    %5206 = vperm.xlu0 %5205, %v5136
    %v5207 = vpop.permute.xlu0 %5206
    %5210 = vset.pattern.permute.xlu0 0
    %5211 = vperm.xlu0 %5210, %v5137
    %v5212 = vpop.permute.xlu0 %5211
    %5215 = vset.pattern.permute.xlu0 0
    %5216 = vperm.xlu0 %5215, %v5138
    %v5217 = vpop.permute.xlu0 %5216
    %5220 = vset.pattern.permute.xlu0 0
    %5221 = vperm.xlu0 %5220, %v5139
    %v5222 = vpop.permute.xlu0 %5221
    %5225 = vset.pattern.permute.xlu0 0
    %5226 = vperm.xlu0 %5225, %v5140
    %v5227 = vpop.permute.xlu0 %5226
    %5230 = vset.pattern.permute.xlu0 0
    %5231 = vperm.xlu0 %5230, %v5141
    %v5232 = vpop.permute.xlu0 %5231
    %5235 = vset.pattern.permute.xlu0 0
    %5236 = vperm.xlu0 %5235, %v5142
    %v5237 = vpop.permute.xlu0 %5236
    %5240 = vset.pattern.permute.xlu0 0
    %5241 = vperm.xlu0 %5240, %v5143
    %v5242 = vpop.permute.xlu0 %5241
    %5245 = vset.pattern.permute.xlu0 0
    %5246 = vperm.xlu0 %5245, %v5144
    %v5247 = vpop.permute.xlu0 %5246
    %5250 = vset.pattern.permute.xlu0 0
    %5251 = vperm.xlu0 %5250, %v5145
    %v5252 = vpop.permute.xlu0 %5251
    %5255 = vset.pattern.permute.xlu0 0
    %5256 = vperm.xlu0 %5255, %v5146
    %v5257 = vpop.permute.xlu0 %5256
    %5260 = vset.pattern.permute.xlu0 0
    %5261 = vperm.xlu0 %5260, %v5147
    %v5262 = vpop.permute.xlu0 %5261
    %5265 = vset.pattern.permute.xlu0 0
    %5266 = vperm.xlu0 %5265, %v5148
    %v5267 = vpop.permute.xlu0 %5266
    %5270 = vset.pattern.permute.xlu0 0
    %5271 = vperm.xlu0 %5270, %v5149
    %v5272 = vpop.permute.xlu0 %5271
    %5275 = vset.pattern.permute.xlu0 0
    %5276 = vperm.xlu0 %5275, %v5150
    %v5277 = vpop.permute.xlu0 %5276
    %5280 = vset.pattern.permute.xlu0 0
    %5281 = vperm.xlu0 %5280, %v5151
    %v5282 = vpop.permute.xlu0 %5281
    %5285 = vset.pattern.permute.xlu0 0
    %5286 = vperm.xlu0 %5285, %v5152
    %v5287 = vpop.permute.xlu0 %5286
    %5290 = vset.pattern.permute.xlu0 0
    %5291 = vperm.xlu0 %5290, %v5153
    %v5292 = vpop.permute.xlu0 %5291
    %5295 = vset.pattern.permute.xlu0 0
    %5296 = vperm.xlu0 %5295, %v5154
    %v5297 = vpop.permute.xlu0 %5296
    %5300 = vset.pattern.permute.xlu0 0
    %5301 = vperm.xlu0 %5300, %v5155
    %v5302 = vpop.permute.xlu0 %5301
    %5305 = vset.pattern.permute.xlu0 0
    %5306 = vperm.xlu0 %5305, %v5156
    %v5307 = vpop.permute.xlu0 %5306
    %5310 = vset.pattern.permute.xlu0 0
    %5311 = vperm.xlu0 %5310, %v5157
    %v5312 = vpop.permute.xlu0 %5311
    %5315 = vset.pattern.permute.xlu0 0
    %5316 = vperm.xlu0 %5315, %v5158
    %v5317 = vpop.permute.xlu0 %5316
    %v5319 = vmul.f32 %v5162, %v716
    %v5320 = vmul.f32 %v5167, %v716
    %v5321 = vmul.f32 %v5172, %v716
    %v5322 = vmul.f32 %v5177, %v716
    %v5323 = vmul.f32 %v5182, %v716
    %v5324 = vmul.f32 %v5187, %v716
    %v5325 = vmul.f32 %v5192, %v716
    %v5326 = vmul.f32 %v5197, %v716
    %v5327 = vmul.f32 %v5202, %v716
    %v5328 = vmul.f32 %v5207, %v716
    %v5329 = vmul.f32 %v5212, %v716
    %v5330 = vmul.f32 %v5217, %v716
    %v5331 = vmul.f32 %v5222, %v716
    %v5332 = vmul.f32 %v5227, %v716
    %v5333 = vmul.f32 %v5232, %v716
    %v5334 = vmul.f32 %v5237, %v716
    %v5335 = vmul.f32 %v5242, %v716
    %v5336 = vmul.f32 %v5247, %v716
    %v5337 = vmul.f32 %v5252, %v716
    %v5338 = vmul.f32 %v5257, %v716
    %v5339 = vmul.f32 %v5262, %v716
    %v5340 = vmul.f32 %v5267, %v716
    %v5341 = vmul.f32 %v5272, %v716
    %v5342 = vmul.f32 %v5277, %v716
    %v5343 = vmul.f32 %v5282, %v716
    %v5344 = vmul.f32 %v5287, %v716
    %v5345 = vmul.f32 %v5292, %v716
    %v5346 = vmul.f32 %v5297, %v716
    %v5347 = vmul.f32 %v5302, %v716
    %v5348 = vmul.f32 %v5307, %v716
    %v5349 = vmul.f32 %v5312, %v716
    %v5350 = vmul.f32 %v5317, %v716
    %v5351 = vadd.f32 %v5095, %v5319
    %v5352 = vadd.f32 %v5096, %v5320
    %v5353 = vadd.f32 %v5097, %v5321
    %v5354 = vadd.f32 %v5098, %v5322
    %v5355 = vadd.f32 %v5099, %v5323
    %v5356 = vadd.f32 %v5100, %v5324
    %v5357 = vadd.f32 %v5101, %v5325
    %v5358 = vadd.f32 %v5102, %v5326
    %v5359 = vadd.f32 %v5103, %v5327
    %v5360 = vadd.f32 %v5104, %v5328
    %v5361 = vadd.f32 %v5105, %v5329
    %v5362 = vadd.f32 %v5106, %v5330
    %v5363 = vadd.f32 %v5107, %v5331
    %v5364 = vadd.f32 %v5108, %v5332
    %v5365 = vadd.f32 %v5109, %v5333
    %v5366 = vadd.f32 %v5110, %v5334
    %v5367 = vadd.f32 %v5111, %v5335
    %v5368 = vadd.f32 %v5112, %v5336
    %v5369 = vadd.f32 %v5113, %v5337
    %v5370 = vadd.f32 %v5114, %v5338
    %v5371 = vadd.f32 %v5115, %v5339
    %v5372 = vadd.f32 %v5116, %v5340
    %v5373 = vadd.f32 %v5117, %v5341
    %v5374 = vadd.f32 %v5118, %v5342
    %v5375 = vadd.f32 %v5119, %v5343
    %v5376 = vadd.f32 %v5120, %v5344
    %v5377 = vadd.f32 %v5121, %v5345
    %v5378 = vadd.f32 %v5122, %v5346
    %v5379 = vadd.f32 %v5123, %v5347
    %v5380 = vadd.f32 %v5124, %v5348
    %v5381 = vadd.f32 %v5125, %v5349
    %v5382 = vadd.f32 %v5126, %v5350
    %v5383 = vld [vmem:[#allocation2 + $0x9] sm:$0xff]
    %v5384 = vld [vmem:[#allocation2 + $0x11] sm:$0xff]
    %v5385 = vld [vmem:[#allocation2 + $0x29] sm:$0xff]
    %v5386 = vld [vmem:[#allocation2 + $0x31] sm:$0xff]
    %v5387 = vld [vmem:[#allocation2 + $0x49] sm:$0xff]
    %v5388 = vld [vmem:[#allocation2 + $0x51] sm:$0xff]
    %v5389 = vld [vmem:[#allocation2 + $0x69] sm:$0xff]
    %v5390 = vld [vmem:[#allocation2 + $0x71] sm:$0xff]
    %v5391 = vld [vmem:[#allocation2 + $0x89] sm:$0xff]
    %v5392 = vld [vmem:[#allocation2 + $0x91] sm:$0xff]
    %v5393 = vld [vmem:[#allocation2 + $0xa9] sm:$0xff]
    %v5394 = vld [vmem:[#allocation2 + $0xb1] sm:$0xff]
    %v5395 = vld [vmem:[#allocation2 + $0xc9] sm:$0xff]
    %v5396 = vld [vmem:[#allocation2 + $0xd1] sm:$0xff]
    %v5397 = vld [vmem:[#allocation2 + $0xe9] sm:$0xff]
    %v5398 = vld [vmem:[#allocation2 + $0xf1] sm:$0xff]
    %v5399 = vld [vmem:[#allocation2 + $0x109] sm:$0xff]
    %v5400 = vld [vmem:[#allocation2 + $0x111] sm:$0xff]
    %v5401 = vld [vmem:[#allocation2 + $0x129] sm:$0xff]
    %v5402 = vld [vmem:[#allocation2 + $0x131] sm:$0xff]
    %v5403 = vld [vmem:[#allocation2 + $0x149] sm:$0xff]
    %v5404 = vld [vmem:[#allocation2 + $0x151] sm:$0xff]
    %v5405 = vld [vmem:[#allocation2 + $0x169] sm:$0xff]
    %v5406 = vld [vmem:[#allocation2 + $0x171] sm:$0xff]
    %v5407 = vld [vmem:[#allocation2 + $0x189] sm:$0xff]
    %v5408 = vld [vmem:[#allocation2 + $0x191] sm:$0xff]
    %v5409 = vld [vmem:[#allocation2 + $0x1a9] sm:$0xff]
    %v5410 = vld [vmem:[#allocation2 + $0x1b1] sm:$0xff]
    %v5411 = vld [vmem:[#allocation2 + $0x1c9] sm:$0xff]
    %v5412 = vld [vmem:[#allocation2 + $0x1d1] sm:$0xff]
    %v5413 = vld [vmem:[#allocation2 + $0x1e9] sm:$0xff]
    %v5414 = vld [vmem:[#allocation2 + $0x1f1] sm:$0xff]
    %5416 = vset.pattern.permute.xlu0 0
    %5417 = vperm.xlu0 %5416, %v5383
    %v5418 = vpop.permute.xlu0 %5417
    %5421 = vset.pattern.permute.xlu0 0
    %5422 = vperm.xlu0 %5421, %v5384
    %v5423 = vpop.permute.xlu0 %5422
    %5426 = vset.pattern.permute.xlu0 0
    %5427 = vperm.xlu0 %5426, %v5385
    %v5428 = vpop.permute.xlu0 %5427
    %5431 = vset.pattern.permute.xlu0 0
    %5432 = vperm.xlu0 %5431, %v5386
    %v5433 = vpop.permute.xlu0 %5432
    %5436 = vset.pattern.permute.xlu0 0
    %5437 = vperm.xlu0 %5436, %v5387
    %v5438 = vpop.permute.xlu0 %5437
    %5441 = vset.pattern.permute.xlu0 0
    %5442 = vperm.xlu0 %5441, %v5388
    %v5443 = vpop.permute.xlu0 %5442
    %5446 = vset.pattern.permute.xlu0 0
    %5447 = vperm.xlu0 %5446, %v5389
    %v5448 = vpop.permute.xlu0 %5447
    %5451 = vset.pattern.permute.xlu0 0
    %5452 = vperm.xlu0 %5451, %v5390
    %v5453 = vpop.permute.xlu0 %5452
    %5456 = vset.pattern.permute.xlu0 0
    %5457 = vperm.xlu0 %5456, %v5391
    %v5458 = vpop.permute.xlu0 %5457
    %5461 = vset.pattern.permute.xlu0 0
    %5462 = vperm.xlu0 %5461, %v5392
    %v5463 = vpop.permute.xlu0 %5462
    %5466 = vset.pattern.permute.xlu0 0
    %5467 = vperm.xlu0 %5466, %v5393
    %v5468 = vpop.permute.xlu0 %5467
    %5471 = vset.pattern.permute.xlu0 0
    %5472 = vperm.xlu0 %5471, %v5394
    %v5473 = vpop.permute.xlu0 %5472
    %5476 = vset.pattern.permute.xlu0 0
    %5477 = vperm.xlu0 %5476, %v5395
    %v5478 = vpop.permute.xlu0 %5477
    %5481 = vset.pattern.permute.xlu0 0
    %5482 = vperm.xlu0 %5481, %v5396
    %v5483 = vpop.permute.xlu0 %5482
    %5486 = vset.pattern.permute.xlu0 0
    %5487 = vperm.xlu0 %5486, %v5397
    %v5488 = vpop.permute.xlu0 %5487
    %5491 = vset.pattern.permute.xlu0 0
    %5492 = vperm.xlu0 %5491, %v5398
    %v5493 = vpop.permute.xlu0 %5492
    %5496 = vset.pattern.permute.xlu0 0
    %5497 = vperm.xlu0 %5496, %v5399
    %v5498 = vpop.permute.xlu0 %5497
    %5501 = vset.pattern.permute.xlu0 0
    %5502 = vperm.xlu0 %5501, %v5400
    %v5503 = vpop.permute.xlu0 %5502
    %5506 = vset.pattern.permute.xlu0 0
    %5507 = vperm.xlu0 %5506, %v5401
    %v5508 = vpop.permute.xlu0 %5507
    %5511 = vset.pattern.permute.xlu0 0
    %5512 = vperm.xlu0 %5511, %v5402
    %v5513 = vpop.permute.xlu0 %5512
    %5516 = vset.pattern.permute.xlu0 0
    %5517 = vperm.xlu0 %5516, %v5403
    %v5518 = vpop.permute.xlu0 %5517
    %5521 = vset.pattern.permute.xlu0 0
    %5522 = vperm.xlu0 %5521, %v5404
    %v5523 = vpop.permute.xlu0 %5522
    %5526 = vset.pattern.permute.xlu0 0
    %5527 = vperm.xlu0 %5526, %v5405
    %v5528 = vpop.permute.xlu0 %5527
    %5531 = vset.pattern.permute.xlu0 0
    %5532 = vperm.xlu0 %5531, %v5406
    %v5533 = vpop.permute.xlu0 %5532
    %5536 = vset.pattern.permute.xlu0 0
    %5537 = vperm.xlu0 %5536, %v5407
    %v5538 = vpop.permute.xlu0 %5537
    %5541 = vset.pattern.permute.xlu0 0
    %5542 = vperm.xlu0 %5541, %v5408
    %v5543 = vpop.permute.xlu0 %5542
    %5546 = vset.pattern.permute.xlu0 0
    %5547 = vperm.xlu0 %5546, %v5409
    %v5548 = vpop.permute.xlu0 %5547
    %5551 = vset.pattern.permute.xlu0 0
    %5552 = vperm.xlu0 %5551, %v5410
    %v5553 = vpop.permute.xlu0 %5552
    %5556 = vset.pattern.permute.xlu0 0
    %5557 = vperm.xlu0 %5556, %v5411
    %v5558 = vpop.permute.xlu0 %5557
    %5561 = vset.pattern.permute.xlu0 0
    %5562 = vperm.xlu0 %5561, %v5412
    %v5563 = vpop.permute.xlu0 %5562
    %5566 = vset.pattern.permute.xlu0 0
    %5567 = vperm.xlu0 %5566, %v5413
    %v5568 = vpop.permute.xlu0 %5567
    %5571 = vset.pattern.permute.xlu0 0
    %5572 = vperm.xlu0 %5571, %v5414
    %v5573 = vpop.permute.xlu0 %5572
    %v5575 = vmul.f32 %v5418, %v976
    %v5576 = vmul.f32 %v5423, %v976
    %v5577 = vmul.f32 %v5428, %v976
    %v5578 = vmul.f32 %v5433, %v976
    %v5579 = vmul.f32 %v5438, %v976
    %v5580 = vmul.f32 %v5443, %v976
    %v5581 = vmul.f32 %v5448, %v976
    %v5582 = vmul.f32 %v5453, %v976
    %v5583 = vmul.f32 %v5458, %v976
    %v5584 = vmul.f32 %v5463, %v976
    %v5585 = vmul.f32 %v5468, %v976
    %v5586 = vmul.f32 %v5473, %v976
    %v5587 = vmul.f32 %v5478, %v976
    %v5588 = vmul.f32 %v5483, %v976
    %v5589 = vmul.f32 %v5488, %v976
    %v5590 = vmul.f32 %v5493, %v976
    %v5591 = vmul.f32 %v5498, %v976
    %v5592 = vmul.f32 %v5503, %v976
    %v5593 = vmul.f32 %v5508, %v976
    %v5594 = vmul.f32 %v5513, %v976
    %v5595 = vmul.f32 %v5518, %v976
    %v5596 = vmul.f32 %v5523, %v976
    %v5597 = vmul.f32 %v5528, %v976
    %v5598 = vmul.f32 %v5533, %v976
    %v5599 = vmul.f32 %v5538, %v976
    %v5600 = vmul.f32 %v5543, %v976
    %v5601 = vmul.f32 %v5548, %v976
    %v5602 = vmul.f32 %v5553, %v976
    %v5603 = vmul.f32 %v5558, %v976
    %v5604 = vmul.f32 %v5563, %v976
    %v5605 = vmul.f32 %v5568, %v976
    %v5606 = vmul.f32 %v5573, %v976
    %v5607 = vadd.f32 %v5351, %v5575
    %v5608 = vadd.f32 %v5352, %v5576
    %v5609 = vadd.f32 %v5353, %v5577
    %v5610 = vadd.f32 %v5354, %v5578
    %v5611 = vadd.f32 %v5355, %v5579
    %v5612 = vadd.f32 %v5356, %v5580
    %v5613 = vadd.f32 %v5357, %v5581
    %v5614 = vadd.f32 %v5358, %v5582
    %v5615 = vadd.f32 %v5359, %v5583
    %v5616 = vadd.f32 %v5360, %v5584
    %v5617 = vadd.f32 %v5361, %v5585
    %v5618 = vadd.f32 %v5362, %v5586
    %v5619 = vadd.f32 %v5363, %v5587
    %v5620 = vadd.f32 %v5364, %v5588
    %v5621 = vadd.f32 %v5365, %v5589
    %v5622 = vadd.f32 %v5366, %v5590
    %v5623 = vadd.f32 %v5367, %v5591
    %v5624 = vadd.f32 %v5368, %v5592
    %v5625 = vadd.f32 %v5369, %v5593
    %v5626 = vadd.f32 %v5370, %v5594
    %v5627 = vadd.f32 %v5371, %v5595
    %v5628 = vadd.f32 %v5372, %v5596
    %v5629 = vadd.f32 %v5373, %v5597
    %v5630 = vadd.f32 %v5374, %v5598
    %v5631 = vadd.f32 %v5375, %v5599
    %v5632 = vadd.f32 %v5376, %v5600
    %v5633 = vadd.f32 %v5377, %v5601
    %v5634 = vadd.f32 %v5378, %v5602
    %v5635 = vadd.f32 %v5379, %v5603
    %v5636 = vadd.f32 %v5380, %v5604
    %v5637 = vadd.f32 %v5381, %v5605
    %v5638 = vadd.f32 %v5382, %v5606
    %v5639 = vld [vmem:[%s228 + $0x7] sm:$0xff]
    %v5640 = vld [vmem:[%s228 + $0xf] sm:$0xff]
    %v5641 = vld [vmem:[%s228 + $0x27] sm:$0xff]
    %v5642 = vld [vmem:[%s228 + $0x2f] sm:$0xff]
    %v5643 = vld [vmem:[%s228 + $0x47] sm:$0xff]
    %v5644 = vld [vmem:[%s228 + $0x4f] sm:$0xff]
    %v5645 = vld [vmem:[%s228 + $0x67] sm:$0xff]
    %v5646 = vld [vmem:[%s228 + $0x6f] sm:$0xff]
    %v5647 = vld [vmem:[%s228 + $0x87] sm:$0xff]
    %v5648 = vld [vmem:[%s228 + $0x8f] sm:$0xff]
    %v5649 = vld [vmem:[%s228 + $0xa7] sm:$0xff]
    %v5650 = vld [vmem:[%s228 + $0xaf] sm:$0xff]
    %v5651 = vld [vmem:[%s228 + $0xc7] sm:$0xff]
    %v5652 = vld [vmem:[%s228 + $0xcf] sm:$0xff]
    %v5653 = vld [vmem:[%s228 + $0xe7] sm:$0xff]
    %v5654 = vld [vmem:[%s228 + $0xef] sm:$0xff]
    %v5655 = vld [vmem:[%s228 + $0x107] sm:$0xff]
    %v5656 = vld [vmem:[%s228 + $0x10f] sm:$0xff]
    %v5657 = vld [vmem:[%s228 + $0x127] sm:$0xff]
    %v5658 = vld [vmem:[%s228 + $0x12f] sm:$0xff]
    %v5659 = vld [vmem:[%s228 + $0x147] sm:$0xff]
    %v5660 = vld [vmem:[%s228 + $0x14f] sm:$0xff]
    %v5661 = vld [vmem:[%s228 + $0x167] sm:$0xff]
    %v5662 = vld [vmem:[%s228 + $0x16f] sm:$0xff]
    %v5663 = vld [vmem:[%s228 + $0x187] sm:$0xff]
    %v5664 = vld [vmem:[%s228 + $0x18f] sm:$0xff]
    %v5665 = vld [vmem:[%s228 + $0x1a7] sm:$0xff]
    %v5666 = vld [vmem:[%s228 + $0x1af] sm:$0xff]
    %v5667 = vld [vmem:[%s228 + $0x1c7] sm:$0xff]
    %v5668 = vld [vmem:[%s228 + $0x1cf] sm:$0xff]
    %v5669 = vld [vmem:[%s228 + $0x1e7] sm:$0xff]
    %v5670 = vld [vmem:[%s228 + $0x1ef] sm:$0xff]
    %5672 = vset.pattern.permute.xlu0 0
    %5673 = vperm.xlu0 %5672, %v5639
    %v5674 = vpop.permute.xlu0 %5673
    %5677 = vset.pattern.permute.xlu0 0
    %5678 = vperm.xlu0 %5677, %v5640
    %v5679 = vpop.permute.xlu0 %5678
    %5682 = vset.pattern.permute.xlu0 0
    %5683 = vperm.xlu0 %5682, %v5641
    %v5684 = vpop.permute.xlu0 %5683
    %5687 = vset.pattern.permute.xlu0 0
    %5688 = vperm.xlu0 %5687, %v5642
    %v5689 = vpop.permute.xlu0 %5688
    %5692 = vset.pattern.permute.xlu0 0
    %5693 = vperm.xlu0 %5692, %v5643
    %v5694 = vpop.permute.xlu0 %5693
    %5697 = vset.pattern.permute.xlu0 0
    %5698 = vperm.xlu0 %5697, %v5644
    %v5699 = vpop.permute.xlu0 %5698
    %5702 = vset.pattern.permute.xlu0 0
    %5703 = vperm.xlu0 %5702, %v5645
    %v5704 = vpop.permute.xlu0 %5703
    %5707 = vset.pattern.permute.xlu0 0
    %5708 = vperm.xlu0 %5707, %v5646
    %v5709 = vpop.permute.xlu0 %5708
    %5712 = vset.pattern.permute.xlu0 0
    %5713 = vperm.xlu0 %5712, %v5647
    %v5714 = vpop.permute.xlu0 %5713
    %5717 = vset.pattern.permute.xlu0 0
    %5718 = vperm.xlu0 %5717, %v5648
    %v5719 = vpop.permute.xlu0 %5718
    %5722 = vset.pattern.permute.xlu0 0
    %5723 = vperm.xlu0 %5722, %v5649
    %v5724 = vpop.permute.xlu0 %5723
    %5727 = vset.pattern.permute.xlu0 0
    %5728 = vperm.xlu0 %5727, %v5650
    %v5729 = vpop.permute.xlu0 %5728
    %5732 = vset.pattern.permute.xlu0 0
    %5733 = vperm.xlu0 %5732, %v5651
    %v5734 = vpop.permute.xlu0 %5733
    %5737 = vset.pattern.permute.xlu0 0
    %5738 = vperm.xlu0 %5737, %v5652
    %v5739 = vpop.permute.xlu0 %5738
    %5742 = vset.pattern.permute.xlu0 0
    %5743 = vperm.xlu0 %5742, %v5653
    %v5744 = vpop.permute.xlu0 %5743
    %5747 = vset.pattern.permute.xlu0 0
    %5748 = vperm.xlu0 %5747, %v5654
    %v5749 = vpop.permute.xlu0 %5748
    %5752 = vset.pattern.permute.xlu0 0
    %5753 = vperm.xlu0 %5752, %v5655
    %v5754 = vpop.permute.xlu0 %5753
    %5757 = vset.pattern.permute.xlu0 0
    %5758 = vperm.xlu0 %5757, %v5656
    %v5759 = vpop.permute.xlu0 %5758
    %5762 = vset.pattern.permute.xlu0 0
    %5763 = vperm.xlu0 %5762, %v5657
    %v5764 = vpop.permute.xlu0 %5763
    %5767 = vset.pattern.permute.xlu0 0
    %5768 = vperm.xlu0 %5767, %v5658
    %v5769 = vpop.permute.xlu0 %5768
    %5772 = vset.pattern.permute.xlu0 0
    %5773 = vperm.xlu0 %5772, %v5659
    %v5774 = vpop.permute.xlu0 %5773
    %5777 = vset.pattern.permute.xlu0 0
    %5778 = vperm.xlu0 %5777, %v5660
    %v5779 = vpop.permute.xlu0 %5778
    %5782 = vset.pattern.permute.xlu0 0
    %5783 = vperm.xlu0 %5782, %v5661
    %v5784 = vpop.permute.xlu0 %5783
    %5787 = vset.pattern.permute.xlu0 0
    %5788 = vperm.xlu0 %5787, %v5662
    %v5789 = vpop.permute.xlu0 %5788
    %5792 = vset.pattern.permute.xlu0 0
    %5793 = vperm.xlu0 %5792, %v5663
    %v5794 = vpop.permute.xlu0 %5793
    %5797 = vset.pattern.permute.xlu0 0
    %5798 = vperm.xlu0 %5797, %v5664
    %v5799 = vpop.permute.xlu0 %5798
    %5802 = vset.pattern.permute.xlu0 0
    %5803 = vperm.xlu0 %5802, %v5665
    %v5804 = vpop.permute.xlu0 %5803
    %5807 = vset.pattern.permute.xlu0 0
    %5808 = vperm.xlu0 %5807, %v5666
    %v5809 = vpop.permute.xlu0 %5808
    %5812 = vset.pattern.permute.xlu0 0
    %5813 = vperm.xlu0 %5812, %v5667
    %v5814 = vpop.permute.xlu0 %5813
    %5817 = vset.pattern.permute.xlu0 0
    %5818 = vperm.xlu0 %5817, %v5668
    %v5819 = vpop.permute.xlu0 %5818
    %5822 = vset.pattern.permute.xlu0 0
    %5823 = vperm.xlu0 %5822, %v5669
    %v5824 = vpop.permute.xlu0 %5823
    %5827 = vset.pattern.permute.xlu0 0
    %5828 = vperm.xlu0 %5827, %v5670
    %v5829 = vpop.permute.xlu0 %5828
    %v5831 = vmul.f32 %v5674, %v1236
    %v5832 = vmul.f32 %v5679, %v1236
    %v5833 = vmul.f32 %v5684, %v1236
    %v5834 = vmul.f32 %v5689, %v1236
    %v5835 = vmul.f32 %v5694, %v1236
    %v5836 = vmul.f32 %v5699, %v1236
    %v5837 = vmul.f32 %v5704, %v1236
    %v5838 = vmul.f32 %v5709, %v1236
    %v5839 = vmul.f32 %v5714, %v1236
    %v5840 = vmul.f32 %v5719, %v1236
    %v5841 = vmul.f32 %v5724, %v1236
    %v5842 = vmul.f32 %v5729, %v1236
    %v5843 = vmul.f32 %v5734, %v1236
    %v5844 = vmul.f32 %v5739, %v1236
    %v5845 = vmul.f32 %v5744, %v1236
    %v5846 = vmul.f32 %v5749, %v1236
    %v5847 = vmul.f32 %v5754, %v1236
    %v5848 = vmul.f32 %v5759, %v1236
    %v5849 = vmul.f32 %v5764, %v1236
    %v5850 = vmul.f32 %v5769, %v1236
    %v5851 = vmul.f32 %v5774, %v1236
    %v5852 = vmul.f32 %v5779, %v1236
    %v5853 = vmul.f32 %v5784, %v1236
    %v5854 = vmul.f32 %v5789, %v1236
    %v5855 = vmul.f32 %v5794, %v1236
    %v5856 = vmul.f32 %v5799, %v1236
    %v5857 = vmul.f32 %v5804, %v1236
    %v5858 = vmul.f32 %v5809, %v1236
    %v5859 = vmul.f32 %v5814, %v1236
    %v5860 = vmul.f32 %v5819, %v1236
    %v5861 = vmul.f32 %v5824, %v1236
    %v5862 = vmul.f32 %v5829, %v1236
    %v5863 = vadd.f32 %v5607, %v5831
    %v5864 = vadd.f32 %v5608, %v5832
    %v5865 = vadd.f32 %v5609, %v5833
    %v5866 = vadd.f32 %v5610, %v5834
    %v5867 = vadd.f32 %v5611, %v5835
    %v5868 = vadd.f32 %v5612, %v5836
    %v5869 = vadd.f32 %v5613, %v5837
    %v5870 = vadd.f32 %v5614, %v5838
    %v5871 = vadd.f32 %v5615, %v5839
    %v5872 = vadd.f32 %v5616, %v5840
    %v5873 = vadd.f32 %v5617, %v5841
    %v5874 = vadd.f32 %v5618, %v5842
    %v5875 = vadd.f32 %v5619, %v5843
    %v5876 = vadd.f32 %v5620, %v5844
    %v5877 = vadd.f32 %v5621, %v5845
    %v5878 = vadd.f32 %v5622, %v5846
    %v5879 = vadd.f32 %v5623, %v5847
    %v5880 = vadd.f32 %v5624, %v5848
    %v5881 = vadd.f32 %v5625, %v5849
    %v5882 = vadd.f32 %v5626, %v5850
    %v5883 = vadd.f32 %v5627, %v5851
    %v5884 = vadd.f32 %v5628, %v5852
    %v5885 = vadd.f32 %v5629, %v5853
    %v5886 = vadd.f32 %v5630, %v5854
    %v5887 = vadd.f32 %v5631, %v5855
    %v5888 = vadd.f32 %v5632, %v5856
    %v5889 = vadd.f32 %v5633, %v5857
    %v5890 = vadd.f32 %v5634, %v5858
    %v5891 = vadd.f32 %v5635, %v5859
    %v5892 = vadd.f32 %v5636, %v5860
    %v5893 = vadd.f32 %v5637, %v5861
    %v5894 = vadd.f32 %v5638, %v5862
    %v5895 = vld [vmem:[%s228 + $0x8] sm:$0xff]
    %v5896 = vld [vmem:[%s228 + $0x10] sm:$0xff]
    %v5897 = vld [vmem:[%s228 + $0x28] sm:$0xff]
    %v5898 = vld [vmem:[%s228 + $0x30] sm:$0xff]
    %v5899 = vld [vmem:[%s228 + $0x48] sm:$0xff]
    %v5900 = vld [vmem:[%s228 + $0x50] sm:$0xff]
    %v5901 = vld [vmem:[%s228 + $0x68] sm:$0xff]
    %v5902 = vld [vmem:[%s228 + $0x70] sm:$0xff]
    %v5903 = vld [vmem:[%s228 + $0x88] sm:$0xff]
    %v5904 = vld [vmem:[%s228 + $0x90] sm:$0xff]
    %v5905 = vld [vmem:[%s228 + $0xa8] sm:$0xff]
    %v5906 = vld [vmem:[%s228 + $0xb0] sm:$0xff]
    %v5907 = vld [vmem:[%s228 + $0xc8] sm:$0xff]
    %v5908 = vld [vmem:[%s228 + $0xd0] sm:$0xff]
    %v5909 = vld [vmem:[%s228 + $0xe8] sm:$0xff]
    %v5910 = vld [vmem:[%s228 + $0xf0] sm:$0xff]
    %v5911 = vld [vmem:[%s228 + $0x108] sm:$0xff]
    %v5912 = vld [vmem:[%s228 + $0x110] sm:$0xff]
    %v5913 = vld [vmem:[%s228 + $0x128] sm:$0xff]
    %v5914 = vld [vmem:[%s228 + $0x130] sm:$0xff]
    %v5915 = vld [vmem:[%s228 + $0x148] sm:$0xff]
    %v5916 = vld [vmem:[%s228 + $0x150] sm:$0xff]
    %v5917 = vld [vmem:[%s228 + $0x168] sm:$0xff]
    %v5918 = vld [vmem:[%s228 + $0x170] sm:$0xff]
    %v5919 = vld [vmem:[%s228 + $0x188] sm:$0xff]
    %v5920 = vld [vmem:[%s228 + $0x190] sm:$0xff]
    %v5921 = vld [vmem:[%s228 + $0x1a8] sm:$0xff]
    %v5922 = vld [vmem:[%s228 + $0x1b0] sm:$0xff]
    %v5923 = vld [vmem:[%s228 + $0x1c8] sm:$0xff]
    %v5924 = vld [vmem:[%s228 + $0x1d0] sm:$0xff]
    %v5925 = vld [vmem:[%s228 + $0x1e8] sm:$0xff]
    %v5926 = vld [vmem:[%s228 + $0x1f0] sm:$0xff]
    %5928 = vset.pattern.permute.xlu0 0
    %5929 = vperm.xlu0 %5928, %v5895
    %v5930 = vpop.permute.xlu0 %5929
    %5933 = vset.pattern.permute.xlu0 0
    %5934 = vperm.xlu0 %5933, %v5896
    %v5935 = vpop.permute.xlu0 %5934
    %5938 = vset.pattern.permute.xlu0 0
    %5939 = vperm.xlu0 %5938, %v5897
    %v5940 = vpop.permute.xlu0 %5939
    %5943 = vset.pattern.permute.xlu0 0
    %5944 = vperm.xlu0 %5943, %v5898
    %v5945 = vpop.permute.xlu0 %5944
    %5948 = vset.pattern.permute.xlu0 0
    %5949 = vperm.xlu0 %5948, %v5899
    %v5950 = vpop.permute.xlu0 %5949
    %5953 = vset.pattern.permute.xlu0 0
    %5954 = vperm.xlu0 %5953, %v5900
    %v5955 = vpop.permute.xlu0 %5954
    %5958 = vset.pattern.permute.xlu0 0
    %5959 = vperm.xlu0 %5958, %v5901
    %v5960 = vpop.permute.xlu0 %5959
    %5963 = vset.pattern.permute.xlu0 0
    %5964 = vperm.xlu0 %5963, %v5902
    %v5965 = vpop.permute.xlu0 %5964
    %5968 = vset.pattern.permute.xlu0 0
    %5969 = vperm.xlu0 %5968, %v5903
    %v5970 = vpop.permute.xlu0 %5969
    %5973 = vset.pattern.permute.xlu0 0
    %5974 = vperm.xlu0 %5973, %v5904
    %v5975 = vpop.permute.xlu0 %5974
    %5978 = vset.pattern.permute.xlu0 0
    %5979 = vperm.xlu0 %5978, %v5905
    %v5980 = vpop.permute.xlu0 %5979
    %5983 = vset.pattern.permute.xlu0 0
    %5984 = vperm.xlu0 %5983, %v5906
    %v5985 = vpop.permute.xlu0 %5984
    %5988 = vset.pattern.permute.xlu0 0
    %5989 = vperm.xlu0 %5988, %v5907
    %v5990 = vpop.permute.xlu0 %5989
    %5993 = vset.pattern.permute.xlu0 0
    %5994 = vperm.xlu0 %5993, %v5908
    %v5995 = vpop.permute.xlu0 %5994
    %5998 = vset.pattern.permute.xlu0 0
    %5999 = vperm.xlu0 %5998, %v5909
    %v6000 = vpop.permute.xlu0 %5999
    %6003 = vset.pattern.permute.xlu0 0
    %6004 = vperm.xlu0 %6003, %v5910
    %v6005 = vpop.permute.xlu0 %6004
    %6008 = vset.pattern.permute.xlu0 0
    %6009 = vperm.xlu0 %6008, %v5911
    %v6010 = vpop.permute.xlu0 %6009
    %6013 = vset.pattern.permute.xlu0 0
    %6014 = vperm.xlu0 %6013, %v5912
    %v6015 = vpop.permute.xlu0 %6014
    %6018 = vset.pattern.permute.xlu0 0
    %6019 = vperm.xlu0 %6018, %v5913
    %v6020 = vpop.permute.xlu0 %6019
    %6023 = vset.pattern.permute.xlu0 0
    %6024 = vperm.xlu0 %6023, %v5914
    %v6025 = vpop.permute.xlu0 %6024
    %6028 = vset.pattern.permute.xlu0 0
    %6029 = vperm.xlu0 %6028, %v5915
    %v6030 = vpop.permute.xlu0 %6029
    %6033 = vset.pattern.permute.xlu0 0
    %6034 = vperm.xlu0 %6033, %v5916
    %v6035 = vpop.permute.xlu0 %6034
    %6038 = vset.pattern.permute.xlu0 0
    %6039 = vperm.xlu0 %6038, %v5917
    %v6040 = vpop.permute.xlu0 %6039
    %6043 = vset.pattern.permute.xlu0 0
    %6044 = vperm.xlu0 %6043, %v5918
    %v6045 = vpop.permute.xlu0 %6044
    %6048 = vset.pattern.permute.xlu0 0
    %6049 = vperm.xlu0 %6048, %v5919
    %v6050 = vpop.permute.xlu0 %6049
    %6053 = vset.pattern.permute.xlu0 0
    %6054 = vperm.xlu0 %6053, %v5920
    %v6055 = vpop.permute.xlu0 %6054
    %6058 = vset.pattern.permute.xlu0 0
    %6059 = vperm.xlu0 %6058, %v5921
    %v6060 = vpop.permute.xlu0 %6059
    %6063 = vset.pattern.permute.xlu0 0
    %6064 = vperm.xlu0 %6063, %v5922
    %v6065 = vpop.permute.xlu0 %6064
    %6068 = vset.pattern.permute.xlu0 0
    %6069 = vperm.xlu0 %6068, %v5923
    %v6070 = vpop.permute.xlu0 %6069
    %6073 = vset.pattern.permute.xlu0 0
    %6074 = vperm.xlu0 %6073, %v5924
    %v6075 = vpop.permute.xlu0 %6074
    %6078 = vset.pattern.permute.xlu0 0
    %6079 = vperm.xlu0 %6078, %v5925
    %v6080 = vpop.permute.xlu0 %6079
    %6083 = vset.pattern.permute.xlu0 0
    %6084 = vperm.xlu0 %6083, %v5926
    %v6085 = vpop.permute.xlu0 %6084
    %v6087 = vmul.f32 %v5930, %v1496
    %v6088 = vmul.f32 %v5935, %v1496
    %v6089 = vmul.f32 %v5940, %v1496
    %v6090 = vmul.f32 %v5945, %v1496
    %v6091 = vmul.f32 %v5950, %v1496
    %v6092 = vmul.f32 %v5955, %v1496
    %v6093 = vmul.f32 %v5960, %v1496
    %v6094 = vmul.f32 %v5965, %v1496
    %v6095 = vmul.f32 %v5970, %v1496
    %v6096 = vmul.f32 %v5975, %v1496
    %v6097 = vmul.f32 %v5980, %v1496
    %v6098 = vmul.f32 %v5985, %v1496
    %v6099 = vmul.f32 %v5990, %v1496
    %v6100 = vmul.f32 %v5995, %v1496
    %v6101 = vmul.f32 %v6000, %v1496
    %v6102 = vmul.f32 %v6005, %v1496
    %v6103 = vmul.f32 %v6010, %v1496
    %v6104 = vmul.f32 %v6015, %v1496
    %v6105 = vmul.f32 %v6020, %v1496
    %v6106 = vmul.f32 %v6025, %v1496
    %v6107 = vmul.f32 %v6030, %v1496
    %v6108 = vmul.f32 %v6035, %v1496
    %v6109 = vmul.f32 %v6040, %v1496
    %v6110 = vmul.f32 %v6045, %v1496
    %v6111 = vmul.f32 %v6050, %v1496
    %v6112 = vmul.f32 %v6055, %v1496
    %v6113 = vmul.f32 %v6060, %v1496
    %v6114 = vmul.f32 %v6065, %v1496
    %v6115 = vmul.f32 %v6070, %v1496
    %v6116 = vmul.f32 %v6075, %v1496
    %v6117 = vmul.f32 %v6080, %v1496
    %v6118 = vmul.f32 %v6085, %v1496
    %v6119 = vadd.f32 %v5863, %v6087
    %v6120 = vadd.f32 %v5864, %v6088
    %v6121 = vadd.f32 %v5865, %v6089
    %v6122 = vadd.f32 %v5866, %v6090
    %v6123 = vadd.f32 %v5867, %v6091
    %v6124 = vadd.f32 %v5868, %v6092
    %v6125 = vadd.f32 %v5869, %v6093
    %v6126 = vadd.f32 %v5870, %v6094
    %v6127 = vadd.f32 %v5871, %v6095
    %v6128 = vadd.f32 %v5872, %v6096
    %v6129 = vadd.f32 %v5873, %v6097
    %v6130 = vadd.f32 %v5874, %v6098
    %v6131 = vadd.f32 %v5875, %v6099
    %v6132 = vadd.f32 %v5876, %v6100
    %v6133 = vadd.f32 %v5877, %v6101
    %v6134 = vadd.f32 %v5878, %v6102
    %v6135 = vadd.f32 %v5879, %v6103
    %v6136 = vadd.f32 %v5880, %v6104
    %v6137 = vadd.f32 %v5881, %v6105
    %v6138 = vadd.f32 %v5882, %v6106
    %v6139 = vadd.f32 %v5883, %v6107
    %v6140 = vadd.f32 %v5884, %v6108
    %v6141 = vadd.f32 %v5885, %v6109
    %v6142 = vadd.f32 %v5886, %v6110
    %v6143 = vadd.f32 %v5887, %v6111
    %v6144 = vadd.f32 %v5888, %v6112
    %v6145 = vadd.f32 %v5889, %v6113
    %v6146 = vadd.f32 %v5890, %v6114
    %v6147 = vadd.f32 %v5891, %v6115
    %v6148 = vadd.f32 %v5892, %v6116
    %v6149 = vadd.f32 %v5893, %v6117
    %v6150 = vadd.f32 %v5894, %v6118
    %v6151 = vld [vmem:[%s228 + $0x9] sm:$0xff]
    %v6152 = vld [vmem:[%s228 + $0x11] sm:$0xff]
    %v6153 = vld [vmem:[%s228 + $0x29] sm:$0xff]
    %v6154 = vld [vmem:[%s228 + $0x31] sm:$0xff]
    %v6155 = vld [vmem:[%s228 + $0x49] sm:$0xff]
    %v6156 = vld [vmem:[%s228 + $0x51] sm:$0xff]
    %v6157 = vld [vmem:[%s228 + $0x69] sm:$0xff]
    %v6158 = vld [vmem:[%s228 + $0x71] sm:$0xff]
    %v6159 = vld [vmem:[%s228 + $0x89] sm:$0xff]
    %v6160 = vld [vmem:[%s228 + $0x91] sm:$0xff]
    %v6161 = vld [vmem:[%s228 + $0xa9] sm:$0xff]
    %v6162 = vld [vmem:[%s228 + $0xb1] sm:$0xff]
    %v6163 = vld [vmem:[%s228 + $0xc9] sm:$0xff]
    %v6164 = vld [vmem:[%s228 + $0xd1] sm:$0xff]
    %v6165 = vld [vmem:[%s228 + $0xe9] sm:$0xff]
    %v6166 = vld [vmem:[%s228 + $0xf1] sm:$0xff]
    %v6167 = vld [vmem:[%s228 + $0x109] sm:$0xff]
    %v6168 = vld [vmem:[%s228 + $0x111] sm:$0xff]
    %v6169 = vld [vmem:[%s228 + $0x129] sm:$0xff]
    %v6170 = vld [vmem:[%s228 + $0x131] sm:$0xff]
    %v6171 = vld [vmem:[%s228 + $0x149] sm:$0xff]
    %v6172 = vld [vmem:[%s228 + $0x151] sm:$0xff]
    %v6173 = vld [vmem:[%s228 + $0x169] sm:$0xff]
    %v6174 = vld [vmem:[%s228 + $0x171] sm:$0xff]
    %v6175 = vld [vmem:[%s228 + $0x189] sm:$0xff]
    %v6176 = vld [vmem:[%s228 + $0x191] sm:$0xff]
    %v6177 = vld [vmem:[%s228 + $0x1a9] sm:$0xff]
    %v6178 = vld [vmem:[%s228 + $0x1b1] sm:$0xff]
    %v6179 = vld [vmem:[%s228 + $0x1c9] sm:$0xff]
    %v6180 = vld [vmem:[%s228 + $0x1d1] sm:$0xff]
    %v6181 = vld [vmem:[%s228 + $0x1e9] sm:$0xff]
    %v6182 = vld [vmem:[%s228 + $0x1f1] sm:$0xff]
    %6184 = vset.pattern.permute.xlu0 0
    %6185 = vperm.xlu0 %6184, %v6151
    %v6186 = vpop.permute.xlu0 %6185
    %6189 = vset.pattern.permute.xlu0 0
    %6190 = vperm.xlu0 %6189, %v6152
    %v6191 = vpop.permute.xlu0 %6190
    %6194 = vset.pattern.permute.xlu0 0
    %6195 = vperm.xlu0 %6194, %v6153
    %v6196 = vpop.permute.xlu0 %6195
    %6199 = vset.pattern.permute.xlu0 0
    %6200 = vperm.xlu0 %6199, %v6154
    %v6201 = vpop.permute.xlu0 %6200
    %6204 = vset.pattern.permute.xlu0 0
    %6205 = vperm.xlu0 %6204, %v6155
    %v6206 = vpop.permute.xlu0 %6205
    %6209 = vset.pattern.permute.xlu0 0
    %6210 = vperm.xlu0 %6209, %v6156
    %v6211 = vpop.permute.xlu0 %6210
    %6214 = vset.pattern.permute.xlu0 0
    %6215 = vperm.xlu0 %6214, %v6157
    %v6216 = vpop.permute.xlu0 %6215
    %6219 = vset.pattern.permute.xlu0 0
    %6220 = vperm.xlu0 %6219, %v6158
    %v6221 = vpop.permute.xlu0 %6220
    %6224 = vset.pattern.permute.xlu0 0
    %6225 = vperm.xlu0 %6224, %v6159
    %v6226 = vpop.permute.xlu0 %6225
    %6229 = vset.pattern.permute.xlu0 0
    %6230 = vperm.xlu0 %6229, %v6160
    %v6231 = vpop.permute.xlu0 %6230
    %6234 = vset.pattern.permute.xlu0 0
    %6235 = vperm.xlu0 %6234, %v6161
    %v6236 = vpop.permute.xlu0 %6235
    %6239 = vset.pattern.permute.xlu0 0
    %6240 = vperm.xlu0 %6239, %v6162
    %v6241 = vpop.permute.xlu0 %6240
    %6244 = vset.pattern.permute.xlu0 0
    %6245 = vperm.xlu0 %6244, %v6163
    %v6246 = vpop.permute.xlu0 %6245
    %6249 = vset.pattern.permute.xlu0 0
    %6250 = vperm.xlu0 %6249, %v6164
    %v6251 = vpop.permute.xlu0 %6250
    %6254 = vset.pattern.permute.xlu0 0
    %6255 = vperm.xlu0 %6254, %v6165
    %v6256 = vpop.permute.xlu0 %6255
    %6259 = vset.pattern.permute.xlu0 0
    %6260 = vperm.xlu0 %6259, %v6166
    %v6261 = vpop.permute.xlu0 %6260
    %6264 = vset.pattern.permute.xlu0 0
    %6265 = vperm.xlu0 %6264, %v6167
    %v6266 = vpop.permute.xlu0 %6265
    %6269 = vset.pattern.permute.xlu0 0
    %6270 = vperm.xlu0 %6269, %v6168
    %v6271 = vpop.permute.xlu0 %6270
    %6274 = vset.pattern.permute.xlu0 0
    %6275 = vperm.xlu0 %6274, %v6169
    %v6276 = vpop.permute.xlu0 %6275
    %6279 = vset.pattern.permute.xlu0 0
    %6280 = vperm.xlu0 %6279, %v6170
    %v6281 = vpop.permute.xlu0 %6280
    %6284 = vset.pattern.permute.xlu0 0
    %6285 = vperm.xlu0 %6284, %v6171
    %v6286 = vpop.permute.xlu0 %6285
    %6289 = vset.pattern.permute.xlu0 0
    %6290 = vperm.xlu0 %6289, %v6172
    %v6291 = vpop.permute.xlu0 %6290
    %6294 = vset.pattern.permute.xlu0 0
    %6295 = vperm.xlu0 %6294, %v6173
    %v6296 = vpop.permute.xlu0 %6295
    %6299 = vset.pattern.permute.xlu0 0
    %6300 = vperm.xlu0 %6299, %v6174
    %v6301 = vpop.permute.xlu0 %6300
    %6304 = vset.pattern.permute.xlu0 0
    %6305 = vperm.xlu0 %6304, %v6175
    %v6306 = vpop.permute.xlu0 %6305
    %6309 = vset.pattern.permute.xlu0 0
    %6310 = vperm.xlu0 %6309, %v6176
    %v6311 = vpop.permute.xlu0 %6310
    %6314 = vset.pattern.permute.xlu0 0
    %6315 = vperm.xlu0 %6314, %v6177
    %v6316 = vpop.permute.xlu0 %6315
    %6319 = vset.pattern.permute.xlu0 0
    %6320 = vperm.xlu0 %6319, %v6178
    %v6321 = vpop.permute.xlu0 %6320
    %6324 = vset.pattern.permute.xlu0 0
    %6325 = vperm.xlu0 %6324, %v6179
    %v6326 = vpop.permute.xlu0 %6325
    %6329 = vset.pattern.permute.xlu0 0
    %6330 = vperm.xlu0 %6329, %v6180
    %v6331 = vpop.permute.xlu0 %6330
    %6334 = vset.pattern.permute.xlu0 0
    %6335 = vperm.xlu0 %6334, %v6181
    %v6336 = vpop.permute.xlu0 %6335
    %6339 = vset.pattern.permute.xlu0 0
    %6340 = vperm.xlu0 %6339, %v6182
    %v6341 = vpop.permute.xlu0 %6340
    %v6343 = vmul.f32 %v6186, %v1756
    %v6344 = vmul.f32 %v6191, %v1756
    %v6345 = vmul.f32 %v6196, %v1756
    %v6346 = vmul.f32 %v6201, %v1756
    %v6347 = vmul.f32 %v6206, %v1756
    %v6348 = vmul.f32 %v6211, %v1756
    %v6349 = vmul.f32 %v6216, %v1756
    %v6350 = vmul.f32 %v6221, %v1756
    %v6351 = vmul.f32 %v6226, %v1756
    %v6352 = vmul.f32 %v6231, %v1756
    %v6353 = vmul.f32 %v6236, %v1756
    %v6354 = vmul.f32 %v6241, %v1756
    %v6355 = vmul.f32 %v6246, %v1756
    %v6356 = vmul.f32 %v6251, %v1756
    %v6357 = vmul.f32 %v6256, %v1756
    %v6358 = vmul.f32 %v6261, %v1756
    %v6359 = vmul.f32 %v6266, %v1756
    %v6360 = vmul.f32 %v6271, %v1756
    %v6361 = vmul.f32 %v6276, %v1756
    %v6362 = vmul.f32 %v6281, %v1756
    %v6363 = vmul.f32 %v6286, %v1756
    %v6364 = vmul.f32 %v6291, %v1756
    %v6365 = vmul.f32 %v6296, %v1756
    %v6366 = vmul.f32 %v6301, %v1756
    %v6367 = vmul.f32 %v6306, %v1756
    %v6368 = vmul.f32 %v6311, %v1756
    %v6369 = vmul.f32 %v6316, %v1756
    %v6370 = vmul.f32 %v6321, %v1756
    %v6371 = vmul.f32 %v6326, %v1756
    %v6372 = vmul.f32 %v6331, %v1756
    %v6373 = vmul.f32 %v6336, %v1756
    %v6374 = vmul.f32 %v6341, %v1756
    %v6375 = vadd.f32 %v6119, %v6343
    %v6376 = vadd.f32 %v6120, %v6344
    %v6377 = vadd.f32 %v6121, %v6345
    %v6378 = vadd.f32 %v6122, %v6346
    %v6379 = vadd.f32 %v6123, %v6347
    %v6380 = vadd.f32 %v6124, %v6348
    %v6381 = vadd.f32 %v6125, %v6349
    %v6382 = vadd.f32 %v6126, %v6350
    %v6383 = vadd.f32 %v6127, %v6351
    %v6384 = vadd.f32 %v6128, %v6352
    %v6385 = vadd.f32 %v6129, %v6353
    %v6386 = vadd.f32 %v6130, %v6354
    %v6387 = vadd.f32 %v6131, %v6355
    %v6388 = vadd.f32 %v6132, %v6356
    %v6389 = vadd.f32 %v6133, %v6357
    %v6390 = vadd.f32 %v6134, %v6358
    %v6391 = vadd.f32 %v6135, %v6359
    %v6392 = vadd.f32 %v6136, %v6360
    %v6393 = vadd.f32 %v6137, %v6361
    %v6394 = vadd.f32 %v6138, %v6362
    %v6395 = vadd.f32 %v6139, %v6363
    %v6396 = vadd.f32 %v6140, %v6364
    %v6397 = vadd.f32 %v6141, %v6365
    %v6398 = vadd.f32 %v6142, %v6366
    %v6399 = vadd.f32 %v6143, %v6367
    %v6400 = vadd.f32 %v6144, %v6368
    %v6401 = vadd.f32 %v6145, %v6369
    %v6402 = vadd.f32 %v6146, %v6370
    %v6403 = vadd.f32 %v6147, %v6371
    %v6404 = vadd.f32 %v6148, %v6372
    %v6405 = vadd.f32 %v6149, %v6373
    %v6406 = vadd.f32 %v6150, %v6374
    %v6407 = vld [vmem:[%s1821 + $0x7] sm:$0xff]
    %v6408 = vld [vmem:[%s1821 + $0xf] sm:$0xff]
    %v6409 = vld [vmem:[%s1821 + $0x27] sm:$0xff]
    %v6410 = vld [vmem:[%s1821 + $0x2f] sm:$0xff]
    %v6411 = vld [vmem:[%s1821 + $0x47] sm:$0xff]
    %v6412 = vld [vmem:[%s1821 + $0x4f] sm:$0xff]
    %v6413 = vld [vmem:[%s1821 + $0x67] sm:$0xff]
    %v6414 = vld [vmem:[%s1821 + $0x6f] sm:$0xff]
    %v6415 = vld [vmem:[%s1821 + $0x87] sm:$0xff]
    %v6416 = vld [vmem:[%s1821 + $0x8f] sm:$0xff]
    %v6417 = vld [vmem:[%s1821 + $0xa7] sm:$0xff]
    %v6418 = vld [vmem:[%s1821 + $0xaf] sm:$0xff]
    %v6419 = vld [vmem:[%s1821 + $0xc7] sm:$0xff]
    %v6420 = vld [vmem:[%s1821 + $0xcf] sm:$0xff]
    %v6421 = vld [vmem:[%s1821 + $0xe7] sm:$0xff]
    %v6422 = vld [vmem:[%s1821 + $0xef] sm:$0xff]
    %v6423 = vld [vmem:[%s1821 + $0x107] sm:$0xff]
    %v6424 = vld [vmem:[%s1821 + $0x10f] sm:$0xff]
    %v6425 = vld [vmem:[%s1821 + $0x127] sm:$0xff]
    %v6426 = vld [vmem:[%s1821 + $0x12f] sm:$0xff]
    %v6427 = vld [vmem:[%s1821 + $0x147] sm:$0xff]
    %v6428 = vld [vmem:[%s1821 + $0x14f] sm:$0xff]
    %v6429 = vld [vmem:[%s1821 + $0x167] sm:$0xff]
    %v6430 = vld [vmem:[%s1821 + $0x16f] sm:$0xff]
    %v6431 = vld [vmem:[%s1821 + $0x187] sm:$0xff]
    %v6432 = vld [vmem:[%s1821 + $0x18f] sm:$0xff]
    %v6433 = vld [vmem:[%s1821 + $0x1a7] sm:$0xff]
    %v6434 = vld [vmem:[%s1821 + $0x1af] sm:$0xff]
    %v6435 = vld [vmem:[%s1821 + $0x1c7] sm:$0xff]
    %v6436 = vld [vmem:[%s1821 + $0x1cf] sm:$0xff]
    %v6437 = vld [vmem:[%s1821 + $0x1e7] sm:$0xff]
    %v6438 = vld [vmem:[%s1821 + $0x1ef] sm:$0xff]
    %6440 = vset.pattern.permute.xlu0 0
    %6441 = vperm.xlu0 %6440, %v6407
    %v6442 = vpop.permute.xlu0 %6441
    %6445 = vset.pattern.permute.xlu0 0
    %6446 = vperm.xlu0 %6445, %v6408
    %v6447 = vpop.permute.xlu0 %6446
    %6450 = vset.pattern.permute.xlu0 0
    %6451 = vperm.xlu0 %6450, %v6409
    %v6452 = vpop.permute.xlu0 %6451
    %6455 = vset.pattern.permute.xlu0 0
    %6456 = vperm.xlu0 %6455, %v6410
    %v6457 = vpop.permute.xlu0 %6456
    %6460 = vset.pattern.permute.xlu0 0
    %6461 = vperm.xlu0 %6460, %v6411
    %v6462 = vpop.permute.xlu0 %6461
    %6465 = vset.pattern.permute.xlu0 0
    %6466 = vperm.xlu0 %6465, %v6412
    %v6467 = vpop.permute.xlu0 %6466
    %6470 = vset.pattern.permute.xlu0 0
    %6471 = vperm.xlu0 %6470, %v6413
    %v6472 = vpop.permute.xlu0 %6471
    %6475 = vset.pattern.permute.xlu0 0
    %6476 = vperm.xlu0 %6475, %v6414
    %v6477 = vpop.permute.xlu0 %6476
    %6480 = vset.pattern.permute.xlu0 0
    %6481 = vperm.xlu0 %6480, %v6415
    %v6482 = vpop.permute.xlu0 %6481
    %6485 = vset.pattern.permute.xlu0 0
    %6486 = vperm.xlu0 %6485, %v6416
    %v6487 = vpop.permute.xlu0 %6486
    %6490 = vset.pattern.permute.xlu0 0
    %6491 = vperm.xlu0 %6490, %v6417
    %v6492 = vpop.permute.xlu0 %6491
    %6495 = vset.pattern.permute.xlu0 0
    %6496 = vperm.xlu0 %6495, %v6418
    %v6497 = vpop.permute.xlu0 %6496
    %6500 = vset.pattern.permute.xlu0 0
    %6501 = vperm.xlu0 %6500, %v6419
    %v6502 = vpop.permute.xlu0 %6501
    %6505 = vset.pattern.permute.xlu0 0
    %6506 = vperm.xlu0 %6505, %v6420
    %v6507 = vpop.permute.xlu0 %6506
    %6510 = vset.pattern.permute.xlu0 0
    %6511 = vperm.xlu0 %6510, %v6421
    %v6512 = vpop.permute.xlu0 %6511
    %6515 = vset.pattern.permute.xlu0 0
    %6516 = vperm.xlu0 %6515, %v6422
    %v6517 = vpop.permute.xlu0 %6516
    %6520 = vset.pattern.permute.xlu0 0
    %6521 = vperm.xlu0 %6520, %v6423
    %v6522 = vpop.permute.xlu0 %6521
    %6525 = vset.pattern.permute.xlu0 0
    %6526 = vperm.xlu0 %6525, %v6424
    %v6527 = vpop.permute.xlu0 %6526
    %6530 = vset.pattern.permute.xlu0 0
    %6531 = vperm.xlu0 %6530, %v6425
    %v6532 = vpop.permute.xlu0 %6531
    %6535 = vset.pattern.permute.xlu0 0
    %6536 = vperm.xlu0 %6535, %v6426
    %v6537 = vpop.permute.xlu0 %6536
    %6540 = vset.pattern.permute.xlu0 0
    %6541 = vperm.xlu0 %6540, %v6427
    %v6542 = vpop.permute.xlu0 %6541
    %6545 = vset.pattern.permute.xlu0 0
    %6546 = vperm.xlu0 %6545, %v6428
    %v6547 = vpop.permute.xlu0 %6546
    %6550 = vset.pattern.permute.xlu0 0
    %6551 = vperm.xlu0 %6550, %v6429
    %v6552 = vpop.permute.xlu0 %6551
    %6555 = vset.pattern.permute.xlu0 0
    %6556 = vperm.xlu0 %6555, %v6430
    %v6557 = vpop.permute.xlu0 %6556
    %6560 = vset.pattern.permute.xlu0 0
    %6561 = vperm.xlu0 %6560, %v6431
    %v6562 = vpop.permute.xlu0 %6561
    %6565 = vset.pattern.permute.xlu0 0
    %6566 = vperm.xlu0 %6565, %v6432
    %v6567 = vpop.permute.xlu0 %6566
    %6570 = vset.pattern.permute.xlu0 0
    %6571 = vperm.xlu0 %6570, %v6433
    %v6572 = vpop.permute.xlu0 %6571
    %6575 = vset.pattern.permute.xlu0 0
    %6576 = vperm.xlu0 %6575, %v6434
    %v6577 = vpop.permute.xlu0 %6576
    %6580 = vset.pattern.permute.xlu0 0
    %6581 = vperm.xlu0 %6580, %v6435
    %v6582 = vpop.permute.xlu0 %6581
    %6585 = vset.pattern.permute.xlu0 0
    %6586 = vperm.xlu0 %6585, %v6436
    %v6587 = vpop.permute.xlu0 %6586
    %6590 = vset.pattern.permute.xlu0 0
    %6591 = vperm.xlu0 %6590, %v6437
    %v6592 = vpop.permute.xlu0 %6591
    %6595 = vset.pattern.permute.xlu0 0
    %6596 = vperm.xlu0 %6595, %v6438
    %v6597 = vpop.permute.xlu0 %6596
    %v6599 = vmul.f32 %v6442, %v2017
    %v6600 = vmul.f32 %v6447, %v2017
    %v6601 = vmul.f32 %v6452, %v2017
    %v6602 = vmul.f32 %v6457, %v2017
    %v6603 = vmul.f32 %v6462, %v2017
    %v6604 = vmul.f32 %v6467, %v2017
    %v6605 = vmul.f32 %v6472, %v2017
    %v6606 = vmul.f32 %v6477, %v2017
    %v6607 = vmul.f32 %v6482, %v2017
    %v6608 = vmul.f32 %v6487, %v2017
    %v6609 = vmul.f32 %v6492, %v2017
    %v6610 = vmul.f32 %v6497, %v2017
    %v6611 = vmul.f32 %v6502, %v2017
    %v6612 = vmul.f32 %v6507, %v2017
    %v6613 = vmul.f32 %v6512, %v2017
    %v6614 = vmul.f32 %v6517, %v2017
    %v6615 = vmul.f32 %v6522, %v2017
    %v6616 = vmul.f32 %v6527, %v2017
    %v6617 = vmul.f32 %v6532, %v2017
    %v6618 = vmul.f32 %v6537, %v2017
    %v6619 = vmul.f32 %v6542, %v2017
    %v6620 = vmul.f32 %v6547, %v2017
    %v6621 = vmul.f32 %v6552, %v2017
    %v6622 = vmul.f32 %v6557, %v2017
    %v6623 = vmul.f32 %v6562, %v2017
    %v6624 = vmul.f32 %v6567, %v2017
    %v6625 = vmul.f32 %v6572, %v2017
    %v6626 = vmul.f32 %v6577, %v2017
    %v6627 = vmul.f32 %v6582, %v2017
    %v6628 = vmul.f32 %v6587, %v2017
    %v6629 = vmul.f32 %v6592, %v2017
    %v6630 = vmul.f32 %v6597, %v2017
    %v6631 = vadd.f32 %v6375, %v6599
    %v6632 = vadd.f32 %v6376, %v6600
    %v6633 = vadd.f32 %v6377, %v6601
    %v6634 = vadd.f32 %v6378, %v6602
    %v6635 = vadd.f32 %v6379, %v6603
    %v6636 = vadd.f32 %v6380, %v6604
    %v6637 = vadd.f32 %v6381, %v6605
    %v6638 = vadd.f32 %v6382, %v6606
    %v6639 = vadd.f32 %v6383, %v6607
    %v6640 = vadd.f32 %v6384, %v6608
    %v6641 = vadd.f32 %v6385, %v6609
    %v6642 = vadd.f32 %v6386, %v6610
    %v6643 = vadd.f32 %v6387, %v6611
    %v6644 = vadd.f32 %v6388, %v6612
    %v6645 = vadd.f32 %v6389, %v6613
    %v6646 = vadd.f32 %v6390, %v6614
    %v6647 = vadd.f32 %v6391, %v6615
    %v6648 = vadd.f32 %v6392, %v6616
    %v6649 = vadd.f32 %v6393, %v6617
    %v6650 = vadd.f32 %v6394, %v6618
    %v6651 = vadd.f32 %v6395, %v6619
    %v6652 = vadd.f32 %v6396, %v6620
    %v6653 = vadd.f32 %v6397, %v6621
    %v6654 = vadd.f32 %v6398, %v6622
    %v6655 = vadd.f32 %v6399, %v6623
    %v6656 = vadd.f32 %v6400, %v6624
    %v6657 = vadd.f32 %v6401, %v6625
    %v6658 = vadd.f32 %v6402, %v6626
    %v6659 = vadd.f32 %v6403, %v6627
    %v6660 = vadd.f32 %v6404, %v6628
    %v6661 = vadd.f32 %v6405, %v6629
    %v6662 = vadd.f32 %v6406, %v6630
    %v6663 = vld [vmem:[%s1821 + $0x8] sm:$0xff]
    %v6664 = vld [vmem:[%s1821 + $0x10] sm:$0xff]
    %v6665 = vld [vmem:[%s1821 + $0x28] sm:$0xff]
    %v6666 = vld [vmem:[%s1821 + $0x30] sm:$0xff]
    %v6667 = vld [vmem:[%s1821 + $0x48] sm:$0xff]
    %v6668 = vld [vmem:[%s1821 + $0x50] sm:$0xff]
    %v6669 = vld [vmem:[%s1821 + $0x68] sm:$0xff]
    %v6670 = vld [vmem:[%s1821 + $0x70] sm:$0xff]
    %v6671 = vld [vmem:[%s1821 + $0x88] sm:$0xff]
    %v6672 = vld [vmem:[%s1821 + $0x90] sm:$0xff]
    %v6673 = vld [vmem:[%s1821 + $0xa8] sm:$0xff]
    %v6674 = vld [vmem:[%s1821 + $0xb0] sm:$0xff]
    %v6675 = vld [vmem:[%s1821 + $0xc8] sm:$0xff]
    %v6676 = vld [vmem:[%s1821 + $0xd0] sm:$0xff]
    %v6677 = vld [vmem:[%s1821 + $0xe8] sm:$0xff]
    %v6678 = vld [vmem:[%s1821 + $0xf0] sm:$0xff]
    %v6679 = vld [vmem:[%s1821 + $0x108] sm:$0xff]
    %v6680 = vld [vmem:[%s1821 + $0x110] sm:$0xff]
    %v6681 = vld [vmem:[%s1821 + $0x128] sm:$0xff]
    %v6682 = vld [vmem:[%s1821 + $0x130] sm:$0xff]
    %v6683 = vld [vmem:[%s1821 + $0x148] sm:$0xff]
    %v6684 = vld [vmem:[%s1821 + $0x150] sm:$0xff]
    %v6685 = vld [vmem:[%s1821 + $0x168] sm:$0xff]
    %v6686 = vld [vmem:[%s1821 + $0x170] sm:$0xff]
    %v6687 = vld [vmem:[%s1821 + $0x188] sm:$0xff]
    %v6688 = vld [vmem:[%s1821 + $0x190] sm:$0xff]
    %v6689 = vld [vmem:[%s1821 + $0x1a8] sm:$0xff]
    %v6690 = vld [vmem:[%s1821 + $0x1b0] sm:$0xff]
    %v6691 = vld [vmem:[%s1821 + $0x1c8] sm:$0xff]
    %v6692 = vld [vmem:[%s1821 + $0x1d0] sm:$0xff]
    %v6693 = vld [vmem:[%s1821 + $0x1e8] sm:$0xff]
    %v6694 = vld [vmem:[%s1821 + $0x1f0] sm:$0xff]
    %6696 = vset.pattern.permute.xlu0 0
    %6697 = vperm.xlu0 %6696, %v6663
    %v6698 = vpop.permute.xlu0 %6697
    %6701 = vset.pattern.permute.xlu0 0
    %6702 = vperm.xlu0 %6701, %v6664
    %v6703 = vpop.permute.xlu0 %6702
    %6706 = vset.pattern.permute.xlu0 0
    %6707 = vperm.xlu0 %6706, %v6665
    %v6708 = vpop.permute.xlu0 %6707
    %6711 = vset.pattern.permute.xlu0 0
    %6712 = vperm.xlu0 %6711, %v6666
    %v6713 = vpop.permute.xlu0 %6712
    %6716 = vset.pattern.permute.xlu0 0
    %6717 = vperm.xlu0 %6716, %v6667
    %v6718 = vpop.permute.xlu0 %6717
    %6721 = vset.pattern.permute.xlu0 0
    %6722 = vperm.xlu0 %6721, %v6668
    %v6723 = vpop.permute.xlu0 %6722
    %6726 = vset.pattern.permute.xlu0 0
    %6727 = vperm.xlu0 %6726, %v6669
    %v6728 = vpop.permute.xlu0 %6727
    %6731 = vset.pattern.permute.xlu0 0
    %6732 = vperm.xlu0 %6731, %v6670
    %v6733 = vpop.permute.xlu0 %6732
    %6736 = vset.pattern.permute.xlu0 0
    %6737 = vperm.xlu0 %6736, %v6671
    %v6738 = vpop.permute.xlu0 %6737
    %6741 = vset.pattern.permute.xlu0 0
    %6742 = vperm.xlu0 %6741, %v6672
    %v6743 = vpop.permute.xlu0 %6742
    %6746 = vset.pattern.permute.xlu0 0
    %6747 = vperm.xlu0 %6746, %v6673
    %v6748 = vpop.permute.xlu0 %6747
    %6751 = vset.pattern.permute.xlu0 0
    %6752 = vperm.xlu0 %6751, %v6674
    %v6753 = vpop.permute.xlu0 %6752
    %6756 = vset.pattern.permute.xlu0 0
    %6757 = vperm.xlu0 %6756, %v6675
    %v6758 = vpop.permute.xlu0 %6757
    %6761 = vset.pattern.permute.xlu0 0
    %6762 = vperm.xlu0 %6761, %v6676
    %v6763 = vpop.permute.xlu0 %6762
    %6766 = vset.pattern.permute.xlu0 0
    %6767 = vperm.xlu0 %6766, %v6677
    %v6768 = vpop.permute.xlu0 %6767
    %6771 = vset.pattern.permute.xlu0 0
    %6772 = vperm.xlu0 %6771, %v6678
    %v6773 = vpop.permute.xlu0 %6772
    %6776 = vset.pattern.permute.xlu0 0
    %6777 = vperm.xlu0 %6776, %v6679
    %v6778 = vpop.permute.xlu0 %6777
    %6781 = vset.pattern.permute.xlu0 0
    %6782 = vperm.xlu0 %6781, %v6680
    %v6783 = vpop.permute.xlu0 %6782
    %6786 = vset.pattern.permute.xlu0 0
    %6787 = vperm.xlu0 %6786, %v6681
    %v6788 = vpop.permute.xlu0 %6787
    %6791 = vset.pattern.permute.xlu0 0
    %6792 = vperm.xlu0 %6791, %v6682
    %v6793 = vpop.permute.xlu0 %6792
    %6796 = vset.pattern.permute.xlu0 0
    %6797 = vperm.xlu0 %6796, %v6683
    %v6798 = vpop.permute.xlu0 %6797
    %6801 = vset.pattern.permute.xlu0 0
    %6802 = vperm.xlu0 %6801, %v6684
    %v6803 = vpop.permute.xlu0 %6802
    %6806 = vset.pattern.permute.xlu0 0
    %6807 = vperm.xlu0 %6806, %v6685
    %v6808 = vpop.permute.xlu0 %6807
    %6811 = vset.pattern.permute.xlu0 0
    %6812 = vperm.xlu0 %6811, %v6686
    %v6813 = vpop.permute.xlu0 %6812
    %6816 = vset.pattern.permute.xlu0 0
    %6817 = vperm.xlu0 %6816, %v6687
    %v6818 = vpop.permute.xlu0 %6817
    %6821 = vset.pattern.permute.xlu0 0
    %6822 = vperm.xlu0 %6821, %v6688
    %v6823 = vpop.permute.xlu0 %6822
    %6826 = vset.pattern.permute.xlu0 0
    %6827 = vperm.xlu0 %6826, %v6689
    %v6828 = vpop.permute.xlu0 %6827
    %6831 = vset.pattern.permute.xlu0 0
    %6832 = vperm.xlu0 %6831, %v6690
    %v6833 = vpop.permute.xlu0 %6832
    %6836 = vset.pattern.permute.xlu0 0
    %6837 = vperm.xlu0 %6836, %v6691
    %v6838 = vpop.permute.xlu0 %6837
    %6841 = vset.pattern.permute.xlu0 0
    %6842 = vperm.xlu0 %6841, %v6692
    %v6843 = vpop.permute.xlu0 %6842
    %6846 = vset.pattern.permute.xlu0 0
    %6847 = vperm.xlu0 %6846, %v6693
    %v6848 = vpop.permute.xlu0 %6847
    %6851 = vset.pattern.permute.xlu0 0
    %6852 = vperm.xlu0 %6851, %v6694
    %v6853 = vpop.permute.xlu0 %6852
    %v6855 = vmul.f32 %v6698, %v2277
    %v6856 = vmul.f32 %v6703, %v2277
    %v6857 = vmul.f32 %v6708, %v2277
    %v6858 = vmul.f32 %v6713, %v2277
    %v6859 = vmul.f32 %v6718, %v2277
    %v6860 = vmul.f32 %v6723, %v2277
    %v6861 = vmul.f32 %v6728, %v2277
    %v6862 = vmul.f32 %v6733, %v2277
    %v6863 = vmul.f32 %v6738, %v2277
    %v6864 = vmul.f32 %v6743, %v2277
    %v6865 = vmul.f32 %v6748, %v2277
    %v6866 = vmul.f32 %v6753, %v2277
    %v6867 = vmul.f32 %v6758, %v2277
    %v6868 = vmul.f32 %v6763, %v2277
    %v6869 = vmul.f32 %v6768, %v2277
    %v6870 = vmul.f32 %v6773, %v2277
    %v6871 = vmul.f32 %v6778, %v2277
    %v6872 = vmul.f32 %v6783, %v2277
    %v6873 = vmul.f32 %v6788, %v2277
    %v6874 = vmul.f32 %v6793, %v2277
    %v6875 = vmul.f32 %v6798, %v2277
    %v6876 = vmul.f32 %v6803, %v2277
    %v6877 = vmul.f32 %v6808, %v2277
    %v6878 = vmul.f32 %v6813, %v2277
    %v6879 = vmul.f32 %v6818, %v2277
    %v6880 = vmul.f32 %v6823, %v2277
    %v6881 = vmul.f32 %v6828, %v2277
    %v6882 = vmul.f32 %v6833, %v2277
    %v6883 = vmul.f32 %v6838, %v2277
    %v6884 = vmul.f32 %v6843, %v2277
    %v6885 = vmul.f32 %v6848, %v2277
    %v6886 = vmul.f32 %v6853, %v2277
    %v6887 = vadd.f32 %v6631, %v6855
    %v6888 = vadd.f32 %v6632, %v6856
    %v6889 = vadd.f32 %v6633, %v6857
    %v6890 = vadd.f32 %v6634, %v6858
    %v6891 = vadd.f32 %v6635, %v6859
    %v6892 = vadd.f32 %v6636, %v6860
    %v6893 = vadd.f32 %v6637, %v6861
    %v6894 = vadd.f32 %v6638, %v6862
    %v6895 = vadd.f32 %v6639, %v6863
    %v6896 = vadd.f32 %v6640, %v6864
    %v6897 = vadd.f32 %v6641, %v6865
    %v6898 = vadd.f32 %v6642, %v6866
    %v6899 = vadd.f32 %v6643, %v6867
    %v6900 = vadd.f32 %v6644, %v6868
    %v6901 = vadd.f32 %v6645, %v6869
    %v6902 = vadd.f32 %v6646, %v6870
    %v6903 = vadd.f32 %v6647, %v6871
    %v6904 = vadd.f32 %v6648, %v6872
    %v6905 = vadd.f32 %v6649, %v6873
    %v6906 = vadd.f32 %v6650, %v6874
    %v6907 = vadd.f32 %v6651, %v6875
    %v6908 = vadd.f32 %v6652, %v6876
    %v6909 = vadd.f32 %v6653, %v6877
    %v6910 = vadd.f32 %v6654, %v6878
    %v6911 = vadd.f32 %v6655, %v6879
    %v6912 = vadd.f32 %v6656, %v6880
    %v6913 = vadd.f32 %v6657, %v6881
    %v6914 = vadd.f32 %v6658, %v6882
    %v6915 = vadd.f32 %v6659, %v6883
    %v6916 = vadd.f32 %v6660, %v6884
    %v6917 = vadd.f32 %v6661, %v6885
    %v6918 = vadd.f32 %v6662, %v6886
    %v6919 = vld [vmem:[%s1821 + $0x9] sm:$0xff]
    %v6920 = vld [vmem:[%s1821 + $0x11] sm:$0xff]
    %v6921 = vld [vmem:[%s1821 + $0x29] sm:$0xff]
    %v6922 = vld [vmem:[%s1821 + $0x31] sm:$0xff]
    %v6923 = vld [vmem:[%s1821 + $0x49] sm:$0xff]
    %v6924 = vld [vmem:[%s1821 + $0x51] sm:$0xff]
    %v6925 = vld [vmem:[%s1821 + $0x69] sm:$0xff]
    %v6926 = vld [vmem:[%s1821 + $0x71] sm:$0xff]
    %v6927 = vld [vmem:[%s1821 + $0x89] sm:$0xff]
    %v6928 = vld [vmem:[%s1821 + $0x91] sm:$0xff]
    %v6929 = vld [vmem:[%s1821 + $0xa9] sm:$0xff]
    %v6930 = vld [vmem:[%s1821 + $0xb1] sm:$0xff]
    %v6931 = vld [vmem:[%s1821 + $0xc9] sm:$0xff]
    %v6932 = vld [vmem:[%s1821 + $0xd1] sm:$0xff]
    %v6933 = vld [vmem:[%s1821 + $0xe9] sm:$0xff]
    %v6934 = vld [vmem:[%s1821 + $0xf1] sm:$0xff]
    %v6935 = vld [vmem:[%s1821 + $0x109] sm:$0xff]
    %v6936 = vld [vmem:[%s1821 + $0x111] sm:$0xff]
    %v6937 = vld [vmem:[%s1821 + $0x129] sm:$0xff]
    %v6938 = vld [vmem:[%s1821 + $0x131] sm:$0xff]
    %v6939 = vld [vmem:[%s1821 + $0x149] sm:$0xff]
    %v6940 = vld [vmem:[%s1821 + $0x151] sm:$0xff]
    %v6941 = vld [vmem:[%s1821 + $0x169] sm:$0xff]
    %v6942 = vld [vmem:[%s1821 + $0x171] sm:$0xff]
    %v6943 = vld [vmem:[%s1821 + $0x189] sm:$0xff]
    %v6944 = vld [vmem:[%s1821 + $0x191] sm:$0xff]
    %v6945 = vld [vmem:[%s1821 + $0x1a9] sm:$0xff]
    %v6946 = vld [vmem:[%s1821 + $0x1b1] sm:$0xff]
    %v6947 = vld [vmem:[%s1821 + $0x1c9] sm:$0xff]
    %v6948 = vld [vmem:[%s1821 + $0x1d1] sm:$0xff]
    %v6949 = vld [vmem:[%s1821 + $0x1e9] sm:$0xff]
    %v6950 = vld [vmem:[%s1821 + $0x1f1] sm:$0xff]
    %6952 = vset.pattern.permute.xlu0 0
    %6953 = vperm.xlu0 %6952, %v6919
    %v6954 = vpop.permute.xlu0 %6953
    %6957 = vset.pattern.permute.xlu0 0
    %6958 = vperm.xlu0 %6957, %v6920
    %v6959 = vpop.permute.xlu0 %6958
    %6962 = vset.pattern.permute.xlu0 0
    %6963 = vperm.xlu0 %6962, %v6921
    %v6964 = vpop.permute.xlu0 %6963
    %6967 = vset.pattern.permute.xlu0 0
    %6968 = vperm.xlu0 %6967, %v6922
    %v6969 = vpop.permute.xlu0 %6968
    %6972 = vset.pattern.permute.xlu0 0
    %6973 = vperm.xlu0 %6972, %v6923
    %v6974 = vpop.permute.xlu0 %6973
    %6977 = vset.pattern.permute.xlu0 0
    %6978 = vperm.xlu0 %6977, %v6924
    %v6979 = vpop.permute.xlu0 %6978
    %6982 = vset.pattern.permute.xlu0 0
    %6983 = vperm.xlu0 %6982, %v6925
    %v6984 = vpop.permute.xlu0 %6983
    %6987 = vset.pattern.permute.xlu0 0
    %6988 = vperm.xlu0 %6987, %v6926
    %v6989 = vpop.permute.xlu0 %6988
    %6992 = vset.pattern.permute.xlu0 0
    %6993 = vperm.xlu0 %6992, %v6927
    %v6994 = vpop.permute.xlu0 %6993
    %6997 = vset.pattern.permute.xlu0 0
    %6998 = vperm.xlu0 %6997, %v6928
    %v6999 = vpop.permute.xlu0 %6998
    %7002 = vset.pattern.permute.xlu0 0
    %7003 = vperm.xlu0 %7002, %v6929
    %v7004 = vpop.permute.xlu0 %7003
    %7007 = vset.pattern.permute.xlu0 0
    %7008 = vperm.xlu0 %7007, %v6930
    %v7009 = vpop.permute.xlu0 %7008
    %7012 = vset.pattern.permute.xlu0 0
    %7013 = vperm.xlu0 %7012, %v6931
    %v7014 = vpop.permute.xlu0 %7013
    %7017 = vset.pattern.permute.xlu0 0
    %7018 = vperm.xlu0 %7017, %v6932
    %v7019 = vpop.permute.xlu0 %7018
    %7022 = vset.pattern.permute.xlu0 0
    %7023 = vperm.xlu0 %7022, %v6933
    %v7024 = vpop.permute.xlu0 %7023
    %7027 = vset.pattern.permute.xlu0 0
    %7028 = vperm.xlu0 %7027, %v6934
    %v7029 = vpop.permute.xlu0 %7028
    %7032 = vset.pattern.permute.xlu0 0
    %7033 = vperm.xlu0 %7032, %v6935
    %v7034 = vpop.permute.xlu0 %7033
    %7037 = vset.pattern.permute.xlu0 0
    %7038 = vperm.xlu0 %7037, %v6936
    %v7039 = vpop.permute.xlu0 %7038
    %7042 = vset.pattern.permute.xlu0 0
    %7043 = vperm.xlu0 %7042, %v6937
    %v7044 = vpop.permute.xlu0 %7043
    %7047 = vset.pattern.permute.xlu0 0
    %7048 = vperm.xlu0 %7047, %v6938
    %v7049 = vpop.permute.xlu0 %7048
    %7052 = vset.pattern.permute.xlu0 0
    %7053 = vperm.xlu0 %7052, %v6939
    %v7054 = vpop.permute.xlu0 %7053
    %7057 = vset.pattern.permute.xlu0 0
    %7058 = vperm.xlu0 %7057, %v6940
    %v7059 = vpop.permute.xlu0 %7058
    %7062 = vset.pattern.permute.xlu0 0
    %7063 = vperm.xlu0 %7062, %v6941
    %v7064 = vpop.permute.xlu0 %7063
    %7067 = vset.pattern.permute.xlu0 0
    %7068 = vperm.xlu0 %7067, %v6942
    %v7069 = vpop.permute.xlu0 %7068
    %7072 = vset.pattern.permute.xlu0 0
    %7073 = vperm.xlu0 %7072, %v6943
    %v7074 = vpop.permute.xlu0 %7073
    %7077 = vset.pattern.permute.xlu0 0
    %7078 = vperm.xlu0 %7077, %v6944
    %v7079 = vpop.permute.xlu0 %7078
    %7082 = vset.pattern.permute.xlu0 0
    %7083 = vperm.xlu0 %7082, %v6945
    %v7084 = vpop.permute.xlu0 %7083
    %7087 = vset.pattern.permute.xlu0 0
    %7088 = vperm.xlu0 %7087, %v6946
    %v7089 = vpop.permute.xlu0 %7088
    %7092 = vset.pattern.permute.xlu0 0
    %7093 = vperm.xlu0 %7092, %v6947
    %v7094 = vpop.permute.xlu0 %7093
    %7097 = vset.pattern.permute.xlu0 0
    %7098 = vperm.xlu0 %7097, %v6948
    %v7099 = vpop.permute.xlu0 %7098
    %7102 = vset.pattern.permute.xlu0 0
    %7103 = vperm.xlu0 %7102, %v6949
    %v7104 = vpop.permute.xlu0 %7103
    %7107 = vset.pattern.permute.xlu0 0
    %7108 = vperm.xlu0 %7107, %v6950
    %v7109 = vpop.permute.xlu0 %7108
    %v7111 = vmul.f32 %v6954, %v2537
    %v7112 = vmul.f32 %v6959, %v2537
    %v7113 = vmul.f32 %v6964, %v2537
    %v7114 = vmul.f32 %v6969, %v2537
    %v7115 = vmul.f32 %v6974, %v2537
    %v7116 = vmul.f32 %v6979, %v2537
    %v7117 = vmul.f32 %v6984, %v2537
    %v7118 = vmul.f32 %v6989, %v2537
    %v7119 = vmul.f32 %v6994, %v2537
    %v7120 = vmul.f32 %v6999, %v2537
    %v7121 = vmul.f32 %v7004, %v2537
    %v7122 = vmul.f32 %v7009, %v2537
    %v7123 = vmul.f32 %v7014, %v2537
    %v7124 = vmul.f32 %v7019, %v2537
    %v7125 = vmul.f32 %v7024, %v2537
    %v7126 = vmul.f32 %v7029, %v2537
    %v7127 = vmul.f32 %v7034, %v2537
    %v7128 = vmul.f32 %v7039, %v2537
    %v7129 = vmul.f32 %v7044, %v2537
    %v7130 = vmul.f32 %v7049, %v2537
    %v7131 = vmul.f32 %v7054, %v2537
    %v7132 = vmul.f32 %v7059, %v2537
    %v7133 = vmul.f32 %v7064, %v2537
    %v7134 = vmul.f32 %v7069, %v2537
    %v7135 = vmul.f32 %v7074, %v2537
    %v7136 = vmul.f32 %v7079, %v2537
    %v7137 = vmul.f32 %v7084, %v2537
    %v7138 = vmul.f32 %v7089, %v2537
    %v7139 = vmul.f32 %v7094, %v2537
    %v7140 = vmul.f32 %v7099, %v2537
    %v7141 = vmul.f32 %v7104, %v2537
    %v7142 = vmul.f32 %v7109, %v2537
    %v7143 = vadd.f32 %v6887, %v7111
    %v7144 = vadd.f32 %v6888, %v7112
    %v7145 = vadd.f32 %v6889, %v7113
    %v7146 = vadd.f32 %v6890, %v7114
    %v7147 = vadd.f32 %v6891, %v7115
    %v7148 = vadd.f32 %v6892, %v7116
    %v7149 = vadd.f32 %v6893, %v7117
    %v7150 = vadd.f32 %v6894, %v7118
    %v7151 = vadd.f32 %v6895, %v7119
    %v7152 = vadd.f32 %v6896, %v7120
    %v7153 = vadd.f32 %v6897, %v7121
    %v7154 = vadd.f32 %v6898, %v7122
    %v7155 = vadd.f32 %v6899, %v7123
    %v7156 = vadd.f32 %v6900, %v7124
    %v7157 = vadd.f32 %v6901, %v7125
    %v7158 = vadd.f32 %v6902, %v7126
    %v7159 = vadd.f32 %v6903, %v7127
    %v7160 = vadd.f32 %v6904, %v7128
    %v7161 = vadd.f32 %v6905, %v7129
    %v7162 = vadd.f32 %v6906, %v7130
    %v7163 = vadd.f32 %v6907, %v7131
    %v7164 = vadd.f32 %v6908, %v7132
    %v7165 = vadd.f32 %v6909, %v7133
    %v7166 = vadd.f32 %v6910, %v7134
    %v7167 = vadd.f32 %v6911, %v7135
    %v7168 = vadd.f32 %v6912, %v7136
    %v7169 = vadd.f32 %v6913, %v7137
    %v7170 = vadd.f32 %v6914, %v7138
    %v7171 = vadd.f32 %v6915, %v7139
    %v7172 = vadd.f32 %v6916, %v7140
    %v7173 = vadd.f32 %v6917, %v7141
    %v7174 = vadd.f32 %v6918, %v7142
    %v7175 = vadd.f32 %v7143, %v2606
    %v7176 = vadd.f32 %v7144, %v2606
    %v7177 = vadd.f32 %v7145, %v2606
    %v7178 = vadd.f32 %v7146, %v2606
    %v7179 = vadd.f32 %v7147, %v2606
    %v7180 = vadd.f32 %v7148, %v2606
    %v7181 = vadd.f32 %v7149, %v2606
    %v7182 = vadd.f32 %v7150, %v2606
    %v7183 = vadd.f32 %v7151, %v2606
    %v7184 = vadd.f32 %v7152, %v2606
    %v7185 = vadd.f32 %v7153, %v2606
    %v7186 = vadd.f32 %v7154, %v2606
    %v7187 = vadd.f32 %v7155, %v2606
    %v7188 = vadd.f32 %v7156, %v2606
    %v7189 = vadd.f32 %v7157, %v2606
    %v7190 = vadd.f32 %v7158, %v2606
    %v7191 = vadd.f32 %v7159, %v2606
    %v7192 = vadd.f32 %v7160, %v2606
    %v7193 = vadd.f32 %v7161, %v2606
    %v7194 = vadd.f32 %v7162, %v2606
    %v7195 = vadd.f32 %v7163, %v2606
    %v7196 = vadd.f32 %v7164, %v2606
    %v7197 = vadd.f32 %v7165, %v2606
    %v7198 = vadd.f32 %v7166, %v2606
    %v7199 = vadd.f32 %v7167, %v2606
    %v7200 = vadd.f32 %v7168, %v2606
    %v7201 = vadd.f32 %v7169, %v2606
    %v7202 = vadd.f32 %v7170, %v2606
    %v7203 = vadd.f32 %v7171, %v2606
    %v7204 = vadd.f32 %v7172, %v2606
    %v7205 = vadd.f32 %v7173, %v2606
    %v7206 = vadd.f32 %v7174, %v2606
    %v7207 = vmax.f32 %v7175, 0.0
    %v7208 = vmax.f32 %v7176, 0.0
    %v7209 = vmax.f32 %v7177, 0.0
    %v7210 = vmax.f32 %v7178, 0.0
    %v7211 = vmax.f32 %v7179, 0.0
    %v7212 = vmax.f32 %v7180, 0.0
    %v7213 = vmax.f32 %v7181, 0.0
    %v7214 = vmax.f32 %v7182, 0.0
    %v7215 = vmax.f32 %v7183, 0.0
    %v7216 = vmax.f32 %v7184, 0.0
    %v7217 = vmax.f32 %v7185, 0.0
    %v7218 = vmax.f32 %v7186, 0.0
    %v7219 = vmax.f32 %v7187, 0.0
    %v7220 = vmax.f32 %v7188, 0.0
    %v7221 = vmax.f32 %v7189, 0.0
    %v7222 = vmax.f32 %v7190, 0.0
    %v7223 = vmax.f32 %v7191, 0.0
    %v7224 = vmax.f32 %v7192, 0.0
    %v7225 = vmax.f32 %v7193, 0.0
    %v7226 = vmax.f32 %v7194, 0.0
    %v7227 = vmax.f32 %v7195, 0.0
    %v7228 = vmax.f32 %v7196, 0.0
    %v7229 = vmax.f32 %v7197, 0.0
    %v7230 = vmax.f32 %v7198, 0.0
    %v7231 = vmax.f32 %v7199, 0.0
    %v7232 = vmax.f32 %v7200, 0.0
    %v7233 = vmax.f32 %v7201, 0.0
    %v7234 = vmax.f32 %v7202, 0.0
    %v7235 = vmax.f32 %v7203, 0.0
    %v7236 = vmax.f32 %v7204, 0.0
    %v7237 = vmax.f32 %v7205, 0.0
    %v7238 = vmax.f32 %v7206, 0.0
    %7239 = vst.msk [vmem:[%s2672 + $0x8] sm:$0xff] %vm100, %v7207
    %7240 = vst.msk [vmem:[%s2672 + $0x10] sm:$0xff] %vm100, %v7208
    %7241 = vst.msk [vmem:[%s2672 + $0x28] sm:$0xff] %vm100, %v7209
    %7242 = vst.msk [vmem:[%s2672 + $0x30] sm:$0xff] %vm100, %v7210
    %7243 = vst.msk [vmem:[%s2672 + $0x48] sm:$0xff] %vm100, %v7211
    %7244 = vst.msk [vmem:[%s2672 + $0x50] sm:$0xff] %vm100, %v7212
    %7245 = vst.msk [vmem:[%s2672 + $0x68] sm:$0xff] %vm100, %v7213
    %7246 = vst.msk [vmem:[%s2672 + $0x70] sm:$0xff] %vm100, %v7214
    %7247 = vst.msk [vmem:[%s2672 + $0x88] sm:$0xff] %vm100, %v7215
    %7248 = vst.msk [vmem:[%s2672 + $0x90] sm:$0xff] %vm100, %v7216
    %7249 = vst.msk [vmem:[%s2672 + $0xa8] sm:$0xff] %vm100, %v7217
    %7250 = vst.msk [vmem:[%s2672 + $0xb0] sm:$0xff] %vm100, %v7218
    %7251 = vst.msk [vmem:[%s2672 + $0xc8] sm:$0xff] %vm100, %v7219
    %7252 = vst.msk [vmem:[%s2672 + $0xd0] sm:$0xff] %vm100, %v7220
    %7253 = vst.msk [vmem:[%s2672 + $0xe8] sm:$0xff] %vm100, %v7221
    %7254 = vst.msk [vmem:[%s2672 + $0xf0] sm:$0xff] %vm100, %v7222
    %7255 = vst.msk [vmem:[%s2672 + $0x108] sm:$0xff] %vm100, %v7223
    %7256 = vst.msk [vmem:[%s2672 + $0x110] sm:$0xff] %vm100, %v7224
    %7257 = vst.msk [vmem:[%s2672 + $0x128] sm:$0xff] %vm100, %v7225
    %7258 = vst.msk [vmem:[%s2672 + $0x130] sm:$0xff] %vm100, %v7226
    %7259 = vst.msk [vmem:[%s2672 + $0x148] sm:$0xff] %vm100, %v7227
    %7260 = vst.msk [vmem:[%s2672 + $0x150] sm:$0xff] %vm100, %v7228
    %7261 = vst.msk [vmem:[%s2672 + $0x168] sm:$0xff] %vm100, %v7229
    %7262 = vst.msk [vmem:[%s2672 + $0x170] sm:$0xff] %vm100, %v7230
    %7263 = vst.msk [vmem:[%s2672 + $0x188] sm:$0xff] %vm100, %v7231
    %7264 = vst.msk [vmem:[%s2672 + $0x190] sm:$0xff] %vm100, %v7232
    %7265 = vst.msk [vmem:[%s2672 + $0x1a8] sm:$0xff] %vm100, %v7233
    %7266 = vst.msk [vmem:[%s2672 + $0x1b0] sm:$0xff] %vm100, %v7234
    %7267 = vst.msk [vmem:[%s2672 + $0x1c8] sm:$0xff] %vm100, %v7235
    %7268 = vst.msk [vmem:[%s2672 + $0x1d0] sm:$0xff] %vm100, %v7236
    %7269 = vst.msk [vmem:[%s2672 + $0x1e8] sm:$0xff] %vm100, %v7237
    %7270 = vst.msk [vmem:[%s2672 + $0x1f0] sm:$0xff] %vm100, %v7238
    %v7271 = vld [vmem:[#allocation3 + $0x7] sm:$0xff]
    %v7272 = vld [vmem:[#allocation3 + $0xf] sm:$0xff]
    %v7273 = vld [vmem:[#allocation3 + $0x27] sm:$0xff]
    %v7274 = vld [vmem:[#allocation3 + $0x2f] sm:$0xff]
    %v7275 = vld [vmem:[#allocation3 + $0x47] sm:$0xff]
    %v7276 = vld [vmem:[#allocation3 + $0x4f] sm:$0xff]
    %v7277 = vld [vmem:[#allocation3 + $0x67] sm:$0xff]
    %v7278 = vld [vmem:[#allocation3 + $0x6f] sm:$0xff]
    %v7279 = vld [vmem:[#allocation3 + $0x87] sm:$0xff]
    %v7280 = vld [vmem:[#allocation3 + $0x8f] sm:$0xff]
    %v7281 = vld [vmem:[#allocation3 + $0xa7] sm:$0xff]
    %v7282 = vld [vmem:[#allocation3 + $0xaf] sm:$0xff]
    %v7283 = vld [vmem:[#allocation3 + $0xc7] sm:$0xff]
    %v7284 = vld [vmem:[#allocation3 + $0xcf] sm:$0xff]
    %v7285 = vld [vmem:[#allocation3 + $0xe7] sm:$0xff]
    %v7286 = vld [vmem:[#allocation3 + $0xef] sm:$0xff]
    %v7287 = vld [vmem:[#allocation3 + $0x107] sm:$0xff]
    %v7288 = vld [vmem:[#allocation3 + $0x10f] sm:$0xff]
    %v7289 = vld [vmem:[#allocation3 + $0x127] sm:$0xff]
    %v7290 = vld [vmem:[#allocation3 + $0x12f] sm:$0xff]
    %v7291 = vld [vmem:[#allocation3 + $0x147] sm:$0xff]
    %v7292 = vld [vmem:[#allocation3 + $0x14f] sm:$0xff]
    %v7293 = vld [vmem:[#allocation3 + $0x167] sm:$0xff]
    %v7294 = vld [vmem:[#allocation3 + $0x16f] sm:$0xff]
    %v7295 = vld [vmem:[#allocation3 + $0x187] sm:$0xff]
    %v7296 = vld [vmem:[#allocation3 + $0x18f] sm:$0xff]
    %v7297 = vld [vmem:[#allocation3 + $0x1a7] sm:$0xff]
    %v7298 = vld [vmem:[#allocation3 + $0x1af] sm:$0xff]
    %v7299 = vld [vmem:[#allocation3 + $0x1c7] sm:$0xff]
    %v7300 = vld [vmem:[#allocation3 + $0x1cf] sm:$0xff]
    %v7301 = vld [vmem:[#allocation3 + $0x1e7] sm:$0xff]
    %v7302 = vld [vmem:[#allocation3 + $0x1ef] sm:$0xff]
    %v7303 = vld [vmem:[#allocation3 + $0x8] sm:$0xff]
    %v7304 = vld [vmem:[#allocation3 + $0x10] sm:$0xff]
    %v7305 = vld [vmem:[#allocation3 + $0x28] sm:$0xff]
    %v7306 = vld [vmem:[#allocation3 + $0x30] sm:$0xff]
    %v7307 = vld [vmem:[#allocation3 + $0x48] sm:$0xff]
    %v7308 = vld [vmem:[#allocation3 + $0x50] sm:$0xff]
    %v7309 = vld [vmem:[#allocation3 + $0x68] sm:$0xff]
    %v7310 = vld [vmem:[#allocation3 + $0x70] sm:$0xff]
    %v7311 = vld [vmem:[#allocation3 + $0x88] sm:$0xff]
    %v7312 = vld [vmem:[#allocation3 + $0x90] sm:$0xff]
    %v7313 = vld [vmem:[#allocation3 + $0xa8] sm:$0xff]
    %v7314 = vld [vmem:[#allocation3 + $0xb0] sm:$0xff]
    %v7315 = vld [vmem:[#allocation3 + $0xc8] sm:$0xff]
    %v7316 = vld [vmem:[#allocation3 + $0xd0] sm:$0xff]
    %v7317 = vld [vmem:[#allocation3 + $0xe8] sm:$0xff]
    %v7318 = vld [vmem:[#allocation3 + $0xf0] sm:$0xff]
    %v7319 = vld [vmem:[#allocation3 + $0x108] sm:$0xff]
    %v7320 = vld [vmem:[#allocation3 + $0x110] sm:$0xff]
    %v7321 = vld [vmem:[#allocation3 + $0x128] sm:$0xff]
    %v7322 = vld [vmem:[#allocation3 + $0x130] sm:$0xff]
    %v7323 = vld [vmem:[#allocation3 + $0x148] sm:$0xff]
    %v7324 = vld [vmem:[#allocation3 + $0x150] sm:$0xff]
    %v7325 = vld [vmem:[#allocation3 + $0x168] sm:$0xff]
    %v7326 = vld [vmem:[#allocation3 + $0x170] sm:$0xff]
    %v7327 = vld [vmem:[#allocation3 + $0x188] sm:$0xff]
    %v7328 = vld [vmem:[#allocation3 + $0x190] sm:$0xff]
    %v7329 = vld [vmem:[#allocation3 + $0x1a8] sm:$0xff]
    %v7330 = vld [vmem:[#allocation3 + $0x1b0] sm:$0xff]
    %v7331 = vld [vmem:[#allocation3 + $0x1c8] sm:$0xff]
    %v7332 = vld [vmem:[#allocation3 + $0x1d0] sm:$0xff]
    %v7333 = vld [vmem:[#allocation3 + $0x1e8] sm:$0xff]
    %v7334 = vld [vmem:[#allocation3 + $0x1f0] sm:$0xff]
    %v7336 = vsel %vm100, %v7303, 0
    %v7339 = vsel %vm100, %v7304, 0
    %v7342 = vsel %vm100, %v7305, 0
    %v7345 = vsel %vm100, %v7306, 0
    %v7348 = vsel %vm100, %v7307, 0
    %v7351 = vsel %vm100, %v7308, 0
    %v7354 = vsel %vm100, %v7309, 0
    %v7357 = vsel %vm100, %v7310, 0
    %v7360 = vsel %vm100, %v7311, 0
    %v7363 = vsel %vm100, %v7312, 0
    %v7366 = vsel %vm100, %v7313, 0
    %v7369 = vsel %vm100, %v7314, 0
    %v7372 = vsel %vm100, %v7315, 0
    %v7375 = vsel %vm100, %v7316, 0
    %v7378 = vsel %vm100, %v7317, 0
    %v7381 = vsel %vm100, %v7318, 0
    %v7384 = vsel %vm100, %v7319, 0
    %v7387 = vsel %vm100, %v7320, 0
    %v7390 = vsel %vm100, %v7321, 0
    %v7393 = vsel %vm100, %v7322, 0
    %v7396 = vsel %vm100, %v7323, 0
    %v7399 = vsel %vm100, %v7324, 0
    %v7402 = vsel %vm100, %v7325, 0
    %v7405 = vsel %vm100, %v7326, 0
    %v7408 = vsel %vm100, %v7327, 0
    %v7411 = vsel %vm100, %v7328, 0
    %v7414 = vsel %vm100, %v7329, 0
    %v7417 = vsel %vm100, %v7330, 0
    %v7420 = vsel %vm100, %v7331, 0
    %v7423 = vsel %vm100, %v7332, 0
    %v7426 = vsel %vm100, %v7333, 0
    %v7429 = vsel %vm100, %v7334, 0
    %7431 = vmatprep.subr.mxu0 0.0
    %7432 = vmatpush1.xpose.msra.mxu0 %v7336
    %7433 = vmatprep.subr.mxu0 0.0
    %7434 = vmatpush1.xpose.msra.mxu0 %v7339
    %7435 = vmatprep.subr.mxu0 0.0
    %7436 = vmatpush1.xpose.msra.mxu0 %v7342
    %7437 = vmatprep.subr.mxu0 0.0
    %7438 = vmatpush1.xpose.msra.mxu0 %v7345
    %7439 = vmatprep.subr.mxu0 0.0
    %7440 = vmatpush1.xpose.msra.mxu0 %v7348
    %7441 = vmatprep.subr.mxu0 0.0
    %7442 = vmatpush1.xpose.msra.mxu0 %v7351
    %7443 = vmatprep.subr.mxu0 0.0
    %7444 = vmatpush1.xpose.msra.mxu0 %v7354
    %7445 = vmatprep.subr.mxu0 0.0
    %7446 = vmatpush1.xpose.msra.mxu0 %v7357
    %7447 = vmatprep.subr.mxu0 0.0
    %7448 = vmatpush1.xpose.msra.mxu0 %v7360
    %7449 = vmatprep.subr.mxu0 0.0
    %7450 = vmatpush1.xpose.msra.mxu0 %v7363
    %7451 = vmatprep.subr.mxu0 0.0
    %7452 = vmatpush1.xpose.msra.mxu0 %v7366
    %7453 = vmatprep.subr.mxu0 0.0
    %7454 = vmatpush1.xpose.msra.mxu0 %v7369
    %7455 = vmatprep.subr.mxu0 0.0
    %7456 = vmatpush1.xpose.msra.mxu0 %v7372
    %7457 = vmatprep.subr.mxu0 0.0
    %7458 = vmatpush1.xpose.msra.mxu0 %v7375
    %7459 = vmatprep.subr.mxu0 0.0
    %7460 = vmatpush1.xpose.msra.mxu0 %v7378
    %7461 = vmatprep.subr.mxu0 0.0
    %7462 = vmatpush1.xpose.msra.mxu0 %v7381
    %7463 = vmatprep.subr.mxu0 0.0
    %7464 = vmatpush1.xpose.msra.mxu0 %v7384
    %7465 = vmatprep.subr.mxu0 0.0
    %7466 = vmatpush1.xpose.msra.mxu0 %v7387
    %7467 = vmatprep.subr.mxu0 0.0
    %7468 = vmatpush1.xpose.msra.mxu0 %v7390
    %7469 = vmatprep.subr.mxu0 0.0
    %7470 = vmatpush1.xpose.msra.mxu0 %v7393
    %7471 = vmatprep.subr.mxu0 0.0
    %7472 = vmatpush1.xpose.msra.mxu0 %v7396
    %7473 = vmatprep.subr.mxu0 0.0
    %7474 = vmatpush1.xpose.msra.mxu0 %v7399
    %7475 = vmatprep.subr.mxu0 0.0
    %7476 = vmatpush1.xpose.msra.mxu0 %v7402
    %7477 = vmatprep.subr.mxu0 0.0
    %7478 = vmatpush1.xpose.msra.mxu0 %v7405
    %7479 = vmatprep.subr.mxu0 0.0
    %7480 = vmatpush1.xpose.msra.mxu0 %v7408
    %7481 = vmatprep.subr.mxu0 0.0
    %7482 = vmatpush1.xpose.msra.mxu0 %v7411
    %7483 = vmatprep.subr.mxu0 0.0
    %7484 = vmatpush1.xpose.msra.mxu0 %v7414
    %7485 = vmatprep.subr.mxu0 0.0
    %7486 = vmatpush1.xpose.msra.mxu0 %v7417
    %7487 = vmatprep.subr.mxu0 0.0
    %7488 = vmatpush1.xpose.msra.mxu0 %v7420
    %7489 = vmatprep.subr.mxu0 0.0
    %7490 = vmatpush1.xpose.msra.mxu0 %v7423
    %7491 = vmatprep.subr.mxu0 0.0
    %7492 = vmatpush1.xpose.msra.mxu0 %v7426
    %7493 = vmatprep.subr.mxu0 0.0
    %7494 = vmatpush1.xpose.msra.mxu0 %v7429
    %7495 = vmatprep.mubr.f32.mxu0 0.0
    %7496 = vmatmul.mubr.f32.gmra.mrb[0].mxu0 %v2770
    %v7497 = vpop.f32.mrb[0].mxu0
    %v7498 = vadd.f32 0.0, %v7497
    %v7499 = vpop.f32.mrb[0].mxu0
    %v7500 = vadd.f32 0.0, %v7499
    %7501 = vmatprep.mubr.f32.mxu0 0.0
    %7502 = vmatmul.mubr.f32.gmra.mrb[0].mxu0 %v2773
    %v7503 = vpop.f32.mrb[0].mxu0
    %v7504 = vadd.f32 0.0, %v7503
    %v7505 = vpop.f32.mrb[0].mxu0
    %v7506 = vadd.f32 0.0, %v7505
    %7507 = vdwg.mxu0
    %v7509 = vsel %vm100, %v7271, 0
    %v7512 = vsel %vm100, %v7272, 0
    %v7515 = vsel %vm100, %v7273, 0
    %v7518 = vsel %vm100, %v7274, 0
    %v7521 = vsel %vm100, %v7275, 0
    %v7524 = vsel %vm100, %v7276, 0
    %v7527 = vsel %vm100, %v7277, 0
    %v7530 = vsel %vm100, %v7278, 0
    %v7533 = vsel %vm100, %v7279, 0
    %v7536 = vsel %vm100, %v7280, 0
    %v7539 = vsel %vm100, %v7281, 0
    %v7542 = vsel %vm100, %v7282, 0
    %v7545 = vsel %vm100, %v7283, 0
    %v7548 = vsel %vm100, %v7284, 0
    %v7551 = vsel %vm100, %v7285, 0
    %v7554 = vsel %vm100, %v7286, 0
    %v7557 = vsel %vm100, %v7287, 0
    %v7560 = vsel %vm100, %v7288, 0
    %v7563 = vsel %vm100, %v7289, 0
    %v7566 = vsel %vm100, %v7290, 0
    %v7569 = vsel %vm100, %v7291, 0
    %v7572 = vsel %vm100, %v7292, 0
    %v7575 = vsel %vm100, %v7293, 0
    %v7578 = vsel %vm100, %v7294, 0
    %v7581 = vsel %vm100, %v7295, 0
    %v7584 = vsel %vm100, %v7296, 0
    %v7587 = vsel %vm100, %v7297, 0
    %v7590 = vsel %vm100, %v7298, 0
    %v7593 = vsel %vm100, %v7299, 0
    %v7596 = vsel %vm100, %v7300, 0
    %v7599 = vsel %vm100, %v7301, 0
    %v7602 = vsel %vm100, %v7302, 0
    %7604 = vmatprep.subr.mxu0 0.0
    %7605 = vmatpush1.xpose.msra.mxu0 %v7509
    %7606 = vmatprep.subr.mxu0 0.0
    %7607 = vmatpush1.xpose.msra.mxu0 %v7512
    %7608 = vmatprep.subr.mxu0 0.0
    %7609 = vmatpush1.xpose.msra.mxu0 %v7515
    %7610 = vmatprep.subr.mxu0 0.0
    %7611 = vmatpush1.xpose.msra.mxu0 %v7518
    %7612 = vmatprep.subr.mxu0 0.0
    %7613 = vmatpush1.xpose.msra.mxu0 %v7521
    %7614 = vmatprep.subr.mxu0 0.0
    %7615 = vmatpush1.xpose.msra.mxu0 %v7524
    %7616 = vmatprep.subr.mxu0 0.0
    %7617 = vmatpush1.xpose.msra.mxu0 %v7527
    %7618 = vmatprep.subr.mxu0 0.0
    %7619 = vmatpush1.xpose.msra.mxu0 %v7530
    %7620 = vmatprep.subr.mxu0 0.0
    %7621 = vmatpush1.xpose.msra.mxu0 %v7533
    %7622 = vmatprep.subr.mxu0 0.0
    %7623 = vmatpush1.xpose.msra.mxu0 %v7536
    %7624 = vmatprep.subr.mxu0 0.0
    %7625 = vmatpush1.xpose.msra.mxu0 %v7539
    %7626 = vmatprep.subr.mxu0 0.0
    %7627 = vmatpush1.xpose.msra.mxu0 %v7542
    %7628 = vmatprep.subr.mxu0 0.0
    %7629 = vmatpush1.xpose.msra.mxu0 %v7545
    %7630 = vmatprep.subr.mxu0 0.0
    %7631 = vmatpush1.xpose.msra.mxu0 %v7548
    %7632 = vmatprep.subr.mxu0 0.0
    %7633 = vmatpush1.xpose.msra.mxu0 %v7551
    %7634 = vmatprep.subr.mxu0 0.0
    %7635 = vmatpush1.xpose.msra.mxu0 %v7554
    %7636 = vmatprep.subr.mxu0 0.0
    %7637 = vmatpush1.xpose.msra.mxu0 %v7557
    %7638 = vmatprep.subr.mxu0 0.0
    %7639 = vmatpush1.xpose.msra.mxu0 %v7560
    %7640 = vmatprep.subr.mxu0 0.0
    %7641 = vmatpush1.xpose.msra.mxu0 %v7563
    %7642 = vmatprep.subr.mxu0 0.0
    %7643 = vmatpush1.xpose.msra.mxu0 %v7566
    %7644 = vmatprep.subr.mxu0 0.0
    %7645 = vmatpush1.xpose.msra.mxu0 %v7569
    %7646 = vmatprep.subr.mxu0 0.0
    %7647 = vmatpush1.xpose.msra.mxu0 %v7572
    %7648 = vmatprep.subr.mxu0 0.0
    %7649 = vmatpush1.xpose.msra.mxu0 %v7575
    %7650 = vmatprep.subr.mxu0 0.0
    %7651 = vmatpush1.xpose.msra.mxu0 %v7578
    %7652 = vmatprep.subr.mxu0 0.0
    %7653 = vmatpush1.xpose.msra.mxu0 %v7581
    %7654 = vmatprep.subr.mxu0 0.0
    %7655 = vmatpush1.xpose.msra.mxu0 %v7584
    %7656 = vmatprep.subr.mxu0 0.0
    %7657 = vmatpush1.xpose.msra.mxu0 %v7587
    %7658 = vmatprep.subr.mxu0 0.0
    %7659 = vmatpush1.xpose.msra.mxu0 %v7590
    %7660 = vmatprep.subr.mxu0 0.0
    %7661 = vmatpush1.xpose.msra.mxu0 %v7593
    %7662 = vmatprep.subr.mxu0 0.0
    %7663 = vmatpush1.xpose.msra.mxu0 %v7596
    %7664 = vmatprep.subr.mxu0 0.0
    %7665 = vmatpush1.xpose.msra.mxu0 %v7599
    %7666 = vmatprep.subr.mxu0 0.0
    %7667 = vmatpush1.xpose.msra.mxu0 %v7602
    %7668 = vmatprep.mubr.f32.mxu0 0.0
    %7669 = vmatmul.mubr.f32.gmra.mrb[0].mxu0 %v2949
    %v7670 = vpop.f32.mrb[0].mxu0
    %v7671 = vadd.f32 %v7498, %v7670
    %v7672 = vpop.f32.mrb[0].mxu0
    %v7673 = vadd.f32 %v7500, %v7672
    %7674 = vmatprep.mubr.f32.mxu0 0.0
    %7675 = vmatmul.mubr.f32.gmra.mrb[0].mxu0 %v2952
    %v7676 = vpop.f32.mrb[0].mxu0
    %v7677 = vadd.f32 %v7504, %v7676
    %v7678 = vpop.f32.mrb[0].mxu0
    %v7679 = vadd.f32 %v7506, %v7678
    %7680 = vdwg.mxu0
    %v7681 = vld [vmem:[#allocation3 + $0x9] sm:$0xff]
    %v7682 = vld [vmem:[#allocation3 + $0x11] sm:$0xff]
    %v7683 = vld [vmem:[#allocation3 + $0x29] sm:$0xff]
    %v7684 = vld [vmem:[#allocation3 + $0x31] sm:$0xff]
    %v7685 = vld [vmem:[#allocation3 + $0x49] sm:$0xff]
    %v7686 = vld [vmem:[#allocation3 + $0x51] sm:$0xff]
    %v7687 = vld [vmem:[#allocation3 + $0x69] sm:$0xff]
    %v7688 = vld [vmem:[#allocation3 + $0x71] sm:$0xff]
    %v7689 = vld [vmem:[#allocation3 + $0x89] sm:$0xff]
    %v7690 = vld [vmem:[#allocation3 + $0x91] sm:$0xff]
    %v7691 = vld [vmem:[#allocation3 + $0xa9] sm:$0xff]
    %v7692 = vld [vmem:[#allocation3 + $0xb1] sm:$0xff]
    %v7693 = vld [vmem:[#allocation3 + $0xc9] sm:$0xff]
    %v7694 = vld [vmem:[#allocation3 + $0xd1] sm:$0xff]
    %v7695 = vld [vmem:[#allocation3 + $0xe9] sm:$0xff]
    %v7696 = vld [vmem:[#allocation3 + $0xf1] sm:$0xff]
    %v7697 = vld [vmem:[#allocation3 + $0x109] sm:$0xff]
    %v7698 = vld [vmem:[#allocation3 + $0x111] sm:$0xff]
    %v7699 = vld [vmem:[#allocation3 + $0x129] sm:$0xff]
    %v7700 = vld [vmem:[#allocation3 + $0x131] sm:$0xff]
    %v7701 = vld [vmem:[#allocation3 + $0x149] sm:$0xff]
    %v7702 = vld [vmem:[#allocation3 + $0x151] sm:$0xff]
    %v7703 = vld [vmem:[#allocation3 + $0x169] sm:$0xff]
    %v7704 = vld [vmem:[#allocation3 + $0x171] sm:$0xff]
    %v7705 = vld [vmem:[#allocation3 + $0x189] sm:$0xff]
    %v7706 = vld [vmem:[#allocation3 + $0x191] sm:$0xff]
    %v7707 = vld [vmem:[#allocation3 + $0x1a9] sm:$0xff]
    %v7708 = vld [vmem:[#allocation3 + $0x1b1] sm:$0xff]
    %v7709 = vld [vmem:[#allocation3 + $0x1c9] sm:$0xff]
    %v7710 = vld [vmem:[#allocation3 + $0x1d1] sm:$0xff]
    %v7711 = vld [vmem:[#allocation3 + $0x1e9] sm:$0xff]
    %v7712 = vld [vmem:[#allocation3 + $0x1f1] sm:$0xff]
    %v7714 = vsel %vm100, %v7681, 0
    %v7717 = vsel %vm100, %v7682, 0
    %v7720 = vsel %vm100, %v7683, 0
    %v7723 = vsel %vm100, %v7684, 0
    %v7726 = vsel %vm100, %v7685, 0
    %v7729 = vsel %vm100, %v7686, 0
    %v7732 = vsel %vm100, %v7687, 0
    %v7735 = vsel %vm100, %v7688, 0
    %v7738 = vsel %vm100, %v7689, 0
    %v7741 = vsel %vm100, %v7690, 0
    %v7744 = vsel %vm100, %v7691, 0
    %v7747 = vsel %vm100, %v7692, 0
    %v7750 = vsel %vm100, %v7693, 0
    %v7753 = vsel %vm100, %v7694, 0
    %v7756 = vsel %vm100, %v7695, 0
    %v7759 = vsel %vm100, %v7696, 0
    %v7762 = vsel %vm100, %v7697, 0
    %v7765 = vsel %vm100, %v7698, 0
    %v7768 = vsel %vm100, %v7699, 0
    %v7771 = vsel %vm100, %v7700, 0
    %v7774 = vsel %vm100, %v7701, 0
    %v7777 = vsel %vm100, %v7702, 0
    %v7780 = vsel %vm100, %v7703, 0
    %v7783 = vsel %vm100, %v7704, 0
    %v7786 = vsel %vm100, %v7705, 0
    %v7789 = vsel %vm100, %v7706, 0
    %v7792 = vsel %vm100, %v7707, 0
    %v7795 = vsel %vm100, %v7708, 0
    %v7798 = vsel %vm100, %v7709, 0
    %v7801 = vsel %vm100, %v7710, 0
    %v7804 = vsel %vm100, %v7711, 0
    %v7807 = vsel %vm100, %v7712, 0
    %7809 = vmatprep.subr.mxu0 0.0
    %7810 = vmatpush1.xpose.msra.mxu0 %v7714
    %7811 = vmatprep.subr.mxu0 0.0
    %7812 = vmatpush1.xpose.msra.mxu0 %v7717
    %7813 = vmatprep.subr.mxu0 0.0
    %7814 = vmatpush1.xpose.msra.mxu0 %v7720
    %7815 = vmatprep.subr.mxu0 0.0
    %7816 = vmatpush1.xpose.msra.mxu0 %v7723
    %7817 = vmatprep.subr.mxu0 0.0
    %7818 = vmatpush1.xpose.msra.mxu0 %v7726
    %7819 = vmatprep.subr.mxu0 0.0
    %7820 = vmatpush1.xpose.msra.mxu0 %v7729
    %7821 = vmatprep.subr.mxu0 0.0
    %7822 = vmatpush1.xpose.msra.mxu0 %v7732
    %7823 = vmatprep.subr.mxu0 0.0
    %7824 = vmatpush1.xpose.msra.mxu0 %v7735
    %7825 = vmatprep.subr.mxu0 0.0
    %7826 = vmatpush1.xpose.msra.mxu0 %v7738
    %7827 = vmatprep.subr.mxu0 0.0
    %7828 = vmatpush1.xpose.msra.mxu0 %v7741
    %7829 = vmatprep.subr.mxu0 0.0
    %7830 = vmatpush1.xpose.msra.mxu0 %v7744
    %7831 = vmatprep.subr.mxu0 0.0
    %7832 = vmatpush1.xpose.msra.mxu0 %v7747
    %7833 = vmatprep.subr.mxu0 0.0
    %7834 = vmatpush1.xpose.msra.mxu0 %v7750
    %7835 = vmatprep.subr.mxu0 0.0
    %7836 = vmatpush1.xpose.msra.mxu0 %v7753
    %7837 = vmatprep.subr.mxu0 0.0
    %7838 = vmatpush1.xpose.msra.mxu0 %v7756
    %7839 = vmatprep.subr.mxu0 0.0
    %7840 = vmatpush1.xpose.msra.mxu0 %v7759
    %7841 = vmatprep.subr.mxu0 0.0
    %7842 = vmatpush1.xpose.msra.mxu0 %v7762
    %7843 = vmatprep.subr.mxu0 0.0
    %7844 = vmatpush1.xpose.msra.mxu0 %v7765
    %7845 = vmatprep.subr.mxu0 0.0
    %7846 = vmatpush1.xpose.msra.mxu0 %v7768
    %7847 = vmatprep.subr.mxu0 0.0
    %7848 = vmatpush1.xpose.msra.mxu0 %v7771
    %7849 = vmatprep.subr.mxu0 0.0
    %7850 = vmatpush1.xpose.msra.mxu0 %v7774
    %7851 = vmatprep.subr.mxu0 0.0
    %7852 = vmatpush1.xpose.msra.mxu0 %v7777
    %7853 = vmatprep.subr.mxu0 0.0
    %7854 = vmatpush1.xpose.msra.mxu0 %v7780
    %7855 = vmatprep.subr.mxu0 0.0
    %7856 = vmatpush1.xpose.msra.mxu0 %v7783
    %7857 = vmatprep.subr.mxu0 0.0
    %7858 = vmatpush1.xpose.msra.mxu0 %v7786
    %7859 = vmatprep.subr.mxu0 0.0
    %7860 = vmatpush1.xpose.msra.mxu0 %v7789
    %7861 = vmatprep.subr.mxu0 0.0
    %7862 = vmatpush1.xpose.msra.mxu0 %v7792
    %7863 = vmatprep.subr.mxu0 0.0
    %7864 = vmatpush1.xpose.msra.mxu0 %v7795
    %7865 = vmatprep.subr.mxu0 0.0
    %7866 = vmatpush1.xpose.msra.mxu0 %v7798
    %7867 = vmatprep.subr.mxu0 0.0
    %7868 = vmatpush1.xpose.msra.mxu0 %v7801
    %7869 = vmatprep.subr.mxu0 0.0
    %7870 = vmatpush1.xpose.msra.mxu0 %v7804
    %7871 = vmatprep.subr.mxu0 0.0
    %7872 = vmatpush1.xpose.msra.mxu0 %v7807
    %7873 = vmatprep.mubr.f32.mxu0 0.0
    %7874 = vmatmul.mubr.f32.gmra.mrb[0].mxu0 %v3160
    %v7875 = vpop.f32.mrb[0].mxu0
    %v7876 = vadd.f32 0.0, %v7875
    %v7877 = vpop.f32.mrb[0].mxu0
    %v7878 = vadd.f32 0.0, %v7877
    %7879 = vmatprep.mubr.f32.mxu0 0.0
    %7880 = vmatmul.mubr.f32.gmra.mrb[0].mxu0 %v3163
    %v7881 = vpop.f32.mrb[0].mxu0
    %v7882 = vadd.f32 0.0, %v7881
    %v7883 = vpop.f32.mrb[0].mxu0
    %v7884 = vadd.f32 0.0, %v7883
    %7885 = vdwg.mxu0
    %v7886 = vadd.f32 %v7671, %v7876
    %v7887 = vadd.f32 %v7673, %v7878
    %v7888 = vadd.f32 %v7677, %v7882
    %v7889 = vadd.f32 %v7679, %v7884
    %v7890 = vld [vmem:[%s2672 + $0x7] sm:$0xff]
    %v7891 = vld [vmem:[%s2672 + $0xf] sm:$0xff]
    %v7892 = vld [vmem:[%s2672 + $0x27] sm:$0xff]
    %v7893 = vld [vmem:[%s2672 + $0x2f] sm:$0xff]
    %v7894 = vld [vmem:[%s2672 + $0x47] sm:$0xff]
    %v7895 = vld [vmem:[%s2672 + $0x4f] sm:$0xff]
    %v7896 = vld [vmem:[%s2672 + $0x67] sm:$0xff]
    %v7897 = vld [vmem:[%s2672 + $0x6f] sm:$0xff]
    %v7898 = vld [vmem:[%s2672 + $0x87] sm:$0xff]
    %v7899 = vld [vmem:[%s2672 + $0x8f] sm:$0xff]
    %v7900 = vld [vmem:[%s2672 + $0xa7] sm:$0xff]
    %v7901 = vld [vmem:[%s2672 + $0xaf] sm:$0xff]
    %v7902 = vld [vmem:[%s2672 + $0xc7] sm:$0xff]
    %v7903 = vld [vmem:[%s2672 + $0xcf] sm:$0xff]
    %v7904 = vld [vmem:[%s2672 + $0xe7] sm:$0xff]
    %v7905 = vld [vmem:[%s2672 + $0xef] sm:$0xff]
    %v7906 = vld [vmem:[%s2672 + $0x107] sm:$0xff]
    %v7907 = vld [vmem:[%s2672 + $0x10f] sm:$0xff]
    %v7908 = vld [vmem:[%s2672 + $0x127] sm:$0xff]
    %v7909 = vld [vmem:[%s2672 + $0x12f] sm:$0xff]
    %v7910 = vld [vmem:[%s2672 + $0x147] sm:$0xff]
    %v7911 = vld [vmem:[%s2672 + $0x14f] sm:$0xff]
    %v7912 = vld [vmem:[%s2672 + $0x167] sm:$0xff]
    %v7913 = vld [vmem:[%s2672 + $0x16f] sm:$0xff]
    %v7914 = vld [vmem:[%s2672 + $0x187] sm:$0xff]
    %v7915 = vld [vmem:[%s2672 + $0x18f] sm:$0xff]
    %v7916 = vld [vmem:[%s2672 + $0x1a7] sm:$0xff]
    %v7917 = vld [vmem:[%s2672 + $0x1af] sm:$0xff]
    %v7918 = vld [vmem:[%s2672 + $0x1c7] sm:$0xff]
    %v7919 = vld [vmem:[%s2672 + $0x1cf] sm:$0xff]
    %v7920 = vld [vmem:[%s2672 + $0x1e7] sm:$0xff]
    %v7921 = vld [vmem:[%s2672 + $0x1ef] sm:$0xff]
    %v7923 = vsel %vm100, %v7890, 0
    %v7926 = vsel %vm100, %v7891, 0
    %v7929 = vsel %vm100, %v7892, 0
    %v7932 = vsel %vm100, %v7893, 0
    %v7935 = vsel %vm100, %v7894, 0
    %v7938 = vsel %vm100, %v7895, 0
    %v7941 = vsel %vm100, %v7896, 0
    %v7944 = vsel %vm100, %v7897, 0
    %v7947 = vsel %vm100, %v7898, 0
    %v7950 = vsel %vm100, %v7899, 0
    %v7953 = vsel %vm100, %v7900, 0
    %v7956 = vsel %vm100, %v7901, 0
    %v7959 = vsel %vm100, %v7902, 0
    %v7962 = vsel %vm100, %v7903, 0
    %v7965 = vsel %vm100, %v7904, 0
    %v7968 = vsel %vm100, %v7905, 0
    %v7971 = vsel %vm100, %v7906, 0
    %v7974 = vsel %vm100, %v7907, 0
    %v7977 = vsel %vm100, %v7908, 0
    %v7980 = vsel %vm100, %v7909, 0
    %v7983 = vsel %vm100, %v7910, 0
    %v7986 = vsel %vm100, %v7911, 0
    %v7989 = vsel %vm100, %v7912, 0
    %v7992 = vsel %vm100, %v7913, 0
    %v7995 = vsel %vm100, %v7914, 0
    %v7998 = vsel %vm100, %v7915, 0
    %v8001 = vsel %vm100, %v7916, 0
    %v8004 = vsel %vm100, %v7917, 0
    %v8007 = vsel %vm100, %v7918, 0
    %v8010 = vsel %vm100, %v7919, 0
    %v8013 = vsel %vm100, %v7920, 0
    %v8016 = vsel %vm100, %v7921, 0
    %8018 = vmatprep.subr.mxu0 0.0
    %8019 = vmatpush1.xpose.msra.mxu0 %v7923
    %8020 = vmatprep.subr.mxu0 0.0
    %8021 = vmatpush1.xpose.msra.mxu0 %v7926
    %8022 = vmatprep.subr.mxu0 0.0
    %8023 = vmatpush1.xpose.msra.mxu0 %v7929
    %8024 = vmatprep.subr.mxu0 0.0
    %8025 = vmatpush1.xpose.msra.mxu0 %v7932
    %8026 = vmatprep.subr.mxu0 0.0
    %8027 = vmatpush1.xpose.msra.mxu0 %v7935
    %8028 = vmatprep.subr.mxu0 0.0
    %8029 = vmatpush1.xpose.msra.mxu0 %v7938
    %8030 = vmatprep.subr.mxu0 0.0
    %8031 = vmatpush1.xpose.msra.mxu0 %v7941
    %8032 = vmatprep.subr.mxu0 0.0
    %8033 = vmatpush1.xpose.msra.mxu0 %v7944
    %8034 = vmatprep.subr.mxu0 0.0
    %8035 = vmatpush1.xpose.msra.mxu0 %v7947
    %8036 = vmatprep.subr.mxu0 0.0
    %8037 = vmatpush1.xpose.msra.mxu0 %v7950
    %8038 = vmatprep.subr.mxu0 0.0
    %8039 = vmatpush1.xpose.msra.mxu0 %v7953
    %8040 = vmatprep.subr.mxu0 0.0
    %8041 = vmatpush1.xpose.msra.mxu0 %v7956
    %8042 = vmatprep.subr.mxu0 0.0
    %8043 = vmatpush1.xpose.msra.mxu0 %v7959
    %8044 = vmatprep.subr.mxu0 0.0
    %8045 = vmatpush1.xpose.msra.mxu0 %v7962
    %8046 = vmatprep.subr.mxu0 0.0
    %8047 = vmatpush1.xpose.msra.mxu0 %v7965
    %8048 = vmatprep.subr.mxu0 0.0
    %8049 = vmatpush1.xpose.msra.mxu0 %v7968
    %8050 = vmatprep.subr.mxu0 0.0
    %8051 = vmatpush1.xpose.msra.mxu0 %v7971
    %8052 = vmatprep.subr.mxu0 0.0
    %8053 = vmatpush1.xpose.msra.mxu0 %v7974
    %8054 = vmatprep.subr.mxu0 0.0
    %8055 = vmatpush1.xpose.msra.mxu0 %v7977
    %8056 = vmatprep.subr.mxu0 0.0
    %8057 = vmatpush1.xpose.msra.mxu0 %v7980
    %8058 = vmatprep.subr.mxu0 0.0
    %8059 = vmatpush1.xpose.msra.mxu0 %v7983
    %8060 = vmatprep.subr.mxu0 0.0
    %8061 = vmatpush1.xpose.msra.mxu0 %v7986
    %8062 = vmatprep.subr.mxu0 0.0
    %8063 = vmatpush1.xpose.msra.mxu0 %v7989
    %8064 = vmatprep.subr.mxu0 0.0
    %8065 = vmatpush1.xpose.msra.mxu0 %v7992
    %8066 = vmatprep.subr.mxu0 0.0
    %8067 = vmatpush1.xpose.msra.mxu0 %v7995
    %8068 = vmatprep.subr.mxu0 0.0
    %8069 = vmatpush1.xpose.msra.mxu0 %v7998
    %8070 = vmatprep.subr.mxu0 0.0
    %8071 = vmatpush1.xpose.msra.mxu0 %v8001
    %8072 = vmatprep.subr.mxu0 0.0
    %8073 = vmatpush1.xpose.msra.mxu0 %v8004
    %8074 = vmatprep.subr.mxu0 0.0
    %8075 = vmatpush1.xpose.msra.mxu0 %v8007
    %8076 = vmatprep.subr.mxu0 0.0
    %8077 = vmatpush1.xpose.msra.mxu0 %v8010
    %8078 = vmatprep.subr.mxu0 0.0
    %8079 = vmatpush1.xpose.msra.mxu0 %v8013
    %8080 = vmatprep.subr.mxu0 0.0
    %8081 = vmatpush1.xpose.msra.mxu0 %v8016
    %8082 = vmatprep.mubr.f32.mxu0 0.0
    %8083 = vmatmul.mubr.f32.gmra.mrb[0].mxu0 %v3375
    %v8084 = vpop.f32.mrb[0].mxu0
    %v8085 = vadd.f32 0.0, %v8084
    %v8086 = vpop.f32.mrb[0].mxu0
    %v8087 = vadd.f32 0.0, %v8086
    %8088 = vmatprep.mubr.f32.mxu0 0.0
    %8089 = vmatmul.mubr.f32.gmra.mrb[0].mxu0 %v3378
    %v8090 = vpop.f32.mrb[0].mxu0
    %v8091 = vadd.f32 0.0, %v8090
    %v8092 = vpop.f32.mrb[0].mxu0
    %v8093 = vadd.f32 0.0, %v8092
    %8094 = vdwg.mxu0
    %v8095 = vadd.f32 %v7886, %v8085
    %v8096 = vadd.f32 %v7887, %v8087
    %v8097 = vadd.f32 %v7888, %v8091
    %v8098 = vadd.f32 %v7889, %v8093
    %v8099 = vld [vmem:[%s2672 + $0x8] sm:$0xff]
    %v8100 = vld [vmem:[%s2672 + $0x10] sm:$0xff]
    %v8101 = vld [vmem:[%s2672 + $0x28] sm:$0xff]
    %v8102 = vld [vmem:[%s2672 + $0x30] sm:$0xff]
    %v8103 = vld [vmem:[%s2672 + $0x48] sm:$0xff]
    %v8104 = vld [vmem:[%s2672 + $0x50] sm:$0xff]
    %v8105 = vld [vmem:[%s2672 + $0x68] sm:$0xff]
    %v8106 = vld [vmem:[%s2672 + $0x70] sm:$0xff]
    %v8107 = vld [vmem:[%s2672 + $0x88] sm:$0xff]
    %v8108 = vld [vmem:[%s2672 + $0x90] sm:$0xff]
    %v8109 = vld [vmem:[%s2672 + $0xa8] sm:$0xff]
    %v8110 = vld [vmem:[%s2672 + $0xb0] sm:$0xff]
    %v8111 = vld [vmem:[%s2672 + $0xc8] sm:$0xff]
    %v8112 = vld [vmem:[%s2672 + $0xd0] sm:$0xff]
    %v8113 = vld [vmem:[%s2672 + $0xe8] sm:$0xff]
    %v8114 = vld [vmem:[%s2672 + $0xf0] sm:$0xff]
    %v8115 = vld [vmem:[%s2672 + $0x108] sm:$0xff]
    %v8116 = vld [vmem:[%s2672 + $0x110] sm:$0xff]
    %v8117 = vld [vmem:[%s2672 + $0x128] sm:$0xff]
    %v8118 = vld [vmem:[%s2672 + $0x130] sm:$0xff]
    %v8119 = vld [vmem:[%s2672 + $0x148] sm:$0xff]
    %v8120 = vld [vmem:[%s2672 + $0x150] sm:$0xff]
    %v8121 = vld [vmem:[%s2672 + $0x168] sm:$0xff]
    %v8122 = vld [vmem:[%s2672 + $0x170] sm:$0xff]
    %v8123 = vld [vmem:[%s2672 + $0x188] sm:$0xff]
    %v8124 = vld [vmem:[%s2672 + $0x190] sm:$0xff]
    %v8125 = vld [vmem:[%s2672 + $0x1a8] sm:$0xff]
    %v8126 = vld [vmem:[%s2672 + $0x1b0] sm:$0xff]
    %v8127 = vld [vmem:[%s2672 + $0x1c8] sm:$0xff]
    %v8128 = vld [vmem:[%s2672 + $0x1d0] sm:$0xff]
    %v8129 = vld [vmem:[%s2672 + $0x1e8] sm:$0xff]
    %v8130 = vld [vmem:[%s2672 + $0x1f0] sm:$0xff]
    %v8132 = vsel %vm100, %v8099, 0
    %v8135 = vsel %vm100, %v8100, 0
    %v8138 = vsel %vm100, %v8101, 0
    %v8141 = vsel %vm100, %v8102, 0
    %v8144 = vsel %vm100, %v8103, 0
    %v8147 = vsel %vm100, %v8104, 0
    %v8150 = vsel %vm100, %v8105, 0
    %v8153 = vsel %vm100, %v8106, 0
    %v8156 = vsel %vm100, %v8107, 0
    %v8159 = vsel %vm100, %v8108, 0
    %v8162 = vsel %vm100, %v8109, 0
    %v8165 = vsel %vm100, %v8110, 0
    %v8168 = vsel %vm100, %v8111, 0
    %v8171 = vsel %vm100, %v8112, 0
    %v8174 = vsel %vm100, %v8113, 0
    %v8177 = vsel %vm100, %v8114, 0
    %v8180 = vsel %vm100, %v8115, 0
    %v8183 = vsel %vm100, %v8116, 0
    %v8186 = vsel %vm100, %v8117, 0
    %v8189 = vsel %vm100, %v8118, 0
    %v8192 = vsel %vm100, %v8119, 0
    %v8195 = vsel %vm100, %v8120, 0
    %v8198 = vsel %vm100, %v8121, 0
    %v8201 = vsel %vm100, %v8122, 0
    %v8204 = vsel %vm100, %v8123, 0
    %v8207 = vsel %vm100, %v8124, 0
    %v8210 = vsel %vm100, %v8125, 0
    %v8213 = vsel %vm100, %v8126, 0
    %v8216 = vsel %vm100, %v8127, 0
    %v8219 = vsel %vm100, %v8128, 0
    %v8222 = vsel %vm100, %v8129, 0
    %v8225 = vsel %vm100, %v8130, 0
    %8227 = vmatprep.subr.mxu0 0.0
    %8228 = vmatpush1.xpose.msra.mxu0 %v8132
    %8229 = vmatprep.subr.mxu0 0.0
    %8230 = vmatpush1.xpose.msra.mxu0 %v8135
    %8231 = vmatprep.subr.mxu0 0.0
    %8232 = vmatpush1.xpose.msra.mxu0 %v8138
    %8233 = vmatprep.subr.mxu0 0.0
    %8234 = vmatpush1.xpose.msra.mxu0 %v8141
    %8235 = vmatprep.subr.mxu0 0.0
    %8236 = vmatpush1.xpose.msra.mxu0 %v8144
    %8237 = vmatprep.subr.mxu0 0.0
    %8238 = vmatpush1.xpose.msra.mxu0 %v8147
    %8239 = vmatprep.subr.mxu0 0.0
    %8240 = vmatpush1.xpose.msra.mxu0 %v8150
    %8241 = vmatprep.subr.mxu0 0.0
    %8242 = vmatpush1.xpose.msra.mxu0 %v8153
    %8243 = vmatprep.subr.mxu0 0.0
    %8244 = vmatpush1.xpose.msra.mxu0 %v8156
    %8245 = vmatprep.subr.mxu0 0.0
    %8246 = vmatpush1.xpose.msra.mxu0 %v8159
    %8247 = vmatprep.subr.mxu0 0.0
    %8248 = vmatpush1.xpose.msra.mxu0 %v8162
    %8249 = vmatprep.subr.mxu0 0.0
    %8250 = vmatpush1.xpose.msra.mxu0 %v8165
    %8251 = vmatprep.subr.mxu0 0.0
    %8252 = vmatpush1.xpose.msra.mxu0 %v8168
    %8253 = vmatprep.subr.mxu0 0.0
    %8254 = vmatpush1.xpose.msra.mxu0 %v8171
    %8255 = vmatprep.subr.mxu0 0.0
    %8256 = vmatpush1.xpose.msra.mxu0 %v8174
    %8257 = vmatprep.subr.mxu0 0.0
    %8258 = vmatpush1.xpose.msra.mxu0 %v8177
    %8259 = vmatprep.subr.mxu0 0.0
    %8260 = vmatpush1.xpose.msra.mxu0 %v8180
    %8261 = vmatprep.subr.mxu0 0.0
    %8262 = vmatpush1.xpose.msra.mxu0 %v8183
    %8263 = vmatprep.subr.mxu0 0.0
    %8264 = vmatpush1.xpose.msra.mxu0 %v8186
    %8265 = vmatprep.subr.mxu0 0.0
    %8266 = vmatpush1.xpose.msra.mxu0 %v8189
    %8267 = vmatprep.subr.mxu0 0.0
    %8268 = vmatpush1.xpose.msra.mxu0 %v8192
    %8269 = vmatprep.subr.mxu0 0.0
    %8270 = vmatpush1.xpose.msra.mxu0 %v8195
    %8271 = vmatprep.subr.mxu0 0.0
    %8272 = vmatpush1.xpose.msra.mxu0 %v8198
    %8273 = vmatprep.subr.mxu0 0.0
    %8274 = vmatpush1.xpose.msra.mxu0 %v8201
    %8275 = vmatprep.subr.mxu0 0.0
    %8276 = vmatpush1.xpose.msra.mxu0 %v8204
    %8277 = vmatprep.subr.mxu0 0.0
    %8278 = vmatpush1.xpose.msra.mxu0 %v8207
    %8279 = vmatprep.subr.mxu0 0.0
    %8280 = vmatpush1.xpose.msra.mxu0 %v8210
    %8281 = vmatprep.subr.mxu0 0.0
    %8282 = vmatpush1.xpose.msra.mxu0 %v8213
    %8283 = vmatprep.subr.mxu0 0.0
    %8284 = vmatpush1.xpose.msra.mxu0 %v8216
    %8285 = vmatprep.subr.mxu0 0.0
    %8286 = vmatpush1.xpose.msra.mxu0 %v8219
    %8287 = vmatprep.subr.mxu0 0.0
    %8288 = vmatpush1.xpose.msra.mxu0 %v8222
    %8289 = vmatprep.subr.mxu0 0.0
    %8290 = vmatpush1.xpose.msra.mxu0 %v8225
    %8291 = vmatprep.mubr.f32.mxu0 0.0
    %8292 = vmatmul.mubr.f32.gmra.mrb[0].mxu0 %v3590
    %v8293 = vpop.f32.mrb[0].mxu0
    %v8294 = vadd.f32 0.0, %v8293
    %v8295 = vpop.f32.mrb[0].mxu0
    %v8296 = vadd.f32 0.0, %v8295
    %8297 = vmatprep.mubr.f32.mxu0 0.0
    %8298 = vmatmul.mubr.f32.gmra.mrb[0].mxu0 %v3593
    %v8299 = vpop.f32.mrb[0].mxu0
    %v8300 = vadd.f32 0.0, %v8299
    %v8301 = vpop.f32.mrb[0].mxu0
    %v8302 = vadd.f32 0.0, %v8301
    %8303 = vdwg.mxu0
    %v8304 = vadd.f32 %v8095, %v8294
    %v8305 = vadd.f32 %v8096, %v8296
    %v8306 = vadd.f32 %v8097, %v8300
    %v8307 = vadd.f32 %v8098, %v8302
    %v8308 = vld [vmem:[%s2672 + $0x9] sm:$0xff]
    %v8309 = vld [vmem:[%s2672 + $0x11] sm:$0xff]
    %v8310 = vld [vmem:[%s2672 + $0x29] sm:$0xff]
    %v8311 = vld [vmem:[%s2672 + $0x31] sm:$0xff]
    %v8312 = vld [vmem:[%s2672 + $0x49] sm:$0xff]
    %v8313 = vld [vmem:[%s2672 + $0x51] sm:$0xff]
    %v8314 = vld [vmem:[%s2672 + $0x69] sm:$0xff]
    %v8315 = vld [vmem:[%s2672 + $0x71] sm:$0xff]
    %v8316 = vld [vmem:[%s2672 + $0x89] sm:$0xff]
    %v8317 = vld [vmem:[%s2672 + $0x91] sm:$0xff]
    %v8318 = vld [vmem:[%s2672 + $0xa9] sm:$0xff]
    %v8319 = vld [vmem:[%s2672 + $0xb1] sm:$0xff]
    %v8320 = vld [vmem:[%s2672 + $0xc9] sm:$0xff]
    %v8321 = vld [vmem:[%s2672 + $0xd1] sm:$0xff]
    %v8322 = vld [vmem:[%s2672 + $0xe9] sm:$0xff]
    %v8323 = vld [vmem:[%s2672 + $0xf1] sm:$0xff]
    %v8324 = vld [vmem:[%s2672 + $0x109] sm:$0xff]
    %v8325 = vld [vmem:[%s2672 + $0x111] sm:$0xff]
    %v8326 = vld [vmem:[%s2672 + $0x129] sm:$0xff]
    %v8327 = vld [vmem:[%s2672 + $0x131] sm:$0xff]
    %v8328 = vld [vmem:[%s2672 + $0x149] sm:$0xff]
    %v8329 = vld [vmem:[%s2672 + $0x151] sm:$0xff]
    %v8330 = vld [vmem:[%s2672 + $0x169] sm:$0xff]
    %v8331 = vld [vmem:[%s2672 + $0x171] sm:$0xff]
    %v8332 = vld [vmem:[%s2672 + $0x189] sm:$0xff]
    %v8333 = vld [vmem:[%s2672 + $0x191] sm:$0xff]
    %v8334 = vld [vmem:[%s2672 + $0x1a9] sm:$0xff]
    %v8335 = vld [vmem:[%s2672 + $0x1b1] sm:$0xff]
    %v8336 = vld [vmem:[%s2672 + $0x1c9] sm:$0xff]
    %v8337 = vld [vmem:[%s2672 + $0x1d1] sm:$0xff]
    %v8338 = vld [vmem:[%s2672 + $0x1e9] sm:$0xff]
    %v8339 = vld [vmem:[%s2672 + $0x1f1] sm:$0xff]
    %v8341 = vsel %vm100, %v8308, 0
    %v8344 = vsel %vm100, %v8309, 0
    %v8347 = vsel %vm100, %v8310, 0
    %v8350 = vsel %vm100, %v8311, 0
    %v8353 = vsel %vm100, %v8312, 0
    %v8356 = vsel %vm100, %v8313, 0
    %v8359 = vsel %vm100, %v8314, 0
    %v8362 = vsel %vm100, %v8315, 0
    %v8365 = vsel %vm100, %v8316, 0
    %v8368 = vsel %vm100, %v8317, 0
    %v8371 = vsel %vm100, %v8318, 0
    %v8374 = vsel %vm100, %v8319, 0
    %v8377 = vsel %vm100, %v8320, 0
    %v8380 = vsel %vm100, %v8321, 0
    %v8383 = vsel %vm100, %v8322, 0
    %v8386 = vsel %vm100, %v8323, 0
    %v8389 = vsel %vm100, %v8324, 0
    %v8392 = vsel %vm100, %v8325, 0
    %v8395 = vsel %vm100, %v8326, 0
    %v8398 = vsel %vm100, %v8327, 0
    %v8401 = vsel %vm100, %v8328, 0
    %v8404 = vsel %vm100, %v8329, 0
    %v8407 = vsel %vm100, %v8330, 0
    %v8410 = vsel %vm100, %v8331, 0
    %v8413 = vsel %vm100, %v8332, 0
    %v8416 = vsel %vm100, %v8333, 0
    %v8419 = vsel %vm100, %v8334, 0
    %v8422 = vsel %vm100, %v8335, 0
    %v8425 = vsel %vm100, %v8336, 0
    %v8428 = vsel %vm100, %v8337, 0
    %v8431 = vsel %vm100, %v8338, 0
    %v8434 = vsel %vm100, %v8339, 0
    %8436 = vmatprep.subr.mxu0 0.0
    %8437 = vmatpush1.xpose.msra.mxu0 %v8341
    %8438 = vmatprep.subr.mxu0 0.0
    %8439 = vmatpush1.xpose.msra.mxu0 %v8344
    %8440 = vmatprep.subr.mxu0 0.0
    %8441 = vmatpush1.xpose.msra.mxu0 %v8347
    %8442 = vmatprep.subr.mxu0 0.0
    %8443 = vmatpush1.xpose.msra.mxu0 %v8350
    %8444 = vmatprep.subr.mxu0 0.0
    %8445 = vmatpush1.xpose.msra.mxu0 %v8353
    %8446 = vmatprep.subr.mxu0 0.0
    %8447 = vmatpush1.xpose.msra.mxu0 %v8356
    %8448 = vmatprep.subr.mxu0 0.0
    %8449 = vmatpush1.xpose.msra.mxu0 %v8359
    %8450 = vmatprep.subr.mxu0 0.0
    %8451 = vmatpush1.xpose.msra.mxu0 %v8362
    %8452 = vmatprep.subr.mxu0 0.0
    %8453 = vmatpush1.xpose.msra.mxu0 %v8365
    %8454 = vmatprep.subr.mxu0 0.0
    %8455 = vmatpush1.xpose.msra.mxu0 %v8368
    %8456 = vmatprep.subr.mxu0 0.0
    %8457 = vmatpush1.xpose.msra.mxu0 %v8371
    %8458 = vmatprep.subr.mxu0 0.0
    %8459 = vmatpush1.xpose.msra.mxu0 %v8374
    %8460 = vmatprep.subr.mxu0 0.0
    %8461 = vmatpush1.xpose.msra.mxu0 %v8377
    %8462 = vmatprep.subr.mxu0 0.0
    %8463 = vmatpush1.xpose.msra.mxu0 %v8380
    %8464 = vmatprep.subr.mxu0 0.0
    %8465 = vmatpush1.xpose.msra.mxu0 %v8383
    %8466 = vmatprep.subr.mxu0 0.0
    %8467 = vmatpush1.xpose.msra.mxu0 %v8386
    %8468 = vmatprep.subr.mxu0 0.0
    %8469 = vmatpush1.xpose.msra.mxu0 %v8389
    %8470 = vmatprep.subr.mxu0 0.0
    %8471 = vmatpush1.xpose.msra.mxu0 %v8392
    %8472 = vmatprep.subr.mxu0 0.0
    %8473 = vmatpush1.xpose.msra.mxu0 %v8395
    %8474 = vmatprep.subr.mxu0 0.0
    %8475 = vmatpush1.xpose.msra.mxu0 %v8398
    %8476 = vmatprep.subr.mxu0 0.0
    %8477 = vmatpush1.xpose.msra.mxu0 %v8401
    %8478 = vmatprep.subr.mxu0 0.0
    %8479 = vmatpush1.xpose.msra.mxu0 %v8404
    %8480 = vmatprep.subr.mxu0 0.0
    %8481 = vmatpush1.xpose.msra.mxu0 %v8407
    %8482 = vmatprep.subr.mxu0 0.0
    %8483 = vmatpush1.xpose.msra.mxu0 %v8410
    %8484 = vmatprep.subr.mxu0 0.0
    %8485 = vmatpush1.xpose.msra.mxu0 %v8413
    %8486 = vmatprep.subr.mxu0 0.0
    %8487 = vmatpush1.xpose.msra.mxu0 %v8416
    %8488 = vmatprep.subr.mxu0 0.0
    %8489 = vmatpush1.xpose.msra.mxu0 %v8419
    %8490 = vmatprep.subr.mxu0 0.0
    %8491 = vmatpush1.xpose.msra.mxu0 %v8422
    %8492 = vmatprep.subr.mxu0 0.0
    %8493 = vmatpush1.xpose.msra.mxu0 %v8425
    %8494 = vmatprep.subr.mxu0 0.0
    %8495 = vmatpush1.xpose.msra.mxu0 %v8428
    %8496 = vmatprep.subr.mxu0 0.0
    %8497 = vmatpush1.xpose.msra.mxu0 %v8431
    %8498 = vmatprep.subr.mxu0 0.0
    %8499 = vmatpush1.xpose.msra.mxu0 %v8434
    %8500 = vmatprep.mubr.f32.mxu0 0.0
    %8501 = vmatmul.mubr.f32.gmra.mrb[0].mxu0 %v3805
    %v8502 = vpop.f32.mrb[0].mxu0
    %v8503 = vadd.f32 0.0, %v8502
    %v8504 = vpop.f32.mrb[0].mxu0
    %v8505 = vadd.f32 0.0, %v8504
    %8506 = vmatprep.mubr.f32.mxu0 0.0
    %8507 = vmatmul.mubr.f32.gmra.mrb[0].mxu0 %v3808
    %v8508 = vpop.f32.mrb[0].mxu0
    %v8509 = vadd.f32 0.0, %v8508
    %v8510 = vpop.f32.mrb[0].mxu0
    %v8511 = vadd.f32 0.0, %v8510
    %8512 = vdwg.mxu0
    %v8513 = vadd.f32 %v8304, %v8503
    %v8514 = vadd.f32 %v8305, %v8505
    %v8515 = vadd.f32 %v8306, %v8509
    %v8516 = vadd.f32 %v8307, %v8511
    %v8517 = vld [vmem:[%s3987 + $0x7] sm:$0xff]
    %v8518 = vld [vmem:[%s3987 + $0xf] sm:$0xff]
    %v8519 = vld [vmem:[%s3987 + $0x27] sm:$0xff]
    %v8520 = vld [vmem:[%s3987 + $0x2f] sm:$0xff]
    %v8521 = vld [vmem:[%s3987 + $0x47] sm:$0xff]
    %v8522 = vld [vmem:[%s3987 + $0x4f] sm:$0xff]
    %v8523 = vld [vmem:[%s3987 + $0x67] sm:$0xff]
    %v8524 = vld [vmem:[%s3987 + $0x6f] sm:$0xff]
    %v8525 = vld [vmem:[%s3987 + $0x87] sm:$0xff]
    %v8526 = vld [vmem:[%s3987 + $0x8f] sm:$0xff]
    %v8527 = vld [vmem:[%s3987 + $0xa7] sm:$0xff]
    %v8528 = vld [vmem:[%s3987 + $0xaf] sm:$0xff]
    %v8529 = vld [vmem:[%s3987 + $0xc7] sm:$0xff]
    %v8530 = vld [vmem:[%s3987 + $0xcf] sm:$0xff]
    %v8531 = vld [vmem:[%s3987 + $0xe7] sm:$0xff]
    %v8532 = vld [vmem:[%s3987 + $0xef] sm:$0xff]
    %v8533 = vld [vmem:[%s3987 + $0x107] sm:$0xff]
    %v8534 = vld [vmem:[%s3987 + $0x10f] sm:$0xff]
    %v8535 = vld [vmem:[%s3987 + $0x127] sm:$0xff]
    %v8536 = vld [vmem:[%s3987 + $0x12f] sm:$0xff]
    %v8537 = vld [vmem:[%s3987 + $0x147] sm:$0xff]
    %v8538 = vld [vmem:[%s3987 + $0x14f] sm:$0xff]
    %v8539 = vld [vmem:[%s3987 + $0x167] sm:$0xff]
    %v8540 = vld [vmem:[%s3987 + $0x16f] sm:$0xff]
    %v8541 = vld [vmem:[%s3987 + $0x187] sm:$0xff]
    %v8542 = vld [vmem:[%s3987 + $0x18f] sm:$0xff]
    %v8543 = vld [vmem:[%s3987 + $0x1a7] sm:$0xff]
    %v8544 = vld [vmem:[%s3987 + $0x1af] sm:$0xff]
    %v8545 = vld [vmem:[%s3987 + $0x1c7] sm:$0xff]
    %v8546 = vld [vmem:[%s3987 + $0x1cf] sm:$0xff]
    %v8547 = vld [vmem:[%s3987 + $0x1e7] sm:$0xff]
    %v8548 = vld [vmem:[%s3987 + $0x1ef] sm:$0xff]
    %v8550 = vsel %vm100, %v8517, 0
    %v8553 = vsel %vm100, %v8518, 0
    %v8556 = vsel %vm100, %v8519, 0
    %v8559 = vsel %vm100, %v8520, 0
    %v8562 = vsel %vm100, %v8521, 0
    %v8565 = vsel %vm100, %v8522, 0
    %v8568 = vsel %vm100, %v8523, 0
    %v8571 = vsel %vm100, %v8524, 0
    %v8574 = vsel %vm100, %v8525, 0
    %v8577 = vsel %vm100, %v8526, 0
    %v8580 = vsel %vm100, %v8527, 0
    %v8583 = vsel %vm100, %v8528, 0
    %v8586 = vsel %vm100, %v8529, 0
    %v8589 = vsel %vm100, %v8530, 0
    %v8592 = vsel %vm100, %v8531, 0
    %v8595 = vsel %vm100, %v8532, 0
    %v8598 = vsel %vm100, %v8533, 0
    %v8601 = vsel %vm100, %v8534, 0
    %v8604 = vsel %vm100, %v8535, 0
    %v8607 = vsel %vm100, %v8536, 0
    %v8610 = vsel %vm100, %v8537, 0
    %v8613 = vsel %vm100, %v8538, 0
    %v8616 = vsel %vm100, %v8539, 0
    %v8619 = vsel %vm100, %v8540, 0
    %v8622 = vsel %vm100, %v8541, 0
    %v8625 = vsel %vm100, %v8542, 0
    %v8628 = vsel %vm100, %v8543, 0
    %v8631 = vsel %vm100, %v8544, 0
    %v8634 = vsel %vm100, %v8545, 0
    %v8637 = vsel %vm100, %v8546, 0
    %v8640 = vsel %vm100, %v8547, 0
    %v8643 = vsel %vm100, %v8548, 0
    %8645 = vmatprep.subr.mxu0 0.0
    %8646 = vmatpush1.xpose.msra.mxu0 %v8550
    %8647 = vmatprep.subr.mxu0 0.0
    %8648 = vmatpush1.xpose.msra.mxu0 %v8553
    %8649 = vmatprep.subr.mxu0 0.0
    %8650 = vmatpush1.xpose.msra.mxu0 %v8556
    %8651 = vmatprep.subr.mxu0 0.0
    %8652 = vmatpush1.xpose.msra.mxu0 %v8559
    %8653 = vmatprep.subr.mxu0 0.0
    %8654 = vmatpush1.xpose.msra.mxu0 %v8562
    %8655 = vmatprep.subr.mxu0 0.0
    %8656 = vmatpush1.xpose.msra.mxu0 %v8565
    %8657 = vmatprep.subr.mxu0 0.0
    %8658 = vmatpush1.xpose.msra.mxu0 %v8568
    %8659 = vmatprep.subr.mxu0 0.0
    %8660 = vmatpush1.xpose.msra.mxu0 %v8571
    %8661 = vmatprep.subr.mxu0 0.0
    %8662 = vmatpush1.xpose.msra.mxu0 %v8574
    %8663 = vmatprep.subr.mxu0 0.0
    %8664 = vmatpush1.xpose.msra.mxu0 %v8577
    %8665 = vmatprep.subr.mxu0 0.0
    %8666 = vmatpush1.xpose.msra.mxu0 %v8580
    %8667 = vmatprep.subr.mxu0 0.0
    %8668 = vmatpush1.xpose.msra.mxu0 %v8583
    %8669 = vmatprep.subr.mxu0 0.0
    %8670 = vmatpush1.xpose.msra.mxu0 %v8586
    %8671 = vmatprep.subr.mxu0 0.0
    %8672 = vmatpush1.xpose.msra.mxu0 %v8589
    %8673 = vmatprep.subr.mxu0 0.0
    %8674 = vmatpush1.xpose.msra.mxu0 %v8592
    %8675 = vmatprep.subr.mxu0 0.0
    %8676 = vmatpush1.xpose.msra.mxu0 %v8595
    %8677 = vmatprep.subr.mxu0 0.0
    %8678 = vmatpush1.xpose.msra.mxu0 %v8598
    %8679 = vmatprep.subr.mxu0 0.0
    %8680 = vmatpush1.xpose.msra.mxu0 %v8601
    %8681 = vmatprep.subr.mxu0 0.0
    %8682 = vmatpush1.xpose.msra.mxu0 %v8604
    %8683 = vmatprep.subr.mxu0 0.0
    %8684 = vmatpush1.xpose.msra.mxu0 %v8607
    %8685 = vmatprep.subr.mxu0 0.0
    %8686 = vmatpush1.xpose.msra.mxu0 %v8610
    %8687 = vmatprep.subr.mxu0 0.0
    %8688 = vmatpush1.xpose.msra.mxu0 %v8613
    %8689 = vmatprep.subr.mxu0 0.0
    %8690 = vmatpush1.xpose.msra.mxu0 %v8616
    %8691 = vmatprep.subr.mxu0 0.0
    %8692 = vmatpush1.xpose.msra.mxu0 %v8619
    %8693 = vmatprep.subr.mxu0 0.0
    %8694 = vmatpush1.xpose.msra.mxu0 %v8622
    %8695 = vmatprep.subr.mxu0 0.0
    %8696 = vmatpush1.xpose.msra.mxu0 %v8625
    %8697 = vmatprep.subr.mxu0 0.0
    %8698 = vmatpush1.xpose.msra.mxu0 %v8628
    %8699 = vmatprep.subr.mxu0 0.0
    %8700 = vmatpush1.xpose.msra.mxu0 %v8631
    %8701 = vmatprep.subr.mxu0 0.0
    %8702 = vmatpush1.xpose.msra.mxu0 %v8634
    %8703 = vmatprep.subr.mxu0 0.0
    %8704 = vmatpush1.xpose.msra.mxu0 %v8637
    %8705 = vmatprep.subr.mxu0 0.0
    %8706 = vmatpush1.xpose.msra.mxu0 %v8640
    %8707 = vmatprep.subr.mxu0 0.0
    %8708 = vmatpush1.xpose.msra.mxu0 %v8643
    %8709 = vmatprep.mubr.f32.mxu0 0.0
    %8710 = vmatmul.mubr.f32.gmra.mrb[0].mxu0 %v4021
    %v8711 = vpop.f32.mrb[0].mxu0
    %v8712 = vadd.f32 0.0, %v8711
    %v8713 = vpop.f32.mrb[0].mxu0
    %v8714 = vadd.f32 0.0, %v8713
    %8715 = vmatprep.mubr.f32.mxu0 0.0
    %8716 = vmatmul.mubr.f32.gmra.mrb[0].mxu0 %v4024
    %v8717 = vpop.f32.mrb[0].mxu0
    %v8718 = vadd.f32 0.0, %v8717
    %v8719 = vpop.f32.mrb[0].mxu0
    %v8720 = vadd.f32 0.0, %v8719
    %8721 = vdwg.mxu0
    %v8722 = vadd.f32 %v8513, %v8712
    %v8723 = vadd.f32 %v8514, %v8714
    %v8724 = vadd.f32 %v8515, %v8718
    %v8725 = vadd.f32 %v8516, %v8720
    %v8726 = vld [vmem:[%s3987 + $0x8] sm:$0xff]
    %v8727 = vld [vmem:[%s3987 + $0x10] sm:$0xff]
    %v8728 = vld [vmem:[%s3987 + $0x28] sm:$0xff]
    %v8729 = vld [vmem:[%s3987 + $0x30] sm:$0xff]
    %v8730 = vld [vmem:[%s3987 + $0x48] sm:$0xff]
    %v8731 = vld [vmem:[%s3987 + $0x50] sm:$0xff]
    %v8732 = vld [vmem:[%s3987 + $0x68] sm:$0xff]
    %v8733 = vld [vmem:[%s3987 + $0x70] sm:$0xff]
    %v8734 = vld [vmem:[%s3987 + $0x88] sm:$0xff]
    %v8735 = vld [vmem:[%s3987 + $0x90] sm:$0xff]
    %v8736 = vld [vmem:[%s3987 + $0xa8] sm:$0xff]
    %v8737 = vld [vmem:[%s3987 + $0xb0] sm:$0xff]
    %v8738 = vld [vmem:[%s3987 + $0xc8] sm:$0xff]
    %v8739 = vld [vmem:[%s3987 + $0xd0] sm:$0xff]
    %v8740 = vld [vmem:[%s3987 + $0xe8] sm:$0xff]
    %v8741 = vld [vmem:[%s3987 + $0xf0] sm:$0xff]
    %v8742 = vld [vmem:[%s3987 + $0x108] sm:$0xff]
    %v8743 = vld [vmem:[%s3987 + $0x110] sm:$0xff]
    %v8744 = vld [vmem:[%s3987 + $0x128] sm:$0xff]
    %v8745 = vld [vmem:[%s3987 + $0x130] sm:$0xff]
    %v8746 = vld [vmem:[%s3987 + $0x148] sm:$0xff]
    %v8747 = vld [vmem:[%s3987 + $0x150] sm:$0xff]
    %v8748 = vld [vmem:[%s3987 + $0x168] sm:$0xff]
    %v8749 = vld [vmem:[%s3987 + $0x170] sm:$0xff]
    %v8750 = vld [vmem:[%s3987 + $0x188] sm:$0xff]
    %v8751 = vld [vmem:[%s3987 + $0x190] sm:$0xff]
    %v8752 = vld [vmem:[%s3987 + $0x1a8] sm:$0xff]
    %v8753 = vld [vmem:[%s3987 + $0x1b0] sm:$0xff]
    %v8754 = vld [vmem:[%s3987 + $0x1c8] sm:$0xff]
    %v8755 = vld [vmem:[%s3987 + $0x1d0] sm:$0xff]
    %v8756 = vld [vmem:[%s3987 + $0x1e8] sm:$0xff]
    %v8757 = vld [vmem:[%s3987 + $0x1f0] sm:$0xff]
    %v8759 = vsel %vm100, %v8726, 0
    %v8762 = vsel %vm100, %v8727, 0
    %v8765 = vsel %vm100, %v8728, 0
    %v8768 = vsel %vm100, %v8729, 0
    %v8771 = vsel %vm100, %v8730, 0
    %v8774 = vsel %vm100, %v8731, 0
    %v8777 = vsel %vm100, %v8732, 0
    %v8780 = vsel %vm100, %v8733, 0
    %v8783 = vsel %vm100, %v8734, 0
    %v8786 = vsel %vm100, %v8735, 0
    %v8789 = vsel %vm100, %v8736, 0
    %v8792 = vsel %vm100, %v8737, 0
    %v8795 = vsel %vm100, %v8738, 0
    %v8798 = vsel %vm100, %v8739, 0
    %v8801 = vsel %vm100, %v8740, 0
    %v8804 = vsel %vm100, %v8741, 0
    %v8807 = vsel %vm100, %v8742, 0
    %v8810 = vsel %vm100, %v8743, 0
    %v8813 = vsel %vm100, %v8744, 0
    %v8816 = vsel %vm100, %v8745, 0
    %v8819 = vsel %vm100, %v8746, 0
    %v8822 = vsel %vm100, %v8747, 0
    %v8825 = vsel %vm100, %v8748, 0
    %v8828 = vsel %vm100, %v8749, 0
    %v8831 = vsel %vm100, %v8750, 0
    %v8834 = vsel %vm100, %v8751, 0
    %v8837 = vsel %vm100, %v8752, 0
    %v8840 = vsel %vm100, %v8753, 0
    %v8843 = vsel %vm100, %v8754, 0
    %v8846 = vsel %vm100, %v8755, 0
    %v8849 = vsel %vm100, %v8756, 0
    %v8852 = vsel %vm100, %v8757, 0
    %8854 = vmatprep.subr.mxu0 0.0
    %8855 = vmatpush1.xpose.msra.mxu0 %v8759
    %8856 = vmatprep.subr.mxu0 0.0
    %8857 = vmatpush1.xpose.msra.mxu0 %v8762
    %8858 = vmatprep.subr.mxu0 0.0
    %8859 = vmatpush1.xpose.msra.mxu0 %v8765
    %8860 = vmatprep.subr.mxu0 0.0
    %8861 = vmatpush1.xpose.msra.mxu0 %v8768
    %8862 = vmatprep.subr.mxu0 0.0
    %8863 = vmatpush1.xpose.msra.mxu0 %v8771
    %8864 = vmatprep.subr.mxu0 0.0
    %8865 = vmatpush1.xpose.msra.mxu0 %v8774
    %8866 = vmatprep.subr.mxu0 0.0
    %8867 = vmatpush1.xpose.msra.mxu0 %v8777
    %8868 = vmatprep.subr.mxu0 0.0
    %8869 = vmatpush1.xpose.msra.mxu0 %v8780
    %8870 = vmatprep.subr.mxu0 0.0
    %8871 = vmatpush1.xpose.msra.mxu0 %v8783
    %8872 = vmatprep.subr.mxu0 0.0
    %8873 = vmatpush1.xpose.msra.mxu0 %v8786
    %8874 = vmatprep.subr.mxu0 0.0
    %8875 = vmatpush1.xpose.msra.mxu0 %v8789
    %8876 = vmatprep.subr.mxu0 0.0
    %8877 = vmatpush1.xpose.msra.mxu0 %v8792
    %8878 = vmatprep.subr.mxu0 0.0
    %8879 = vmatpush1.xpose.msra.mxu0 %v8795
    %8880 = vmatprep.subr.mxu0 0.0
    %8881 = vmatpush1.xpose.msra.mxu0 %v8798
    %8882 = vmatprep.subr.mxu0 0.0
    %8883 = vmatpush1.xpose.msra.mxu0 %v8801
    %8884 = vmatprep.subr.mxu0 0.0
    %8885 = vmatpush1.xpose.msra.mxu0 %v8804
    %8886 = vmatprep.subr.mxu0 0.0
    %8887 = vmatpush1.xpose.msra.mxu0 %v8807
    %8888 = vmatprep.subr.mxu0 0.0
    %8889 = vmatpush1.xpose.msra.mxu0 %v8810
    %8890 = vmatprep.subr.mxu0 0.0
    %8891 = vmatpush1.xpose.msra.mxu0 %v8813
    %8892 = vmatprep.subr.mxu0 0.0
    %8893 = vmatpush1.xpose.msra.mxu0 %v8816
    %8894 = vmatprep.subr.mxu0 0.0
    %8895 = vmatpush1.xpose.msra.mxu0 %v8819
    %8896 = vmatprep.subr.mxu0 0.0
    %8897 = vmatpush1.xpose.msra.mxu0 %v8822
    %8898 = vmatprep.subr.mxu0 0.0
    %8899 = vmatpush1.xpose.msra.mxu0 %v8825
    %8900 = vmatprep.subr.mxu0 0.0
    %8901 = vmatpush1.xpose.msra.mxu0 %v8828
    %8902 = vmatprep.subr.mxu0 0.0
    %8903 = vmatpush1.xpose.msra.mxu0 %v8831
    %8904 = vmatprep.subr.mxu0 0.0
    %8905 = vmatpush1.xpose.msra.mxu0 %v8834
    %8906 = vmatprep.subr.mxu0 0.0
    %8907 = vmatpush1.xpose.msra.mxu0 %v8837
    %8908 = vmatprep.subr.mxu0 0.0
    %8909 = vmatpush1.xpose.msra.mxu0 %v8840
    %8910 = vmatprep.subr.mxu0 0.0
    %8911 = vmatpush1.xpose.msra.mxu0 %v8843
    %8912 = vmatprep.subr.mxu0 0.0
    %8913 = vmatpush1.xpose.msra.mxu0 %v8846
    %8914 = vmatprep.subr.mxu0 0.0
    %8915 = vmatpush1.xpose.msra.mxu0 %v8849
    %8916 = vmatprep.subr.mxu0 0.0
    %8917 = vmatpush1.xpose.msra.mxu0 %v8852
    %8918 = vmatprep.mubr.f32.mxu0 0.0
    %8919 = vmatmul.mubr.f32.gmra.mrb[0].mxu0 %v4236
    %v8920 = vpop.f32.mrb[0].mxu0
    %v8921 = vadd.f32 0.0, %v8920
    %v8922 = vpop.f32.mrb[0].mxu0
    %v8923 = vadd.f32 0.0, %v8922
    %8924 = vmatprep.mubr.f32.mxu0 0.0
    %8925 = vmatmul.mubr.f32.gmra.mrb[0].mxu0 %v4239
    %v8926 = vpop.f32.mrb[0].mxu0
    %v8927 = vadd.f32 0.0, %v8926
    %v8928 = vpop.f32.mrb[0].mxu0
    %v8929 = vadd.f32 0.0, %v8928
    %8930 = vdwg.mxu0
    %v8931 = vadd.f32 %v8722, %v8921
    %v8932 = vadd.f32 %v8723, %v8923
    %v8933 = vadd.f32 %v8724, %v8927
    %v8934 = vadd.f32 %v8725, %v8929
    %v8935 = vld [vmem:[%s3987 + $0x9] sm:$0xff]
    %v8936 = vld [vmem:[%s3987 + $0x11] sm:$0xff]
    %v8937 = vld [vmem:[%s3987 + $0x29] sm:$0xff]
    %v8938 = vld [vmem:[%s3987 + $0x31] sm:$0xff]
    %v8939 = vld [vmem:[%s3987 + $0x49] sm:$0xff]
    %v8940 = vld [vmem:[%s3987 + $0x51] sm:$0xff]
    %v8941 = vld [vmem:[%s3987 + $0x69] sm:$0xff]
    %v8942 = vld [vmem:[%s3987 + $0x71] sm:$0xff]
    %v8943 = vld [vmem:[%s3987 + $0x89] sm:$0xff]
    %v8944 = vld [vmem:[%s3987 + $0x91] sm:$0xff]
    %v8945 = vld [vmem:[%s3987 + $0xa9] sm:$0xff]
    %v8946 = vld [vmem:[%s3987 + $0xb1] sm:$0xff]
    %v8947 = vld [vmem:[%s3987 + $0xc9] sm:$0xff]
    %v8948 = vld [vmem:[%s3987 + $0xd1] sm:$0xff]
    %v8949 = vld [vmem:[%s3987 + $0xe9] sm:$0xff]
    %v8950 = vld [vmem:[%s3987 + $0xf1] sm:$0xff]
    %v8951 = vld [vmem:[%s3987 + $0x109] sm:$0xff]
    %v8952 = vld [vmem:[%s3987 + $0x111] sm:$0xff]
    %v8953 = vld [vmem:[%s3987 + $0x129] sm:$0xff]
    %v8954 = vld [vmem:[%s3987 + $0x131] sm:$0xff]
    %v8955 = vld [vmem:[%s3987 + $0x149] sm:$0xff]
    %v8956 = vld [vmem:[%s3987 + $0x151] sm:$0xff]
    %v8957 = vld [vmem:[%s3987 + $0x169] sm:$0xff]
    %v8958 = vld [vmem:[%s3987 + $0x171] sm:$0xff]
    %v8959 = vld [vmem:[%s3987 + $0x189] sm:$0xff]
    %v8960 = vld [vmem:[%s3987 + $0x191] sm:$0xff]
    %v8961 = vld [vmem:[%s3987 + $0x1a9] sm:$0xff]
    %v8962 = vld [vmem:[%s3987 + $0x1b1] sm:$0xff]
    %v8963 = vld [vmem:[%s3987 + $0x1c9] sm:$0xff]
    %v8964 = vld [vmem:[%s3987 + $0x1d1] sm:$0xff]
    %v8965 = vld [vmem:[%s3987 + $0x1e9] sm:$0xff]
    %v8966 = vld [vmem:[%s3987 + $0x1f1] sm:$0xff]
    %v8968 = vsel %vm100, %v8935, 0
    %v8971 = vsel %vm100, %v8936, 0
    %v8974 = vsel %vm100, %v8937, 0
    %v8977 = vsel %vm100, %v8938, 0
    %v8980 = vsel %vm100, %v8939, 0
    %v8983 = vsel %vm100, %v8940, 0
    %v8986 = vsel %vm100, %v8941, 0
    %v8989 = vsel %vm100, %v8942, 0
    %v8992 = vsel %vm100, %v8943, 0
    %v8995 = vsel %vm100, %v8944, 0
    %v8998 = vsel %vm100, %v8945, 0
    %v9001 = vsel %vm100, %v8946, 0
    %v9004 = vsel %vm100, %v8947, 0
    %v9007 = vsel %vm100, %v8948, 0
    %v9010 = vsel %vm100, %v8949, 0
    %v9013 = vsel %vm100, %v8950, 0
    %v9016 = vsel %vm100, %v8951, 0
    %v9019 = vsel %vm100, %v8952, 0
    %v9022 = vsel %vm100, %v8953, 0
    %v9025 = vsel %vm100, %v8954, 0
    %v9028 = vsel %vm100, %v8955, 0
    %v9031 = vsel %vm100, %v8956, 0
    %v9034 = vsel %vm100, %v8957, 0
    %v9037 = vsel %vm100, %v8958, 0
    %v9040 = vsel %vm100, %v8959, 0
    %v9043 = vsel %vm100, %v8960, 0
    %v9046 = vsel %vm100, %v8961, 0
    %v9049 = vsel %vm100, %v8962, 0
    %v9052 = vsel %vm100, %v8963, 0
    %v9055 = vsel %vm100, %v8964, 0
    %v9058 = vsel %vm100, %v8965, 0
    %v9061 = vsel %vm100, %v8966, 0
    %9063 = vmatprep.subr.mxu0 0.0
    %9064 = vmatpush1.xpose.msra.mxu0 %v8968
    %9065 = vmatprep.subr.mxu0 0.0
    %9066 = vmatpush1.xpose.msra.mxu0 %v8971
    %9067 = vmatprep.subr.mxu0 0.0
    %9068 = vmatpush1.xpose.msra.mxu0 %v8974
    %9069 = vmatprep.subr.mxu0 0.0
    %9070 = vmatpush1.xpose.msra.mxu0 %v8977
    %9071 = vmatprep.subr.mxu0 0.0
    %9072 = vmatpush1.xpose.msra.mxu0 %v8980
    %9073 = vmatprep.subr.mxu0 0.0
    %9074 = vmatpush1.xpose.msra.mxu0 %v8983
    %9075 = vmatprep.subr.mxu0 0.0
    %9076 = vmatpush1.xpose.msra.mxu0 %v8986
    %9077 = vmatprep.subr.mxu0 0.0
    %9078 = vmatpush1.xpose.msra.mxu0 %v8989
    %9079 = vmatprep.subr.mxu0 0.0
    %9080 = vmatpush1.xpose.msra.mxu0 %v8992
    %9081 = vmatprep.subr.mxu0 0.0
    %9082 = vmatpush1.xpose.msra.mxu0 %v8995
    %9083 = vmatprep.subr.mxu0 0.0
    %9084 = vmatpush1.xpose.msra.mxu0 %v8998
    %9085 = vmatprep.subr.mxu0 0.0
    %9086 = vmatpush1.xpose.msra.mxu0 %v9001
    %9087 = vmatprep.subr.mxu0 0.0
    %9088 = vmatpush1.xpose.msra.mxu0 %v9004
    %9089 = vmatprep.subr.mxu0 0.0
    %9090 = vmatpush1.xpose.msra.mxu0 %v9007
    %9091 = vmatprep.subr.mxu0 0.0
    %9092 = vmatpush1.xpose.msra.mxu0 %v9010
    %9093 = vmatprep.subr.mxu0 0.0
    %9094 = vmatpush1.xpose.msra.mxu0 %v9013
    %9095 = vmatprep.subr.mxu0 0.0
    %9096 = vmatpush1.xpose.msra.mxu0 %v9016
    %9097 = vmatprep.subr.mxu0 0.0
    %9098 = vmatpush1.xpose.msra.mxu0 %v9019
    %9099 = vmatprep.subr.mxu0 0.0
    %9100 = vmatpush1.xpose.msra.mxu0 %v9022
    %9101 = vmatprep.subr.mxu0 0.0
    %9102 = vmatpush1.xpose.msra.mxu0 %v9025
    %9103 = vmatprep.subr.mxu0 0.0
    %9104 = vmatpush1.xpose.msra.mxu0 %v9028
    %9105 = vmatprep.subr.mxu0 0.0
    %9106 = vmatpush1.xpose.msra.mxu0 %v9031
    %9107 = vmatprep.subr.mxu0 0.0
    %9108 = vmatpush1.xpose.msra.mxu0 %v9034
    %9109 = vmatprep.subr.mxu0 0.0
    %9110 = vmatpush1.xpose.msra.mxu0 %v9037
    %9111 = vmatprep.subr.mxu0 0.0
    %9112 = vmatpush1.xpose.msra.mxu0 %v9040
    %9113 = vmatprep.subr.mxu0 0.0
    %9114 = vmatpush1.xpose.msra.mxu0 %v9043
    %9115 = vmatprep.subr.mxu0 0.0
    %9116 = vmatpush1.xpose.msra.mxu0 %v9046
    %9117 = vmatprep.subr.mxu0 0.0
    %9118 = vmatpush1.xpose.msra.mxu0 %v9049
    %9119 = vmatprep.subr.mxu0 0.0
    %9120 = vmatpush1.xpose.msra.mxu0 %v9052
    %9121 = vmatprep.subr.mxu0 0.0
    %9122 = vmatpush1.xpose.msra.mxu0 %v9055
    %9123 = vmatprep.subr.mxu0 0.0
    %9124 = vmatpush1.xpose.msra.mxu0 %v9058
    %9125 = vmatprep.subr.mxu0 0.0
    %9126 = vmatpush1.xpose.msra.mxu0 %v9061
    %9127 = vmatprep.mubr.f32.mxu0 0.0
    %9128 = vmatmul.mubr.f32.gmra.mrb[0].mxu0 %v4451
    %v9129 = vpop.f32.mrb[0].mxu0
    %v9130 = vadd.f32 0.0, %v9129
    %v9131 = vpop.f32.mrb[0].mxu0
    %v9132 = vadd.f32 0.0, %v9131
    %9133 = vmatprep.mubr.f32.mxu0 0.0
    %9134 = vmatmul.mubr.f32.gmra.mrb[0].mxu0 %v4454
    %v9135 = vpop.f32.mrb[0].mxu0
    %v9136 = vadd.f32 0.0, %v9135
    %v9137 = vpop.f32.mrb[0].mxu0
    %v9138 = vadd.f32 0.0, %v9137
    %9139 = vdwg.mxu0
    %v9140 = vadd.f32 %v8931, %v9130
    %v9141 = vadd.f32 %v8932, %v9132
    %v9142 = vadd.f32 %v8933, %v9136
    %v9143 = vadd.f32 %v8934, %v9138
    %v9144 = vadd.f32 %v9140, %v4636
    %v9145 = vadd.f32 %v9141, %v4636
    %v9146 = vadd.f32 %v9142, %v4641
    %v9147 = vadd.f32 %v9143, %v4641
    %v9148 = vmax.f32 %v9144, 0.0
    %v9149 = vmax.f32 %v9145, 0.0
    %v9150 = vmax.f32 %v9146, 0.0
    %v9151 = vmax.f32 %v9147, 0.0
    %v9154 = vcombine.low %v9148, %v9149
    %v9156 = vunpack.c.l.s4 1966171168
    %v9157 = vunpack.c.0.s8 %v9156
    %v9158 = vlaneseq
    %v9159 = vshrl.u32 %v9158, 7
    %v9160 = vsub.s32 %v9157, %v9159
    %v9161 = vrot.slane %v9154, %v9160
    %v9163 = vunpack.c.l.s4 1966171168
    %v9164 = vunpack.c.0.s8 %v9163
    %v9165 = vlaneseq
    %v9166 = vshrl.u32 %v9165, 7
    %v9167 = vsub.s32 %v9164, %v9166
    %v9168 = vrot.slane %v9161, %v9167
    %s9170 = scalar_lea.vmem [#allocation4], 1
    %9171 = vst.msk [vmem:[%s9170] ss:$2 sm:$0x3] %vm4672, %v9168
    %v9172 = vcombine.high %v9161, %v9161
    %v9174 = vunpack.c.l.s4 1966171168
    %v9175 = vunpack.c.0.s8 %v9174
    %v9176 = vlaneseq
    %v9177 = vshrl.u32 %v9176, 7
    %v9178 = vsub.s32 %v9175, %v9177
    %v9179 = vrot.slane %v9172, %v9178
    %s9181 = scalar_lea.vmem [#allocation4], 5
    %9182 = vst.msk [vmem:[%s9181] ss:$2 sm:$0x3] %vm4672, %v9179
    %v9183 = vcombine.high %v9168, %v9168
    %s9185 = scalar_lea.vmem [#allocation4], 9
    %9186 = vst.msk [vmem:[%s9185] ss:$2 sm:$0x3] %vm4672, %v9183
    %v9187 = vcombine.high %v9179, %v9179
    %s9189 = scalar_lea.vmem [#allocation4], 13
    %9190 = vst.msk [vmem:[%s9189] ss:$2 sm:$0x3] %vm4672, %v9187
    %v9191 = vcombine.high %v9148, %v9149
    %v9193 = vunpack.c.l.s4 1966171168
    %v9194 = vunpack.c.0.s8 %v9193
    %v9195 = vlaneseq
    %v9196 = vshrl.u32 %v9195, 7
    %v9197 = vsub.s32 %v9194, %v9196
    %v9198 = vrot.slane %v9191, %v9197
    %v9200 = vunpack.c.l.s4 1966171168
    %v9201 = vunpack.c.0.s8 %v9200
    %v9202 = vlaneseq
    %v9203 = vshrl.u32 %v9202, 7
    %v9204 = vsub.s32 %v9201, %v9203
    %v9205 = vrot.slane %v9198, %v9204
    %s9207 = scalar_lea.vmem [#allocation4], 17
    %9208 = vst.msk [vmem:[%s9207] ss:$2 sm:$0x3] %vm4672, %v9205
    %v9209 = vcombine.high %v9198, %v9198
    %v9211 = vunpack.c.l.s4 1966171168
    %v9212 = vunpack.c.0.s8 %v9211
    %v9213 = vlaneseq
    %v9214 = vshrl.u32 %v9213, 7
    %v9215 = vsub.s32 %v9212, %v9214
    %v9216 = vrot.slane %v9209, %v9215
    %s9218 = scalar_lea.vmem [#allocation4], 21
    %9219 = vst.msk [vmem:[%s9218] ss:$2 sm:$0x3] %vm4672, %v9216
    %v9220 = vcombine.high %v9205, %v9205
    %s9222 = scalar_lea.vmem [#allocation4], 25
    %9223 = vst.msk [vmem:[%s9222] ss:$2 sm:$0x3] %vm4672, %v9220
    %v9224 = vcombine.high %v9216, %v9216
    %s9226 = scalar_lea.vmem [#allocation4], 29
    %9227 = vst.msk [vmem:[%s9226] ss:$2 sm:$0x3] %vm4672, %v9224
    %v9230 = vcombine.low %v9150, %v9151
    %v9232 = vunpack.c.l.s4 1966171168
    %v9233 = vunpack.c.0.s8 %v9232
    %v9234 = vlaneseq
    %v9235 = vshrl.u32 %v9234, 7
    %v9236 = vsub.s32 %v9233, %v9235
    %v9237 = vrot.slane %v9230, %v9236
    %v9239 = vunpack.c.l.s4 1966171168
    %v9240 = vunpack.c.0.s8 %v9239
    %v9241 = vlaneseq
    %v9242 = vshrl.u32 %v9241, 7
    %v9243 = vsub.s32 %v9240, %v9242
    %v9244 = vrot.slane %v9237, %v9243
    %s9246 = scalar_lea.vmem [#allocation4], 33
    %9247 = vst.msk [vmem:[%s9246] ss:$2 sm:$0x3] %vm4672, %v9244
    %v9248 = vcombine.high %v9237, %v9237
    %v9250 = vunpack.c.l.s4 1966171168
    %v9251 = vunpack.c.0.s8 %v9250
    %v9252 = vlaneseq
    %v9253 = vshrl.u32 %v9252, 7
    %v9254 = vsub.s32 %v9251, %v9253
    %v9255 = vrot.slane %v9248, %v9254
    %s9257 = scalar_lea.vmem [#allocation4], 37
    %9258 = vst.msk [vmem:[%s9257] ss:$2 sm:$0x3] %vm4672, %v9255
    %v9259 = vcombine.high %v9244, %v9244
    %s9261 = scalar_lea.vmem [#allocation4], 41
    %9262 = vst.msk [vmem:[%s9261] ss:$2 sm:$0x3] %vm4672, %v9259
    %v9263 = vcombine.high %v9255, %v9255
    %s9265 = scalar_lea.vmem [#allocation4], 45
    %9266 = vst.msk [vmem:[%s9265] ss:$2 sm:$0x3] %vm4672, %v9263
    %v9267 = vcombine.high %v9150, %v9151
    %v9269 = vunpack.c.l.s4 1966171168
    %v9270 = vunpack.c.0.s8 %v9269
    %v9271 = vlaneseq
    %v9272 = vshrl.u32 %v9271, 7
    %v9273 = vsub.s32 %v9270, %v9272
    %v9274 = vrot.slane %v9267, %v9273
    %v9276 = vunpack.c.l.s4 1966171168
    %v9277 = vunpack.c.0.s8 %v9276
    %v9278 = vlaneseq
    %v9279 = vshrl.u32 %v9278, 7
    %v9280 = vsub.s32 %v9277, %v9279
    %v9281 = vrot.slane %v9274, %v9280
    %s9283 = scalar_lea.vmem [#allocation4], 49
    %9284 = vst.msk [vmem:[%s9283] ss:$2 sm:$0x3] %vm4672, %v9281
    %v9285 = vcombine.high %v9274, %v9274
    %v9287 = vunpack.c.l.s4 1966171168
    %v9288 = vunpack.c.0.s8 %v9287
    %v9289 = vlaneseq
    %v9290 = vshrl.u32 %v9289, 7
    %v9291 = vsub.s32 %v9288, %v9290
    %v9292 = vrot.slane %v9285, %v9291
    %s9294 = scalar_lea.vmem [#allocation4], 53
    %9295 = vst.msk [vmem:[%s9294] ss:$2 sm:$0x3] %vm4672, %v9292
    %v9296 = vcombine.high %v9281, %v9281
    %s9298 = scalar_lea.vmem [#allocation4], 57
    %9299 = vst.msk [vmem:[%s9298] ss:$2 sm:$0x3] %vm4672, %v9296
    %v9300 = vcombine.high %v9292, %v9292
    %s9302 = scalar_lea.vmem [#allocation4], 61
    %9303 = vst.msk [vmem:[%s9302] ss:$2 sm:$0x3] %vm4672, %v9300
    %v9304 = vld [vmem:[#allocation4] sm:$0xff]
    %v9305 = vld [vmem:[#allocation4 + $0x8] sm:$0xff]
    %v9306 = vld [vmem:[#allocation4 + $0x10] sm:$0xff]
    %v9307 = vld [vmem:[#allocation4 + $0x18] sm:$0xff]
    %v9308 = vld [vmem:[#allocation4 + $0x20] sm:$0xff]
    %v9309 = vld [vmem:[#allocation4 + $0x28] sm:$0xff]
    %v9310 = vld [vmem:[#allocation4 + $0x30] sm:$0xff]
    %v9311 = vld [vmem:[#allocation4 + $0x38] sm:$0xff]
    %v9312 = vld [vmem:[%s5] sm:$0xff]
    %v9313 = vld [vmem:[%s5 + $0x8] sm:$0xff]
    %v9314 = vld [vmem:[%s5 + $0x10] sm:$0xff]
    %v9315 = vld [vmem:[%s5 + $0x18] sm:$0xff]
    %v9316 = vld [vmem:[%s5 + $0x20] sm:$0xff]
    %v9317 = vld [vmem:[%s5 + $0x28] sm:$0xff]
    %v9318 = vld [vmem:[%s5 + $0x30] sm:$0xff]
    %v9319 = vld [vmem:[%s5 + $0x38] sm:$0xff]
    %v9320 = vld [vmem:[%s5 + $0x40] sm:$0xff]
    %v9321 = vld [vmem:[%s5 + $0x48] sm:$0xff]
    %v9322 = vld [vmem:[%s5 + $0x50] sm:$0xff]
    %v9323 = vld [vmem:[%s5 + $0x58] sm:$0xff]
    %v9324 = vld [vmem:[%s5 + $0x60] sm:$0xff]
    %v9325 = vld [vmem:[%s5 + $0x68] sm:$0xff]
    %v9326 = vld [vmem:[%s5 + $0x70] sm:$0xff]
    %v9327 = vld [vmem:[%s5 + $0x78] sm:$0xff]
    %v9328 = vld [vmem:[%s5 + $0x80] sm:$0xff]
    %v9329 = vld [vmem:[%s5 + $0x88] sm:$0xff]
    %v9330 = vld [vmem:[%s5 + $0x90] sm:$0xff]
    %v9331 = vld [vmem:[%s5 + $0x98] sm:$0xff]
    %v9332 = vld [vmem:[%s5 + $0xa0] sm:$0xff]
    %v9333 = vld [vmem:[%s5 + $0xa8] sm:$0xff]
    %v9334 = vld [vmem:[%s5 + $0xb0] sm:$0xff]
    %v9335 = vld [vmem:[%s5 + $0xb8] sm:$0xff]
    %v9336 = vld [vmem:[%s5 + $0xc0] sm:$0xff]
    %v9337 = vld [vmem:[%s5 + $0xc8] sm:$0xff]
    %v9338 = vld [vmem:[%s5 + $0xd0] sm:$0xff]
    %v9339 = vld [vmem:[%s5 + $0xd8] sm:$0xff]
    %v9340 = vld [vmem:[%s5 + $0xe0] sm:$0xff]
    %v9341 = vld [vmem:[%s5 + $0xe8] sm:$0xff]
    %v9342 = vld [vmem:[%s5 + $0xf0] sm:$0xff]
    %v9343 = vld [vmem:[%s5 + $0xf8] sm:$0xff]
    %v9344 = vld [vmem:[%s5 + $0x100] sm:$0xff]
    %v9345 = vld [vmem:[%s5 + $0x108] sm:$0xff]
    %v9346 = vld [vmem:[%s5 + $0x110] sm:$0xff]
    %v9347 = vld [vmem:[%s5 + $0x118] sm:$0xff]
    %v9348 = vld [vmem:[%s5 + $0x120] sm:$0xff]
    %v9349 = vld [vmem:[%s5 + $0x128] sm:$0xff]
    %v9350 = vld [vmem:[%s5 + $0x130] sm:$0xff]
    %v9351 = vld [vmem:[%s5 + $0x138] sm:$0xff]
    %v9352 = vld [vmem:[%s5 + $0x140] sm:$0xff]
    %v9353 = vld [vmem:[%s5 + $0x148] sm:$0xff]
    %v9354 = vld [vmem:[%s5 + $0x150] sm:$0xff]
    %v9355 = vld [vmem:[%s5 + $0x158] sm:$0xff]
    %v9356 = vld [vmem:[%s5 + $0x160] sm:$0xff]
    %v9357 = vld [vmem:[%s5 + $0x168] sm:$0xff]
    %v9358 = vld [vmem:[%s5 + $0x170] sm:$0xff]
    %v9359 = vld [vmem:[%s5 + $0x178] sm:$0xff]
    %v9360 = vld [vmem:[%s5 + $0x180] sm:$0xff]
    %v9361 = vld [vmem:[%s5 + $0x188] sm:$0xff]
    %v9362 = vld [vmem:[%s5 + $0x190] sm:$0xff]
    %v9363 = vld [vmem:[%s5 + $0x198] sm:$0xff]
    %v9364 = vld [vmem:[%s5 + $0x1a0] sm:$0xff]
    %v9365 = vld [vmem:[%s5 + $0x1a8] sm:$0xff]
    %v9366 = vld [vmem:[%s5 + $0x1b0] sm:$0xff]
    %v9367 = vld [vmem:[%s5 + $0x1b8] sm:$0xff]
    %v9368 = vld [vmem:[%s5 + $0x1c0] sm:$0xff]
    %v9369 = vld [vmem:[%s5 + $0x1c8] sm:$0xff]
    %v9370 = vld [vmem:[%s5 + $0x1d0] sm:$0xff]
    %v9371 = vld [vmem:[%s5 + $0x1d8] sm:$0xff]
    %v9372 = vld [vmem:[%s5 + $0x1e0] sm:$0xff]
    %v9373 = vld [vmem:[%s5 + $0x1e8] sm:$0xff]
    %v9374 = vld [vmem:[%s5 + $0x1f0] sm:$0xff]
    %v9375 = vld [vmem:[%s5 + $0x1f8] sm:$0xff]
    %v9376 = vld [vmem:[%s5 + $0x200] sm:$0xff]
    %v9377 = vld [vmem:[%s5 + $0x208] sm:$0xff]
    %v9378 = vld [vmem:[%s5 + $0x210] sm:$0xff]
    %v9379 = vld [vmem:[%s5 + $0x218] sm:$0xff]
    %v9380 = vld [vmem:[%s5 + $0x220] sm:$0xff]
    %v9381 = vld [vmem:[%s5 + $0x228] sm:$0xff]
    %v9382 = vld [vmem:[%s5 + $0x230] sm:$0xff]
    %v9383 = vld [vmem:[%s5 + $0x238] sm:$0xff]
    %v9384 = vld [vmem:[%s5 + $0x240] sm:$0xff]
    %v9385 = vld [vmem:[%s5 + $0x248] sm:$0xff]
    %v9386 = vld [vmem:[%s5 + $0x250] sm:$0xff]
    %v9387 = vld [vmem:[%s5 + $0x258] sm:$0xff]
    %v9388 = vld [vmem:[%s5 + $0x260] sm:$0xff]
    %v9389 = vld [vmem:[%s5 + $0x268] sm:$0xff]
    %v9390 = vld [vmem:[%s5 + $0x270] sm:$0xff]
    %v9391 = vld [vmem:[%s5 + $0x278] sm:$0xff]
    %v9392 = vld [vmem:[%s5 + $0x280] sm:$0xff]
    %v9393 = vld [vmem:[%s5 + $0x288] sm:$0xff]
    %v9394 = vld [vmem:[%s5 + $0x290] sm:$0xff]
    %v9395 = vld [vmem:[%s5 + $0x298] sm:$0xff]
    %v9396 = vld [vmem:[%s5 + $0x2a0] sm:$0xff]
    %v9397 = vld [vmem:[%s5 + $0x2a8] sm:$0xff]
    %v9398 = vld [vmem:[%s5 + $0x2b0] sm:$0xff]
    %v9399 = vld [vmem:[%s5 + $0x2b8] sm:$0xff]
    %v9400 = vld [vmem:[%s5 + $0x2c0] sm:$0xff]
    %v9401 = vld [vmem:[%s5 + $0x2c8] sm:$0xff]
    %v9402 = vld [vmem:[%s5 + $0x2d0] sm:$0xff]
    %v9403 = vld [vmem:[%s5 + $0x2d8] sm:$0xff]
    %v9404 = vld [vmem:[%s5 + $0x2e0] sm:$0xff]
    %v9405 = vld [vmem:[%s5 + $0x2e8] sm:$0xff]
    %v9406 = vld [vmem:[%s5 + $0x2f0] sm:$0xff]
    %v9407 = vld [vmem:[%s5 + $0x2f8] sm:$0xff]
    %v9408 = vld [vmem:[%s5 + $0x300] sm:$0xff]
    %v9409 = vld [vmem:[%s5 + $0x308] sm:$0xff]
    %v9410 = vld [vmem:[%s5 + $0x310] sm:$0xff]
    %v9411 = vld [vmem:[%s5 + $0x318] sm:$0xff]
    %v9412 = vld [vmem:[%s5 + $0x320] sm:$0xff]
    %v9413 = vld [vmem:[%s5 + $0x328] sm:$0xff]
    %v9414 = vld [vmem:[%s5 + $0x330] sm:$0xff]
    %v9415 = vld [vmem:[%s5 + $0x338] sm:$0xff]
    %v9416 = vld [vmem:[%s5 + $0x340] sm:$0xff]
    %v9417 = vld [vmem:[%s5 + $0x348] sm:$0xff]
    %v9418 = vld [vmem:[%s5 + $0x350] sm:$0xff]
    %v9419 = vld [vmem:[%s5 + $0x358] sm:$0xff]
    %v9420 = vld [vmem:[%s5 + $0x360] sm:$0xff]
    %v9421 = vld [vmem:[%s5 + $0x368] sm:$0xff]
    %v9422 = vld [vmem:[%s5 + $0x370] sm:$0xff]
    %v9423 = vld [vmem:[%s5 + $0x378] sm:$0xff]
    %v9424 = vld [vmem:[%s5 + $0x380] sm:$0xff]
    %v9425 = vld [vmem:[%s5 + $0x388] sm:$0xff]
    %v9426 = vld [vmem:[%s5 + $0x390] sm:$0xff]
    %v9427 = vld [vmem:[%s5 + $0x398] sm:$0xff]
    %v9428 = vld [vmem:[%s5 + $0x3a0] sm:$0xff]
    %v9429 = vld [vmem:[%s5 + $0x3a8] sm:$0xff]
    %v9430 = vld [vmem:[%s5 + $0x3b0] sm:$0xff]
    %v9431 = vld [vmem:[%s5 + $0x3b8] sm:$0xff]
    %v9432 = vld [vmem:[%s5 + $0x3c0] sm:$0xff]
    %v9433 = vld [vmem:[%s5 + $0x3c8] sm:$0xff]
    %v9434 = vld [vmem:[%s5 + $0x3d0] sm:$0xff]
    %v9435 = vld [vmem:[%s5 + $0x3d8] sm:$0xff]
    %v9436 = vld [vmem:[%s5 + $0x3e0] sm:$0xff]
    %v9437 = vld [vmem:[%s5 + $0x3e8] sm:$0xff]
    %v9438 = vld [vmem:[%s5 + $0x3f0] sm:$0xff]
    %v9439 = vld [vmem:[%s5 + $0x3f8] sm:$0xff]
    %v9440 = vld [vmem:[%s5 + $0x400] sm:$0xff]
    %v9441 = vld [vmem:[%s5 + $0x408] sm:$0xff]
    %v9442 = vld [vmem:[%s5 + $0x410] sm:$0xff]
    %v9443 = vld [vmem:[%s5 + $0x418] sm:$0xff]
    %v9444 = vld [vmem:[%s5 + $0x420] sm:$0xff]
    %v9445 = vld [vmem:[%s5 + $0x428] sm:$0xff]
    %v9446 = vld [vmem:[%s5 + $0x430] sm:$0xff]
    %v9447 = vld [vmem:[%s5 + $0x438] sm:$0xff]
    %v9448 = vld [vmem:[%s5 + $0x440] sm:$0xff]
    %v9449 = vld [vmem:[%s5 + $0x448] sm:$0xff]
    %v9450 = vld [vmem:[%s5 + $0x450] sm:$0xff]
    %v9451 = vld [vmem:[%s5 + $0x458] sm:$0xff]
    %v9452 = vld [vmem:[%s5 + $0x460] sm:$0xff]
    %v9453 = vld [vmem:[%s5 + $0x468] sm:$0xff]
    %v9454 = vld [vmem:[%s5 + $0x470] sm:$0xff]
    %v9455 = vld [vmem:[%s5 + $0x478] sm:$0xff]
    %v9456 = vld [vmem:[%s5 + $0x480] sm:$0xff]
    %v9457 = vld [vmem:[%s5 + $0x488] sm:$0xff]
    %v9458 = vld [vmem:[%s5 + $0x490] sm:$0xff]
    %v9459 = vld [vmem:[%s5 + $0x498] sm:$0xff]
    %v9460 = vld [vmem:[%s5 + $0x4a0] sm:$0xff]
    %v9461 = vld [vmem:[%s5 + $0x4a8] sm:$0xff]
    %v9462 = vld [vmem:[%s5 + $0x4b0] sm:$0xff]
    %v9463 = vld [vmem:[%s5 + $0x4b8] sm:$0xff]
    %v9464 = vld [vmem:[%s5 + $0x4c0] sm:$0xff]
    %v9465 = vld [vmem:[%s5 + $0x4c8] sm:$0xff]
    %v9466 = vld [vmem:[%s5 + $0x4d0] sm:$0xff]
    %v9467 = vld [vmem:[%s5 + $0x4d8] sm:$0xff]
    %v9468 = vld [vmem:[%s5 + $0x4e0] sm:$0xff]
    %v9469 = vld [vmem:[%s5 + $0x4e8] sm:$0xff]
    %v9470 = vld [vmem:[%s5 + $0x4f0] sm:$0xff]
    %v9471 = vld [vmem:[%s5 + $0x4f8] sm:$0xff]
    %v9472 = vld [vmem:[%s5 + $0x500] sm:$0xff]
    %v9473 = vld [vmem:[%s5 + $0x508] sm:$0xff]
    %v9474 = vld [vmem:[%s5 + $0x510] sm:$0xff]
    %v9475 = vld [vmem:[%s5 + $0x518] sm:$0xff]
    %v9476 = vld [vmem:[%s5 + $0x520] sm:$0xff]
    %v9477 = vld [vmem:[%s5 + $0x528] sm:$0xff]
    %v9478 = vld [vmem:[%s5 + $0x530] sm:$0xff]
    %v9479 = vld [vmem:[%s5 + $0x538] sm:$0xff]
    %v9480 = vld [vmem:[%s5 + $0x540] sm:$0xff]
    %v9481 = vld [vmem:[%s5 + $0x548] sm:$0xff]
    %v9482 = vld [vmem:[%s5 + $0x550] sm:$0xff]
    %v9483 = vld [vmem:[%s5 + $0x558] sm:$0xff]
    %v9484 = vld [vmem:[%s5 + $0x560] sm:$0xff]
    %v9485 = vld [vmem:[%s5 + $0x568] sm:$0xff]
    %v9486 = vld [vmem:[%s5 + $0x570] sm:$0xff]
    %v9487 = vld [vmem:[%s5 + $0x578] sm:$0xff]
    %v9488 = vld [vmem:[%s5 + $0x580] sm:$0xff]
    %v9489 = vld [vmem:[%s5 + $0x588] sm:$0xff]
    %v9490 = vld [vmem:[%s5 + $0x590] sm:$0xff]
    %v9491 = vld [vmem:[%s5 + $0x598] sm:$0xff]
    %v9492 = vld [vmem:[%s5 + $0x5a0] sm:$0xff]
    %v9493 = vld [vmem:[%s5 + $0x5a8] sm:$0xff]
    %v9494 = vld [vmem:[%s5 + $0x5b0] sm:$0xff]
    %v9495 = vld [vmem:[%s5 + $0x5b8] sm:$0xff]
    %v9496 = vld [vmem:[%s5 + $0x5c0] sm:$0xff]
    %v9497 = vld [vmem:[%s5 + $0x5c8] sm:$0xff]
    %v9498 = vld [vmem:[%s5 + $0x5d0] sm:$0xff]
    %v9499 = vld [vmem:[%s5 + $0x5d8] sm:$0xff]
    %v9500 = vld [vmem:[%s5 + $0x5e0] sm:$0xff]
    %v9501 = vld [vmem:[%s5 + $0x5e8] sm:$0xff]
    %v9502 = vld [vmem:[%s5 + $0x5f0] sm:$0xff]
    %v9503 = vld [vmem:[%s5 + $0x5f8] sm:$0xff]
    %v9504 = vld [vmem:[%s5 + $0x600] sm:$0xff]
    %v9505 = vld [vmem:[%s5 + $0x608] sm:$0xff]
    %v9506 = vld [vmem:[%s5 + $0x610] sm:$0xff]
    %v9507 = vld [vmem:[%s5 + $0x618] sm:$0xff]
    %v9508 = vld [vmem:[%s5 + $0x620] sm:$0xff]
    %v9509 = vld [vmem:[%s5 + $0x628] sm:$0xff]
    %v9510 = vld [vmem:[%s5 + $0x630] sm:$0xff]
    %v9511 = vld [vmem:[%s5 + $0x638] sm:$0xff]
    %v9512 = vld [vmem:[%s5 + $0x640] sm:$0xff]
    %v9513 = vld [vmem:[%s5 + $0x648] sm:$0xff]
    %v9514 = vld [vmem:[%s5 + $0x650] sm:$0xff]
    %v9515 = vld [vmem:[%s5 + $0x658] sm:$0xff]
    %v9516 = vld [vmem:[%s5 + $0x660] sm:$0xff]
    %v9517 = vld [vmem:[%s5 + $0x668] sm:$0xff]
    %v9518 = vld [vmem:[%s5 + $0x670] sm:$0xff]
    %v9519 = vld [vmem:[%s5 + $0x678] sm:$0xff]
    %v9520 = vld [vmem:[%s5 + $0x680] sm:$0xff]
    %v9521 = vld [vmem:[%s5 + $0x688] sm:$0xff]
    %v9522 = vld [vmem:[%s5 + $0x690] sm:$0xff]
    %v9523 = vld [vmem:[%s5 + $0x698] sm:$0xff]
    %v9524 = vld [vmem:[%s5 + $0x6a0] sm:$0xff]
    %v9525 = vld [vmem:[%s5 + $0x6a8] sm:$0xff]
    %v9526 = vld [vmem:[%s5 + $0x6b0] sm:$0xff]
    %v9527 = vld [vmem:[%s5 + $0x6b8] sm:$0xff]
    %v9528 = vld [vmem:[%s5 + $0x6c0] sm:$0xff]
    %v9529 = vld [vmem:[%s5 + $0x6c8] sm:$0xff]
    %v9530 = vld [vmem:[%s5 + $0x6d0] sm:$0xff]
    %v9531 = vld [vmem:[%s5 + $0x6d8] sm:$0xff]
    %v9532 = vld [vmem:[%s5 + $0x6e0] sm:$0xff]
    %v9533 = vld [vmem:[%s5 + $0x6e8] sm:$0xff]
    %v9534 = vld [vmem:[%s5 + $0x6f0] sm:$0xff]
    %v9535 = vld [vmem:[%s5 + $0x6f8] sm:$0xff]
    %v9536 = vld [vmem:[%s5 + $0x700] sm:$0xff]
    %v9537 = vld [vmem:[%s5 + $0x708] sm:$0xff]
    %v9538 = vld [vmem:[%s5 + $0x710] sm:$0xff]
    %v9539 = vld [vmem:[%s5 + $0x718] sm:$0xff]
    %v9540 = vld [vmem:[%s5 + $0x720] sm:$0xff]
    %v9541 = vld [vmem:[%s5 + $0x728] sm:$0xff]
    %v9542 = vld [vmem:[%s5 + $0x730] sm:$0xff]
    %v9543 = vld [vmem:[%s5 + $0x738] sm:$0xff]
    %v9544 = vld [vmem:[%s5 + $0x740] sm:$0xff]
    %v9545 = vld [vmem:[%s5 + $0x748] sm:$0xff]
    %v9546 = vld [vmem:[%s5 + $0x750] sm:$0xff]
    %v9547 = vld [vmem:[%s5 + $0x758] sm:$0xff]
    %v9548 = vld [vmem:[%s5 + $0x760] sm:$0xff]
    %v9549 = vld [vmem:[%s5 + $0x768] sm:$0xff]
    %v9550 = vld [vmem:[%s5 + $0x770] sm:$0xff]
    %v9551 = vld [vmem:[%s5 + $0x778] sm:$0xff]
    %v9552 = vld [vmem:[%s5 + $0x780] sm:$0xff]
    %v9553 = vld [vmem:[%s5 + $0x788] sm:$0xff]
    %v9554 = vld [vmem:[%s5 + $0x790] sm:$0xff]
    %v9555 = vld [vmem:[%s5 + $0x798] sm:$0xff]
    %v9556 = vld [vmem:[%s5 + $0x7a0] sm:$0xff]
    %v9557 = vld [vmem:[%s5 + $0x7a8] sm:$0xff]
    %v9558 = vld [vmem:[%s5 + $0x7b0] sm:$0xff]
    %v9559 = vld [vmem:[%s5 + $0x7b8] sm:$0xff]
    %v9560 = vld [vmem:[%s5 + $0x7c0] sm:$0xff]
    %v9561 = vld [vmem:[%s5 + $0x7c8] sm:$0xff]
    %v9562 = vld [vmem:[%s5 + $0x7d0] sm:$0xff]
    %v9563 = vld [vmem:[%s5 + $0x7d8] sm:$0xff]
    %v9564 = vld [vmem:[%s5 + $0x7e0] sm:$0xff]
    %v9565 = vld [vmem:[%s5 + $0x7e8] sm:$0xff]
    %v9566 = vld [vmem:[%s5 + $0x7f0] sm:$0xff]
    %v9567 = vld [vmem:[%s5 + $0x7f8] sm:$0xff]
    %v9568 = vld [vmem:[%s5 + $0x800] sm:$0xff]
    %v9569 = vld [vmem:[%s5 + $0x808] sm:$0xff]
    %v9570 = vld [vmem:[%s5 + $0x810] sm:$0xff]
    %v9571 = vld [vmem:[%s5 + $0x818] sm:$0xff]
    %v9572 = vld [vmem:[%s5 + $0x820] sm:$0xff]
    %v9573 = vld [vmem:[%s5 + $0x828] sm:$0xff]
    %v9574 = vld [vmem:[%s5 + $0x830] sm:$0xff]
    %v9575 = vld [vmem:[%s5 + $0x838] sm:$0xff]
    %v9576 = vld [vmem:[%s5 + $0x840] sm:$0xff]
    %v9577 = vld [vmem:[%s5 + $0x848] sm:$0xff]
    %v9578 = vld [vmem:[%s5 + $0x850] sm:$0xff]
    %v9579 = vld [vmem:[%s5 + $0x858] sm:$0xff]
    %v9580 = vld [vmem:[%s5 + $0x860] sm:$0xff]
    %v9581 = vld [vmem:[%s5 + $0x868] sm:$0xff]
    %v9582 = vld [vmem:[%s5 + $0x870] sm:$0xff]
    %v9583 = vld [vmem:[%s5 + $0x878] sm:$0xff]
    %v9584 = vld [vmem:[%s5 + $0x880] sm:$0xff]
    %v9585 = vld [vmem:[%s5 + $0x888] sm:$0xff]
    %v9586 = vld [vmem:[%s5 + $0x890] sm:$0xff]
    %v9587 = vld [vmem:[%s5 + $0x898] sm:$0xff]
    %v9588 = vld [vmem:[%s5 + $0x8a0] sm:$0xff]
    %v9589 = vld [vmem:[%s5 + $0x8a8] sm:$0xff]
    %v9590 = vld [vmem:[%s5 + $0x8b0] sm:$0xff]
    %v9591 = vld [vmem:[%s5 + $0x8b8] sm:$0xff]
    %v9592 = vld [vmem:[%s5 + $0x8c0] sm:$0xff]
    %v9593 = vld [vmem:[%s5 + $0x8c8] sm:$0xff]
    %v9594 = vld [vmem:[%s5 + $0x8d0] sm:$0xff]
    %v9595 = vld [vmem:[%s5 + $0x8d8] sm:$0xff]
    %v9596 = vld [vmem:[%s5 + $0x8e0] sm:$0xff]
    %v9597 = vld [vmem:[%s5 + $0x8e8] sm:$0xff]
    %v9598 = vld [vmem:[%s5 + $0x8f0] sm:$0xff]
    %v9599 = vld [vmem:[%s5 + $0x8f8] sm:$0xff]
    %v9600 = vld [vmem:[%s5 + $0x900] sm:$0xff]
    %v9601 = vld [vmem:[%s5 + $0x908] sm:$0xff]
    %v9602 = vld [vmem:[%s5 + $0x910] sm:$0xff]
    %v9603 = vld [vmem:[%s5 + $0x918] sm:$0xff]
    %v9604 = vld [vmem:[%s5 + $0x920] sm:$0xff]
    %v9605 = vld [vmem:[%s5 + $0x928] sm:$0xff]
    %v9606 = vld [vmem:[%s5 + $0x930] sm:$0xff]
    %v9607 = vld [vmem:[%s5 + $0x938] sm:$0xff]
    %v9608 = vld [vmem:[%s5 + $0x940] sm:$0xff]
    %v9609 = vld [vmem:[%s5 + $0x948] sm:$0xff]
    %v9610 = vld [vmem:[%s5 + $0x950] sm:$0xff]
    %v9611 = vld [vmem:[%s5 + $0x958] sm:$0xff]
    %v9612 = vld [vmem:[%s5 + $0x960] sm:$0xff]
    %v9613 = vld [vmem:[%s5 + $0x968] sm:$0xff]
    %v9614 = vld [vmem:[%s5 + $0x970] sm:$0xff]
    %v9615 = vld [vmem:[%s5 + $0x978] sm:$0xff]
    %v9616 = vld [vmem:[%s5 + $0x980] sm:$0xff]
    %v9617 = vld [vmem:[%s5 + $0x988] sm:$0xff]
    %v9618 = vld [vmem:[%s5 + $0x990] sm:$0xff]
    %v9619 = vld [vmem:[%s5 + $0x998] sm:$0xff]
    %v9620 = vld [vmem:[%s5 + $0x9a0] sm:$0xff]
    %v9621 = vld [vmem:[%s5 + $0x9a8] sm:$0xff]
    %v9622 = vld [vmem:[%s5 + $0x9b0] sm:$0xff]
    %v9623 = vld [vmem:[%s5 + $0x9b8] sm:$0xff]
    %v9624 = vld [vmem:[%s5 + $0x9c0] sm:$0xff]
    %v9625 = vld [vmem:[%s5 + $0x9c8] sm:$0xff]
    %v9626 = vld [vmem:[%s5 + $0x9d0] sm:$0xff]
    %v9627 = vld [vmem:[%s5 + $0x9d8] sm:$0xff]
    %v9628 = vld [vmem:[%s5 + $0x9e0] sm:$0xff]
    %v9629 = vld [vmem:[%s5 + $0x9e8] sm:$0xff]
    %v9630 = vld [vmem:[%s5 + $0x9f0] sm:$0xff]
    %v9631 = vld [vmem:[%s5 + $0x9f8] sm:$0xff]
    %v9632 = vld [vmem:[%s5 + $0xa00] sm:$0xff]
    %v9633 = vld [vmem:[%s5 + $0xa08] sm:$0xff]
    %v9634 = vld [vmem:[%s5 + $0xa10] sm:$0xff]
    %v9635 = vld [vmem:[%s5 + $0xa18] sm:$0xff]
    %v9636 = vld [vmem:[%s5 + $0xa20] sm:$0xff]
    %v9637 = vld [vmem:[%s5 + $0xa28] sm:$0xff]
    %v9638 = vld [vmem:[%s5 + $0xa30] sm:$0xff]
    %v9639 = vld [vmem:[%s5 + $0xa38] sm:$0xff]
    %v9640 = vld [vmem:[%s5 + $0xa40] sm:$0xff]
    %v9641 = vld [vmem:[%s5 + $0xa48] sm:$0xff]
    %v9642 = vld [vmem:[%s5 + $0xa50] sm:$0xff]
    %v9643 = vld [vmem:[%s5 + $0xa58] sm:$0xff]
    %v9644 = vld [vmem:[%s5 + $0xa60] sm:$0xff]
    %v9645 = vld [vmem:[%s5 + $0xa68] sm:$0xff]
    %v9646 = vld [vmem:[%s5 + $0xa70] sm:$0xff]
    %v9647 = vld [vmem:[%s5 + $0xa78] sm:$0xff]
    %v9648 = vld [vmem:[%s5 + $0xa80] sm:$0xff]
    %v9649 = vld [vmem:[%s5 + $0xa88] sm:$0xff]
    %v9650 = vld [vmem:[%s5 + $0xa90] sm:$0xff]
    %v9651 = vld [vmem:[%s5 + $0xa98] sm:$0xff]
    %v9652 = vld [vmem:[%s5 + $0xaa0] sm:$0xff]
    %v9653 = vld [vmem:[%s5 + $0xaa8] sm:$0xff]
    %v9654 = vld [vmem:[%s5 + $0xab0] sm:$0xff]
    %v9655 = vld [vmem:[%s5 + $0xab8] sm:$0xff]
    %v9656 = vld [vmem:[%s5 + $0xac0] sm:$0xff]
    %v9657 = vld [vmem:[%s5 + $0xac8] sm:$0xff]
    %v9658 = vld [vmem:[%s5 + $0xad0] sm:$0xff]
    %v9659 = vld [vmem:[%s5 + $0xad8] sm:$0xff]
    %v9660 = vld [vmem:[%s5 + $0xae0] sm:$0xff]
    %v9661 = vld [vmem:[%s5 + $0xae8] sm:$0xff]
    %v9662 = vld [vmem:[%s5 + $0xaf0] sm:$0xff]
    %v9663 = vld [vmem:[%s5 + $0xaf8] sm:$0xff]
    %v9664 = vld [vmem:[%s5 + $0xb00] sm:$0xff]
    %v9665 = vld [vmem:[%s5 + $0xb08] sm:$0xff]
    %v9666 = vld [vmem:[%s5 + $0xb10] sm:$0xff]
    %v9667 = vld [vmem:[%s5 + $0xb18] sm:$0xff]
    %v9668 = vld [vmem:[%s5 + $0xb20] sm:$0xff]
    %v9669 = vld [vmem:[%s5 + $0xb28] sm:$0xff]
    %v9670 = vld [vmem:[%s5 + $0xb30] sm:$0xff]
    %v9671 = vld [vmem:[%s5 + $0xb38] sm:$0xff]
    %v9672 = vld [vmem:[%s5 + $0xb40] sm:$0xff]
    %v9673 = vld [vmem:[%s5 + $0xb48] sm:$0xff]
    %v9674 = vld [vmem:[%s5 + $0xb50] sm:$0xff]
    %v9675 = vld [vmem:[%s5 + $0xb58] sm:$0xff]
    %v9676 = vld [vmem:[%s5 + $0xb60] sm:$0xff]
    %v9677 = vld [vmem:[%s5 + $0xb68] sm:$0xff]
    %v9678 = vld [vmem:[%s5 + $0xb70] sm:$0xff]
    %v9679 = vld [vmem:[%s5 + $0xb78] sm:$0xff]
    %v9680 = vld [vmem:[%s5 + $0xb80] sm:$0xff]
    %v9681 = vld [vmem:[%s5 + $0xb88] sm:$0xff]
    %v9682 = vld [vmem:[%s5 + $0xb90] sm:$0xff]
    %v9683 = vld [vmem:[%s5 + $0xb98] sm:$0xff]
    %v9684 = vld [vmem:[%s5 + $0xba0] sm:$0xff]
    %v9685 = vld [vmem:[%s5 + $0xba8] sm:$0xff]
    %v9686 = vld [vmem:[%s5 + $0xbb0] sm:$0xff]
    %v9687 = vld [vmem:[%s5 + $0xbb8] sm:$0xff]
    %v9688 = vld [vmem:[%s5 + $0xbc0] sm:$0xff]
    %v9689 = vld [vmem:[%s5 + $0xbc8] sm:$0xff]
    %v9690 = vld [vmem:[%s5 + $0xbd0] sm:$0xff]
    %v9691 = vld [vmem:[%s5 + $0xbd8] sm:$0xff]
    %v9692 = vld [vmem:[%s5 + $0xbe0] sm:$0xff]
    %v9693 = vld [vmem:[%s5 + $0xbe8] sm:$0xff]
    %v9694 = vld [vmem:[%s5 + $0xbf0] sm:$0xff]
    %v9695 = vld [vmem:[%s5 + $0xbf8] sm:$0xff]
    %v9696 = vld [vmem:[%s5 + $0xc00] sm:$0xff]
    %v9697 = vld [vmem:[%s5 + $0xc08] sm:$0xff]
    %v9698 = vld [vmem:[%s5 + $0xc10] sm:$0xff]
    %v9699 = vld [vmem:[%s5 + $0xc18] sm:$0xff]
    %v9700 = vld [vmem:[%s5 + $0xc20] sm:$0xff]
    %v9701 = vld [vmem:[%s5 + $0xc28] sm:$0xff]
    %v9702 = vld [vmem:[%s5 + $0xc30] sm:$0xff]
    %v9703 = vld [vmem:[%s5 + $0xc38] sm:$0xff]
    %v9704 = vld [vmem:[%s5 + $0xc40] sm:$0xff]
    %v9705 = vld [vmem:[%s5 + $0xc48] sm:$0xff]
    %v9706 = vld [vmem:[%s5 + $0xc50] sm:$0xff]
    %v9707 = vld [vmem:[%s5 + $0xc58] sm:$0xff]
    %v9708 = vld [vmem:[%s5 + $0xc60] sm:$0xff]
    %v9709 = vld [vmem:[%s5 + $0xc68] sm:$0xff]
    %v9710 = vld [vmem:[%s5 + $0xc70] sm:$0xff]
    %v9711 = vld [vmem:[%s5 + $0xc78] sm:$0xff]
    %v9712 = vld [vmem:[%s5 + $0xc80] sm:$0xff]
    %v9713 = vld [vmem:[%s5 + $0xc88] sm:$0xff]
    %v9714 = vld [vmem:[%s5 + $0xc90] sm:$0xff]
    %v9715 = vld [vmem:[%s5 + $0xc98] sm:$0xff]
    %v9716 = vld [vmem:[%s5 + $0xca0] sm:$0xff]
    %v9717 = vld [vmem:[%s5 + $0xca8] sm:$0xff]
    %v9718 = vld [vmem:[%s5 + $0xcb0] sm:$0xff]
    %v9719 = vld [vmem:[%s5 + $0xcb8] sm:$0xff]
    %v9720 = vld [vmem:[%s5 + $0xcc0] sm:$0xff]
    %v9721 = vld [vmem:[%s5 + $0xcc8] sm:$0xff]
    %v9722 = vld [vmem:[%s5 + $0xcd0] sm:$0xff]
    %v9723 = vld [vmem:[%s5 + $0xcd8] sm:$0xff]
    %v9724 = vld [vmem:[%s5 + $0xce0] sm:$0xff]
    %v9725 = vld [vmem:[%s5 + $0xce8] sm:$0xff]
    %v9726 = vld [vmem:[%s5 + $0xcf0] sm:$0xff]
    %v9727 = vld [vmem:[%s5 + $0xcf8] sm:$0xff]
    %v9728 = vld [vmem:[%s5 + $0xd00] sm:$0xff]
    %v9729 = vld [vmem:[%s5 + $0xd08] sm:$0xff]
    %v9730 = vld [vmem:[%s5 + $0xd10] sm:$0xff]
    %v9731 = vld [vmem:[%s5 + $0xd18] sm:$0xff]
    %v9732 = vld [vmem:[%s5 + $0xd20] sm:$0xff]
    %v9733 = vld [vmem:[%s5 + $0xd28] sm:$0xff]
    %v9734 = vld [vmem:[%s5 + $0xd30] sm:$0xff]
    %v9735 = vld [vmem:[%s5 + $0xd38] sm:$0xff]
    %v9736 = vld [vmem:[%s5 + $0xd40] sm:$0xff]
    %v9737 = vld [vmem:[%s5 + $0xd48] sm:$0xff]
    %v9738 = vld [vmem:[%s5 + $0xd50] sm:$0xff]
    %v9739 = vld [vmem:[%s5 + $0xd58] sm:$0xff]
    %v9740 = vld [vmem:[%s5 + $0xd60] sm:$0xff]
    %v9741 = vld [vmem:[%s5 + $0xd68] sm:$0xff]
    %v9742 = vld [vmem:[%s5 + $0xd70] sm:$0xff]
    %v9743 = vld [vmem:[%s5 + $0xd78] sm:$0xff]
    %v9744 = vld [vmem:[%s5 + $0xd80] sm:$0xff]
    %v9745 = vld [vmem:[%s5 + $0xd88] sm:$0xff]
    %v9746 = vld [vmem:[%s5 + $0xd90] sm:$0xff]
    %v9747 = vld [vmem:[%s5 + $0xd98] sm:$0xff]
    %v9748 = vld [vmem:[%s5 + $0xda0] sm:$0xff]
    %v9749 = vld [vmem:[%s5 + $0xda8] sm:$0xff]
    %v9750 = vld [vmem:[%s5 + $0xdb0] sm:$0xff]
    %v9751 = vld [vmem:[%s5 + $0xdb8] sm:$0xff]
    %v9752 = vld [vmem:[%s5 + $0xdc0] sm:$0xff]
    %v9753 = vld [vmem:[%s5 + $0xdc8] sm:$0xff]
    %v9754 = vld [vmem:[%s5 + $0xdd0] sm:$0xff]
    %v9755 = vld [vmem:[%s5 + $0xdd8] sm:$0xff]
    %v9756 = vld [vmem:[%s5 + $0xde0] sm:$0xff]
    %v9757 = vld [vmem:[%s5 + $0xde8] sm:$0xff]
    %v9758 = vld [vmem:[%s5 + $0xdf0] sm:$0xff]
    %v9759 = vld [vmem:[%s5 + $0xdf8] sm:$0xff]
    %v9760 = vld [vmem:[%s5 + $0xe00] sm:$0xff]
    %v9761 = vld [vmem:[%s5 + $0xe08] sm:$0xff]
    %v9762 = vld [vmem:[%s5 + $0xe10] sm:$0xff]
    %v9763 = vld [vmem:[%s5 + $0xe18] sm:$0xff]
    %v9764 = vld [vmem:[%s5 + $0xe20] sm:$0xff]
    %v9765 = vld [vmem:[%s5 + $0xe28] sm:$0xff]
    %v9766 = vld [vmem:[%s5 + $0xe30] sm:$0xff]
    %v9767 = vld [vmem:[%s5 + $0xe38] sm:$0xff]
    %v9768 = vld [vmem:[%s5 + $0xe40] sm:$0xff]
    %v9769 = vld [vmem:[%s5 + $0xe48] sm:$0xff]
    %v9770 = vld [vmem:[%s5 + $0xe50] sm:$0xff]
    %v9771 = vld [vmem:[%s5 + $0xe58] sm:$0xff]
    %v9772 = vld [vmem:[%s5 + $0xe60] sm:$0xff]
    %v9773 = vld [vmem:[%s5 + $0xe68] sm:$0xff]
    %v9774 = vld [vmem:[%s5 + $0xe70] sm:$0xff]
    %v9775 = vld [vmem:[%s5 + $0xe78] sm:$0xff]
    %v9776 = vld [vmem:[%s5 + $0xe80] sm:$0xff]
    %v9777 = vld [vmem:[%s5 + $0xe88] sm:$0xff]
    %v9778 = vld [vmem:[%s5 + $0xe90] sm:$0xff]
    %v9779 = vld [vmem:[%s5 + $0xe98] sm:$0xff]
    %v9780 = vld [vmem:[%s5 + $0xea0] sm:$0xff]
    %v9781 = vld [vmem:[%s5 + $0xea8] sm:$0xff]
    %v9782 = vld [vmem:[%s5 + $0xeb0] sm:$0xff]
    %v9783 = vld [vmem:[%s5 + $0xeb8] sm:$0xff]
    %v9784 = vld [vmem:[%s5 + $0xec0] sm:$0xff]
    %v9785 = vld [vmem:[%s5 + $0xec8] sm:$0xff]
    %v9786 = vld [vmem:[%s5 + $0xed0] sm:$0xff]
    %v9787 = vld [vmem:[%s5 + $0xed8] sm:$0xff]
    %v9788 = vld [vmem:[%s5 + $0xee0] sm:$0xff]
    %v9789 = vld [vmem:[%s5 + $0xee8] sm:$0xff]
    %v9790 = vld [vmem:[%s5 + $0xef0] sm:$0xff]
    %v9791 = vld [vmem:[%s5 + $0xef8] sm:$0xff]
    %v9792 = vld [vmem:[%s5 + $0xf00] sm:$0xff]
    %v9793 = vld [vmem:[%s5 + $0xf08] sm:$0xff]
    %v9794 = vld [vmem:[%s5 + $0xf10] sm:$0xff]
    %v9795 = vld [vmem:[%s5 + $0xf18] sm:$0xff]
    %v9796 = vld [vmem:[%s5 + $0xf20] sm:$0xff]
    %v9797 = vld [vmem:[%s5 + $0xf28] sm:$0xff]
    %v9798 = vld [vmem:[%s5 + $0xf30] sm:$0xff]
    %v9799 = vld [vmem:[%s5 + $0xf38] sm:$0xff]
    %v9800 = vld [vmem:[%s5 + $0xf40] sm:$0xff]
    %v9801 = vld [vmem:[%s5 + $0xf48] sm:$0xff]
    %v9802 = vld [vmem:[%s5 + $0xf50] sm:$0xff]
    %v9803 = vld [vmem:[%s5 + $0xf58] sm:$0xff]
    %v9804 = vld [vmem:[%s5 + $0xf60] sm:$0xff]
    %v9805 = vld [vmem:[%s5 + $0xf68] sm:$0xff]
    %v9806 = vld [vmem:[%s5 + $0xf70] sm:$0xff]
    %v9807 = vld [vmem:[%s5 + $0xf78] sm:$0xff]
    %v9808 = vld [vmem:[%s5 + $0xf80] sm:$0xff]
    %v9809 = vld [vmem:[%s5 + $0xf88] sm:$0xff]
    %v9810 = vld [vmem:[%s5 + $0xf90] sm:$0xff]
    %v9811 = vld [vmem:[%s5 + $0xf98] sm:$0xff]
    %v9812 = vld [vmem:[%s5 + $0xfa0] sm:$0xff]
    %v9813 = vld [vmem:[%s5 + $0xfa8] sm:$0xff]
    %v9814 = vld [vmem:[%s5 + $0xfb0] sm:$0xff]
    %v9815 = vld [vmem:[%s5 + $0xfb8] sm:$0xff]
    %v9816 = vld [vmem:[%s5 + $0xfc0] sm:$0xff]
    %v9817 = vld [vmem:[%s5 + $0xfc8] sm:$0xff]
    %v9818 = vld [vmem:[%s5 + $0xfd0] sm:$0xff]
    %v9819 = vld [vmem:[%s5 + $0xfd8] sm:$0xff]
    %v9820 = vld [vmem:[%s5 + $0xfe0] sm:$0xff]
    %v9821 = vld [vmem:[%s5 + $0xfe8] sm:$0xff]
    %v9822 = vld [vmem:[%s5 + $0xff0] sm:$0xff]
    %v9823 = vld [vmem:[%s5 + $0xff8] sm:$0xff]
    %v9824 = vld [vmem:[%s6] sm:$0x1]
    %v9826 = vlaneseq
    %v9827 = vshrl.u32 %v9826, 7
    %v9828 = vsub.s32 0, %v9827
    %v9829 = vrot.slane %v9824, %v9828
    %v9839 = vcombine.high %v9304, %v9304
    %v9841 = vunpack.c.l.s4 1983009808
    %v9842 = vunpack.c.0.s8 %v9841
    %v9843 = vlaneseq
    %v9844 = vshrl.u32 %v9843, 7
    %v9845 = vsub.s32 %v9842, %v9844
    %v9846 = vrot.slane %v9304, %v9845
    %v9848 = vunpack.c.l.s4 1983009808
    %v9849 = vunpack.c.0.s8 %v9848
    %v9850 = vlaneseq
    %v9851 = vshrl.u32 %v9850, 7
    %v9852 = vsub.s32 %v9849, %v9851
    %v9853 = vrot.slane %v9839, %v9852
    %v9854 = vcombine.high %v9846, %v9846
    %v9855 = vcombine.high %v9853, %v9853
    %v9856 = vcombine.high %v9305, %v9305
    %v9858 = vunpack.c.l.s4 1983009808
    %v9859 = vunpack.c.0.s8 %v9858
    %v9860 = vlaneseq
    %v9861 = vshrl.u32 %v9860, 7
    %v9862 = vsub.s32 %v9859, %v9861
    %v9863 = vrot.slane %v9305, %v9862
    %v9865 = vunpack.c.l.s4 1983009808
    %v9866 = vunpack.c.0.s8 %v9865
    %v9867 = vlaneseq
    %v9868 = vshrl.u32 %v9867, 7
    %v9869 = vsub.s32 %v9866, %v9868
    %v9870 = vrot.slane %v9856, %v9869
    %v9871 = vcombine.high %v9863, %v9863
    %v9872 = vcombine.high %v9870, %v9870
    %v9873 = vcombine.high %v9306, %v9306
    %v9875 = vunpack.c.l.s4 1983009808
    %v9876 = vunpack.c.0.s8 %v9875
    %v9877 = vlaneseq
    %v9878 = vshrl.u32 %v9877, 7
    %v9879 = vsub.s32 %v9876, %v9878
    %v9880 = vrot.slane %v9306, %v9879
    %v9882 = vunpack.c.l.s4 1983009808
    %v9883 = vunpack.c.0.s8 %v9882
    %v9884 = vlaneseq
    %v9885 = vshrl.u32 %v9884, 7
    %v9886 = vsub.s32 %v9883, %v9885
    %v9887 = vrot.slane %v9873, %v9886
    %v9888 = vcombine.high %v9880, %v9880
    %v9889 = vcombine.high %v9887, %v9887
    %v9890 = vcombine.high %v9307, %v9307
    %v9892 = vunpack.c.l.s4 1983009808
    %v9893 = vunpack.c.0.s8 %v9892
    %v9894 = vlaneseq
    %v9895 = vshrl.u32 %v9894, 7
    %v9896 = vsub.s32 %v9893, %v9895
    %v9897 = vrot.slane %v9307, %v9896
    %v9899 = vunpack.c.l.s4 1983009808
    %v9900 = vunpack.c.0.s8 %v9899
    %v9901 = vlaneseq
    %v9902 = vshrl.u32 %v9901, 7
    %v9903 = vsub.s32 %v9900, %v9902
    %v9904 = vrot.slane %v9890, %v9903
    %v9905 = vcombine.high %v9897, %v9897
    %v9906 = vcombine.high %v9904, %v9904
    %v9907 = vcombine.high %v9308, %v9308
    %v9909 = vunpack.c.l.s4 1983009808
    %v9910 = vunpack.c.0.s8 %v9909
    %v9911 = vlaneseq
    %v9912 = vshrl.u32 %v9911, 7
    %v9913 = vsub.s32 %v9910, %v9912
    %v9914 = vrot.slane %v9308, %v9913
    %v9916 = vunpack.c.l.s4 1983009808
    %v9917 = vunpack.c.0.s8 %v9916
    %v9918 = vlaneseq
    %v9919 = vshrl.u32 %v9918, 7
    %v9920 = vsub.s32 %v9917, %v9919
    %v9921 = vrot.slane %v9907, %v9920
    %v9922 = vcombine.high %v9914, %v9914
    %v9923 = vcombine.high %v9921, %v9921
    %v9924 = vcombine.high %v9309, %v9309
    %v9926 = vunpack.c.l.s4 1983009808
    %v9927 = vunpack.c.0.s8 %v9926
    %v9928 = vlaneseq
    %v9929 = vshrl.u32 %v9928, 7
    %v9930 = vsub.s32 %v9927, %v9929
    %v9931 = vrot.slane %v9309, %v9930
    %v9933 = vunpack.c.l.s4 1983009808
    %v9934 = vunpack.c.0.s8 %v9933
    %v9935 = vlaneseq
    %v9936 = vshrl.u32 %v9935, 7
    %v9937 = vsub.s32 %v9934, %v9936
    %v9938 = vrot.slane %v9924, %v9937
    %v9939 = vcombine.high %v9931, %v9931
    %v9940 = vcombine.high %v9938, %v9938
    %v9941 = vcombine.high %v9310, %v9310
    %v9943 = vunpack.c.l.s4 1983009808
    %v9944 = vunpack.c.0.s8 %v9943
    %v9945 = vlaneseq
    %v9946 = vshrl.u32 %v9945, 7
    %v9947 = vsub.s32 %v9944, %v9946
    %v9948 = vrot.slane %v9310, %v9947
    %v9950 = vunpack.c.l.s4 1983009808
    %v9951 = vunpack.c.0.s8 %v9950
    %v9952 = vlaneseq
    %v9953 = vshrl.u32 %v9952, 7
    %v9954 = vsub.s32 %v9951, %v9953
    %v9955 = vrot.slane %v9941, %v9954
    %v9956 = vcombine.high %v9948, %v9948
    %v9957 = vcombine.high %v9955, %v9955
    %v9958 = vcombine.high %v9311, %v9311
    %v9960 = vunpack.c.l.s4 1983009808
    %v9961 = vunpack.c.0.s8 %v9960
    %v9962 = vlaneseq
    %v9963 = vshrl.u32 %v9962, 7
    %v9964 = vsub.s32 %v9961, %v9963
    %v9965 = vrot.slane %v9311, %v9964
    %v9967 = vunpack.c.l.s4 1983009808
    %v9968 = vunpack.c.0.s8 %v9967
    %v9969 = vlaneseq
    %v9970 = vshrl.u32 %v9969, 7
    %v9971 = vsub.s32 %v9968, %v9970
    %v9972 = vrot.slane %v9958, %v9971
    %v9973 = vcombine.high %v9965, %v9965
    %v9974 = vcombine.high %v9972, %v9972
    %10007 = vmatprep.subr.mxu0 0.0
    %10008 = vmatpush1.msra.mxu0 %v9312
    %10009 = vmatprep.subr.mxu0 0.0
    %10010 = vmatpush1.msra.mxu0 %v9313
    %10011 = vmatprep.subr.mxu0 0.0
    %10012 = vmatpush1.msra.mxu0 %v9314
    %10013 = vmatprep.subr.mxu0 0.0
    %10014 = vmatpush1.msra.mxu0 %v9315
    %10015 = vmatprep.subr.mxu0 0.0
    %10016 = vmatpush1.msra.mxu0 %v9316
    %10017 = vmatprep.subr.mxu0 0.0
    %10018 = vmatpush1.msra.mxu0 %v9317
    %10019 = vmatprep.subr.mxu0 0.0
    %10020 = vmatpush1.msra.mxu0 %v9318
    %10021 = vmatprep.subr.mxu0 0.0
    %10022 = vmatpush1.msra.mxu0 %v9319
    %10023 = vmatprep.subr.mxu0 0.0
    %10024 = vmatpush1.msra.mxu0 %v9320
    %10025 = vmatprep.subr.mxu0 0.0
    %10026 = vmatpush1.msra.mxu0 %v9321
    %10027 = vmatprep.subr.mxu0 0.0
    %10028 = vmatpush1.msra.mxu0 %v9322
    %10029 = vmatprep.subr.mxu0 0.0
    %10030 = vmatpush1.msra.mxu0 %v9323
    %10031 = vmatprep.subr.mxu0 0.0
    %10032 = vmatpush1.msra.mxu0 %v9324
    %10033 = vmatprep.subr.mxu0 0.0
    %10034 = vmatpush1.msra.mxu0 %v9325
    %10035 = vmatprep.subr.mxu0 0.0
    %10036 = vmatpush1.msra.mxu0 %v9326
    %10037 = vmatprep.subr.mxu0 0.0
    %10038 = vmatpush1.msra.mxu0 %v9327
    %10039 = vmatprep.subr.mxu0 0.0
    %10040 = vmatpush1.msra.mxu0 %v9328
    %10041 = vmatprep.subr.mxu0 0.0
    %10042 = vmatpush1.msra.mxu0 %v9329
    %10043 = vmatprep.subr.mxu0 0.0
    %10044 = vmatpush1.msra.mxu0 %v9330
    %10045 = vmatprep.subr.mxu0 0.0
    %10046 = vmatpush1.msra.mxu0 %v9331
    %10047 = vmatprep.subr.mxu0 0.0
    %10048 = vmatpush1.msra.mxu0 %v9332
    %10049 = vmatprep.subr.mxu0 0.0
    %10050 = vmatpush1.msra.mxu0 %v9333
    %10051 = vmatprep.subr.mxu0 0.0
    %10052 = vmatpush1.msra.mxu0 %v9334
    %10053 = vmatprep.subr.mxu0 0.0
    %10054 = vmatpush1.msra.mxu0 %v9335
    %10055 = vmatprep.subr.mxu0 0.0
    %10056 = vmatpush1.msra.mxu0 %v9336
    %10057 = vmatprep.subr.mxu0 0.0
    %10058 = vmatpush1.msra.mxu0 %v9337
    %10059 = vmatprep.subr.mxu0 0.0
    %10060 = vmatpush1.msra.mxu0 %v9338
    %10061 = vmatprep.subr.mxu0 0.0
    %10062 = vmatpush1.msra.mxu0 %v9339
    %10063 = vmatprep.subr.mxu0 0.0
    %10064 = vmatpush1.msra.mxu0 %v9340
    %10065 = vmatprep.subr.mxu0 0.0
    %10066 = vmatpush1.msra.mxu0 %v9341
    %10067 = vmatprep.subr.mxu0 0.0
    %10068 = vmatpush1.msra.mxu0 %v9342
    %10069 = vmatprep.subr.mxu0 0.0
    %10070 = vmatpush1.msra.mxu0 %v9343
    %10071 = vmatprep.mubr.f32.mxu0 %v9854
    %10072 = vmatmul.mubr.f32.gmra.mrb[0].mxu0 %v9846
    %v10073 = vpop.f32.mrb[0].mxu0
    %v10074 = vadd.f32 %v9829, %v10073
    %v10075 = vpop.f32.mrb[0].mxu0
    %10076 = vdwg.mxu0
    %10077 = vmatprep.subr.mxu0 0.0
    %10078 = vmatpush1.msra.mxu0 %v9344
    %10079 = vmatprep.subr.mxu0 0.0
    %10080 = vmatpush1.msra.mxu0 %v9345
    %10081 = vmatprep.subr.mxu0 0.0
    %10082 = vmatpush1.msra.mxu0 %v9346
    %10083 = vmatprep.subr.mxu0 0.0
    %10084 = vmatpush1.msra.mxu0 %v9347
    %10085 = vmatprep.subr.mxu0 0.0
    %10086 = vmatpush1.msra.mxu0 %v9348
    %10087 = vmatprep.subr.mxu0 0.0
    %10088 = vmatpush1.msra.mxu0 %v9349
    %10089 = vmatprep.subr.mxu0 0.0
    %10090 = vmatpush1.msra.mxu0 %v9350
    %10091 = vmatprep.subr.mxu0 0.0
    %10092 = vmatpush1.msra.mxu0 %v9351
    %10093 = vmatprep.subr.mxu0 0.0
    %10094 = vmatpush1.msra.mxu0 %v9352
    %10095 = vmatprep.subr.mxu0 0.0
    %10096 = vmatpush1.msra.mxu0 %v9353
    %10097 = vmatprep.subr.mxu0 0.0
    %10098 = vmatpush1.msra.mxu0 %v9354
    %10099 = vmatprep.subr.mxu0 0.0
    %10100 = vmatpush1.msra.mxu0 %v9355
    %10101 = vmatprep.subr.mxu0 0.0
    %10102 = vmatpush1.msra.mxu0 %v9356
    %10103 = vmatprep.subr.mxu0 0.0
    %10104 = vmatpush1.msra.mxu0 %v9357
    %10105 = vmatprep.subr.mxu0 0.0
    %10106 = vmatpush1.msra.mxu0 %v9358
    %10107 = vmatprep.subr.mxu0 0.0
    %10108 = vmatpush1.msra.mxu0 %v9359
    %10109 = vmatprep.subr.mxu0 0.0
    %10110 = vmatpush1.msra.mxu0 %v9360
    %10111 = vmatprep.subr.mxu0 0.0
    %10112 = vmatpush1.msra.mxu0 %v9361
    %10113 = vmatprep.subr.mxu0 0.0
    %10114 = vmatpush1.msra.mxu0 %v9362
    %10115 = vmatprep.subr.mxu0 0.0
    %10116 = vmatpush1.msra.mxu0 %v9363
    %10117 = vmatprep.subr.mxu0 0.0
    %10118 = vmatpush1.msra.mxu0 %v9364
    %10119 = vmatprep.subr.mxu0 0.0
    %10120 = vmatpush1.msra.mxu0 %v9365
    %10121 = vmatprep.subr.mxu0 0.0
    %10122 = vmatpush1.msra.mxu0 %v9366
    %10123 = vmatprep.subr.mxu0 0.0
    %10124 = vmatpush1.msra.mxu0 %v9367
    %10125 = vmatprep.subr.mxu0 0.0
    %10126 = vmatpush1.msra.mxu0 %v9368
    %10127 = vmatprep.subr.mxu0 0.0
    %10128 = vmatpush1.msra.mxu0 %v9369
    %10129 = vmatprep.subr.mxu0 0.0
    %10130 = vmatpush1.msra.mxu0 %v9370
    %10131 = vmatprep.subr.mxu0 0.0
    %10132 = vmatpush1.msra.mxu0 %v9371
    %10133 = vmatprep.subr.mxu0 0.0
    %10134 = vmatpush1.msra.mxu0 %v9372
    %10135 = vmatprep.subr.mxu0 0.0
    %10136 = vmatpush1.msra.mxu0 %v9373
    %10137 = vmatprep.subr.mxu0 0.0
    %10138 = vmatpush1.msra.mxu0 %v9374
    %10139 = vmatprep.subr.mxu0 0.0
    %10140 = vmatpush1.msra.mxu0 %v9375
    %10141 = vmatprep.mubr.f32.mxu0 %v9855
    %10142 = vmatmul.mubr.f32.gmra.mrb[0].mxu0 %v9853
    %v10143 = vpop.f32.mrb[0].mxu0
    %v10144 = vadd.f32 %v10074, %v10143
    %v10145 = vpop.f32.mrb[0].mxu0
    %10146 = vdwg.mxu0
    %10147 = vmatprep.subr.mxu0 0.0
    %10148 = vmatpush1.msra.mxu0 %v9376
    %10149 = vmatprep.subr.mxu0 0.0
    %10150 = vmatpush1.msra.mxu0 %v9377
    %10151 = vmatprep.subr.mxu0 0.0
    %10152 = vmatpush1.msra.mxu0 %v9378
    %10153 = vmatprep.subr.mxu0 0.0
    %10154 = vmatpush1.msra.mxu0 %v9379
    %10155 = vmatprep.subr.mxu0 0.0
    %10156 = vmatpush1.msra.mxu0 %v9380
    %10157 = vmatprep.subr.mxu0 0.0
    %10158 = vmatpush1.msra.mxu0 %v9381
    %10159 = vmatprep.subr.mxu0 0.0
    %10160 = vmatpush1.msra.mxu0 %v9382
    %10161 = vmatprep.subr.mxu0 0.0
    %10162 = vmatpush1.msra.mxu0 %v9383
    %10163 = vmatprep.subr.mxu0 0.0
    %10164 = vmatpush1.msra.mxu0 %v9384
    %10165 = vmatprep.subr.mxu0 0.0
    %10166 = vmatpush1.msra.mxu0 %v9385
    %10167 = vmatprep.subr.mxu0 0.0
    %10168 = vmatpush1.msra.mxu0 %v9386
    %10169 = vmatprep.subr.mxu0 0.0
    %10170 = vmatpush1.msra.mxu0 %v9387
    %10171 = vmatprep.subr.mxu0 0.0
    %10172 = vmatpush1.msra.mxu0 %v9388
    %10173 = vmatprep.subr.mxu0 0.0
    %10174 = vmatpush1.msra.mxu0 %v9389
    %10175 = vmatprep.subr.mxu0 0.0
    %10176 = vmatpush1.msra.mxu0 %v9390
    %10177 = vmatprep.subr.mxu0 0.0
    %10178 = vmatpush1.msra.mxu0 %v9391
    %10179 = vmatprep.subr.mxu0 0.0
    %10180 = vmatpush1.msra.mxu0 %v9392
    %10181 = vmatprep.subr.mxu0 0.0
    %10182 = vmatpush1.msra.mxu0 %v9393
    %10183 = vmatprep.subr.mxu0 0.0
    %10184 = vmatpush1.msra.mxu0 %v9394
    %10185 = vmatprep.subr.mxu0 0.0
    %10186 = vmatpush1.msra.mxu0 %v9395
    %10187 = vmatprep.subr.mxu0 0.0
    %10188 = vmatpush1.msra.mxu0 %v9396
    %10189 = vmatprep.subr.mxu0 0.0
    %10190 = vmatpush1.msra.mxu0 %v9397
    %10191 = vmatprep.subr.mxu0 0.0
    %10192 = vmatpush1.msra.mxu0 %v9398
    %10193 = vmatprep.subr.mxu0 0.0
    %10194 = vmatpush1.msra.mxu0 %v9399
    %10195 = vmatprep.subr.mxu0 0.0
    %10196 = vmatpush1.msra.mxu0 %v9400
    %10197 = vmatprep.subr.mxu0 0.0
    %10198 = vmatpush1.msra.mxu0 %v9401
    %10199 = vmatprep.subr.mxu0 0.0
    %10200 = vmatpush1.msra.mxu0 %v9402
    %10201 = vmatprep.subr.mxu0 0.0
    %10202 = vmatpush1.msra.mxu0 %v9403
    %10203 = vmatprep.subr.mxu0 0.0
    %10204 = vmatpush1.msra.mxu0 %v9404
    %10205 = vmatprep.subr.mxu0 0.0
    %10206 = vmatpush1.msra.mxu0 %v9405
    %10207 = vmatprep.subr.mxu0 0.0
    %10208 = vmatpush1.msra.mxu0 %v9406
    %10209 = vmatprep.subr.mxu0 0.0
    %10210 = vmatpush1.msra.mxu0 %v9407
    %10211 = vmatprep.mubr.f32.mxu0 %v9871
    %10212 = vmatmul.mubr.f32.gmra.mrb[0].mxu0 %v9863
    %v10213 = vpop.f32.mrb[0].mxu0
    %v10214 = vadd.f32 %v10144, %v10213
    %v10215 = vpop.f32.mrb[0].mxu0
    %10216 = vdwg.mxu0
    %10217 = vmatprep.subr.mxu0 0.0
    %10218 = vmatpush1.msra.mxu0 %v9408
    %10219 = vmatprep.subr.mxu0 0.0
    %10220 = vmatpush1.msra.mxu0 %v9409
    %10221 = vmatprep.subr.mxu0 0.0
    %10222 = vmatpush1.msra.mxu0 %v9410
    %10223 = vmatprep.subr.mxu0 0.0
    %10224 = vmatpush1.msra.mxu0 %v9411
    %10225 = vmatprep.subr.mxu0 0.0
    %10226 = vmatpush1.msra.mxu0 %v9412
    %10227 = vmatprep.subr.mxu0 0.0
    %10228 = vmatpush1.msra.mxu0 %v9413
    %10229 = vmatprep.subr.mxu0 0.0
    %10230 = vmatpush1.msra.mxu0 %v9414
    %10231 = vmatprep.subr.mxu0 0.0
    %10232 = vmatpush1.msra.mxu0 %v9415
    %10233 = vmatprep.subr.mxu0 0.0
    %10234 = vmatpush1.msra.mxu0 %v9416
    %10235 = vmatprep.subr.mxu0 0.0
    %10236 = vmatpush1.msra.mxu0 %v9417
    %10237 = vmatprep.subr.mxu0 0.0
    %10238 = vmatpush1.msra.mxu0 %v9418
    %10239 = vmatprep.subr.mxu0 0.0
    %10240 = vmatpush1.msra.mxu0 %v9419
    %10241 = vmatprep.subr.mxu0 0.0
    %10242 = vmatpush1.msra.mxu0 %v9420
    %10243 = vmatprep.subr.mxu0 0.0
    %10244 = vmatpush1.msra.mxu0 %v9421
    %10245 = vmatprep.subr.mxu0 0.0
    %10246 = vmatpush1.msra.mxu0 %v9422
    %10247 = vmatprep.subr.mxu0 0.0
    %10248 = vmatpush1.msra.mxu0 %v9423
    %10249 = vmatprep.subr.mxu0 0.0
    %10250 = vmatpush1.msra.mxu0 %v9424
    %10251 = vmatprep.subr.mxu0 0.0
    %10252 = vmatpush1.msra.mxu0 %v9425
    %10253 = vmatprep.subr.mxu0 0.0
    %10254 = vmatpush1.msra.mxu0 %v9426
    %10255 = vmatprep.subr.mxu0 0.0
    %10256 = vmatpush1.msra.mxu0 %v9427
    %10257 = vmatprep.subr.mxu0 0.0
    %10258 = vmatpush1.msra.mxu0 %v9428
    %10259 = vmatprep.subr.mxu0 0.0
    %10260 = vmatpush1.msra.mxu0 %v9429
    %10261 = vmatprep.subr.mxu0 0.0
    %10262 = vmatpush1.msra.mxu0 %v9430
    %10263 = vmatprep.subr.mxu0 0.0
    %10264 = vmatpush1.msra.mxu0 %v9431
    %10265 = vmatprep.subr.mxu0 0.0
    %10266 = vmatpush1.msra.mxu0 %v9432
    %10267 = vmatprep.subr.mxu0 0.0
    %10268 = vmatpush1.msra.mxu0 %v9433
    %10269 = vmatprep.subr.mxu0 0.0
    %10270 = vmatpush1.msra.mxu0 %v9434
    %10271 = vmatprep.subr.mxu0 0.0
    %10272 = vmatpush1.msra.mxu0 %v9435
    %10273 = vmatprep.subr.mxu0 0.0
    %10274 = vmatpush1.msra.mxu0 %v9436
    %10275 = vmatprep.subr.mxu0 0.0
    %10276 = vmatpush1.msra.mxu0 %v9437
    %10277 = vmatprep.subr.mxu0 0.0
    %10278 = vmatpush1.msra.mxu0 %v9438
    %10279 = vmatprep.subr.mxu0 0.0
    %10280 = vmatpush1.msra.mxu0 %v9439
    %10281 = vmatprep.mubr.f32.mxu0 %v9872
    %10282 = vmatmul.mubr.f32.gmra.mrb[0].mxu0 %v9870
    %v10283 = vpop.f32.mrb[0].mxu0
    %v10284 = vadd.f32 %v10214, %v10283
    %v10285 = vpop.f32.mrb[0].mxu0
    %10286 = vdwg.mxu0
    %10287 = vmatprep.subr.mxu0 0.0
    %10288 = vmatpush1.msra.mxu0 %v9440
    %10289 = vmatprep.subr.mxu0 0.0
    %10290 = vmatpush1.msra.mxu0 %v9441
    %10291 = vmatprep.subr.mxu0 0.0
    %10292 = vmatpush1.msra.mxu0 %v9442
    %10293 = vmatprep.subr.mxu0 0.0
    %10294 = vmatpush1.msra.mxu0 %v9443
    %10295 = vmatprep.subr.mxu0 0.0
    %10296 = vmatpush1.msra.mxu0 %v9444
    %10297 = vmatprep.subr.mxu0 0.0
    %10298 = vmatpush1.msra.mxu0 %v9445
    %10299 = vmatprep.subr.mxu0 0.0
    %10300 = vmatpush1.msra.mxu0 %v9446
    %10301 = vmatprep.subr.mxu0 0.0
    %10302 = vmatpush1.msra.mxu0 %v9447
    %10303 = vmatprep.subr.mxu0 0.0
    %10304 = vmatpush1.msra.mxu0 %v9448
    %10305 = vmatprep.subr.mxu0 0.0
    %10306 = vmatpush1.msra.mxu0 %v9449
    %10307 = vmatprep.subr.mxu0 0.0
    %10308 = vmatpush1.msra.mxu0 %v9450
    %10309 = vmatprep.subr.mxu0 0.0
    %10310 = vmatpush1.msra.mxu0 %v9451
    %10311 = vmatprep.subr.mxu0 0.0
    %10312 = vmatpush1.msra.mxu0 %v9452
    %10313 = vmatprep.subr.mxu0 0.0
    %10314 = vmatpush1.msra.mxu0 %v9453
    %10315 = vmatprep.subr.mxu0 0.0
    %10316 = vmatpush1.msra.mxu0 %v9454
    %10317 = vmatprep.subr.mxu0 0.0
    %10318 = vmatpush1.msra.mxu0 %v9455
    %10319 = vmatprep.subr.mxu0 0.0
    %10320 = vmatpush1.msra.mxu0 %v9456
    %10321 = vmatprep.subr.mxu0 0.0
    %10322 = vmatpush1.msra.mxu0 %v9457
    %10323 = vmatprep.subr.mxu0 0.0
    %10324 = vmatpush1.msra.mxu0 %v9458
    %10325 = vmatprep.subr.mxu0 0.0
    %10326 = vmatpush1.msra.mxu0 %v9459
    %10327 = vmatprep.subr.mxu0 0.0
    %10328 = vmatpush1.msra.mxu0 %v9460
    %10329 = vmatprep.subr.mxu0 0.0
    %10330 = vmatpush1.msra.mxu0 %v9461
    %10331 = vmatprep.subr.mxu0 0.0
    %10332 = vmatpush1.msra.mxu0 %v9462
    %10333 = vmatprep.subr.mxu0 0.0
    %10334 = vmatpush1.msra.mxu0 %v9463
    %10335 = vmatprep.subr.mxu0 0.0
    %10336 = vmatpush1.msra.mxu0 %v9464
    %10337 = vmatprep.subr.mxu0 0.0
    %10338 = vmatpush1.msra.mxu0 %v9465
    %10339 = vmatprep.subr.mxu0 0.0
    %10340 = vmatpush1.msra.mxu0 %v9466
    %10341 = vmatprep.subr.mxu0 0.0
    %10342 = vmatpush1.msra.mxu0 %v9467
    %10343 = vmatprep.subr.mxu0 0.0
    %10344 = vmatpush1.msra.mxu0 %v9468
    %10345 = vmatprep.subr.mxu0 0.0
    %10346 = vmatpush1.msra.mxu0 %v9469
    %10347 = vmatprep.subr.mxu0 0.0
    %10348 = vmatpush1.msra.mxu0 %v9470
    %10349 = vmatprep.subr.mxu0 0.0
    %10350 = vmatpush1.msra.mxu0 %v9471
    %10351 = vmatprep.mubr.f32.mxu0 %v9888
    %10352 = vmatmul.mubr.f32.gmra.mrb[0].mxu0 %v9880
    %v10353 = vpop.f32.mrb[0].mxu0
    %v10354 = vadd.f32 %v10284, %v10353
    %v10355 = vpop.f32.mrb[0].mxu0
    %10356 = vdwg.mxu0
    %10357 = vmatprep.subr.mxu0 0.0
    %10358 = vmatpush1.msra.mxu0 %v9472
    %10359 = vmatprep.subr.mxu0 0.0
    %10360 = vmatpush1.msra.mxu0 %v9473
    %10361 = vmatprep.subr.mxu0 0.0
    %10362 = vmatpush1.msra.mxu0 %v9474
    %10363 = vmatprep.subr.mxu0 0.0
    %10364 = vmatpush1.msra.mxu0 %v9475
    %10365 = vmatprep.subr.mxu0 0.0
    %10366 = vmatpush1.msra.mxu0 %v9476
    %10367 = vmatprep.subr.mxu0 0.0
    %10368 = vmatpush1.msra.mxu0 %v9477
    %10369 = vmatprep.subr.mxu0 0.0
    %10370 = vmatpush1.msra.mxu0 %v9478
    %10371 = vmatprep.subr.mxu0 0.0
    %10372 = vmatpush1.msra.mxu0 %v9479
    %10373 = vmatprep.subr.mxu0 0.0
    %10374 = vmatpush1.msra.mxu0 %v9480
    %10375 = vmatprep.subr.mxu0 0.0
    %10376 = vmatpush1.msra.mxu0 %v9481
    %10377 = vmatprep.subr.mxu0 0.0
    %10378 = vmatpush1.msra.mxu0 %v9482
    %10379 = vmatprep.subr.mxu0 0.0
    %10380 = vmatpush1.msra.mxu0 %v9483
    %10381 = vmatprep.subr.mxu0 0.0
    %10382 = vmatpush1.msra.mxu0 %v9484
    %10383 = vmatprep.subr.mxu0 0.0
    %10384 = vmatpush1.msra.mxu0 %v9485
    %10385 = vmatprep.subr.mxu0 0.0
    %10386 = vmatpush1.msra.mxu0 %v9486
    %10387 = vmatprep.subr.mxu0 0.0
    %10388 = vmatpush1.msra.mxu0 %v9487
    %10389 = vmatprep.subr.mxu0 0.0
    %10390 = vmatpush1.msra.mxu0 %v9488
    %10391 = vmatprep.subr.mxu0 0.0
    %10392 = vmatpush1.msra.mxu0 %v9489
    %10393 = vmatprep.subr.mxu0 0.0
    %10394 = vmatpush1.msra.mxu0 %v9490
    %10395 = vmatprep.subr.mxu0 0.0
    %10396 = vmatpush1.msra.mxu0 %v9491
    %10397 = vmatprep.subr.mxu0 0.0
    %10398 = vmatpush1.msra.mxu0 %v9492
    %10399 = vmatprep.subr.mxu0 0.0
    %10400 = vmatpush1.msra.mxu0 %v9493
    %10401 = vmatprep.subr.mxu0 0.0
    %10402 = vmatpush1.msra.mxu0 %v9494
    %10403 = vmatprep.subr.mxu0 0.0
    %10404 = vmatpush1.msra.mxu0 %v9495
    %10405 = vmatprep.subr.mxu0 0.0
    %10406 = vmatpush1.msra.mxu0 %v9496
    %10407 = vmatprep.subr.mxu0 0.0
    %10408 = vmatpush1.msra.mxu0 %v9497
    %10409 = vmatprep.subr.mxu0 0.0
    %10410 = vmatpush1.msra.mxu0 %v9498
    %10411 = vmatprep.subr.mxu0 0.0
    %10412 = vmatpush1.msra.mxu0 %v9499
    %10413 = vmatprep.subr.mxu0 0.0
    %10414 = vmatpush1.msra.mxu0 %v9500
    %10415 = vmatprep.subr.mxu0 0.0
    %10416 = vmatpush1.msra.mxu0 %v9501
    %10417 = vmatprep.subr.mxu0 0.0
    %10418 = vmatpush1.msra.mxu0 %v9502
    %10419 = vmatprep.subr.mxu0 0.0
    %10420 = vmatpush1.msra.mxu0 %v9503
    %10421 = vmatprep.mubr.f32.mxu0 %v9889
    %10422 = vmatmul.mubr.f32.gmra.mrb[0].mxu0 %v9887
    %v10423 = vpop.f32.mrb[0].mxu0
    %v10424 = vadd.f32 %v10354, %v10423
    %v10425 = vpop.f32.mrb[0].mxu0
    %10426 = vdwg.mxu0
    %10427 = vmatprep.subr.mxu0 0.0
    %10428 = vmatpush1.msra.mxu0 %v9504
    %10429 = vmatprep.subr.mxu0 0.0
    %10430 = vmatpush1.msra.mxu0 %v9505
    %10431 = vmatprep.subr.mxu0 0.0
    %10432 = vmatpush1.msra.mxu0 %v9506
    %10433 = vmatprep.subr.mxu0 0.0
    %10434 = vmatpush1.msra.mxu0 %v9507
    %10435 = vmatprep.subr.mxu0 0.0
    %10436 = vmatpush1.msra.mxu0 %v9508
    %10437 = vmatprep.subr.mxu0 0.0
    %10438 = vmatpush1.msra.mxu0 %v9509
    %10439 = vmatprep.subr.mxu0 0.0
    %10440 = vmatpush1.msra.mxu0 %v9510
    %10441 = vmatprep.subr.mxu0 0.0
    %10442 = vmatpush1.msra.mxu0 %v9511
    %10443 = vmatprep.subr.mxu0 0.0
    %10444 = vmatpush1.msra.mxu0 %v9512
    %10445 = vmatprep.subr.mxu0 0.0
    %10446 = vmatpush1.msra.mxu0 %v9513
    %10447 = vmatprep.subr.mxu0 0.0
    %10448 = vmatpush1.msra.mxu0 %v9514
    %10449 = vmatprep.subr.mxu0 0.0
    %10450 = vmatpush1.msra.mxu0 %v9515
    %10451 = vmatprep.subr.mxu0 0.0
    %10452 = vmatpush1.msra.mxu0 %v9516
    %10453 = vmatprep.subr.mxu0 0.0
    %10454 = vmatpush1.msra.mxu0 %v9517
    %10455 = vmatprep.subr.mxu0 0.0
    %10456 = vmatpush1.msra.mxu0 %v9518
    %10457 = vmatprep.subr.mxu0 0.0
    %10458 = vmatpush1.msra.mxu0 %v9519
    %10459 = vmatprep.subr.mxu0 0.0
    %10460 = vmatpush1.msra.mxu0 %v9520
    %10461 = vmatprep.subr.mxu0 0.0
    %10462 = vmatpush1.msra.mxu0 %v9521
    %10463 = vmatprep.subr.mxu0 0.0
    %10464 = vmatpush1.msra.mxu0 %v9522
    %10465 = vmatprep.subr.mxu0 0.0
    %10466 = vmatpush1.msra.mxu0 %v9523
    %10467 = vmatprep.subr.mxu0 0.0
    %10468 = vmatpush1.msra.mxu0 %v9524
    %10469 = vmatprep.subr.mxu0 0.0
    %10470 = vmatpush1.msra.mxu0 %v9525
    %10471 = vmatprep.subr.mxu0 0.0
    %10472 = vmatpush1.msra.mxu0 %v9526
    %10473 = vmatprep.subr.mxu0 0.0
    %10474 = vmatpush1.msra.mxu0 %v9527
    %10475 = vmatprep.subr.mxu0 0.0
    %10476 = vmatpush1.msra.mxu0 %v9528
    %10477 = vmatprep.subr.mxu0 0.0
    %10478 = vmatpush1.msra.mxu0 %v9529
    %10479 = vmatprep.subr.mxu0 0.0
    %10480 = vmatpush1.msra.mxu0 %v9530
    %10481 = vmatprep.subr.mxu0 0.0
    %10482 = vmatpush1.msra.mxu0 %v9531
    %10483 = vmatprep.subr.mxu0 0.0
    %10484 = vmatpush1.msra.mxu0 %v9532
    %10485 = vmatprep.subr.mxu0 0.0
    %10486 = vmatpush1.msra.mxu0 %v9533
    %10487 = vmatprep.subr.mxu0 0.0
    %10488 = vmatpush1.msra.mxu0 %v9534
    %10489 = vmatprep.subr.mxu0 0.0
    %10490 = vmatpush1.msra.mxu0 %v9535
    %10491 = vmatprep.mubr.f32.mxu0 %v9905
    %10492 = vmatmul.mubr.f32.gmra.mrb[0].mxu0 %v9897
    %v10493 = vpop.f32.mrb[0].mxu0
    %v10494 = vadd.f32 %v10424, %v10493
    %v10495 = vpop.f32.mrb[0].mxu0
    %10496 = vdwg.mxu0
    %10497 = vmatprep.subr.mxu0 0.0
    %10498 = vmatpush1.msra.mxu0 %v9536
    %10499 = vmatprep.subr.mxu0 0.0
    %10500 = vmatpush1.msra.mxu0 %v9537
    %10501 = vmatprep.subr.mxu0 0.0
    %10502 = vmatpush1.msra.mxu0 %v9538
    %10503 = vmatprep.subr.mxu0 0.0
    %10504 = vmatpush1.msra.mxu0 %v9539
    %10505 = vmatprep.subr.mxu0 0.0
    %10506 = vmatpush1.msra.mxu0 %v9540
    %10507 = vmatprep.subr.mxu0 0.0
    %10508 = vmatpush1.msra.mxu0 %v9541
    %10509 = vmatprep.subr.mxu0 0.0
    %10510 = vmatpush1.msra.mxu0 %v9542
    %10511 = vmatprep.subr.mxu0 0.0
    %10512 = vmatpush1.msra.mxu0 %v9543
    %10513 = vmatprep.subr.mxu0 0.0
    %10514 = vmatpush1.msra.mxu0 %v9544
    %10515 = vmatprep.subr.mxu0 0.0
    %10516 = vmatpush1.msra.mxu0 %v9545
    %10517 = vmatprep.subr.mxu0 0.0
    %10518 = vmatpush1.msra.mxu0 %v9546
    %10519 = vmatprep.subr.mxu0 0.0
    %10520 = vmatpush1.msra.mxu0 %v9547
    %10521 = vmatprep.subr.mxu0 0.0
    %10522 = vmatpush1.msra.mxu0 %v9548
    %10523 = vmatprep.subr.mxu0 0.0
    %10524 = vmatpush1.msra.mxu0 %v9549
    %10525 = vmatprep.subr.mxu0 0.0
    %10526 = vmatpush1.msra.mxu0 %v9550
    %10527 = vmatprep.subr.mxu0 0.0
    %10528 = vmatpush1.msra.mxu0 %v9551
    %10529 = vmatprep.subr.mxu0 0.0
    %10530 = vmatpush1.msra.mxu0 %v9552
    %10531 = vmatprep.subr.mxu0 0.0
    %10532 = vmatpush1.msra.mxu0 %v9553
    %10533 = vmatprep.subr.mxu0 0.0
    %10534 = vmatpush1.msra.mxu0 %v9554
    %10535 = vmatprep.subr.mxu0 0.0
    %10536 = vmatpush1.msra.mxu0 %v9555
    %10537 = vmatprep.subr.mxu0 0.0
    %10538 = vmatpush1.msra.mxu0 %v9556
    %10539 = vmatprep.subr.mxu0 0.0
    %10540 = vmatpush1.msra.mxu0 %v9557
    %10541 = vmatprep.subr.mxu0 0.0
    %10542 = vmatpush1.msra.mxu0 %v9558
    %10543 = vmatprep.subr.mxu0 0.0
    %10544 = vmatpush1.msra.mxu0 %v9559
    %10545 = vmatprep.subr.mxu0 0.0
    %10546 = vmatpush1.msra.mxu0 %v9560
    %10547 = vmatprep.subr.mxu0 0.0
    %10548 = vmatpush1.msra.mxu0 %v9561
    %10549 = vmatprep.subr.mxu0 0.0
    %10550 = vmatpush1.msra.mxu0 %v9562
    %10551 = vmatprep.subr.mxu0 0.0
    %10552 = vmatpush1.msra.mxu0 %v9563
    %10553 = vmatprep.subr.mxu0 0.0
    %10554 = vmatpush1.msra.mxu0 %v9564
    %10555 = vmatprep.subr.mxu0 0.0
    %10556 = vmatpush1.msra.mxu0 %v9565
    %10557 = vmatprep.subr.mxu0 0.0
    %10558 = vmatpush1.msra.mxu0 %v9566
    %10559 = vmatprep.subr.mxu0 0.0
    %10560 = vmatpush1.msra.mxu0 %v9567
    %10561 = vmatprep.mubr.f32.mxu0 %v9906
    %10562 = vmatmul.mubr.f32.gmra.mrb[0].mxu0 %v9904
    %v10563 = vpop.f32.mrb[0].mxu0
    %v10564 = vadd.f32 %v10494, %v10563
    %v10565 = vpop.f32.mrb[0].mxu0
    %10566 = vdwg.mxu0
    %10567 = vmatprep.subr.mxu0 0.0
    %10568 = vmatpush1.msra.mxu0 %v9568
    %10569 = vmatprep.subr.mxu0 0.0
    %10570 = vmatpush1.msra.mxu0 %v9569
    %10571 = vmatprep.subr.mxu0 0.0
    %10572 = vmatpush1.msra.mxu0 %v9570
    %10573 = vmatprep.subr.mxu0 0.0
    %10574 = vmatpush1.msra.mxu0 %v9571
    %10575 = vmatprep.subr.mxu0 0.0
    %10576 = vmatpush1.msra.mxu0 %v9572
    %10577 = vmatprep.subr.mxu0 0.0
    %10578 = vmatpush1.msra.mxu0 %v9573
    %10579 = vmatprep.subr.mxu0 0.0
    %10580 = vmatpush1.msra.mxu0 %v9574
    %10581 = vmatprep.subr.mxu0 0.0
    %10582 = vmatpush1.msra.mxu0 %v9575
    %10583 = vmatprep.subr.mxu0 0.0
    %10584 = vmatpush1.msra.mxu0 %v9576
    %10585 = vmatprep.subr.mxu0 0.0
    %10586 = vmatpush1.msra.mxu0 %v9577
    %10587 = vmatprep.subr.mxu0 0.0
    %10588 = vmatpush1.msra.mxu0 %v9578
    %10589 = vmatprep.subr.mxu0 0.0
    %10590 = vmatpush1.msra.mxu0 %v9579
    %10591 = vmatprep.subr.mxu0 0.0
    %10592 = vmatpush1.msra.mxu0 %v9580
    %10593 = vmatprep.subr.mxu0 0.0
    %10594 = vmatpush1.msra.mxu0 %v9581
    %10595 = vmatprep.subr.mxu0 0.0
    %10596 = vmatpush1.msra.mxu0 %v9582
    %10597 = vmatprep.subr.mxu0 0.0
    %10598 = vmatpush1.msra.mxu0 %v9583
    %10599 = vmatprep.subr.mxu0 0.0
    %10600 = vmatpush1.msra.mxu0 %v9584
    %10601 = vmatprep.subr.mxu0 0.0
    %10602 = vmatpush1.msra.mxu0 %v9585
    %10603 = vmatprep.subr.mxu0 0.0
    %10604 = vmatpush1.msra.mxu0 %v9586
    %10605 = vmatprep.subr.mxu0 0.0
    %10606 = vmatpush1.msra.mxu0 %v9587
    %10607 = vmatprep.subr.mxu0 0.0
    %10608 = vmatpush1.msra.mxu0 %v9588
    %10609 = vmatprep.subr.mxu0 0.0
    %10610 = vmatpush1.msra.mxu0 %v9589
    %10611 = vmatprep.subr.mxu0 0.0
    %10612 = vmatpush1.msra.mxu0 %v9590
    %10613 = vmatprep.subr.mxu0 0.0
    %10614 = vmatpush1.msra.mxu0 %v9591
    %10615 = vmatprep.subr.mxu0 0.0
    %10616 = vmatpush1.msra.mxu0 %v9592
    %10617 = vmatprep.subr.mxu0 0.0
    %10618 = vmatpush1.msra.mxu0 %v9593
    %10619 = vmatprep.subr.mxu0 0.0
    %10620 = vmatpush1.msra.mxu0 %v9594
    %10621 = vmatprep.subr.mxu0 0.0
    %10622 = vmatpush1.msra.mxu0 %v9595
    %10623 = vmatprep.subr.mxu0 0.0
    %10624 = vmatpush1.msra.mxu0 %v9596
    %10625 = vmatprep.subr.mxu0 0.0
    %10626 = vmatpush1.msra.mxu0 %v9597
    %10627 = vmatprep.subr.mxu0 0.0
    %10628 = vmatpush1.msra.mxu0 %v9598
    %10629 = vmatprep.subr.mxu0 0.0
    %10630 = vmatpush1.msra.mxu0 %v9599
    %10631 = vmatprep.mubr.f32.mxu0 %v9922
    %10632 = vmatmul.mubr.f32.gmra.mrb[0].mxu0 %v9914
    %v10633 = vpop.f32.mrb[0].mxu0
    %v10634 = vadd.f32 %v10564, %v10633
    %v10635 = vpop.f32.mrb[0].mxu0
    %10636 = vdwg.mxu0
    %10637 = vmatprep.subr.mxu0 0.0
    %10638 = vmatpush1.msra.mxu0 %v9600
    %10639 = vmatprep.subr.mxu0 0.0
    %10640 = vmatpush1.msra.mxu0 %v9601
    %10641 = vmatprep.subr.mxu0 0.0
    %10642 = vmatpush1.msra.mxu0 %v9602
    %10643 = vmatprep.subr.mxu0 0.0
    %10644 = vmatpush1.msra.mxu0 %v9603
    %10645 = vmatprep.subr.mxu0 0.0
    %10646 = vmatpush1.msra.mxu0 %v9604
    %10647 = vmatprep.subr.mxu0 0.0
    %10648 = vmatpush1.msra.mxu0 %v9605
    %10649 = vmatprep.subr.mxu0 0.0
    %10650 = vmatpush1.msra.mxu0 %v9606
    %10651 = vmatprep.subr.mxu0 0.0
    %10652 = vmatpush1.msra.mxu0 %v9607
    %10653 = vmatprep.subr.mxu0 0.0
    %10654 = vmatpush1.msra.mxu0 %v9608
    %10655 = vmatprep.subr.mxu0 0.0
    %10656 = vmatpush1.msra.mxu0 %v9609
    %10657 = vmatprep.subr.mxu0 0.0
    %10658 = vmatpush1.msra.mxu0 %v9610
    %10659 = vmatprep.subr.mxu0 0.0
    %10660 = vmatpush1.msra.mxu0 %v9611
    %10661 = vmatprep.subr.mxu0 0.0
    %10662 = vmatpush1.msra.mxu0 %v9612
    %10663 = vmatprep.subr.mxu0 0.0
    %10664 = vmatpush1.msra.mxu0 %v9613
    %10665 = vmatprep.subr.mxu0 0.0
    %10666 = vmatpush1.msra.mxu0 %v9614
    %10667 = vmatprep.subr.mxu0 0.0
    %10668 = vmatpush1.msra.mxu0 %v9615
    %10669 = vmatprep.subr.mxu0 0.0
    %10670 = vmatpush1.msra.mxu0 %v9616
    %10671 = vmatprep.subr.mxu0 0.0
    %10672 = vmatpush1.msra.mxu0 %v9617
    %10673 = vmatprep.subr.mxu0 0.0
    %10674 = vmatpush1.msra.mxu0 %v9618
    %10675 = vmatprep.subr.mxu0 0.0
    %10676 = vmatpush1.msra.mxu0 %v9619
    %10677 = vmatprep.subr.mxu0 0.0
    %10678 = vmatpush1.msra.mxu0 %v9620
    %10679 = vmatprep.subr.mxu0 0.0
    %10680 = vmatpush1.msra.mxu0 %v9621
    %10681 = vmatprep.subr.mxu0 0.0
    %10682 = vmatpush1.msra.mxu0 %v9622
    %10683 = vmatprep.subr.mxu0 0.0
    %10684 = vmatpush1.msra.mxu0 %v9623
    %10685 = vmatprep.subr.mxu0 0.0
    %10686 = vmatpush1.msra.mxu0 %v9624
    %10687 = vmatprep.subr.mxu0 0.0
    %10688 = vmatpush1.msra.mxu0 %v9625
    %10689 = vmatprep.subr.mxu0 0.0
    %10690 = vmatpush1.msra.mxu0 %v9626
    %10691 = vmatprep.subr.mxu0 0.0
    %10692 = vmatpush1.msra.mxu0 %v9627
    %10693 = vmatprep.subr.mxu0 0.0
    %10694 = vmatpush1.msra.mxu0 %v9628
    %10695 = vmatprep.subr.mxu0 0.0
    %10696 = vmatpush1.msra.mxu0 %v9629
    %10697 = vmatprep.subr.mxu0 0.0
    %10698 = vmatpush1.msra.mxu0 %v9630
    %10699 = vmatprep.subr.mxu0 0.0
    %10700 = vmatpush1.msra.mxu0 %v9631
    %10701 = vmatprep.mubr.f32.mxu0 %v9923
    %10702 = vmatmul.mubr.f32.gmra.mrb[0].mxu0 %v9921
    %v10703 = vpop.f32.mrb[0].mxu0
    %v10704 = vadd.f32 %v10634, %v10703
    %v10705 = vpop.f32.mrb[0].mxu0
    %10706 = vdwg.mxu0
    %10707 = vmatprep.subr.mxu0 0.0
    %10708 = vmatpush1.msra.mxu0 %v9632
    %10709 = vmatprep.subr.mxu0 0.0
    %10710 = vmatpush1.msra.mxu0 %v9633
    %10711 = vmatprep.subr.mxu0 0.0
    %10712 = vmatpush1.msra.mxu0 %v9634
    %10713 = vmatprep.subr.mxu0 0.0
    %10714 = vmatpush1.msra.mxu0 %v9635
    %10715 = vmatprep.subr.mxu0 0.0
    %10716 = vmatpush1.msra.mxu0 %v9636
    %10717 = vmatprep.subr.mxu0 0.0
    %10718 = vmatpush1.msra.mxu0 %v9637
    %10719 = vmatprep.subr.mxu0 0.0
    %10720 = vmatpush1.msra.mxu0 %v9638
    %10721 = vmatprep.subr.mxu0 0.0
    %10722 = vmatpush1.msra.mxu0 %v9639
    %10723 = vmatprep.subr.mxu0 0.0
    %10724 = vmatpush1.msra.mxu0 %v9640
    %10725 = vmatprep.subr.mxu0 0.0
    %10726 = vmatpush1.msra.mxu0 %v9641
    %10727 = vmatprep.subr.mxu0 0.0
    %10728 = vmatpush1.msra.mxu0 %v9642
    %10729 = vmatprep.subr.mxu0 0.0
    %10730 = vmatpush1.msra.mxu0 %v9643
    %10731 = vmatprep.subr.mxu0 0.0
    %10732 = vmatpush1.msra.mxu0 %v9644
    %10733 = vmatprep.subr.mxu0 0.0
    %10734 = vmatpush1.msra.mxu0 %v9645
    %10735 = vmatprep.subr.mxu0 0.0
    %10736 = vmatpush1.msra.mxu0 %v9646
    %10737 = vmatprep.subr.mxu0 0.0
    %10738 = vmatpush1.msra.mxu0 %v9647
    %10739 = vmatprep.subr.mxu0 0.0
    %10740 = vmatpush1.msra.mxu0 %v9648
    %10741 = vmatprep.subr.mxu0 0.0
    %10742 = vmatpush1.msra.mxu0 %v9649
    %10743 = vmatprep.subr.mxu0 0.0
    %10744 = vmatpush1.msra.mxu0 %v9650
    %10745 = vmatprep.subr.mxu0 0.0
    %10746 = vmatpush1.msra.mxu0 %v9651
    %10747 = vmatprep.subr.mxu0 0.0
    %10748 = vmatpush1.msra.mxu0 %v9652
    %10749 = vmatprep.subr.mxu0 0.0
    %10750 = vmatpush1.msra.mxu0 %v9653
    %10751 = vmatprep.subr.mxu0 0.0
    %10752 = vmatpush1.msra.mxu0 %v9654
    %10753 = vmatprep.subr.mxu0 0.0
    %10754 = vmatpush1.msra.mxu0 %v9655
    %10755 = vmatprep.subr.mxu0 0.0
    %10756 = vmatpush1.msra.mxu0 %v9656
    %10757 = vmatprep.subr.mxu0 0.0
    %10758 = vmatpush1.msra.mxu0 %v9657
    %10759 = vmatprep.subr.mxu0 0.0
    %10760 = vmatpush1.msra.mxu0 %v9658
    %10761 = vmatprep.subr.mxu0 0.0
    %10762 = vmatpush1.msra.mxu0 %v9659
    %10763 = vmatprep.subr.mxu0 0.0
    %10764 = vmatpush1.msra.mxu0 %v9660
    %10765 = vmatprep.subr.mxu0 0.0
    %10766 = vmatpush1.msra.mxu0 %v9661
    %10767 = vmatprep.subr.mxu0 0.0
    %10768 = vmatpush1.msra.mxu0 %v9662
    %10769 = vmatprep.subr.mxu0 0.0
    %10770 = vmatpush1.msra.mxu0 %v9663
    %10771 = vmatprep.mubr.f32.mxu0 %v9939
    %10772 = vmatmul.mubr.f32.gmra.mrb[0].mxu0 %v9931
    %v10773 = vpop.f32.mrb[0].mxu0
    %v10774 = vadd.f32 %v10704, %v10773
    %v10775 = vpop.f32.mrb[0].mxu0
    %10776 = vdwg.mxu0
    %10777 = vmatprep.subr.mxu0 0.0
    %10778 = vmatpush1.msra.mxu0 %v9664
    %10779 = vmatprep.subr.mxu0 0.0
    %10780 = vmatpush1.msra.mxu0 %v9665
    %10781 = vmatprep.subr.mxu0 0.0
    %10782 = vmatpush1.msra.mxu0 %v9666
    %10783 = vmatprep.subr.mxu0 0.0
    %10784 = vmatpush1.msra.mxu0 %v9667
    %10785 = vmatprep.subr.mxu0 0.0
    %10786 = vmatpush1.msra.mxu0 %v9668
    %10787 = vmatprep.subr.mxu0 0.0
    %10788 = vmatpush1.msra.mxu0 %v9669
    %10789 = vmatprep.subr.mxu0 0.0
    %10790 = vmatpush1.msra.mxu0 %v9670
    %10791 = vmatprep.subr.mxu0 0.0
    %10792 = vmatpush1.msra.mxu0 %v9671
    %10793 = vmatprep.subr.mxu0 0.0
    %10794 = vmatpush1.msra.mxu0 %v9672
    %10795 = vmatprep.subr.mxu0 0.0
    %10796 = vmatpush1.msra.mxu0 %v9673
    %10797 = vmatprep.subr.mxu0 0.0
    %10798 = vmatpush1.msra.mxu0 %v9674
    %10799 = vmatprep.subr.mxu0 0.0
    %10800 = vmatpush1.msra.mxu0 %v9675
    %10801 = vmatprep.subr.mxu0 0.0
    %10802 = vmatpush1.msra.mxu0 %v9676
    %10803 = vmatprep.subr.mxu0 0.0
    %10804 = vmatpush1.msra.mxu0 %v9677
    %10805 = vmatprep.subr.mxu0 0.0
    %10806 = vmatpush1.msra.mxu0 %v9678
    %10807 = vmatprep.subr.mxu0 0.0
    %10808 = vmatpush1.msra.mxu0 %v9679
    %10809 = vmatprep.subr.mxu0 0.0
    %10810 = vmatpush1.msra.mxu0 %v9680
    %10811 = vmatprep.subr.mxu0 0.0
    %10812 = vmatpush1.msra.mxu0 %v9681
    %10813 = vmatprep.subr.mxu0 0.0
    %10814 = vmatpush1.msra.mxu0 %v9682
    %10815 = vmatprep.subr.mxu0 0.0
    %10816 = vmatpush1.msra.mxu0 %v9683
    %10817 = vmatprep.subr.mxu0 0.0
    %10818 = vmatpush1.msra.mxu0 %v9684
    %10819 = vmatprep.subr.mxu0 0.0
    %10820 = vmatpush1.msra.mxu0 %v9685
    %10821 = vmatprep.subr.mxu0 0.0
    %10822 = vmatpush1.msra.mxu0 %v9686
    %10823 = vmatprep.subr.mxu0 0.0
    %10824 = vmatpush1.msra.mxu0 %v9687
    %10825 = vmatprep.subr.mxu0 0.0
    %10826 = vmatpush1.msra.mxu0 %v9688
    %10827 = vmatprep.subr.mxu0 0.0
    %10828 = vmatpush1.msra.mxu0 %v9689
    %10829 = vmatprep.subr.mxu0 0.0
    %10830 = vmatpush1.msra.mxu0 %v9690
    %10831 = vmatprep.subr.mxu0 0.0
    %10832 = vmatpush1.msra.mxu0 %v9691
    %10833 = vmatprep.subr.mxu0 0.0
    %10834 = vmatpush1.msra.mxu0 %v9692
    %10835 = vmatprep.subr.mxu0 0.0
    %10836 = vmatpush1.msra.mxu0 %v9693
    %10837 = vmatprep.subr.mxu0 0.0
    %10838 = vmatpush1.msra.mxu0 %v9694
    %10839 = vmatprep.subr.mxu0 0.0
    %10840 = vmatpush1.msra.mxu0 %v9695
    %10841 = vmatprep.mubr.f32.mxu0 %v9940
    %10842 = vmatmul.mubr.f32.gmra.mrb[0].mxu0 %v9938
    %v10843 = vpop.f32.mrb[0].mxu0
    %v10844 = vadd.f32 %v10774, %v10843
    %v10845 = vpop.f32.mrb[0].mxu0
    %10846 = vdwg.mxu0
    %10847 = vmatprep.subr.mxu0 0.0
    %10848 = vmatpush1.msra.mxu0 %v9696
    %10849 = vmatprep.subr.mxu0 0.0
    %10850 = vmatpush1.msra.mxu0 %v9697
    %10851 = vmatprep.subr.mxu0 0.0
    %10852 = vmatpush1.msra.mxu0 %v9698
    %10853 = vmatprep.subr.mxu0 0.0
    %10854 = vmatpush1.msra.mxu0 %v9699
    %10855 = vmatprep.subr.mxu0 0.0
    %10856 = vmatpush1.msra.mxu0 %v9700
    %10857 = vmatprep.subr.mxu0 0.0
    %10858 = vmatpush1.msra.mxu0 %v9701
    %10859 = vmatprep.subr.mxu0 0.0
    %10860 = vmatpush1.msra.mxu0 %v9702
    %10861 = vmatprep.subr.mxu0 0.0
    %10862 = vmatpush1.msra.mxu0 %v9703
    %10863 = vmatprep.subr.mxu0 0.0
    %10864 = vmatpush1.msra.mxu0 %v9704
    %10865 = vmatprep.subr.mxu0 0.0
    %10866 = vmatpush1.msra.mxu0 %v9705
    %10867 = vmatprep.subr.mxu0 0.0
    %10868 = vmatpush1.msra.mxu0 %v9706
    %10869 = vmatprep.subr.mxu0 0.0
    %10870 = vmatpush1.msra.mxu0 %v9707
    %10871 = vmatprep.subr.mxu0 0.0
    %10872 = vmatpush1.msra.mxu0 %v9708
    %10873 = vmatprep.subr.mxu0 0.0
    %10874 = vmatpush1.msra.mxu0 %v9709
    %10875 = vmatprep.subr.mxu0 0.0
    %10876 = vmatpush1.msra.mxu0 %v9710
    %10877 = vmatprep.subr.mxu0 0.0
    %10878 = vmatpush1.msra.mxu0 %v9711
    %10879 = vmatprep.subr.mxu0 0.0
    %10880 = vmatpush1.msra.mxu0 %v9712
    %10881 = vmatprep.subr.mxu0 0.0
    %10882 = vmatpush1.msra.mxu0 %v9713
    %10883 = vmatprep.subr.mxu0 0.0
    %10884 = vmatpush1.msra.mxu0 %v9714
    %10885 = vmatprep.subr.mxu0 0.0
    %10886 = vmatpush1.msra.mxu0 %v9715
    %10887 = vmatprep.subr.mxu0 0.0
    %10888 = vmatpush1.msra.mxu0 %v9716
    %10889 = vmatprep.subr.mxu0 0.0
    %10890 = vmatpush1.msra.mxu0 %v9717
    %10891 = vmatprep.subr.mxu0 0.0
    %10892 = vmatpush1.msra.mxu0 %v9718
    %10893 = vmatprep.subr.mxu0 0.0
    %10894 = vmatpush1.msra.mxu0 %v9719
    %10895 = vmatprep.subr.mxu0 0.0
    %10896 = vmatpush1.msra.mxu0 %v9720
    %10897 = vmatprep.subr.mxu0 0.0
    %10898 = vmatpush1.msra.mxu0 %v9721
    %10899 = vmatprep.subr.mxu0 0.0
    %10900 = vmatpush1.msra.mxu0 %v9722
    %10901 = vmatprep.subr.mxu0 0.0
    %10902 = vmatpush1.msra.mxu0 %v9723
    %10903 = vmatprep.subr.mxu0 0.0
    %10904 = vmatpush1.msra.mxu0 %v9724
    %10905 = vmatprep.subr.mxu0 0.0
    %10906 = vmatpush1.msra.mxu0 %v9725
    %10907 = vmatprep.subr.mxu0 0.0
    %10908 = vmatpush1.msra.mxu0 %v9726
    %10909 = vmatprep.subr.mxu0 0.0
    %10910 = vmatpush1.msra.mxu0 %v9727
    %10911 = vmatprep.mubr.f32.mxu0 %v9956
    %10912 = vmatmul.mubr.f32.gmra.mrb[0].mxu0 %v9948
    %v10913 = vpop.f32.mrb[0].mxu0
    %v10914 = vadd.f32 %v10844, %v10913
    %v10915 = vpop.f32.mrb[0].mxu0
    %10916 = vdwg.mxu0
    %10917 = vmatprep.subr.mxu0 0.0
    %10918 = vmatpush1.msra.mxu0 %v9728
    %10919 = vmatprep.subr.mxu0 0.0
    %10920 = vmatpush1.msra.mxu0 %v9729
    %10921 = vmatprep.subr.mxu0 0.0
    %10922 = vmatpush1.msra.mxu0 %v9730
    %10923 = vmatprep.subr.mxu0 0.0
    %10924 = vmatpush1.msra.mxu0 %v9731
    %10925 = vmatprep.subr.mxu0 0.0
    %10926 = vmatpush1.msra.mxu0 %v9732
    %10927 = vmatprep.subr.mxu0 0.0
    %10928 = vmatpush1.msra.mxu0 %v9733
    %10929 = vmatprep.subr.mxu0 0.0
    %10930 = vmatpush1.msra.mxu0 %v9734
    %10931 = vmatprep.subr.mxu0 0.0
    %10932 = vmatpush1.msra.mxu0 %v9735
    %10933 = vmatprep.subr.mxu0 0.0
    %10934 = vmatpush1.msra.mxu0 %v9736
    %10935 = vmatprep.subr.mxu0 0.0
    %10936 = vmatpush1.msra.mxu0 %v9737
    %10937 = vmatprep.subr.mxu0 0.0
    %10938 = vmatpush1.msra.mxu0 %v9738
    %10939 = vmatprep.subr.mxu0 0.0
    %10940 = vmatpush1.msra.mxu0 %v9739
    %10941 = vmatprep.subr.mxu0 0.0
    %10942 = vmatpush1.msra.mxu0 %v9740
    %10943 = vmatprep.subr.mxu0 0.0
    %10944 = vmatpush1.msra.mxu0 %v9741
    %10945 = vmatprep.subr.mxu0 0.0
    %10946 = vmatpush1.msra.mxu0 %v9742
    %10947 = vmatprep.subr.mxu0 0.0
    %10948 = vmatpush1.msra.mxu0 %v9743
    %10949 = vmatprep.subr.mxu0 0.0
    %10950 = vmatpush1.msra.mxu0 %v9744
    %10951 = vmatprep.subr.mxu0 0.0
    %10952 = vmatpush1.msra.mxu0 %v9745
    %10953 = vmatprep.subr.mxu0 0.0
    %10954 = vmatpush1.msra.mxu0 %v9746
    %10955 = vmatprep.subr.mxu0 0.0
    %10956 = vmatpush1.msra.mxu0 %v9747
    %10957 = vmatprep.subr.mxu0 0.0
    %10958 = vmatpush1.msra.mxu0 %v9748
    %10959 = vmatprep.subr.mxu0 0.0
    %10960 = vmatpush1.msra.mxu0 %v9749
    %10961 = vmatprep.subr.mxu0 0.0
    %10962 = vmatpush1.msra.mxu0 %v9750
    %10963 = vmatprep.subr.mxu0 0.0
    %10964 = vmatpush1.msra.mxu0 %v9751
    %10965 = vmatprep.subr.mxu0 0.0
    %10966 = vmatpush1.msra.mxu0 %v9752
    %10967 = vmatprep.subr.mxu0 0.0
    %10968 = vmatpush1.msra.mxu0 %v9753
    %10969 = vmatprep.subr.mxu0 0.0
    %10970 = vmatpush1.msra.mxu0 %v9754
    %10971 = vmatprep.subr.mxu0 0.0
    %10972 = vmatpush1.msra.mxu0 %v9755
    %10973 = vmatprep.subr.mxu0 0.0
    %10974 = vmatpush1.msra.mxu0 %v9756
    %10975 = vmatprep.subr.mxu0 0.0
    %10976 = vmatpush1.msra.mxu0 %v9757
    %10977 = vmatprep.subr.mxu0 0.0
    %10978 = vmatpush1.msra.mxu0 %v9758
    %10979 = vmatprep.subr.mxu0 0.0
    %10980 = vmatpush1.msra.mxu0 %v9759
    %10981 = vmatprep.mubr.f32.mxu0 %v9957
    %10982 = vmatmul.mubr.f32.gmra.mrb[0].mxu0 %v9955
    %v10983 = vpop.f32.mrb[0].mxu0
    %v10984 = vadd.f32 %v10914, %v10983
    %v10985 = vpop.f32.mrb[0].mxu0
    %10986 = vdwg.mxu0
    %10987 = vmatprep.subr.mxu0 0.0
    %10988 = vmatpush1.msra.mxu0 %v9760
    %10989 = vmatprep.subr.mxu0 0.0
    %10990 = vmatpush1.msra.mxu0 %v9761
    %10991 = vmatprep.subr.mxu0 0.0
    %10992 = vmatpush1.msra.mxu0 %v9762
    %10993 = vmatprep.subr.mxu0 0.0
    %10994 = vmatpush1.msra.mxu0 %v9763
    %10995 = vmatprep.subr.mxu0 0.0
    %10996 = vmatpush1.msra.mxu0 %v9764
    %10997 = vmatprep.subr.mxu0 0.0
    %10998 = vmatpush1.msra.mxu0 %v9765
    %10999 = vmatprep.subr.mxu0 0.0
    %11000 = vmatpush1.msra.mxu0 %v9766
    %11001 = vmatprep.subr.mxu0 0.0
    %11002 = vmatpush1.msra.mxu0 %v9767
    %11003 = vmatprep.subr.mxu0 0.0
    %11004 = vmatpush1.msra.mxu0 %v9768
    %11005 = vmatprep.subr.mxu0 0.0
    %11006 = vmatpush1.msra.mxu0 %v9769
    %11007 = vmatprep.subr.mxu0 0.0
    %11008 = vmatpush1.msra.mxu0 %v9770
    %11009 = vmatprep.subr.mxu0 0.0
    %11010 = vmatpush1.msra.mxu0 %v9771
    %11011 = vmatprep.subr.mxu0 0.0
    %11012 = vmatpush1.msra.mxu0 %v9772
    %11013 = vmatprep.subr.mxu0 0.0
    %11014 = vmatpush1.msra.mxu0 %v9773
    %11015 = vmatprep.subr.mxu0 0.0
    %11016 = vmatpush1.msra.mxu0 %v9774
    %11017 = vmatprep.subr.mxu0 0.0
    %11018 = vmatpush1.msra.mxu0 %v9775
    %11019 = vmatprep.subr.mxu0 0.0
    %11020 = vmatpush1.msra.mxu0 %v9776
    %11021 = vmatprep.subr.mxu0 0.0
    %11022 = vmatpush1.msra.mxu0 %v9777
    %11023 = vmatprep.subr.mxu0 0.0
    %11024 = vmatpush1.msra.mxu0 %v9778
    %11025 = vmatprep.subr.mxu0 0.0
    %11026 = vmatpush1.msra.mxu0 %v9779
    %11027 = vmatprep.subr.mxu0 0.0
    %11028 = vmatpush1.msra.mxu0 %v9780
    %11029 = vmatprep.subr.mxu0 0.0
    %11030 = vmatpush1.msra.mxu0 %v9781
    %11031 = vmatprep.subr.mxu0 0.0
    %11032 = vmatpush1.msra.mxu0 %v9782
    %11033 = vmatprep.subr.mxu0 0.0
    %11034 = vmatpush1.msra.mxu0 %v9783
    %11035 = vmatprep.subr.mxu0 0.0
    %11036 = vmatpush1.msra.mxu0 %v9784
    %11037 = vmatprep.subr.mxu0 0.0
    %11038 = vmatpush1.msra.mxu0 %v9785
    %11039 = vmatprep.subr.mxu0 0.0
    %11040 = vmatpush1.msra.mxu0 %v9786
    %11041 = vmatprep.subr.mxu0 0.0
    %11042 = vmatpush1.msra.mxu0 %v9787
    %11043 = vmatprep.subr.mxu0 0.0
    %11044 = vmatpush1.msra.mxu0 %v9788
    %11045 = vmatprep.subr.mxu0 0.0
    %11046 = vmatpush1.msra.mxu0 %v9789
    %11047 = vmatprep.subr.mxu0 0.0
    %11048 = vmatpush1.msra.mxu0 %v9790
    %11049 = vmatprep.subr.mxu0 0.0
    %11050 = vmatpush1.msra.mxu0 %v9791
    %11051 = vmatprep.mubr.f32.mxu0 %v9973
    %11052 = vmatmul.mubr.f32.gmra.mrb[0].mxu0 %v9965
    %v11053 = vpop.f32.mrb[0].mxu0
    %v11054 = vadd.f32 %v10984, %v11053
    %v11055 = vpop.f32.mrb[0].mxu0
    %11056 = vdwg.mxu0
    %11057 = vmatprep.subr.mxu0 0.0
    %11058 = vmatpush1.msra.mxu0 %v9792
    %11059 = vmatprep.subr.mxu0 0.0
    %11060 = vmatpush1.msra.mxu0 %v9793
    %11061 = vmatprep.subr.mxu0 0.0
    %11062 = vmatpush1.msra.mxu0 %v9794
    %11063 = vmatprep.subr.mxu0 0.0
    %11064 = vmatpush1.msra.mxu0 %v9795
    %11065 = vmatprep.subr.mxu0 0.0
    %11066 = vmatpush1.msra.mxu0 %v9796
    %11067 = vmatprep.subr.mxu0 0.0
    %11068 = vmatpush1.msra.mxu0 %v9797
    %11069 = vmatprep.subr.mxu0 0.0
    %11070 = vmatpush1.msra.mxu0 %v9798
    %11071 = vmatprep.subr.mxu0 0.0
    %11072 = vmatpush1.msra.mxu0 %v9799
    %11073 = vmatprep.subr.mxu0 0.0
    %11074 = vmatpush1.msra.mxu0 %v9800
    %11075 = vmatprep.subr.mxu0 0.0
    %11076 = vmatpush1.msra.mxu0 %v9801
    %11077 = vmatprep.subr.mxu0 0.0
    %11078 = vmatpush1.msra.mxu0 %v9802
    %11079 = vmatprep.subr.mxu0 0.0
    %11080 = vmatpush1.msra.mxu0 %v9803
    %11081 = vmatprep.subr.mxu0 0.0
    %11082 = vmatpush1.msra.mxu0 %v9804
    %11083 = vmatprep.subr.mxu0 0.0
    %11084 = vmatpush1.msra.mxu0 %v9805
    %11085 = vmatprep.subr.mxu0 0.0
    %11086 = vmatpush1.msra.mxu0 %v9806
    %11087 = vmatprep.subr.mxu0 0.0
    %11088 = vmatpush1.msra.mxu0 %v9807
    %11089 = vmatprep.subr.mxu0 0.0
    %11090 = vmatpush1.msra.mxu0 %v9808
    %11091 = vmatprep.subr.mxu0 0.0
    %11092 = vmatpush1.msra.mxu0 %v9809
    %11093 = vmatprep.subr.mxu0 0.0
    %11094 = vmatpush1.msra.mxu0 %v9810
    %11095 = vmatprep.subr.mxu0 0.0
    %11096 = vmatpush1.msra.mxu0 %v9811
    %11097 = vmatprep.subr.mxu0 0.0
    %11098 = vmatpush1.msra.mxu0 %v9812
    %11099 = vmatprep.subr.mxu0 0.0
    %11100 = vmatpush1.msra.mxu0 %v9813
    %11101 = vmatprep.subr.mxu0 0.0
    %11102 = vmatpush1.msra.mxu0 %v9814
    %11103 = vmatprep.subr.mxu0 0.0
    %11104 = vmatpush1.msra.mxu0 %v9815
    %11105 = vmatprep.subr.mxu0 0.0
    %11106 = vmatpush1.msra.mxu0 %v9816
    %11107 = vmatprep.subr.mxu0 0.0
    %11108 = vmatpush1.msra.mxu0 %v9817
    %11109 = vmatprep.subr.mxu0 0.0
    %11110 = vmatpush1.msra.mxu0 %v9818
    %11111 = vmatprep.subr.mxu0 0.0
    %11112 = vmatpush1.msra.mxu0 %v9819
    %11113 = vmatprep.subr.mxu0 0.0
    %11114 = vmatpush1.msra.mxu0 %v9820
    %11115 = vmatprep.subr.mxu0 0.0
    %11116 = vmatpush1.msra.mxu0 %v9821
    %11117 = vmatprep.subr.mxu0 0.0
    %11118 = vmatpush1.msra.mxu0 %v9822
    %11119 = vmatprep.subr.mxu0 0.0
    %11120 = vmatpush1.msra.mxu0 %v9823
    %11121 = vmatprep.mubr.f32.mxu0 %v9974
    %11122 = vmatmul.mubr.f32.gmra.mrb[0].mxu0 %v9972
    %v11123 = vpop.f32.mrb[0].mxu0
    %v11124 = vadd.f32 %v11054, %v11123
    %v11125 = vpop.f32.mrb[0].mxu0
    %11126 = vdwg.mxu0
    %vm11127 = vcmask 254976
    %11128 = vst.msk [vmem:[#allocation5] sm:$0x3] %vm11127, %v11124
    // Predicated region
    $region30: #{tpu_custom_call.1} parent=1 // pred_check
      _
    $region31: #{tpu_custom_call.1} parent=1 // pred_check_branch
      %11130 = sbr.rel (0) target = $region33
    $region32: #{tpu_custom_call.1} parent=1 // pred_region
      %s11132 = ssub.s32 32, 32
      %11133 = vsyncadd [#allocation6], %s11132
      %s11135 = sshll.u32 [#allocation5], 4
      %s11136 = int_to_ptr.vmem [resolvable:$true] %s11135
      %11138 = dma.vmem_to_hbm [thread:$0]  %s11136, 32, %s7, [#allocation6]
    $region33: #{tpu_custom_call.1} parent=1 // pred_fallthru
      _
    // Predicated region
    $region34: #{tpu_custom_call.1} parent=1 // pred_check
      _
    $region35: #{tpu_custom_call.1} parent=1 // pred_check_branch
      %11140 = sbr.rel (0) target = $region37
    $region36: #{tpu_custom_call.1} parent=1 // pred_region
      %11141 = dma.done [#allocation6], 32
    $region37: #{tpu_custom_call.1} parent=1 // pred_fallthru
      _
    %11142 = vsyncpa [#allocation6], 1

</llo_original>
